<compile_context>
chip_gen: v7x
topology: tpu7x:2x2x1
jax: 0.10.0
libtpu: 0.0.40
codegen_flags: <defaults>
</compile_context>

<pallas_src>
import functools
import math

import jax
import jax.numpy as jnp
from jax.experimental import pallas as pl
from jax.experimental.pallas import tpu as pltpu

# ---- synthetic backbone config (small stand-in for radio_v2.5-l ViT) ----
PATCH = 4            # patch size == minimum supported resolution step
EMBED = 64           # feature dim of the spatial features
HEADS = 4
HEAD_DIM = EMBED // HEADS
MLP = 4 * EMBED
LAYERS = 2
LN_EPS = 1e-6


def _round_up(v, m):
    return ((v + m - 1) // m) * m


def _nearest_supported(size):
    # radio's get_nearest_supported_resolution: nearest multiple of the patch
    # step (round-half-up to avoid banker's-rounding ties), at least one step.
    return max(PATCH, int(math.floor(size / PATCH + 0.5)) * PATCH)


def _grid_steps(n):
    # 2 grid steps only where there are 2 TensorCores per chip (v7x).  On
    # single-TC chips (v5e / v6e) the grid is a serial loop, so extra steps
    # are pure per-step overhead at this problem size.
    try:
        kind = jax.devices()[0].device_kind.lower()
    except Exception:
        kind = ""
    two_tc = ("v7" in kind) or ("7x" in kind)
    return 2 if (two_tc and n >= 2 and n % 2 == 0) else 1


def _bilinear_matrix(out_size, in_size):
    # interpolation matrix of F.interpolate(mode='bilinear', align_corners=False)
    dst = jnp.arange(out_size, dtype=jnp.float32)
    src = (dst + 0.5) * (in_size / out_size) - 0.5
    src = jnp.clip(src, 0.0, in_size - 1.0)
    lo = jnp.floor(src).astype(jnp.int32)
    hi = jnp.minimum(lo + 1, in_size - 1)
    w_hi = src - lo.astype(jnp.float32)
    w_lo = 1.0 - w_hi
    r = jnp.zeros((out_size, in_size), jnp.float32)
    idx = jnp.arange(out_size)
    r = r.at[idx, lo].add(w_lo)
    r = r.at[idx, hi].add(w_hi)
    return r


def _erf(x):
    # Abramowitz & Stegun 7.1.26 rational approximation (|abs err| < 1.5e-7),
    # built only from exp / mul / add / div / where so it lowers on all TPU gens.
    a1, a2, a3, a4, a5 = (0.254829592, -0.284496736, 1.421413741,
                          -1.453152027, 1.061405429)
    p = 0.3275911
    sgn = jnp.where(x >= 0.0, 1.0, -1.0)
    ax = jnp.abs(x)
    t = 1.0 / (1.0 + p * ax)
    poly = ((((a5 * t + a4) * t + a3) * t + a2) * t + a1) * t
    return sgn * (1.0 - poly * jnp.exp(-ax * ax))


def _gelu_exact(x):
    # exact-erf GELU (torch.nn.GELU default), not the tanh approximation
    return 0.5 * x * (1.0 + _erf(x * 0.7071067811865476))


def _layernorm(v, gamma, beta):
    mu = jnp.mean(v, axis=-1, keepdims=True)
    var = jnp.mean(jnp.square(v - mu), axis=-1, keepdims=True)
    return (v - mu) * jax.lax.rsqrt(var + LN_EPS) * gamma + beta


# ---------------------------------------------------------------------------
# ViT backbone kernel: base add + transformer blocks + final LayerNorm.
# One grid step processes a batch of images on (images_per_step*t1p, D) rows.
# ---------------------------------------------------------------------------
def _vit_kernel(tok_ref, base_ref, lng_ref, lnb_ref,
                wqkv_ref, bqkv_ref, wproj_ref, bproj_ref,
                wfc1_ref, bfc1_ref, wfc2_ref, bfc2_ref,
                out_ref, *, t1p, num_tokens, num_valid):
    rb, d = tok_ref.shape                       # rb = images_per_step * t1p
    nimg = rb // t1p
    scale = 1.0 / (HEAD_DIM ** 0.5)

    # residual stream init: fused patch embeddings + (pos + cls) base, f32 rows.
    # (t1p is a multiple of 8, so these f32 reshapes are layout no-ops.)
    tok = tok_ref[...]                                          # (rb, d) f32
    x = (tok.reshape(nimg, t1p, d) + base_ref[...][None]).reshape(rb, d)

    # padded key tokens (index >= num_valid) must never be attended to
    kidx = jax.lax.broadcasted_iota(jnp.int32, (1, 1, t1p), 2)
    key_bias = jnp.where(kidx < num_valid, 0.0, -1e30).astype(jnp.float32)

    for l in range(LAYERS):
        # ---- attention block (pre-norm); fused Q / K / V / proj matmuls ----
        hb = _layernorm(x, lng_ref[2 * l], lnb_ref[2 * l]).astype(jnp.bfloat16)
        q = jnp.dot(hb, wqkv_ref[l, 0],
                    preferred_element_type=jnp.float32) + bqkv_ref[l, 0]
        k = jnp.dot(hb, wqkv_ref[l, 1],
                    preferred_element_type=jnp.float32) + bqkv_ref[l, 1]
        v = jnp.dot(hb, wqkv_ref[l, 2],
                    preferred_element_type=jnp.float32) + bqkv_ref[l, 2]
        # reshape while still f32 (layout no-op), then cast for the MXU einsums
        q3 = q.reshape(nimg, t1p, d).astype(jnp.bfloat16)
        k3 = k.reshape(nimg, t1p, d).astype(jnp.bfloat16)
        v3 = v.reshape(nimg, t1p, d).astype(jnp.bfloat16)

        heads = []
        for hd in range(HEADS):
            sl = slice(hd * HEAD_DIM, (hd + 1) * HEAD_DIM)
            att = jnp.einsum('bqd,bkd->bqk', q3[:, :, sl], k3[:, :, sl],
                             preferred_element_type=jnp.float32) * scale
            att = att + key_bias
            m = jnp.max(att, axis=-1, keepdims=True)
            e = jnp.exp(att - m)
            s = jnp.sum(e, axis=-1, keepdims=True)
            p = (e * pl.reciprocal(s, approx=True)).astype(jnp.bfloat16)
            heads.append(jnp.einsum('bqk,bkd->bqd', p, v3[:, :, sl],
                                    preferred_element_type=jnp.float32))
        o = jnp.concatenate(heads, axis=-1)                     # (nimg,t1p,d) f32
        o = o.reshape(rb, d).astype(jnp.bfloat16)
        x = x + jnp.dot(o, wproj_ref[l],
                        preferred_element_type=jnp.float32) + bproj_ref[l]

        # ---- MLP block (pre-norm), exact-erf GELU ----
        hm = _layernorm(x, lng_ref[2 * l + 1],
                        lnb_ref[2 * l + 1]).astype(jnp.bfloat16)
        h1 = jnp.dot(hm, wfc1_ref[l],
                     preferred_element_type=jnp.float32) + bfc1_ref[l]
        h1 = _gelu_exact(h1).astype(jnp.bfloat16)
        x = x + jnp.dot(h1, wfc2_ref[l],
                        preferred_element_type=jnp.float32) + bfc2_ref[l]

    xf = _layernorm(x, lng_ref[2 * LAYERS], lnb_ref[2 * LAYERS])  # (rb, d) f32
    # drop cls + pad tokens (static, sublane-aligned slice) and store
    out_ref[...] = xf.reshape(nimg, t1p, d)[:, :num_tokens, :]


def _vit_cost(n, t1p, num_tokens, tok_rows, weights):
    r, d = n * t1p, EMBED
    per_layer = (4 * 2 * r * d * d                   # q, k, v, out-proj matmuls
                 + 2 * 2 * n * t1p * t1p * d         # attention scores + values
                 + 2 * 2 * r * d * MLP)              # MLP matmuls
    flops = LAYERS * per_layer
    transc = LAYERS * (n * HEADS * t1p * t1p + r * MLP) + (2 * LAYERS + 1) * r
    nbytes = (tok_rows.size * tok_rows.dtype.itemsize
              + sum(w.size * w.dtype.itemsize for w in weights)
              + n * num_tokens * d * 4)
    return int(flops), int(transc), int(nbytes)


def vit_forward(tok_rows, params, *, num_tokens, t1p):
    """tok_rows: (N*t1p, EMBED) f32 patch embeddings -> (N, num_tokens, EMBED)."""
    rtot, _ = tok_rows.shape
    n = rtot // t1p
    g = _grid_steps(n)
    nb = n // g
    rb = nb * t1p

    weights = [params['base'], params['ln_g'], params['ln_b'],
               params['w_qkv'], params['b_qkv'],
               params['w_proj'], params['b_proj'],
               params['w_fc1'], params['b_fc1'],
               params['w_fc2'], params['b_fc2']]

    def fullspec(a):
        nd = a.ndim
        return pl.BlockSpec(a.shape, lambda i, _n=nd: (0,) * _n)

    flops, transc, bytes_acc = _vit_cost(n, t1p, num_tokens, tok_rows, weights)
    kernel = functools.partial(_vit_kernel, t1p=t1p, num_tokens=num_tokens,
                               num_valid=num_tokens + 1)
    return pl.pallas_call(
        kernel,
        out_shape=jax.ShapeDtypeStruct((n, num_tokens, EMBED), jnp.float32),
        grid=(g,),
        in_specs=[pl.BlockSpec((rb, EMBED), lambda i: (i, 0))]
                 + [fullspec(w) for w in weights],
        out_specs=pl.BlockSpec((nb, num_tokens, EMBED), lambda i: (i, 0, 0)),
        compiler_params=pltpu.CompilerParams(
            dimension_semantics=("parallel",)),
        cost_estimate=pl.CostEstimate(flops=flops, transcendentals=transc,
                                      bytes_accessed=bytes_acc),
    )(tok_rows, *weights)


# ---------------------------------------------------------------------------
# Parameter init (deterministic, synthetic).  The bilinear resize, patchify
# permutation and patch-embedding are composed into one linear map:
#   W_fused[(c,h,w), t*D + d] = sum_{i,j} rh[py*P+i, h] rw[px*P+j, w]
#                                          * wpe[(c,i,j), d],  t = py*wp + px
# ---------------------------------------------------------------------------
def init_params(key, in_chans, H, W):
    nh, nw = _nearest_supported(H), _nearest_supported(W)
    hp, wp = nh // PATCH, nw // PATCH
    t = hp * wp                                   # spatial tokens
    t1p = _round_up(t + 1, 8)                     # + cls, padded to sublane mult
    ppc = in_chans * PATCH * PATCH

    ks = jax.random.split(key, 8)
    nrm = lambda k, s: (0.02 * jax.random.normal(k, s)).astype(jnp.float32)

    wpe = nrm(ks[0], (ppc, EMBED)).reshape(in_chans, PATCH, PATCH, EMBED)
    rh = _bilinear_matrix(nh, H).reshape(hp, PATCH, H)
    rw = _bilinear_matrix(nw, W).reshape(wp, PATCH, W)
    wf = jnp.einsum('yih,xjw,cijd->chwyxd', rh, rw, wpe)
    wf = wf.reshape(in_chans * H * W, t * EMBED)
    wf = jnp.pad(wf, ((0, 0), (0, (t1p - t) * EMBED)))  # zero cols: cls + pad
    w_fused = wf.astype(jnp.bfloat16)                   # (C*H*W, t1p*D) bf16

    pos = nrm(ks[1], (t + 1, EMBED))
    cls = nrm(ks[2], (EMBED,))
    base = jnp.zeros((t1p, EMBED), jnp.float32)
    base = base.at[:t].set(pos[:t])               # spatial tokens
    base = base.at[t].set(pos[t] + cls)           # cls slot; pad rows stay zero

    ln_shape = (2 * LAYERS + 1, 1, EMBED)
    return {
        'w_fused': w_fused,
        'base':    base,                          # (t1p, D) f32
        'ln_g':    jnp.ones(ln_shape, jnp.float32),
        'ln_b':    jnp.zeros(ln_shape, jnp.float32),
        'w_qkv':   nrm(ks[3], (LAYERS, 3, EMBED, EMBED)).astype(jnp.bfloat16),
        'b_qkv':   jnp.zeros((LAYERS, 3, 1, EMBED), jnp.float32),
        'w_proj':  nrm(ks[4], (LAYERS, EMBED, EMBED)).astype(jnp.bfloat16),
        'b_proj':  jnp.zeros((LAYERS, 1, EMBED), jnp.float32),
        'w_fc1':   nrm(ks[5], (LAYERS, EMBED, MLP)).astype(jnp.bfloat16),
        'b_fc1':   jnp.zeros((LAYERS, 1, MLP), jnp.float32),
        'w_fc2':   nrm(ks[6], (LAYERS, MLP, EMBED)).astype(jnp.bfloat16),
        'b_fc2':   jnp.zeros((LAYERS, 1, EMBED), jnp.float32),
    }


# ---------------------------------------------------------------------------
# RadioEncoder.forward
# ---------------------------------------------------------------------------
def radio_encoder_forward(x, params):
    """x: (B, V, C, H, W) f32 -> spatial features (B, V, EMBED, H', W') (NCHW)."""
    B, V, C, H, W = x.shape
    n = B * V
    nh, nw = _nearest_supported(H), _nearest_supported(W)
    hp, wp = nh // PATCH, nw // PATCH
    t = hp * wp
    t1p = _round_up(t + 1, 8)

    # fused bilinear-resize + patchify + patch-embedding: one bf16 matmul.
    # TODO(synk): fold this dot into the Pallas kernel once the lane->sublane
    # reshape ((n, t1p*D) -> (n*t1p, D)) it requires is verified in Mosaic.
    x_flat = x.reshape(n, C * H * W).astype(jnp.bfloat16)
    tok = jnp.dot(x_flat, params['w_fused'],
                  preferred_element_type=jnp.float32)          # (n, t1p*D)
    tok_rows = tok.reshape(n * t1p, EMBED)                     # free (row-major)

    tokens = vit_forward(tok_rows, params, num_tokens=t, t1p=t1p)  # (n, T, D)
    feats = tokens.reshape(B, V, hp, wp, EMBED).transpose(0, 1, 4, 2, 3)
    return feats                                               # (B, V, D, hp, wp)


if __name__ == "__main__":
    key = jax.random.PRNGKey(0)
    kx, kp = jax.random.split(key)

    B, V, C, H, W = 2, 2, 3, 17, 17          # 17 -> nearest supported res 16
    x = jax.random.normal(kx, (B, V, C, H, W), jnp.float32)
    params = init_params(kp, C, H, W)

    fwd = jax.jit(radio_encoder_forward)
    out = jax.block_until_ready(fwd(x, params))

    nh, nw = _nearest_supported(H), _nearest_supported(W)
    assert out.shape == (B, V, EMBED, nh // PATCH, nw // PATCH), out.shape
    assert bool(jnp.all(jnp.isfinite(out)))
    print("KERNEL_OK")
</pallas_src>

<mosaic_0001>
module attributes {stable_mosaic.version = 11 : i64} {
  func.func @_vit_kernel(%arg0: i32, %arg1: memref<96x64xf32, #tpu.memory_space<vmem>>, %arg2: memref<24x64xf32, #tpu.memory_space<vmem>>, %arg3: memref<5x1x64xf32, #tpu.memory_space<vmem>>, %arg4: memref<5x1x64xf32, #tpu.memory_space<vmem>>, %arg5: memref<2x3x64x64xbf16, #tpu.memory_space<vmem>>, %arg6: memref<2x3x1x64xf32, #tpu.memory_space<vmem>>, %arg7: memref<2x64x64xbf16, #tpu.memory_space<vmem>>, %arg8: memref<2x1x64xf32, #tpu.memory_space<vmem>>, %arg9: memref<2x64x256xbf16, #tpu.memory_space<vmem>>, %arg10: memref<2x1x256xf32, #tpu.memory_space<vmem>>, %arg11: memref<2x256x64xbf16, #tpu.memory_space<vmem>>, %arg12: memref<2x1x64xf32, #tpu.memory_space<vmem>>, %arg13: memref<4x16x64xf32, #tpu.memory_space<vmem>>) attributes {dimension_semantics = [#tpu.dimension_semantics<parallel>], iteration_bounds = array<i64: 1>, scalar_prefetch = 0 : i64, scratch_operands = 0 : i64, tpu.core_type = #tpu.core_type<tc>, window_params = [{transform_indices = @transform_0, window_bounds = array<i64: 96, 64>}, {pipeline_mode = #tpu.pipeline_mode<synchronous>, transform_indices = @transform_1, window_bounds = array<i64: 24, 64>}, {pipeline_mode = #tpu.pipeline_mode<synchronous>, transform_indices = @transform_2, window_bounds = array<i64: 5, 1, 64>}, {pipeline_mode = #tpu.pipeline_mode<synchronous>, transform_indices = @transform_3, window_bounds = array<i64: 5, 1, 64>}, {pipeline_mode = #tpu.pipeline_mode<synchronous>, transform_indices = @transform_4, window_bounds = array<i64: 2, 3, 64, 64>}, {pipeline_mode = #tpu.pipeline_mode<synchronous>, transform_indices = @transform_5, window_bounds = array<i64: 2, 3, 1, 64>}, {pipeline_mode = #tpu.pipeline_mode<synchronous>, transform_indices = @transform_6, window_bounds = array<i64: 2, 64, 64>}, {pipeline_mode = #tpu.pipeline_mode<synchronous>, transform_indices = @transform_7, window_bounds = array<i64: 2, 1, 64>}, {pipeline_mode = #tpu.pipeline_mode<synchronous>, transform_indices = @transform_8, window_bounds = array<i64: 2, 64, 256>}, {pipeline_mode = #tpu.pipeline_mode<synchronous>, transform_indices = @transform_9, window_bounds = array<i64: 2, 1, 256>}, {pipeline_mode = #tpu.pipeline_mode<synchronous>, transform_indices = @transform_10, window_bounds = array<i64: 2, 256, 64>}, {pipeline_mode = #tpu.pipeline_mode<synchronous>, transform_indices = @transform_11, window_bounds = array<i64: 2, 1, 64>}, {transform_indices = @transform_12, window_bounds = array<i64: 4, 16, 64>}]} {
    %c0 = arith.constant 0 : index
    %c0_0 = arith.constant 0 : index
    %0 = vector.load %arg1[%c0, %c0_0] : memref<96x64xf32, #tpu.memory_space<vmem>>, vector<96x64xf32>
    %1 = vector.shape_cast %0 : vector<96x64xf32> to vector<4x24x64xf32>
    %c0_1 = arith.constant 0 : index
    %c0_2 = arith.constant 0 : index
    %2 = vector.load %arg2[%c0_1, %c0_2] : memref<24x64xf32, #tpu.memory_space<vmem>>, vector<24x64xf32>
    %3 = vector.shape_cast %2 : vector<24x64xf32> to vector<1x24x64xf32>
    %4 = vector.broadcast %3 : vector<1x24x64xf32> to vector<4x24x64xf32>
    %5 = arith.addf %1, %4 : vector<4x24x64xf32>
    %6 = vector.shape_cast %5 : vector<4x24x64xf32> to vector<96x64xf32>
    %7 = tpu.iota {dimensions = array<i32: 2>} : vector<1x1x24xi32>
    %c17_i32 = arith.constant 17 : i32
    %8 = vector.broadcast %c17_i32 : i32 to vector<1x1x24xi32>
    %9 = arith.cmpi slt, %7, %8 : vector<1x1x24xi32>
    %cst = arith.constant 0.000000e+00 : f32
    %cst_3 = arith.constant -1.000000e+30 : f32
    %10 = vector.broadcast %cst : f32 to vector<1x1x24xf32>
    %11 = vector.broadcast %cst_3 : f32 to vector<1x1x24xf32>
    %12 = arith.select %9, %10, %11 : vector<1x1x24xi1>, vector<1x1x24xf32>
    %c0_4 = arith.constant 0 : index
    %c0_5 = arith.constant 0 : index
    %c0_6 = arith.constant 0 : index
    %13 = vector.load %arg3[%c0_4, %c0_5, %c0_6] : memref<5x1x64xf32, #tpu.memory_space<vmem>>, vector<1x1x64xf32>
    %14 = vector.shape_cast %13 : vector<1x1x64xf32> to vector<1x64xf32>
    %c0_7 = arith.constant 0 : index
    %c0_8 = arith.constant 0 : index
    %c0_9 = arith.constant 0 : index
    %15 = vector.load %arg4[%c0_7, %c0_8, %c0_9] : memref<5x1x64xf32, #tpu.memory_space<vmem>>, vector<1x1x64xf32>
    %16 = vector.shape_cast %15 : vector<1x1x64xf32> to vector<1x64xf32>
    %cst_10 = arith.constant dense<0.000000e+00> : vector<96xf32>
    %17 = vector.multi_reduction <add>, %6, %cst_10 [1] : vector<96x64xf32> to vector<96xf32>
    %18 = vector.shape_cast %17 : vector<96xf32> to vector<96x1xf32>
    %cst_11 = arith.constant 6.400000e+01 : f32
    %19 = vector.broadcast %cst_11 : f32 to vector<96x1xf32>
    %20 = arith.divf %18, %19 : vector<96x1xf32>
    %21 = vector.broadcast %20 : vector<96x1xf32> to vector<96x64xf32>
    %22 = arith.subf %6, %21 : vector<96x64xf32>
    %23 = arith.mulf %22, %22 : vector<96x64xf32>
    %cst_12 = arith.constant dense<0.000000e+00> : vector<96xf32>
    %24 = vector.multi_reduction <add>, %23, %cst_12 [1] : vector<96x64xf32> to vector<96xf32>
    %25 = vector.shape_cast %24 : vector<96xf32> to vector<96x1xf32>
    %cst_13 = arith.constant 6.400000e+01 : f32
    %26 = vector.broadcast %cst_13 : f32 to vector<96x1xf32>
    %27 = arith.divf %25, %26 : vector<96x1xf32>
    %28 = vector.broadcast %20 : vector<96x1xf32> to vector<96x64xf32>
    %29 = arith.subf %6, %28 : vector<96x64xf32>
    %cst_14 = arith.constant 9.99999997E-7 : f32
    %30 = vector.broadcast %cst_14 : f32 to vector<96x1xf32>
    %31 = arith.addf %27, %30 : vector<96x1xf32>
    %32 = math.rsqrt %31 : vector<96x1xf32>
    %33 = vector.broadcast %32 : vector<96x1xf32> to vector<96x64xf32>
    %34 = arith.mulf %29, %33 : vector<96x64xf32>
    %35 = vector.broadcast %14 : vector<1x64xf32> to vector<96x64xf32>
    %36 = arith.mulf %34, %35 : vector<96x64xf32>
    %37 = vector.broadcast %16 : vector<1x64xf32> to vector<96x64xf32>
    %38 = arith.addf %36, %37 : vector<96x64xf32>
    %39 = arith.truncf %38 : vector<96x64xf32> to vector<96x64xbf16>
    %c0_15 = arith.constant 0 : index
    %c0_16 = arith.constant 0 : index
    %c0_17 = arith.constant 0 : index
    %c0_18 = arith.constant 0 : index
    %40 = vector.load %arg5[%c0_15, %c0_16, %c0_17, %c0_18] : memref<2x3x64x64xbf16, #tpu.memory_space<vmem>>, vector<1x1x64x64xbf16>
    %41 = vector.shape_cast %40 : vector<1x1x64x64xbf16> to vector<64x64xbf16>
    %cst_19 = arith.constant dense<0.000000e+00> : vector<96x64xf32>
    %42 = tpu.matmul %39, %41, %cst_19 {dimension_numbers = #tpu.dot_dimension_numbers<[1], [0], [0], [1], [0, 0, 1, 1], [], []>} : vector<96x64xbf16>, vector<64x64xbf16>, vector<96x64xf32> -> vector<96x64xf32>
    %c0_20 = arith.constant 0 : index
    %c0_21 = arith.constant 0 : index
    %c0_22 = arith.constant 0 : index
    %c0_23 = arith.constant 0 : index
    %43 = vector.load %arg6[%c0_20, %c0_21, %c0_22, %c0_23] : memref<2x3x1x64xf32, #tpu.memory_space<vmem>>, vector<1x1x1x64xf32>
    %44 = vector.shape_cast %43 : vector<1x1x1x64xf32> to vector<1x64xf32>
    %45 = vector.broadcast %44 : vector<1x64xf32> to vector<96x64xf32>
    %46 = arith.addf %42, %45 : vector<96x64xf32>
    %c0_24 = arith.constant 0 : index
    %c1 = arith.constant 1 : index
    %c0_25 = arith.constant 0 : index
    %c0_26 = arith.constant 0 : index
    %47 = vector.load %arg5[%c0_24, %c1, %c0_25, %c0_26] : memref<2x3x64x64xbf16, #tpu.memory_space<vmem>>, vector<1x1x64x64xbf16>
    %48 = vector.shape_cast %47 : vector<1x1x64x64xbf16> to vector<64x64xbf16>
    %cst_27 = arith.constant dense<0.000000e+00> : vector<96x64xf32>
    %49 = tpu.matmul %39, %48, %cst_27 {dimension_numbers = #tpu.dot_dimension_numbers<[1], [0], [0], [1], [0, 0, 1, 1], [], []>} : vector<96x64xbf16>, vector<64x64xbf16>, vector<96x64xf32> -> vector<96x64xf32>
    %c0_28 = arith.constant 0 : index
    %c1_29 = arith.constant 1 : index
    %c0_30 = arith.constant 0 : index
    %c0_31 = arith.constant 0 : index
    %50 = vector.load %arg6[%c0_28, %c1_29, %c0_30, %c0_31] : memref<2x3x1x64xf32, #tpu.memory_space<vmem>>, vector<1x1x1x64xf32>
    %51 = vector.shape_cast %50 : vector<1x1x1x64xf32> to vector<1x64xf32>
    %52 = vector.broadcast %51 : vector<1x64xf32> to vector<96x64xf32>
    %53 = arith.addf %49, %52 : vector<96x64xf32>
    %c0_32 = arith.constant 0 : index
    %c2 = arith.constant 2 : index
    %c0_33 = arith.constant 0 : index
    %c0_34 = arith.constant 0 : index
    %54 = vector.load %arg5[%c0_32, %c2, %c0_33, %c0_34] : memref<2x3x64x64xbf16, #tpu.memory_space<vmem>>, vector<1x1x64x64xbf16>
    %55 = vector.shape_cast %54 : vector<1x1x64x64xbf16> to vector<64x64xbf16>
    %cst_35 = arith.constant dense<0.000000e+00> : vector<96x64xf32>
    %56 = tpu.matmul %39, %55, %cst_35 {dimension_numbers = #tpu.dot_dimension_numbers<[1], [0], [0], [1], [0, 0, 1, 1], [], []>} : vector<96x64xbf16>, vector<64x64xbf16>, vector<96x64xf32> -> vector<96x64xf32>
    %c0_36 = arith.constant 0 : index
    %c2_37 = arith.constant 2 : index
    %c0_38 = arith.constant 0 : index
    %c0_39 = arith.constant 0 : index
    %57 = vector.load %arg6[%c0_36, %c2_37, %c0_38, %c0_39] : memref<2x3x1x64xf32, #tpu.memory_space<vmem>>, vector<1x1x1x64xf32>
    %58 = vector.shape_cast %57 : vector<1x1x1x64xf32> to vector<1x64xf32>
    %59 = vector.broadcast %58 : vector<1x64xf32> to vector<96x64xf32>
    %60 = arith.addf %56, %59 : vector<96x64xf32>
    %61 = vector.shape_cast %46 : vector<96x64xf32> to vector<4x24x64xf32>
    %62 = arith.truncf %61 : vector<4x24x64xf32> to vector<4x24x64xbf16>
    %63 = vector.shape_cast %53 : vector<96x64xf32> to vector<4x24x64xf32>
    %64 = arith.truncf %63 : vector<4x24x64xf32> to vector<4x24x64xbf16>
    %65 = vector.shape_cast %60 : vector<96x64xf32> to vector<4x24x64xf32>
    %66 = arith.truncf %65 : vector<4x24x64xf32> to vector<4x24x64xbf16>
    %67 = vector.extract_strided_slice %62 {offsets = [0, 0, 0], sizes = [4, 24, 16], strides = [1, 1, 1]} : vector<4x24x64xbf16> to vector<4x24x16xbf16>
    %68 = vector.extract_strided_slice %64 {offsets = [0, 0, 0], sizes = [4, 24, 16], strides = [1, 1, 1]} : vector<4x24x64xbf16> to vector<4x24x16xbf16>
    "tpu.trace_start"() <{level = 10 : i32, message = "bqd,bkd->bqk"}> : () -> ()
    %cst_40 = arith.constant dense<0.000000e+00> : vector<4x24x24xf32>
    %69 = tpu.matmul %67, %68, %cst_40 {dimension_numbers = #tpu.dot_dimension_numbers<[2], [2], [1], [1], [0, 0, 0, 1, 1, 1], [0], [0]>} : vector<4x24x16xbf16>, vector<4x24x16xbf16>, vector<4x24x24xf32> -> vector<4x24x24xf32>
    "tpu.trace_stop"() : () -> ()
    %cst_41 = arith.constant 2.500000e-01 : f32
    %70 = vector.broadcast %cst_41 : f32 to vector<4x24x24xf32>
    %71 = arith.mulf %69, %70 : vector<4x24x24xf32>
    %72 = vector.broadcast %12 : vector<1x1x24xf32> to vector<4x24x24xf32>
    %73 = arith.addf %71, %72 : vector<4x24x24xf32>
    %cst_42 = arith.constant dense<0xFF800000> : vector<4x24xf32>
    %74 = vector.multi_reduction <maximumf>, %73, %cst_42 [2] : vector<4x24x24xf32> to vector<4x24xf32>
    %75 = vector.shape_cast %74 : vector<4x24xf32> to vector<4x24x1xf32>
    %76 = vector.broadcast %75 : vector<4x24x1xf32> to vector<4x24x24xf32>
    %77 = arith.subf %73, %76 : vector<4x24x24xf32>
    %78 = math.exp %77 : vector<4x24x24xf32>
    %cst_43 = arith.constant dense<0.000000e+00> : vector<4x24xf32>
    %79 = vector.multi_reduction <add>, %78, %cst_43 [2] : vector<4x24x24xf32> to vector<4x24xf32>
    %80 = vector.shape_cast %79 : vector<4x24xf32> to vector<4x24x1xf32>
    %81 = tpu.reciprocal %80 {approx = true} : vector<4x24x1xf32> -> vector<4x24x1xf32>
    %82 = vector.broadcast %81 : vector<4x24x1xf32> to vector<4x24x24xf32>
    %83 = arith.mulf %78, %82 : vector<4x24x24xf32>
    %84 = arith.truncf %83 : vector<4x24x24xf32> to vector<4x24x24xbf16>
    %85 = vector.extract_strided_slice %66 {offsets = [0, 0, 0], sizes = [4, 24, 16], strides = [1, 1, 1]} : vector<4x24x64xbf16> to vector<4x24x16xbf16>
    "tpu.trace_start"() <{level = 10 : i32, message = "bqk,bkd->bqd"}> : () -> ()
    %cst_44 = arith.constant dense<0.000000e+00> : vector<4x24x16xf32>
    %86 = tpu.matmul %84, %85, %cst_44 {dimension_numbers = #tpu.dot_dimension_numbers<[2], [1], [1], [2], [0, 0, 0, 1, 1, 2], [0], [0]>} : vector<4x24x24xbf16>, vector<4x24x16xbf16>, vector<4x24x16xf32> -> vector<4x24x16xf32>
    "tpu.trace_stop"() : () -> ()
    %87 = vector.extract_strided_slice %62 {offsets = [0, 0, 16], sizes = [4, 24, 16], strides = [1, 1, 1]} : vector<4x24x64xbf16> to vector<4x24x16xbf16>
    %88 = vector.extract_strided_slice %64 {offsets = [0, 0, 16], sizes = [4, 24, 16], strides = [1, 1, 1]} : vector<4x24x64xbf16> to vector<4x24x16xbf16>
    "tpu.trace_start"() <{level = 10 : i32, message = "bqd,bkd->bqk"}> : () -> ()
    %cst_45 = arith.constant dense<0.000000e+00> : vector<4x24x24xf32>
    %89 = tpu.matmul %87, %88, %cst_45 {dimension_numbers = #tpu.dot_dimension_numbers<[2], [2], [1], [1], [0, 0, 0, 1, 1, 1], [0], [0]>} : vector<4x24x16xbf16>, vector<4x24x16xbf16>, vector<4x24x24xf32> -> vector<4x24x24xf32>
    "tpu.trace_stop"() : () -> ()
    %cst_46 = arith.constant 2.500000e-01 : f32
    %90 = vector.broadcast %cst_46 : f32 to vector<4x24x24xf32>
    %91 = arith.mulf %89, %90 : vector<4x24x24xf32>
    %92 = vector.broadcast %12 : vector<1x1x24xf32> to vector<4x24x24xf32>
    %93 = arith.addf %91, %92 : vector<4x24x24xf32>
    %cst_47 = arith.constant dense<0xFF800000> : vector<4x24xf32>
    %94 = vector.multi_reduction <maximumf>, %93, %cst_47 [2] : vector<4x24x24xf32> to vector<4x24xf32>
    %95 = vector.shape_cast %94 : vector<4x24xf32> to vector<4x24x1xf32>
    %96 = vector.broadcast %95 : vector<4x24x1xf32> to vector<4x24x24xf32>
    %97 = arith.subf %93, %96 : vector<4x24x24xf32>
    %98 = math.exp %97 : vector<4x24x24xf32>
    %cst_48 = arith.constant dense<0.000000e+00> : vector<4x24xf32>
    %99 = vector.multi_reduction <add>, %98, %cst_48 [2] : vector<4x24x24xf32> to vector<4x24xf32>
    %100 = vector.shape_cast %99 : vector<4x24xf32> to vector<4x24x1xf32>
    %101 = tpu.reciprocal %100 {approx = true} : vector<4x24x1xf32> -> vector<4x24x1xf32>
    %102 = vector.broadcast %101 : vector<4x24x1xf32> to vector<4x24x24xf32>
    %103 = arith.mulf %98, %102 : vector<4x24x24xf32>
    %104 = arith.truncf %103 : vector<4x24x24xf32> to vector<4x24x24xbf16>
    %105 = vector.extract_strided_slice %66 {offsets = [0, 0, 16], sizes = [4, 24, 16], strides = [1, 1, 1]} : vector<4x24x64xbf16> to vector<4x24x16xbf16>
    "tpu.trace_start"() <{level = 10 : i32, message = "bqk,bkd->bqd"}> : () -> ()
    %cst_49 = arith.constant dense<0.000000e+00> : vector<4x24x16xf32>
    %106 = tpu.matmul %104, %105, %cst_49 {dimension_numbers = #tpu.dot_dimension_numbers<[2], [1], [1], [2], [0, 0, 0, 1, 1, 2], [0], [0]>} : vector<4x24x24xbf16>, vector<4x24x16xbf16>, vector<4x24x16xf32> -> vector<4x24x16xf32>
    "tpu.trace_stop"() : () -> ()
    %107 = vector.extract_strided_slice %62 {offsets = [0, 0, 32], sizes = [4, 24, 16], strides = [1, 1, 1]} : vector<4x24x64xbf16> to vector<4x24x16xbf16>
    %108 = vector.extract_strided_slice %64 {offsets = [0, 0, 32], sizes = [4, 24, 16], strides = [1, 1, 1]} : vector<4x24x64xbf16> to vector<4x24x16xbf16>
    "tpu.trace_start"() <{level = 10 : i32, message = "bqd,bkd->bqk"}> : () -> ()
    %cst_50 = arith.constant dense<0.000000e+00> : vector<4x24x24xf32>
    %109 = tpu.matmul %107, %108, %cst_50 {dimension_numbers = #tpu.dot_dimension_numbers<[2], [2], [1], [1], [0, 0, 0, 1, 1, 1], [0], [0]>} : vector<4x24x16xbf16>, vector<4x24x16xbf16>, vector<4x24x24xf32> -> vector<4x24x24xf32>
    "tpu.trace_stop"() : () -> ()
    %cst_51 = arith.constant 2.500000e-01 : f32
    %110 = vector.broadcast %cst_51 : f32 to vector<4x24x24xf32>
    %111 = arith.mulf %109, %110 : vector<4x24x24xf32>
    %112 = vector.broadcast %12 : vector<1x1x24xf32> to vector<4x24x24xf32>
    %113 = arith.addf %111, %112 : vector<4x24x24xf32>
    %cst_52 = arith.constant dense<0xFF800000> : vector<4x24xf32>
    %114 = vector.multi_reduction <maximumf>, %113, %cst_52 [2] : vector<4x24x24xf32> to vector<4x24xf32>
    %115 = vector.shape_cast %114 : vector<4x24xf32> to vector<4x24x1xf32>
    %116 = vector.broadcast %115 : vector<4x24x1xf32> to vector<4x24x24xf32>
    %117 = arith.subf %113, %116 : vector<4x24x24xf32>
    %118 = math.exp %117 : vector<4x24x24xf32>
    %cst_53 = arith.constant dense<0.000000e+00> : vector<4x24xf32>
    %119 = vector.multi_reduction <add>, %118, %cst_53 [2] : vector<4x24x24xf32> to vector<4x24xf32>
    %120 = vector.shape_cast %119 : vector<4x24xf32> to vector<4x24x1xf32>
    %121 = tpu.reciprocal %120 {approx = true} : vector<4x24x1xf32> -> vector<4x24x1xf32>
    %122 = vector.broadcast %121 : vector<4x24x1xf32> to vector<4x24x24xf32>
    %123 = arith.mulf %118, %122 : vector<4x24x24xf32>
    %124 = arith.truncf %123 : vector<4x24x24xf32> to vector<4x24x24xbf16>
    %125 = vector.extract_strided_slice %66 {offsets = [0, 0, 32], sizes = [4, 24, 16], strides = [1, 1, 1]} : vector<4x24x64xbf16> to vector<4x24x16xbf16>
    "tpu.trace_start"() <{level = 10 : i32, message = "bqk,bkd->bqd"}> : () -> ()
    %cst_54 = arith.constant dense<0.000000e+00> : vector<4x24x16xf32>
    %126 = tpu.matmul %124, %125, %cst_54 {dimension_numbers = #tpu.dot_dimension_numbers<[2], [1], [1], [2], [0, 0, 0, 1, 1, 2], [0], [0]>} : vector<4x24x24xbf16>, vector<4x24x16xbf16>, vector<4x24x16xf32> -> vector<4x24x16xf32>
    "tpu.trace_stop"() : () -> ()
    %127 = vector.extract_strided_slice %62 {offsets = [0, 0, 48], sizes = [4, 24, 16], strides = [1, 1, 1]} : vector<4x24x64xbf16> to vector<4x24x16xbf16>
    %128 = vector.extract_strided_slice %64 {offsets = [0, 0, 48], sizes = [4, 24, 16], strides = [1, 1, 1]} : vector<4x24x64xbf16> to vector<4x24x16xbf16>
    "tpu.trace_start"() <{level = 10 : i32, message = "bqd,bkd->bqk"}> : () -> ()
    %cst_55 = arith.constant dense<0.000000e+00> : vector<4x24x24xf32>
    %129 = tpu.matmul %127, %128, %cst_55 {dimension_numbers = #tpu.dot_dimension_numbers<[2], [2], [1], [1], [0, 0, 0, 1, 1, 1], [0], [0]>} : vector<4x24x16xbf16>, vector<4x24x16xbf16>, vector<4x24x24xf32> -> vector<4x24x24xf32>
    "tpu.trace_stop"() : () -> ()
    %cst_56 = arith.constant 2.500000e-01 : f32
    %130 = vector.broadcast %cst_56 : f32 to vector<4x24x24xf32>
    %131 = arith.mulf %129, %130 : vector<4x24x24xf32>
    %132 = vector.broadcast %12 : vector<1x1x24xf32> to vector<4x24x24xf32>
    %133 = arith.addf %131, %132 : vector<4x24x24xf32>
    %cst_57 = arith.constant dense<0xFF800000> : vector<4x24xf32>
    %134 = vector.multi_reduction <maximumf>, %133, %cst_57 [2] : vector<4x24x24xf32> to vector<4x24xf32>
    %135 = vector.shape_cast %134 : vector<4x24xf32> to vector<4x24x1xf32>
    %136 = vector.broadcast %135 : vector<4x24x1xf32> to vector<4x24x24xf32>
    %137 = arith.subf %133, %136 : vector<4x24x24xf32>
    %138 = math.exp %137 : vector<4x24x24xf32>
    %cst_58 = arith.constant dense<0.000000e+00> : vector<4x24xf32>
    %139 = vector.multi_reduction <add>, %138, %cst_58 [2] : vector<4x24x24xf32> to vector<4x24xf32>
    %140 = vector.shape_cast %139 : vector<4x24xf32> to vector<4x24x1xf32>
    %141 = tpu.reciprocal %140 {approx = true} : vector<4x24x1xf32> -> vector<4x24x1xf32>
    %142 = vector.broadcast %141 : vector<4x24x1xf32> to vector<4x24x24xf32>
    %143 = arith.mulf %138, %142 : vector<4x24x24xf32>
    %144 = arith.truncf %143 : vector<4x24x24xf32> to vector<4x24x24xbf16>
    %145 = vector.extract_strided_slice %66 {offsets = [0, 0, 48], sizes = [4, 24, 16], strides = [1, 1, 1]} : vector<4x24x64xbf16> to vector<4x24x16xbf16>
    "tpu.trace_start"() <{level = 10 : i32, message = "bqk,bkd->bqd"}> : () -> ()
    %cst_59 = arith.constant dense<0.000000e+00> : vector<4x24x16xf32>
    %146 = tpu.matmul %144, %145, %cst_59 {dimension_numbers = #tpu.dot_dimension_numbers<[2], [1], [1], [2], [0, 0, 0, 1, 1, 2], [0], [0]>} : vector<4x24x24xbf16>, vector<4x24x16xbf16>, vector<4x24x16xf32> -> vector<4x24x16xf32>
    "tpu.trace_stop"() : () -> ()
    %147 = tpu.concatenate %86, %106, %126, %146 in 2 : vector<4x24x16xf32>, vector<4x24x16xf32>, vector<4x24x16xf32>, vector<4x24x16xf32> -> vector<4x24x64xf32>
    %148 = vector.shape_cast %147 : vector<4x24x64xf32> to vector<96x64xf32>
    %149 = arith.truncf %148 : vector<96x64xf32> to vector<96x64xbf16>
    %c0_60 = arith.constant 0 : index
    %c0_61 = arith.constant 0 : index
    %c0_62 = arith.constant 0 : index
    %150 = vector.load %arg7[%c0_60, %c0_61, %c0_62] : memref<2x64x64xbf16, #tpu.memory_space<vmem>>, vector<1x64x64xbf16>
    %151 = vector.shape_cast %150 : vector<1x64x64xbf16> to vector<64x64xbf16>
    %cst_63 = arith.constant dense<0.000000e+00> : vector<96x64xf32>
    %152 = tpu.matmul %149, %151, %cst_63 {dimension_numbers = #tpu.dot_dimension_numbers<[1], [0], [0], [1], [0, 0, 1, 1], [], []>} : vector<96x64xbf16>, vector<64x64xbf16>, vector<96x64xf32> -> vector<96x64xf32>
    %153 = arith.addf %6, %152 : vector<96x64xf32>
    %c0_64 = arith.constant 0 : index
    %c0_65 = arith.constant 0 : index
    %c0_66 = arith.constant 0 : index
    %154 = vector.load %arg8[%c0_64, %c0_65, %c0_66] : memref<2x1x64xf32, #tpu.memory_space<vmem>>, vector<1x1x64xf32>
    %155 = vector.shape_cast %154 : vector<1x1x64xf32> to vector<1x64xf32>
    %156 = vector.broadcast %155 : vector<1x64xf32> to vector<96x64xf32>
    %157 = arith.addf %153, %156 : vector<96x64xf32>
    %c1_67 = arith.constant 1 : index
    %c0_68 = arith.constant 0 : index
    %c0_69 = arith.constant 0 : index
    %158 = vector.load %arg3[%c1_67, %c0_68, %c0_69] : memref<5x1x64xf32, #tpu.memory_space<vmem>>, vector<1x1x64xf32>
    %159 = vector.shape_cast %158 : vector<1x1x64xf32> to vector<1x64xf32>
    %c1_70 = arith.constant 1 : index
    %c0_71 = arith.constant 0 : index
    %c0_72 = arith.constant 0 : index
    %160 = vector.load %arg4[%c1_70, %c0_71, %c0_72] : memref<5x1x64xf32, #tpu.memory_space<vmem>>, vector<1x1x64xf32>
    %161 = vector.shape_cast %160 : vector<1x1x64xf32> to vector<1x64xf32>
    %cst_73 = arith.constant dense<0.000000e+00> : vector<96xf32>
    %162 = vector.multi_reduction <add>, %157, %cst_73 [1] : vector<96x64xf32> to vector<96xf32>
    %163 = vector.shape_cast %162 : vector<96xf32> to vector<96x1xf32>
    %cst_74 = arith.constant 6.400000e+01 : f32
    %164 = vector.broadcast %cst_74 : f32 to vector<96x1xf32>
    %165 = arith.divf %163, %164 : vector<96x1xf32>
    %166 = vector.broadcast %165 : vector<96x1xf32> to vector<96x64xf32>
    %167 = arith.subf %157, %166 : vector<96x64xf32>
    %168 = arith.mulf %167, %167 : vector<96x64xf32>
    %cst_75 = arith.constant dense<0.000000e+00> : vector<96xf32>
    %169 = vector.multi_reduction <add>, %168, %cst_75 [1] : vector<96x64xf32> to vector<96xf32>
    %170 = vector.shape_cast %169 : vector<96xf32> to vector<96x1xf32>
    %cst_76 = arith.constant 6.400000e+01 : f32
    %171 = vector.broadcast %cst_76 : f32 to vector<96x1xf32>
    %172 = arith.divf %170, %171 : vector<96x1xf32>
    %173 = vector.broadcast %165 : vector<96x1xf32> to vector<96x64xf32>
    %174 = arith.subf %157, %173 : vector<96x64xf32>
    %cst_77 = arith.constant 9.99999997E-7 : f32
    %175 = vector.broadcast %cst_77 : f32 to vector<96x1xf32>
    %176 = arith.addf %172, %175 : vector<96x1xf32>
    %177 = math.rsqrt %176 : vector<96x1xf32>
    %178 = vector.broadcast %177 : vector<96x1xf32> to vector<96x64xf32>
    %179 = arith.mulf %174, %178 : vector<96x64xf32>
    %180 = vector.broadcast %159 : vector<1x64xf32> to vector<96x64xf32>
    %181 = arith.mulf %179, %180 : vector<96x64xf32>
    %182 = vector.broadcast %161 : vector<1x64xf32> to vector<96x64xf32>
    %183 = arith.addf %181, %182 : vector<96x64xf32>
    %184 = arith.truncf %183 : vector<96x64xf32> to vector<96x64xbf16>
    %c0_78 = arith.constant 0 : index
    %c0_79 = arith.constant 0 : index
    %c0_80 = arith.constant 0 : index
    %185 = vector.load %arg9[%c0_78, %c0_79, %c0_80] : memref<2x64x256xbf16, #tpu.memory_space<vmem>>, vector<1x64x256xbf16>
    %186 = vector.shape_cast %185 : vector<1x64x256xbf16> to vector<64x256xbf16>
    %cst_81 = arith.constant dense<0.000000e+00> : vector<96x256xf32>
    %187 = tpu.matmul %184, %186, %cst_81 {dimension_numbers = #tpu.dot_dimension_numbers<[1], [0], [0], [1], [0, 0, 1, 1], [], []>} : vector<96x64xbf16>, vector<64x256xbf16>, vector<96x256xf32> -> vector<96x256xf32>
    %c0_82 = arith.constant 0 : index
    %c0_83 = arith.constant 0 : index
    %c0_84 = arith.constant 0 : index
    %188 = vector.load %arg10[%c0_82, %c0_83, %c0_84] : memref<2x1x256xf32, #tpu.memory_space<vmem>>, vector<1x1x256xf32>
    %189 = vector.shape_cast %188 : vector<1x1x256xf32> to vector<1x256xf32>
    %190 = vector.broadcast %189 : vector<1x256xf32> to vector<96x256xf32>
    %191 = arith.addf %187, %190 : vector<96x256xf32>
    %cst_85 = arith.constant 5.000000e-01 : f32
    %192 = vector.broadcast %cst_85 : f32 to vector<96x256xf32>
    %193 = arith.mulf %192, %191 : vector<96x256xf32>
    %cst_86 = arith.constant 0.707106769 : f32
    %194 = vector.broadcast %cst_86 : f32 to vector<96x256xf32>
    %195 = arith.mulf %191, %194 : vector<96x256xf32>
    %cst_87 = arith.constant 0.000000e+00 : f32
    %196 = vector.broadcast %cst_87 : f32 to vector<96x256xf32>
    %197 = arith.cmpf oge, %195, %196 : vector<96x256xf32>
    %cst_88 = arith.constant 1.000000e+00 : f32
    %cst_89 = arith.constant -1.000000e+00 : f32
    %198 = vector.broadcast %cst_88 : f32 to vector<96x256xf32>
    %199 = vector.broadcast %cst_89 : f32 to vector<96x256xf32>
    %200 = arith.select %197, %198, %199 : vector<96x256xi1>, vector<96x256xf32>
    %201 = math.absf %195 : vector<96x256xf32>
    %cst_90 = arith.constant 0.327591091 : f32
    %202 = vector.broadcast %cst_90 : f32 to vector<96x256xf32>
    %203 = arith.mulf %202, %201 : vector<96x256xf32>
    %cst_91 = arith.constant 1.000000e+00 : f32
    %204 = vector.broadcast %cst_91 : f32 to vector<96x256xf32>
    %205 = arith.addf %204, %203 : vector<96x256xf32>
    %cst_92 = arith.constant 1.000000e+00 : f32
    %206 = vector.broadcast %cst_92 : f32 to vector<96x256xf32>
    %207 = arith.divf %206, %205 : vector<96x256xf32>
    %cst_93 = arith.constant 1.06140542 : f32
    %208 = vector.broadcast %cst_93 : f32 to vector<96x256xf32>
    %209 = arith.mulf %208, %207 : vector<96x256xf32>
    %cst_94 = arith.constant -1.45315206 : f32
    %210 = vector.broadcast %cst_94 : f32 to vector<96x256xf32>
    %211 = arith.addf %209, %210 : vector<96x256xf32>
    %212 = arith.mulf %211, %207 : vector<96x256xf32>
    %cst_95 = arith.constant 1.42141378 : f32
    %213 = vector.broadcast %cst_95 : f32 to vector<96x256xf32>
    %214 = arith.addf %212, %213 : vector<96x256xf32>
    %215 = arith.mulf %214, %207 : vector<96x256xf32>
    %cst_96 = arith.constant -0.284496725 : f32
    %216 = vector.broadcast %cst_96 : f32 to vector<96x256xf32>
    %217 = arith.addf %215, %216 : vector<96x256xf32>
    %218 = arith.mulf %217, %207 : vector<96x256xf32>
    %cst_97 = arith.constant 0.254829586 : f32
    %219 = vector.broadcast %cst_97 : f32 to vector<96x256xf32>
    %220 = arith.addf %218, %219 : vector<96x256xf32>
    %221 = arith.mulf %220, %207 : vector<96x256xf32>
    %cst_98 = arith.constant 0.000000e+00 : f32
    %222 = vector.broadcast %cst_98 : f32 to vector<96x256xf32>
    %223 = arith.subf %222, %201 : vector<96x256xf32>
    %224 = arith.mulf %223, %201 : vector<96x256xf32>
    %225 = math.exp %224 : vector<96x256xf32>
    %226 = arith.mulf %221, %225 : vector<96x256xf32>
    %cst_99 = arith.constant 1.000000e+00 : f32
    %227 = vector.broadcast %cst_99 : f32 to vector<96x256xf32>
    %228 = arith.subf %227, %226 : vector<96x256xf32>
    %229 = arith.mulf %200, %228 : vector<96x256xf32>
    %cst_100 = arith.constant 1.000000e+00 : f32
    %230 = vector.broadcast %cst_100 : f32 to vector<96x256xf32>
    %231 = arith.addf %230, %229 : vector<96x256xf32>
    %232 = arith.mulf %193, %231 : vector<96x256xf32>
    %233 = arith.truncf %232 : vector<96x256xf32> to vector<96x256xbf16>
    %c0_101 = arith.constant 0 : index
    %c0_102 = arith.constant 0 : index
    %c0_103 = arith.constant 0 : index
    %234 = vector.load %arg11[%c0_101, %c0_102, %c0_103] : memref<2x256x64xbf16, #tpu.memory_space<vmem>>, vector<1x256x64xbf16>
    %235 = vector.shape_cast %234 : vector<1x256x64xbf16> to vector<256x64xbf16>
    %cst_104 = arith.constant dense<0.000000e+00> : vector<96x64xf32>
    %236 = tpu.matmul %233, %235, %cst_104 {dimension_numbers = #tpu.dot_dimension_numbers<[1], [0], [0], [1], [0, 0, 1, 1], [], []>} : vector<96x256xbf16>, vector<256x64xbf16>, vector<96x64xf32> -> vector<96x64xf32>
    %237 = arith.addf %157, %236 : vector<96x64xf32>
    %c0_105 = arith.constant 0 : index
    %c0_106 = arith.constant 0 : index
    %c0_107 = arith.constant 0 : index
    %238 = vector.load %arg12[%c0_105, %c0_106, %c0_107] : memref<2x1x64xf32, #tpu.memory_space<vmem>>, vector<1x1x64xf32>
    %239 = vector.shape_cast %238 : vector<1x1x64xf32> to vector<1x64xf32>
    %240 = vector.broadcast %239 : vector<1x64xf32> to vector<96x64xf32>
    %241 = arith.addf %237, %240 : vector<96x64xf32>
    %c2_108 = arith.constant 2 : index
    %c0_109 = arith.constant 0 : index
    %c0_110 = arith.constant 0 : index
    %242 = vector.load %arg3[%c2_108, %c0_109, %c0_110] : memref<5x1x64xf32, #tpu.memory_space<vmem>>, vector<1x1x64xf32>
    %243 = vector.shape_cast %242 : vector<1x1x64xf32> to vector<1x64xf32>
    %c2_111 = arith.constant 2 : index
    %c0_112 = arith.constant 0 : index
    %c0_113 = arith.constant 0 : index
    %244 = vector.load %arg4[%c2_111, %c0_112, %c0_113] : memref<5x1x64xf32, #tpu.memory_space<vmem>>, vector<1x1x64xf32>
    %245 = vector.shape_cast %244 : vector<1x1x64xf32> to vector<1x64xf32>
    %cst_114 = arith.constant dense<0.000000e+00> : vector<96xf32>
    %246 = vector.multi_reduction <add>, %241, %cst_114 [1] : vector<96x64xf32> to vector<96xf32>
    %247 = vector.shape_cast %246 : vector<96xf32> to vector<96x1xf32>
    %cst_115 = arith.constant 6.400000e+01 : f32
    %248 = vector.broadcast %cst_115 : f32 to vector<96x1xf32>
    %249 = arith.divf %247, %248 : vector<96x1xf32>
    %250 = vector.broadcast %249 : vector<96x1xf32> to vector<96x64xf32>
    %251 = arith.subf %241, %250 : vector<96x64xf32>
    %252 = arith.mulf %251, %251 : vector<96x64xf32>
    %cst_116 = arith.constant dense<0.000000e+00> : vector<96xf32>
    %253 = vector.multi_reduction <add>, %252, %cst_116 [1] : vector<96x64xf32> to vector<96xf32>
    %254 = vector.shape_cast %253 : vector<96xf32> to vector<96x1xf32>
    %cst_117 = arith.constant 6.400000e+01 : f32
    %255 = vector.broadcast %cst_117 : f32 to vector<96x1xf32>
    %256 = arith.divf %254, %255 : vector<96x1xf32>
    %257 = vector.broadcast %249 : vector<96x1xf32> to vector<96x64xf32>
    %258 = arith.subf %241, %257 : vector<96x64xf32>
    %cst_118 = arith.constant 9.99999997E-7 : f32
    %259 = vector.broadcast %cst_118 : f32 to vector<96x1xf32>
    %260 = arith.addf %256, %259 : vector<96x1xf32>
    %261 = math.rsqrt %260 : vector<96x1xf32>
    %262 = vector.broadcast %261 : vector<96x1xf32> to vector<96x64xf32>
    %263 = arith.mulf %258, %262 : vector<96x64xf32>
    %264 = vector.broadcast %243 : vector<1x64xf32> to vector<96x64xf32>
    %265 = arith.mulf %263, %264 : vector<96x64xf32>
    %266 = vector.broadcast %245 : vector<1x64xf32> to vector<96x64xf32>
    %267 = arith.addf %265, %266 : vector<96x64xf32>
    %268 = arith.truncf %267 : vector<96x64xf32> to vector<96x64xbf16>
    %c1_119 = arith.constant 1 : index
    %c0_120 = arith.constant 0 : index
    %c0_121 = arith.constant 0 : index
    %c0_122 = arith.constant 0 : index
    %269 = vector.load %arg5[%c1_119, %c0_120, %c0_121, %c0_122] : memref<2x3x64x64xbf16, #tpu.memory_space<vmem>>, vector<1x1x64x64xbf16>
    %270 = vector.shape_cast %269 : vector<1x1x64x64xbf16> to vector<64x64xbf16>
    %cst_123 = arith.constant dense<0.000000e+00> : vector<96x64xf32>
    %271 = tpu.matmul %268, %270, %cst_123 {dimension_numbers = #tpu.dot_dimension_numbers<[1], [0], [0], [1], [0, 0, 1, 1], [], []>} : vector<96x64xbf16>, vector<64x64xbf16>, vector<96x64xf32> -> vector<96x64xf32>
    %c1_124 = arith.constant 1 : index
    %c0_125 = arith.constant 0 : index
    %c0_126 = arith.constant 0 : index
    %c0_127 = arith.constant 0 : index
    %272 = vector.load %arg6[%c1_124, %c0_125, %c0_126, %c0_127] : memref<2x3x1x64xf32, #tpu.memory_space<vmem>>, vector<1x1x1x64xf32>
    %273 = vector.shape_cast %272 : vector<1x1x1x64xf32> to vector<1x64xf32>
    %274 = vector.broadcast %273 : vector<1x64xf32> to vector<96x64xf32>
    %275 = arith.addf %271, %274 : vector<96x64xf32>
    %c1_128 = arith.constant 1 : index
    %c1_129 = arith.constant 1 : index
    %c0_130 = arith.constant 0 : index
    %c0_131 = arith.constant 0 : index
    %276 = vector.load %arg5[%c1_128, %c1_129, %c0_130, %c0_131] : memref<2x3x64x64xbf16, #tpu.memory_space<vmem>>, vector<1x1x64x64xbf16>
    %277 = vector.shape_cast %276 : vector<1x1x64x64xbf16> to vector<64x64xbf16>
    %cst_132 = arith.constant dense<0.000000e+00> : vector<96x64xf32>
    %278 = tpu.matmul %268, %277, %cst_132 {dimension_numbers = #tpu.dot_dimension_numbers<[1], [0], [0], [1], [0, 0, 1, 1], [], []>} : vector<96x64xbf16>, vector<64x64xbf16>, vector<96x64xf32> -> vector<96x64xf32>
    %c1_133 = arith.constant 1 : index
    %c1_134 = arith.constant 1 : index
    %c0_135 = arith.constant 0 : index
    %c0_136 = arith.constant 0 : index
    %279 = vector.load %arg6[%c1_133, %c1_134, %c0_135, %c0_136] : memref<2x3x1x64xf32, #tpu.memory_space<vmem>>, vector<1x1x1x64xf32>
    %280 = vector.shape_cast %279 : vector<1x1x1x64xf32> to vector<1x64xf32>
    %281 = vector.broadcast %280 : vector<1x64xf32> to vector<96x64xf32>
    %282 = arith.addf %278, %281 : vector<96x64xf32>
    %c1_137 = arith.constant 1 : index
    %c2_138 = arith.constant 2 : index
    %c0_139 = arith.constant 0 : index
    %c0_140 = arith.constant 0 : index
    %283 = vector.load %arg5[%c1_137, %c2_138, %c0_139, %c0_140] : memref<2x3x64x64xbf16, #tpu.memory_space<vmem>>, vector<1x1x64x64xbf16>
    %284 = vector.shape_cast %283 : vector<1x1x64x64xbf16> to vector<64x64xbf16>
    %cst_141 = arith.constant dense<0.000000e+00> : vector<96x64xf32>
    %285 = tpu.matmul %268, %284, %cst_141 {dimension_numbers = #tpu.dot_dimension_numbers<[1], [0], [0], [1], [0, 0, 1, 1], [], []>} : vector<96x64xbf16>, vector<64x64xbf16>, vector<96x64xf32> -> vector<96x64xf32>
    %c1_142 = arith.constant 1 : index
    %c2_143 = arith.constant 2 : index
    %c0_144 = arith.constant 0 : index
    %c0_145 = arith.constant 0 : index
    %286 = vector.load %arg6[%c1_142, %c2_143, %c0_144, %c0_145] : memref<2x3x1x64xf32, #tpu.memory_space<vmem>>, vector<1x1x1x64xf32>
    %287 = vector.shape_cast %286 : vector<1x1x1x64xf32> to vector<1x64xf32>
    %288 = vector.broadcast %287 : vector<1x64xf32> to vector<96x64xf32>
    %289 = arith.addf %285, %288 : vector<96x64xf32>
    %290 = vector.shape_cast %275 : vector<96x64xf32> to vector<4x24x64xf32>
    %291 = arith.truncf %290 : vector<4x24x64xf32> to vector<4x24x64xbf16>
    %292 = vector.shape_cast %282 : vector<96x64xf32> to vector<4x24x64xf32>
    %293 = arith.truncf %292 : vector<4x24x64xf32> to vector<4x24x64xbf16>
    %294 = vector.shape_cast %289 : vector<96x64xf32> to vector<4x24x64xf32>
    %295 = arith.truncf %294 : vector<4x24x64xf32> to vector<4x24x64xbf16>
    %296 = vector.extract_strided_slice %291 {offsets = [0, 0, 0], sizes = [4, 24, 16], strides = [1, 1, 1]} : vector<4x24x64xbf16> to vector<4x24x16xbf16>
    %297 = vector.extract_strided_slice %293 {offsets = [0, 0, 0], sizes = [4, 24, 16], strides = [1, 1, 1]} : vector<4x24x64xbf16> to vector<4x24x16xbf16>
    "tpu.trace_start"() <{level = 10 : i32, message = "bqd,bkd->bqk"}> : () -> ()
    %cst_146 = arith.constant dense<0.000000e+00> : vector<4x24x24xf32>
    %298 = tpu.matmul %296, %297, %cst_146 {dimension_numbers = #tpu.dot_dimension_numbers<[2], [2], [1], [1], [0, 0, 0, 1, 1, 1], [0], [0]>} : vector<4x24x16xbf16>, vector<4x24x16xbf16>, vector<4x24x24xf32> -> vector<4x24x24xf32>
    "tpu.trace_stop"() : () -> ()
    %cst_147 = arith.constant 2.500000e-01 : f32
    %299 = vector.broadcast %cst_147 : f32 to vector<4x24x24xf32>
    %300 = arith.mulf %298, %299 : vector<4x24x24xf32>
    %301 = vector.broadcast %12 : vector<1x1x24xf32> to vector<4x24x24xf32>
    %302 = arith.addf %300, %301 : vector<4x24x24xf32>
    %cst_148 = arith.constant dense<0xFF800000> : vector<4x24xf32>
    %303 = vector.multi_reduction <maximumf>, %302, %cst_148 [2] : vector<4x24x24xf32> to vector<4x24xf32>
    %304 = vector.shape_cast %303 : vector<4x24xf32> to vector<4x24x1xf32>
    %305 = vector.broadcast %304 : vector<4x24x1xf32> to vector<4x24x24xf32>
    %306 = arith.subf %302, %305 : vector<4x24x24xf32>
    %307 = math.exp %306 : vector<4x24x24xf32>
    %cst_149 = arith.constant dense<0.000000e+00> : vector<4x24xf32>
    %308 = vector.multi_reduction <add>, %307, %cst_149 [2] : vector<4x24x24xf32> to vector<4x24xf32>
    %309 = vector.shape_cast %308 : vector<4x24xf32> to vector<4x24x1xf32>
    %310 = tpu.reciprocal %309 {approx = true} : vector<4x24x1xf32> -> vector<4x24x1xf32>
    %311 = vector.broadcast %310 : vector<4x24x1xf32> to vector<4x24x24xf32>
    %312 = arith.mulf %307, %311 : vector<4x24x24xf32>
    %313 = arith.truncf %312 : vector<4x24x24xf32> to vector<4x24x24xbf16>
    %314 = vector.extract_strided_slice %295 {offsets = [0, 0, 0], sizes = [4, 24, 16], strides = [1, 1, 1]} : vector<4x24x64xbf16> to vector<4x24x16xbf16>
    "tpu.trace_start"() <{level = 10 : i32, message = "bqk,bkd->bqd"}> : () -> ()
    %cst_150 = arith.constant dense<0.000000e+00> : vector<4x24x16xf32>
    %315 = tpu.matmul %313, %314, %cst_150 {dimension_numbers = #tpu.dot_dimension_numbers<[2], [1], [1], [2], [0, 0, 0, 1, 1, 2], [0], [0]>} : vector<4x24x24xbf16>, vector<4x24x16xbf16>, vector<4x24x16xf32> -> vector<4x24x16xf32>
    "tpu.trace_stop"() : () -> ()
    %316 = vector.extract_strided_slice %291 {offsets = [0, 0, 16], sizes = [4, 24, 16], strides = [1, 1, 1]} : vector<4x24x64xbf16> to vector<4x24x16xbf16>
    %317 = vector.extract_strided_slice %293 {offsets = [0, 0, 16], sizes = [4, 24, 16], strides = [1, 1, 1]} : vector<4x24x64xbf16> to vector<4x24x16xbf16>
    "tpu.trace_start"() <{level = 10 : i32, message = "bqd,bkd->bqk"}> : () -> ()
    %cst_151 = arith.constant dense<0.000000e+00> : vector<4x24x24xf32>
    %318 = tpu.matmul %316, %317, %cst_151 {dimension_numbers = #tpu.dot_dimension_numbers<[2], [2], [1], [1], [0, 0, 0, 1, 1, 1], [0], [0]>} : vector<4x24x16xbf16>, vector<4x24x16xbf16>, vector<4x24x24xf32> -> vector<4x24x24xf32>
    "tpu.trace_stop"() : () -> ()
    %cst_152 = arith.constant 2.500000e-01 : f32
    %319 = vector.broadcast %cst_152 : f32 to vector<4x24x24xf32>
    %320 = arith.mulf %318, %319 : vector<4x24x24xf32>
    %321 = vector.broadcast %12 : vector<1x1x24xf32> to vector<4x24x24xf32>
    %322 = arith.addf %320, %321 : vector<4x24x24xf32>
    %cst_153 = arith.constant dense<0xFF800000> : vector<4x24xf32>
    %323 = vector.multi_reduction <maximumf>, %322, %cst_153 [2] : vector<4x24x24xf32> to vector<4x24xf32>
    %324 = vector.shape_cast %323 : vector<4x24xf32> to vector<4x24x1xf32>
    %325 = vector.broadcast %324 : vector<4x24x1xf32> to vector<4x24x24xf32>
    %326 = arith.subf %322, %325 : vector<4x24x24xf32>
    %327 = math.exp %326 : vector<4x24x24xf32>
    %cst_154 = arith.constant dense<0.000000e+00> : vector<4x24xf32>
    %328 = vector.multi_reduction <add>, %327, %cst_154 [2] : vector<4x24x24xf32> to vector<4x24xf32>
    %329 = vector.shape_cast %328 : vector<4x24xf32> to vector<4x24x1xf32>
    %330 = tpu.reciprocal %329 {approx = true} : vector<4x24x1xf32> -> vector<4x24x1xf32>
    %331 = vector.broadcast %330 : vector<4x24x1xf32> to vector<4x24x24xf32>
    %332 = arith.mulf %327, %331 : vector<4x24x24xf32>
    %333 = arith.truncf %332 : vector<4x24x24xf32> to vector<4x24x24xbf16>
    %334 = vector.extract_strided_slice %295 {offsets = [0, 0, 16], sizes = [4, 24, 16], strides = [1, 1, 1]} : vector<4x24x64xbf16> to vector<4x24x16xbf16>
    "tpu.trace_start"() <{level = 10 : i32, message = "bqk,bkd->bqd"}> : () -> ()
    %cst_155 = arith.constant dense<0.000000e+00> : vector<4x24x16xf32>
    %335 = tpu.matmul %333, %334, %cst_155 {dimension_numbers = #tpu.dot_dimension_numbers<[2], [1], [1], [2], [0, 0, 0, 1, 1, 2], [0], [0]>} : vector<4x24x24xbf16>, vector<4x24x16xbf16>, vector<4x24x16xf32> -> vector<4x24x16xf32>
    "tpu.trace_stop"() : () -> ()
    %336 = vector.extract_strided_slice %291 {offsets = [0, 0, 32], sizes = [4, 24, 16], strides = [1, 1, 1]} : vector<4x24x64xbf16> to vector<4x24x16xbf16>
    %337 = vector.extract_strided_slice %293 {offsets = [0, 0, 32], sizes = [4, 24, 16], strides = [1, 1, 1]} : vector<4x24x64xbf16> to vector<4x24x16xbf16>
    "tpu.trace_start"() <{level = 10 : i32, message = "bqd,bkd->bqk"}> : () -> ()
    %cst_156 = arith.constant dense<0.000000e+00> : vector<4x24x24xf32>
    %338 = tpu.matmul %336, %337, %cst_156 {dimension_numbers = #tpu.dot_dimension_numbers<[2], [2], [1], [1], [0, 0, 0, 1, 1, 1], [0], [0]>} : vector<4x24x16xbf16>, vector<4x24x16xbf16>, vector<4x24x24xf32> -> vector<4x24x24xf32>
    "tpu.trace_stop"() : () -> ()
    %cst_157 = arith.constant 2.500000e-01 : f32
    %339 = vector.broadcast %cst_157 : f32 to vector<4x24x24xf32>
    %340 = arith.mulf %338, %339 : vector<4x24x24xf32>
    %341 = vector.broadcast %12 : vector<1x1x24xf32> to vector<4x24x24xf32>
    %342 = arith.addf %340, %341 : vector<4x24x24xf32>
    %cst_158 = arith.constant dense<0xFF800000> : vector<4x24xf32>
    %343 = vector.multi_reduction <maximumf>, %342, %cst_158 [2] : vector<4x24x24xf32> to vector<4x24xf32>
    %344 = vector.shape_cast %343 : vector<4x24xf32> to vector<4x24x1xf32>
    %345 = vector.broadcast %344 : vector<4x24x1xf32> to vector<4x24x24xf32>
    %346 = arith.subf %342, %345 : vector<4x24x24xf32>
    %347 = math.exp %346 : vector<4x24x24xf32>
    %cst_159 = arith.constant dense<0.000000e+00> : vector<4x24xf32>
    %348 = vector.multi_reduction <add>, %347, %cst_159 [2] : vector<4x24x24xf32> to vector<4x24xf32>
    %349 = vector.shape_cast %348 : vector<4x24xf32> to vector<4x24x1xf32>
    %350 = tpu.reciprocal %349 {approx = true} : vector<4x24x1xf32> -> vector<4x24x1xf32>
    %351 = vector.broadcast %350 : vector<4x24x1xf32> to vector<4x24x24xf32>
    %352 = arith.mulf %347, %351 : vector<4x24x24xf32>
    %353 = arith.truncf %352 : vector<4x24x24xf32> to vector<4x24x24xbf16>
    %354 = vector.extract_strided_slice %295 {offsets = [0, 0, 32], sizes = [4, 24, 16], strides = [1, 1, 1]} : vector<4x24x64xbf16> to vector<4x24x16xbf16>
    "tpu.trace_start"() <{level = 10 : i32, message = "bqk,bkd->bqd"}> : () -> ()
    %cst_160 = arith.constant dense<0.000000e+00> : vector<4x24x16xf32>
    %355 = tpu.matmul %353, %354, %cst_160 {dimension_numbers = #tpu.dot_dimension_numbers<[2], [1], [1], [2], [0, 0, 0, 1, 1, 2], [0], [0]>} : vector<4x24x24xbf16>, vector<4x24x16xbf16>, vector<4x24x16xf32> -> vector<4x24x16xf32>
    "tpu.trace_stop"() : () -> ()
    %356 = vector.extract_strided_slice %291 {offsets = [0, 0, 48], sizes = [4, 24, 16], strides = [1, 1, 1]} : vector<4x24x64xbf16> to vector<4x24x16xbf16>
    %357 = vector.extract_strided_slice %293 {offsets = [0, 0, 48], sizes = [4, 24, 16], strides = [1, 1, 1]} : vector<4x24x64xbf16> to vector<4x24x16xbf16>
    "tpu.trace_start"() <{level = 10 : i32, message = "bqd,bkd->bqk"}> : () -> ()
    %cst_161 = arith.constant dense<0.000000e+00> : vector<4x24x24xf32>
    %358 = tpu.matmul %356, %357, %cst_161 {dimension_numbers = #tpu.dot_dimension_numbers<[2], [2], [1], [1], [0, 0, 0, 1, 1, 1], [0], [0]>} : vector<4x24x16xbf16>, vector<4x24x16xbf16>, vector<4x24x24xf32> -> vector<4x24x24xf32>
    "tpu.trace_stop"() : () -> ()
    %cst_162 = arith.constant 2.500000e-01 : f32
    %359 = vector.broadcast %cst_162 : f32 to vector<4x24x24xf32>
    %360 = arith.mulf %358, %359 : vector<4x24x24xf32>
    %361 = vector.broadcast %12 : vector<1x1x24xf32> to vector<4x24x24xf32>
    %362 = arith.addf %360, %361 : vector<4x24x24xf32>
    %cst_163 = arith.constant dense<0xFF800000> : vector<4x24xf32>
    %363 = vector.multi_reduction <maximumf>, %362, %cst_163 [2] : vector<4x24x24xf32> to vector<4x24xf32>
    %364 = vector.shape_cast %363 : vector<4x24xf32> to vector<4x24x1xf32>
    %365 = vector.broadcast %364 : vector<4x24x1xf32> to vector<4x24x24xf32>
    %366 = arith.subf %362, %365 : vector<4x24x24xf32>
    %367 = math.exp %366 : vector<4x24x24xf32>
    %cst_164 = arith.constant dense<0.000000e+00> : vector<4x24xf32>
    %368 = vector.multi_reduction <add>, %367, %cst_164 [2] : vector<4x24x24xf32> to vector<4x24xf32>
    %369 = vector.shape_cast %368 : vector<4x24xf32> to vector<4x24x1xf32>
    %370 = tpu.reciprocal %369 {approx = true} : vector<4x24x1xf32> -> vector<4x24x1xf32>
    %371 = vector.broadcast %370 : vector<4x24x1xf32> to vector<4x24x24xf32>
    %372 = arith.mulf %367, %371 : vector<4x24x24xf32>
    %373 = arith.truncf %372 : vector<4x24x24xf32> to vector<4x24x24xbf16>
    %374 = vector.extract_strided_slice %295 {offsets = [0, 0, 48], sizes = [4, 24, 16], strides = [1, 1, 1]} : vector<4x24x64xbf16> to vector<4x24x16xbf16>
    "tpu.trace_start"() <{level = 10 : i32, message = "bqk,bkd->bqd"}> : () -> ()
    %cst_165 = arith.constant dense<0.000000e+00> : vector<4x24x16xf32>
    %375 = tpu.matmul %373, %374, %cst_165 {dimension_numbers = #tpu.dot_dimension_numbers<[2], [1], [1], [2], [0, 0, 0, 1, 1, 2], [0], [0]>} : vector<4x24x24xbf16>, vector<4x24x16xbf16>, vector<4x24x16xf32> -> vector<4x24x16xf32>
    "tpu.trace_stop"() : () -> ()
    %376 = tpu.concatenate %315, %335, %355, %375 in 2 : vector<4x24x16xf32>, vector<4x24x16xf32>, vector<4x24x16xf32>, vector<4x24x16xf32> -> vector<4x24x64xf32>
    %377 = vector.shape_cast %376 : vector<4x24x64xf32> to vector<96x64xf32>
    %378 = arith.truncf %377 : vector<96x64xf32> to vector<96x64xbf16>
    %c1_166 = arith.constant 1 : index
    %c0_167 = arith.constant 0 : index
    %c0_168 = arith.constant 0 : index
    %379 = vector.load %arg7[%c1_166, %c0_167, %c0_168] : memref<2x64x64xbf16, #tpu.memory_space<vmem>>, vector<1x64x64xbf16>
    %380 = vector.shape_cast %379 : vector<1x64x64xbf16> to vector<64x64xbf16>
    %cst_169 = arith.constant dense<0.000000e+00> : vector<96x64xf32>
    %381 = tpu.matmul %378, %380, %cst_169 {dimension_numbers = #tpu.dot_dimension_numbers<[1], [0], [0], [1], [0, 0, 1, 1], [], []>} : vector<96x64xbf16>, vector<64x64xbf16>, vector<96x64xf32> -> vector<96x64xf32>
    %382 = arith.addf %241, %381 : vector<96x64xf32>
    %c1_170 = arith.constant 1 : index
    %c0_171 = arith.constant 0 : index
    %c0_172 = arith.constant 0 : index
    %383 = vector.load %arg8[%c1_170, %c0_171, %c0_172] : memref<2x1x64xf32, #tpu.memory_space<vmem>>, vector<1x1x64xf32>
    %384 = vector.shape_cast %383 : vector<1x1x64xf32> to vector<1x64xf32>
    %385 = vector.broadcast %384 : vector<1x64xf32> to vector<96x64xf32>
    %386 = arith.addf %382, %385 : vector<96x64xf32>
    %c3 = arith.constant 3 : index
    %c0_173 = arith.constant 0 : index
    %c0_174 = arith.constant 0 : index
    %387 = vector.load %arg3[%c3, %c0_173, %c0_174] : memref<5x1x64xf32, #tpu.memory_space<vmem>>, vector<1x1x64xf32>
    %388 = vector.shape_cast %387 : vector<1x1x64xf32> to vector<1x64xf32>
    %c3_175 = arith.constant 3 : index
    %c0_176 = arith.constant 0 : index
    %c0_177 = arith.constant 0 : index
    %389 = vector.load %arg4[%c3_175, %c0_176, %c0_177] : memref<5x1x64xf32, #tpu.memory_space<vmem>>, vector<1x1x64xf32>
    %390 = vector.shape_cast %389 : vector<1x1x64xf32> to vector<1x64xf32>
    %cst_178 = arith.constant dense<0.000000e+00> : vector<96xf32>
    %391 = vector.multi_reduction <add>, %386, %cst_178 [1] : vector<96x64xf32> to vector<96xf32>
    %392 = vector.shape_cast %391 : vector<96xf32> to vector<96x1xf32>
    %cst_179 = arith.constant 6.400000e+01 : f32
    %393 = vector.broadcast %cst_179 : f32 to vector<96x1xf32>
    %394 = arith.divf %392, %393 : vector<96x1xf32>
    %395 = vector.broadcast %394 : vector<96x1xf32> to vector<96x64xf32>
    %396 = arith.subf %386, %395 : vector<96x64xf32>
    %397 = arith.mulf %396, %396 : vector<96x64xf32>
    %cst_180 = arith.constant dense<0.000000e+00> : vector<96xf32>
    %398 = vector.multi_reduction <add>, %397, %cst_180 [1] : vector<96x64xf32> to vector<96xf32>
    %399 = vector.shape_cast %398 : vector<96xf32> to vector<96x1xf32>
    %cst_181 = arith.constant 6.400000e+01 : f32
    %400 = vector.broadcast %cst_181 : f32 to vector<96x1xf32>
    %401 = arith.divf %399, %400 : vector<96x1xf32>
    %402 = vector.broadcast %394 : vector<96x1xf32> to vector<96x64xf32>
    %403 = arith.subf %386, %402 : vector<96x64xf32>
    %cst_182 = arith.constant 9.99999997E-7 : f32
    %404 = vector.broadcast %cst_182 : f32 to vector<96x1xf32>
    %405 = arith.addf %401, %404 : vector<96x1xf32>
    %406 = math.rsqrt %405 : vector<96x1xf32>
    %407 = vector.broadcast %406 : vector<96x1xf32> to vector<96x64xf32>
    %408 = arith.mulf %403, %407 : vector<96x64xf32>
    %409 = vector.broadcast %388 : vector<1x64xf32> to vector<96x64xf32>
    %410 = arith.mulf %408, %409 : vector<96x64xf32>
    %411 = vector.broadcast %390 : vector<1x64xf32> to vector<96x64xf32>
    %412 = arith.addf %410, %411 : vector<96x64xf32>
    %413 = arith.truncf %412 : vector<96x64xf32> to vector<96x64xbf16>
    %c1_183 = arith.constant 1 : index
    %c0_184 = arith.constant 0 : index
    %c0_185 = arith.constant 0 : index
    %414 = vector.load %arg9[%c1_183, %c0_184, %c0_185] : memref<2x64x256xbf16, #tpu.memory_space<vmem>>, vector<1x64x256xbf16>
    %415 = vector.shape_cast %414 : vector<1x64x256xbf16> to vector<64x256xbf16>
    %cst_186 = arith.constant dense<0.000000e+00> : vector<96x256xf32>
    %416 = tpu.matmul %413, %415, %cst_186 {dimension_numbers = #tpu.dot_dimension_numbers<[1], [0], [0], [1], [0, 0, 1, 1], [], []>} : vector<96x64xbf16>, vector<64x256xbf16>, vector<96x256xf32> -> vector<96x256xf32>
    %c1_187 = arith.constant 1 : index
    %c0_188 = arith.constant 0 : index
    %c0_189 = arith.constant 0 : index
    %417 = vector.load %arg10[%c1_187, %c0_188, %c0_189] : memref<2x1x256xf32, #tpu.memory_space<vmem>>, vector<1x1x256xf32>
    %418 = vector.shape_cast %417 : vector<1x1x256xf32> to vector<1x256xf32>
    %419 = vector.broadcast %418 : vector<1x256xf32> to vector<96x256xf32>
    %420 = arith.addf %416, %419 : vector<96x256xf32>
    %cst_190 = arith.constant 5.000000e-01 : f32
    %421 = vector.broadcast %cst_190 : f32 to vector<96x256xf32>
    %422 = arith.mulf %421, %420 : vector<96x256xf32>
    %cst_191 = arith.constant 0.707106769 : f32
    %423 = vector.broadcast %cst_191 : f32 to vector<96x256xf32>
    %424 = arith.mulf %420, %423 : vector<96x256xf32>
    %cst_192 = arith.constant 0.000000e+00 : f32
    %425 = vector.broadcast %cst_192 : f32 to vector<96x256xf32>
    %426 = arith.cmpf oge, %424, %425 : vector<96x256xf32>
    %cst_193 = arith.constant 1.000000e+00 : f32
    %cst_194 = arith.constant -1.000000e+00 : f32
    %427 = vector.broadcast %cst_193 : f32 to vector<96x256xf32>
    %428 = vector.broadcast %cst_194 : f32 to vector<96x256xf32>
    %429 = arith.select %426, %427, %428 : vector<96x256xi1>, vector<96x256xf32>
    %430 = math.absf %424 : vector<96x256xf32>
    %cst_195 = arith.constant 0.327591091 : f32
    %431 = vector.broadcast %cst_195 : f32 to vector<96x256xf32>
    %432 = arith.mulf %431, %430 : vector<96x256xf32>
    %cst_196 = arith.constant 1.000000e+00 : f32
    %433 = vector.broadcast %cst_196 : f32 to vector<96x256xf32>
    %434 = arith.addf %433, %432 : vector<96x256xf32>
    %cst_197 = arith.constant 1.000000e+00 : f32
    %435 = vector.broadcast %cst_197 : f32 to vector<96x256xf32>
    %436 = arith.divf %435, %434 : vector<96x256xf32>
    %cst_198 = arith.constant 1.06140542 : f32
    %437 = vector.broadcast %cst_198 : f32 to vector<96x256xf32>
    %438 = arith.mulf %437, %436 : vector<96x256xf32>
    %cst_199 = arith.constant -1.45315206 : f32
    %439 = vector.broadcast %cst_199 : f32 to vector<96x256xf32>
    %440 = arith.addf %438, %439 : vector<96x256xf32>
    %441 = arith.mulf %440, %436 : vector<96x256xf32>
    %cst_200 = arith.constant 1.42141378 : f32
    %442 = vector.broadcast %cst_200 : f32 to vector<96x256xf32>
    %443 = arith.addf %441, %442 : vector<96x256xf32>
    %444 = arith.mulf %443, %436 : vector<96x256xf32>
    %cst_201 = arith.constant -0.284496725 : f32
    %445 = vector.broadcast %cst_201 : f32 to vector<96x256xf32>
    %446 = arith.addf %444, %445 : vector<96x256xf32>
    %447 = arith.mulf %446, %436 : vector<96x256xf32>
    %cst_202 = arith.constant 0.254829586 : f32
    %448 = vector.broadcast %cst_202 : f32 to vector<96x256xf32>
    %449 = arith.addf %447, %448 : vector<96x256xf32>
    %450 = arith.mulf %449, %436 : vector<96x256xf32>
    %cst_203 = arith.constant 0.000000e+00 : f32
    %451 = vector.broadcast %cst_203 : f32 to vector<96x256xf32>
    %452 = arith.subf %451, %430 : vector<96x256xf32>
    %453 = arith.mulf %452, %430 : vector<96x256xf32>
    %454 = math.exp %453 : vector<96x256xf32>
    %455 = arith.mulf %450, %454 : vector<96x256xf32>
    %cst_204 = arith.constant 1.000000e+00 : f32
    %456 = vector.broadcast %cst_204 : f32 to vector<96x256xf32>
    %457 = arith.subf %456, %455 : vector<96x256xf32>
    %458 = arith.mulf %429, %457 : vector<96x256xf32>
    %cst_205 = arith.constant 1.000000e+00 : f32
    %459 = vector.broadcast %cst_205 : f32 to vector<96x256xf32>
    %460 = arith.addf %459, %458 : vector<96x256xf32>
    %461 = arith.mulf %422, %460 : vector<96x256xf32>
    %462 = arith.truncf %461 : vector<96x256xf32> to vector<96x256xbf16>
    %c1_206 = arith.constant 1 : index
    %c0_207 = arith.constant 0 : index
    %c0_208 = arith.constant 0 : index
    %463 = vector.load %arg11[%c1_206, %c0_207, %c0_208] : memref<2x256x64xbf16, #tpu.memory_space<vmem>>, vector<1x256x64xbf16>
    %464 = vector.shape_cast %463 : vector<1x256x64xbf16> to vector<256x64xbf16>
    %cst_209 = arith.constant dense<0.000000e+00> : vector<96x64xf32>
    %465 = tpu.matmul %462, %464, %cst_209 {dimension_numbers = #tpu.dot_dimension_numbers<[1], [0], [0], [1], [0, 0, 1, 1], [], []>} : vector<96x256xbf16>, vector<256x64xbf16>, vector<96x64xf32> -> vector<96x64xf32>
    %466 = arith.addf %386, %465 : vector<96x64xf32>
    %c1_210 = arith.constant 1 : index
    %c0_211 = arith.constant 0 : index
    %c0_212 = arith.constant 0 : index
    %467 = vector.load %arg12[%c1_210, %c0_211, %c0_212] : memref<2x1x64xf32, #tpu.memory_space<vmem>>, vector<1x1x64xf32>
    %468 = vector.shape_cast %467 : vector<1x1x64xf32> to vector<1x64xf32>
    %469 = vector.broadcast %468 : vector<1x64xf32> to vector<96x64xf32>
    %470 = arith.addf %466, %469 : vector<96x64xf32>
    %c4 = arith.constant 4 : index
    %c0_213 = arith.constant 0 : index
    %c0_214 = arith.constant 0 : index
    %471 = vector.load %arg3[%c4, %c0_213, %c0_214] : memref<5x1x64xf32, #tpu.memory_space<vmem>>, vector<1x1x64xf32>
    %472 = vector.shape_cast %471 : vector<1x1x64xf32> to vector<1x64xf32>
    %c4_215 = arith.constant 4 : index
    %c0_216 = arith.constant 0 : index
    %c0_217 = arith.constant 0 : index
    %473 = vector.load %arg4[%c4_215, %c0_216, %c0_217] : memref<5x1x64xf32, #tpu.memory_space<vmem>>, vector<1x1x64xf32>
    %474 = vector.shape_cast %473 : vector<1x1x64xf32> to vector<1x64xf32>
    %cst_218 = arith.constant dense<0.000000e+00> : vector<96xf32>
    %475 = vector.multi_reduction <add>, %470, %cst_218 [1] : vector<96x64xf32> to vector<96xf32>
    %476 = vector.shape_cast %475 : vector<96xf32> to vector<96x1xf32>
    %cst_219 = arith.constant 6.400000e+01 : f32
    %477 = vector.broadcast %cst_219 : f32 to vector<96x1xf32>
    %478 = arith.divf %476, %477 : vector<96x1xf32>
    %479 = vector.broadcast %478 : vector<96x1xf32> to vector<96x64xf32>
    %480 = arith.subf %470, %479 : vector<96x64xf32>
    %481 = arith.mulf %480, %480 : vector<96x64xf32>
    %cst_220 = arith.constant dense<0.000000e+00> : vector<96xf32>
    %482 = vector.multi_reduction <add>, %481, %cst_220 [1] : vector<96x64xf32> to vector<96xf32>
    %483 = vector.shape_cast %482 : vector<96xf32> to vector<96x1xf32>
    %cst_221 = arith.constant 6.400000e+01 : f32
    %484 = vector.broadcast %cst_221 : f32 to vector<96x1xf32>
    %485 = arith.divf %483, %484 : vector<96x1xf32>
    %486 = vector.broadcast %478 : vector<96x1xf32> to vector<96x64xf32>
    %487 = arith.subf %470, %486 : vector<96x64xf32>
    %cst_222 = arith.constant 9.99999997E-7 : f32
    %488 = vector.broadcast %cst_222 : f32 to vector<96x1xf32>
    %489 = arith.addf %485, %488 : vector<96x1xf32>
    %490 = math.rsqrt %489 : vector<96x1xf32>
    %491 = vector.broadcast %490 : vector<96x1xf32> to vector<96x64xf32>
    %492 = arith.mulf %487, %491 : vector<96x64xf32>
    %493 = vector.broadcast %472 : vector<1x64xf32> to vector<96x64xf32>
    %494 = arith.mulf %492, %493 : vector<96x64xf32>
    %495 = vector.broadcast %474 : vector<1x64xf32> to vector<96x64xf32>
    %496 = arith.addf %494, %495 : vector<96x64xf32>
    %497 = vector.shape_cast %496 : vector<96x64xf32> to vector<4x24x64xf32>
    %498 = vector.extract_strided_slice %497 {offsets = [0, 0, 0], sizes = [4, 16, 64], strides = [1, 1, 1]} : vector<4x24x64xf32> to vector<4x16x64xf32>
    %c0_223 = arith.constant 0 : index
    %c0_224 = arith.constant 0 : index
    %c0_225 = arith.constant 0 : index
    %499 = vector.load %arg13[%c0_223, %c0_224, %c0_225] : memref<4x16x64xf32, #tpu.memory_space<vmem>>, vector<4x16x64xf32>
    tpu.vector_store %arg13[%c0_223, %c0_224, %c0_225], %498 {strides = array<i32>} : memref<4x16x64xf32, #tpu.memory_space<vmem>>, vector<4x16x64xf32>,
    return
  }
  func.func @transform_0(%arg0: i32) -> (i32, i32) {
    %c0_i32 = arith.constant 0 : i32
    %c0_i32_0 = arith.constant 0 : i32
    return %arg0, %c0_i32 : i32, i32
  }
  func.func @transform_1(%arg0: i32) -> (i32, i32) {
    %c0_i32 = arith.constant 0 : i32
    %c0_i32_0 = arith.constant 0 : i32
    %c0_i32_1 = arith.constant 0 : i32
    return %c0_i32, %c0_i32_0 : i32, i32
  }
  func.func @transform_2(%arg0: i32) -> (i32, i32, i32) {
    %c0_i32 = arith.constant 0 : i32
    %c0_i32_0 = arith.constant 0 : i32
    %c0_i32_1 = arith.constant 0 : i32
    %c0_i32_2 = arith.constant 0 : i32
    return %c0_i32, %c0_i32_0, %c0_i32_1 : i32, i32, i32
  }
  func.func @transform_3(%arg0: i32) -> (i32, i32, i32) {
    %c0_i32 = arith.constant 0 : i32
    %c0_i32_0 = arith.constant 0 : i32
    %c0_i32_1 = arith.constant 0 : i32
    %c0_i32_2 = arith.constant 0 : i32
    return %c0_i32, %c0_i32_0, %c0_i32_1 : i32, i32, i32
  }
  func.func @transform_4(%arg0: i32) -> (i32, i32, i32, i32) {
    %c0_i32 = arith.constant 0 : i32
    %c0_i32_0 = arith.constant 0 : i32
    %c0_i32_1 = arith.constant 0 : i32
    %c0_i32_2 = arith.constant 0 : i32
    %c0_i32_3 = arith.constant 0 : i32
    return %c0_i32, %c0_i32_0, %c0_i32_1, %c0_i32_2 : i32, i32, i32, i32
  }
  func.func @transform_5(%arg0: i32) -> (i32, i32, i32, i32) {
    %c0_i32 = arith.constant 0 : i32
    %c0_i32_0 = arith.constant 0 : i32
    %c0_i32_1 = arith.constant 0 : i32
    %c0_i32_2 = arith.constant 0 : i32
    %c0_i32_3 = arith.constant 0 : i32
    return %c0_i32, %c0_i32_0, %c0_i32_1, %c0_i32_2 : i32, i32, i32, i32
  }
  func.func @transform_6(%arg0: i32) -> (i32, i32, i32) {
    %c0_i32 = arith.constant 0 : i32
    %c0_i32_0 = arith.constant 0 : i32
    %c0_i32_1 = arith.constant 0 : i32
    %c0_i32_2 = arith.constant 0 : i32
    return %c0_i32, %c0_i32_0, %c0_i32_1 : i32, i32, i32
  }
  func.func @transform_7(%arg0: i32) -> (i32, i32, i32) {
    %c0_i32 = arith.constant 0 : i32
    %c0_i32_0 = arith.constant 0 : i32
    %c0_i32_1 = arith.constant 0 : i32
    %c0_i32_2 = arith.constant 0 : i32
    return %c0_i32, %c0_i32_0, %c0_i32_1 : i32, i32, i32
  }
  func.func @transform_8(%arg0: i32) -> (i32, i32, i32) {
    %c0_i32 = arith.constant 0 : i32
    %c0_i32_0 = arith.constant 0 : i32
    %c0_i32_1 = arith.constant 0 : i32
    %c0_i32_2 = arith.constant 0 : i32
    return %c0_i32, %c0_i32_0, %c0_i32_1 : i32, i32, i32
  }
  func.func @transform_9(%arg0: i32) -> (i32, i32, i32) {
    %c0_i32 = arith.constant 0 : i32
    %c0_i32_0 = arith.constant 0 : i32
    %c0_i32_1 = arith.constant 0 : i32
    %c0_i32_2 = arith.constant 0 : i32
    return %c0_i32, %c0_i32_0, %c0_i32_1 : i32, i32, i32
  }
  func.func @transform_10(%arg0: i32) -> (i32, i32, i32) {
    %c0_i32 = arith.constant 0 : i32
    %c0_i32_0 = arith.constant 0 : i32
    %c0_i32_1 = arith.constant 0 : i32
    %c0_i32_2 = arith.constant 0 : i32
    return %c0_i32, %c0_i32_0, %c0_i32_1 : i32, i32, i32
  }
  func.func @transform_11(%arg0: i32) -> (i32, i32, i32) {
    %c0_i32 = arith.constant 0 : i32
    %c0_i32_0 = arith.constant 0 : i32
    %c0_i32_1 = arith.constant 0 : i32
    %c0_i32_2 = arith.constant 0 : i32
    return %c0_i32, %c0_i32_0, %c0_i32_1 : i32, i32, i32
  }
  func.func @transform_12(%arg0: i32) -> (i32, i32, i32) {
    %c0_i32 = arith.constant 0 : i32
    %c0_i32_0 = arith.constant 0 : i32
    %c0_i32_1 = arith.constant 0 : i32
    return %arg0, %c0_i32, %c0_i32_0 : i32, i32, i32
  }
}

</mosaic_0001>

<llo_original>
// kernel: radio_encoder_forward.1
$region0: #{radio_encoder_forward.1}
  #allocation0 [shape = 'u32[]', space=smem, size = 0x4, offset = 0x4, fixed_abs, tag = 'smem constant byte address 0x4 - core index']
  #allocation1 [shape = 'u32[144,128]{1,0:T(1,128)}', space=vmem, size = 0x12000, scoped, tag = 'internal scratch']
  %s0 = inlined_call_operand.vmem [shape: f32[96,64], index: 0, kind: input, shape index: {}]
  %s1 = inlined_call_operand.vmem [shape: f32[24,64], index: 1, kind: input, shape index: {}]
  %s2 = inlined_call_operand.vmem [shape: f32[5,1,64], index: 2, kind: input, shape index: {}]
  %s3 = inlined_call_operand.vmem [shape: f32[5,1,64], index: 3, kind: input, shape index: {}]
  %s4 = inlined_call_operand.vmem [shape: bf16[2,3,64,64], index: 4, kind: input, shape index: {}]
  %s5 = inlined_call_operand.vmem [shape: f32[2,3,1,64], index: 5, kind: input, shape index: {}]
  %s6 = inlined_call_operand.vmem [shape: bf16[2,64,64], index: 6, kind: input, shape index: {}]
  %s7 = inlined_call_operand.vmem [shape: f32[2,1,64], index: 7, kind: input, shape index: {}]
  %s8 = inlined_call_operand.vmem [shape: bf16[2,64,256], index: 8, kind: input, shape index: {}]
  %s9 = inlined_call_operand.vmem [shape: f32[2,1,256], index: 9, kind: input, shape index: {}]
  %s10 = inlined_call_operand.vmem [shape: bf16[2,256,64], index: 10, kind: input, shape index: {}]
  %s11 = inlined_call_operand.vmem [shape: f32[2,1,64], index: 11, kind: input, shape index: {}]
  %s12 = inlined_call_operand.hbm [shape: f32[4,16,64], index: 12, kind: output, shape index: {}]
  %s13 = sld [smem:[#allocation0]]
  $region58: #{radio_encoder_forward.1} parent=0
    _
  %s15 = ssub.s32 1, %s13
  %s16 = scalar_select 0, %s15, %s13
  $region1: #{radio_encoder_forward.1} parent=0
    #allocation2 [shape = 'u8[32768]{0}', space=vmem, size = 0x8000, scoped, tag = 'output window, operand 0, single buffered']
    #allocation3 [shape = 's32[1]{0}', space=sflag, size = 0x4, scoped, tag = 'scoped memory for radio_encoder_forward.1']
    %17 = vsyncpa [#allocation3], 0
    // Predicated region
    $region2: #{radio_encoder_forward.1} parent=1 // pred_check
      _
    $region3: #{radio_encoder_forward.1} parent=1 // pred_check_branch
      %19 = sbr.rel (0) target = $region5
    $region4: #{radio_encoder_forward.1} parent=1 // pred_region
      _
    $region5: #{radio_encoder_forward.1} parent=1 // pred_fallthru
      _
    // Predicated region
    $region6: #{radio_encoder_forward.1} parent=1 // pred_check
      _
    $region7: #{radio_encoder_forward.1} parent=1 // pred_check_branch
      %21 = sbr.rel (0) target = $region9
    $region8: #{radio_encoder_forward.1} parent=1 // pred_region
      _
    $region9: #{radio_encoder_forward.1} parent=1 // pred_fallthru
      _
    // Predicated region
    $region10: #{radio_encoder_forward.1} parent=1 // pred_check
      _
    $region11: #{radio_encoder_forward.1} parent=1 // pred_check_branch
      %23 = sbr.rel (0) target = $region13
    $region12: #{radio_encoder_forward.1} parent=1 // pred_region
      _
    $region13: #{radio_encoder_forward.1} parent=1 // pred_fallthru
      _
    // Predicated region
    $region14: #{radio_encoder_forward.1} parent=1 // pred_check
      _
    $region15: #{radio_encoder_forward.1} parent=1 // pred_check_branch
      %25 = sbr.rel (0) target = $region17
    $region16: #{radio_encoder_forward.1} parent=1 // pred_region
      _
    $region17: #{radio_encoder_forward.1} parent=1 // pred_fallthru
      _
    // Predicated region
    $region18: #{radio_encoder_forward.1} parent=1 // pred_check
      _
    $region19: #{radio_encoder_forward.1} parent=1 // pred_check_branch
      %27 = sbr.rel (0) target = $region21
    $region20: #{radio_encoder_forward.1} parent=1 // pred_region
      _
    $region21: #{radio_encoder_forward.1} parent=1 // pred_fallthru
      _
    // Predicated region
    $region22: #{radio_encoder_forward.1} parent=1 // pred_check
      _
    $region23: #{radio_encoder_forward.1} parent=1 // pred_check_branch
      %29 = sbr.rel (0) target = $region25
    $region24: #{radio_encoder_forward.1} parent=1 // pred_region
      _
    $region25: #{radio_encoder_forward.1} parent=1 // pred_fallthru
      _
    // Predicated region
    $region26: #{radio_encoder_forward.1} parent=1 // pred_check
      _
    $region27: #{radio_encoder_forward.1} parent=1 // pred_check_branch
      %31 = sbr.rel (0) target = $region29
    $region28: #{radio_encoder_forward.1} parent=1 // pred_region
      _
    $region29: #{radio_encoder_forward.1} parent=1 // pred_fallthru
      _
    // Predicated region
    $region30: #{radio_encoder_forward.1} parent=1 // pred_check
      _
    $region31: #{radio_encoder_forward.1} parent=1 // pred_check_branch
      %33 = sbr.rel (0) target = $region33
    $region32: #{radio_encoder_forward.1} parent=1 // pred_region
      _
    $region33: #{radio_encoder_forward.1} parent=1 // pred_fallthru
      _
    // Predicated region
    $region34: #{radio_encoder_forward.1} parent=1 // pred_check
      _
    $region35: #{radio_encoder_forward.1} parent=1 // pred_check_branch
      %35 = sbr.rel (0) target = $region37
    $region36: #{radio_encoder_forward.1} parent=1 // pred_region
      _
    $region37: #{radio_encoder_forward.1} parent=1 // pred_fallthru
      _
    // Predicated region
    $region38: #{radio_encoder_forward.1} parent=1 // pred_check
      _
    $region39: #{radio_encoder_forward.1} parent=1 // pred_check_branch
      %37 = sbr.rel (0) target = $region41
    $region40: #{radio_encoder_forward.1} parent=1 // pred_region
      _
    $region41: #{radio_encoder_forward.1} parent=1 // pred_fallthru
      _
    // Predicated region
    $region42: #{radio_encoder_forward.1} parent=1 // pred_check
      _
    $region43: #{radio_encoder_forward.1} parent=1 // pred_check_branch
      %39 = sbr.rel (0) target = $region45
    $region44: #{radio_encoder_forward.1} parent=1 // pred_region
      _
    $region45: #{radio_encoder_forward.1} parent=1 // pred_fallthru
      _
    // Predicated region
    $region46: #{radio_encoder_forward.1} parent=1 // pred_check
      _
    $region47: #{radio_encoder_forward.1} parent=1 // pred_check_branch
      %41 = sbr.rel (0) target = $region49
    $region48: #{radio_encoder_forward.1} parent=1 // pred_region
      _
    $region49: #{radio_encoder_forward.1} parent=1 // pred_fallthru
      _
    %v43 = vld [vmem:[%s0] sm:$0xff]
    %v44 = vld [vmem:[%s0 + $0x8] sm:$0xff]
    %v45 = vld [vmem:[%s0 + $0x10] sm:$0xff]
    %v46 = vld [vmem:[%s0 + $0x18] sm:$0xff]
    %v47 = vld [vmem:[%s0 + $0x20] sm:$0xff]
    %v48 = vld [vmem:[%s0 + $0x28] sm:$0xff]
    %v49 = vld [vmem:[%s0 + $0x30] sm:$0xff]
    %v50 = vld [vmem:[%s0 + $0x38] sm:$0xff]
    %v51 = vld [vmem:[%s0 + $0x40] sm:$0xff]
    %v52 = vld [vmem:[%s0 + $0x48] sm:$0xff]
    %v53 = vld [vmem:[%s0 + $0x50] sm:$0xff]
    %v54 = vld [vmem:[%s0 + $0x58] sm:$0xff]
    %v55 = vld [vmem:[%s1] sm:$0xff]
    %v56 = vld [vmem:[%s1 + $0x8] sm:$0xff]
    %v57 = vld [vmem:[%s1 + $0x10] sm:$0xff]
    %v58 = vadd.f32 %v43, %v55
    %v59 = vadd.f32 %v44, %v56
    %v60 = vadd.f32 %v45, %v57
    %v61 = vadd.f32 %v46, %v55
    %v62 = vadd.f32 %v47, %v56
    %v63 = vadd.f32 %v48, %v57
    %v64 = vadd.f32 %v49, %v55
    %v65 = vadd.f32 %v50, %v56
    %v66 = vadd.f32 %v51, %v57
    %v67 = vadd.f32 %v52, %v55
    %v68 = vadd.f32 %v53, %v56
    %v69 = vadd.f32 %v54, %v57
    %v70 = vlaneseq
    %v71 = vand.u32 %v70, 127
    %vm72 = vcmp.lt.s32.totalorder %v71, 17
    %v73 = vsel %vm72, 0.0, -1e+30
    %v74 = vld [vmem:[%s2] sm:$0x1]
    %v75 = vld [vmem:[%s3] sm:$0x1]
    %vm76 = vcmask 523264
    %v77 = vsel %vm76, %v58, 0.0
    %78 = vadd.xlane.f32.xlu0 %v77
    %v79 = vpop.xlane.xlu0 %78
    %v80 = vsel %vm76, %v59, 0.0
    %81 = vadd.xlane.f32.xlu0 %v80
    %v82 = vpop.xlane.xlu0 %81
    %v83 = vsel %vm76, %v60, 0.0
    %84 = vadd.xlane.f32.xlu0 %v83
    %v85 = vpop.xlane.xlu0 %84
    %v86 = vsel %vm76, %v61, 0.0
    %87 = vadd.xlane.f32.xlu0 %v86
    %v88 = vpop.xlane.xlu0 %87
    %v89 = vsel %vm76, %v62, 0.0
    %90 = vadd.xlane.f32.xlu0 %v89
    %v91 = vpop.xlane.xlu0 %90
    %v92 = vsel %vm76, %v63, 0.0
    %93 = vadd.xlane.f32.xlu0 %v92
    %v94 = vpop.xlane.xlu0 %93
    %v95 = vsel %vm76, %v64, 0.0
    %96 = vadd.xlane.f32.xlu0 %v95
    %v97 = vpop.xlane.xlu0 %96
    %v98 = vsel %vm76, %v65, 0.0
    %99 = vadd.xlane.f32.xlu0 %v98
    %v100 = vpop.xlane.xlu0 %99
    %v101 = vsel %vm76, %v66, 0.0
    %102 = vadd.xlane.f32.xlu0 %v101
    %v103 = vpop.xlane.xlu0 %102
    %v104 = vsel %vm76, %v67, 0.0
    %105 = vadd.xlane.f32.xlu0 %v104
    %v106 = vpop.xlane.xlu0 %105
    %v107 = vsel %vm76, %v68, 0.0
    %108 = vadd.xlane.f32.xlu0 %v107
    %v109 = vpop.xlane.xlu0 %108
    %v110 = vsel %vm76, %v69, 0.0
    %111 = vadd.xlane.f32.xlu0 %v110
    %v112 = vpop.xlane.xlu0 %111
    %v113 = vrcp.pop 64.0
    %v114 = vmul.f32 %v79, %v113
    %v115 = vmul.f32 %v82, %v113
    %v116 = vmul.f32 %v85, %v113
    %v117 = vmul.f32 %v88, %v113
    %v118 = vmul.f32 %v91, %v113
    %v119 = vmul.f32 %v94, %v113
    %v120 = vmul.f32 %v97, %v113
    %v121 = vmul.f32 %v100, %v113
    %v122 = vmul.f32 %v103, %v113
    %v123 = vmul.f32 %v106, %v113
    %v124 = vmul.f32 %v109, %v113
    %v125 = vmul.f32 %v112, %v113
    %v126 = vsub.f32 %v58, %v114
    %v127 = vsub.f32 %v59, %v115
    %v128 = vsub.f32 %v60, %v116
    %v129 = vsub.f32 %v61, %v117
    %v130 = vsub.f32 %v62, %v118
    %v131 = vsub.f32 %v63, %v119
    %v132 = vsub.f32 %v64, %v120
    %v133 = vsub.f32 %v65, %v121
    %v134 = vsub.f32 %v66, %v122
    %v135 = vsub.f32 %v67, %v123
    %v136 = vsub.f32 %v68, %v124
    %v137 = vsub.f32 %v69, %v125
    %v138 = vmul.f32 %v126, %v126
    %v139 = vmul.f32 %v127, %v127
    %v140 = vmul.f32 %v128, %v128
    %v141 = vmul.f32 %v129, %v129
    %v142 = vmul.f32 %v130, %v130
    %v143 = vmul.f32 %v131, %v131
    %v144 = vmul.f32 %v132, %v132
    %v145 = vmul.f32 %v133, %v133
    %v146 = vmul.f32 %v134, %v134
    %v147 = vmul.f32 %v135, %v135
    %v148 = vmul.f32 %v136, %v136
    %v149 = vmul.f32 %v137, %v137
    %v150 = vsel %vm76, %v138, 0.0
    %151 = vadd.xlane.f32.xlu0 %v150
    %v152 = vpop.xlane.xlu0 %151
    %v153 = vsel %vm76, %v139, 0.0
    %154 = vadd.xlane.f32.xlu0 %v153
    %v155 = vpop.xlane.xlu0 %154
    %v156 = vsel %vm76, %v140, 0.0
    %157 = vadd.xlane.f32.xlu0 %v156
    %v158 = vpop.xlane.xlu0 %157
    %v159 = vsel %vm76, %v141, 0.0
    %160 = vadd.xlane.f32.xlu0 %v159
    %v161 = vpop.xlane.xlu0 %160
    %v162 = vsel %vm76, %v142, 0.0
    %163 = vadd.xlane.f32.xlu0 %v162
    %v164 = vpop.xlane.xlu0 %163
    %v165 = vsel %vm76, %v143, 0.0
    %166 = vadd.xlane.f32.xlu0 %v165
    %v167 = vpop.xlane.xlu0 %166
    %v168 = vsel %vm76, %v144, 0.0
    %169 = vadd.xlane.f32.xlu0 %v168
    %v170 = vpop.xlane.xlu0 %169
    %v171 = vsel %vm76, %v145, 0.0
    %172 = vadd.xlane.f32.xlu0 %v171
    %v173 = vpop.xlane.xlu0 %172
    %v174 = vsel %vm76, %v146, 0.0
    %175 = vadd.xlane.f32.xlu0 %v174
    %v176 = vpop.xlane.xlu0 %175
    %v177 = vsel %vm76, %v147, 0.0
    %178 = vadd.xlane.f32.xlu0 %v177
    %v179 = vpop.xlane.xlu0 %178
    %v180 = vsel %vm76, %v148, 0.0
    %181 = vadd.xlane.f32.xlu0 %v180
    %v182 = vpop.xlane.xlu0 %181
    %v183 = vsel %vm76, %v149, 0.0
    %184 = vadd.xlane.f32.xlu0 %v183
    %v185 = vpop.xlane.xlu0 %184
    %v186 = vmul.f32 %v152, %v113
    %v187 = vmul.f32 %v155, %v113
    %v188 = vmul.f32 %v158, %v113
    %v189 = vmul.f32 %v161, %v113
    %v190 = vmul.f32 %v164, %v113
    %v191 = vmul.f32 %v167, %v113
    %v192 = vmul.f32 %v170, %v113
    %v193 = vmul.f32 %v173, %v113
    %v194 = vmul.f32 %v176, %v113
    %v195 = vmul.f32 %v179, %v113
    %v196 = vmul.f32 %v182, %v113
    %v197 = vmul.f32 %v185, %v113
    %v198 = vadd.f32 %v186, 1e-06
    %v199 = vadd.f32 %v187, 1e-06
    %v200 = vadd.f32 %v188, 1e-06
    %v201 = vadd.f32 %v189, 1e-06
    %v202 = vadd.f32 %v190, 1e-06
    %v203 = vadd.f32 %v191, 1e-06
    %v204 = vadd.f32 %v192, 1e-06
    %v205 = vadd.f32 %v193, 1e-06
    %v206 = vadd.f32 %v194, 1e-06
    %v207 = vadd.f32 %v195, 1e-06
    %v208 = vadd.f32 %v196, 1e-06
    %v209 = vadd.f32 %v197, 1e-06
    %v210 = vrsqrt.pop %v198
    %v211 = vrsqrt.pop %v199
    %v212 = vrsqrt.pop %v200
    %v213 = vrsqrt.pop %v201
    %v214 = vrsqrt.pop %v202
    %v215 = vrsqrt.pop %v203
    %v216 = vrsqrt.pop %v204
    %v217 = vrsqrt.pop %v205
    %v218 = vrsqrt.pop %v206
    %v219 = vrsqrt.pop %v207
    %v220 = vrsqrt.pop %v208
    %v221 = vrsqrt.pop %v209
    %v222 = vmul.f32 %v126, %v210
    %v223 = vmul.f32 %v127, %v211
    %v224 = vmul.f32 %v128, %v212
    %v225 = vmul.f32 %v129, %v213
    %v226 = vmul.f32 %v130, %v214
    %v227 = vmul.f32 %v131, %v215
    %v228 = vmul.f32 %v132, %v216
    %v229 = vmul.f32 %v133, %v217
    %v230 = vmul.f32 %v134, %v218
    %v231 = vmul.f32 %v135, %v219
    %v232 = vmul.f32 %v136, %v220
    %v233 = vmul.f32 %v137, %v221
    %v235 = vlaneseq
    %v236 = vshrl.u32 %v235, 7
    %v237 = vsub.s32 0, %v236
    %v238 = vrot.slane %v74, %v237
    %v240 = vmul.f32 %v222, %v238
    %v241 = vmul.f32 %v223, %v238
    %v242 = vmul.f32 %v224, %v238
    %v243 = vmul.f32 %v225, %v238
    %v244 = vmul.f32 %v226, %v238
    %v245 = vmul.f32 %v227, %v238
    %v246 = vmul.f32 %v228, %v238
    %v247 = vmul.f32 %v229, %v238
    %v248 = vmul.f32 %v230, %v238
    %v249 = vmul.f32 %v231, %v238
    %v250 = vmul.f32 %v232, %v238
    %v251 = vmul.f32 %v233, %v238
    %v253 = vlaneseq
    %v254 = vshrl.u32 %v253, 7
    %v255 = vsub.s32 0, %v254
    %v256 = vrot.slane %v75, %v255
    %v258 = vadd.f32 %v240, %v256
    %v259 = vadd.f32 %v241, %v256
    %v260 = vadd.f32 %v242, %v256
    %v261 = vadd.f32 %v243, %v256
    %v262 = vadd.f32 %v244, %v256
    %v263 = vadd.f32 %v245, %v256
    %v264 = vadd.f32 %v246, %v256
    %v265 = vadd.f32 %v247, %v256
    %v266 = vadd.f32 %v248, %v256
    %v267 = vadd.f32 %v249, %v256
    %v268 = vadd.f32 %v250, %v256
    %v269 = vadd.f32 %v251, %v256
    %v270 = vpack.c.bf16 %v259, %v258
    %v271 = vpack.c.bf16 %v261, %v260
    %v272 = vpack.c.bf16 %v263, %v262
    %v273 = vpack.c.bf16 %v265, %v264
    %v274 = vpack.c.bf16 %v267, %v266
    %v275 = vpack.c.bf16 %v269, %v268
    %v276 = vld [vmem:[%s4] sm:$0xf]
    %v277 = vld [vmem:[%s4 + $0x4] sm:$0xf]
    %v278 = vld [vmem:[%s4 + $0x8] sm:$0xf]
    %v279 = vld [vmem:[%s4 + $0xc] sm:$0xf]
    %v280 = vld [vmem:[%s4 + $0x10] sm:$0xf]
    %v281 = vld [vmem:[%s4 + $0x14] sm:$0xf]
    %v282 = vld [vmem:[%s4 + $0x18] sm:$0xf]
    %v283 = vld [vmem:[%s4 + $0x1c] sm:$0xf]
    %v284 = vld [vmem:[%s5] sm:$0x1]
    %v286 = vlaneseq
    %v287 = vshrl.u32 %v286, 7
    %v288 = vsub.s32 0, %v287
    %v289 = vrot.slane %v284, %v288
    %v299 = vunpack.c.l.b16 %v276
    %v300 = vunpack.c.l.b16 %v277
    %v301 = vunpack.c.l.b16 %v278
    %v302 = vunpack.c.l.b16 %v279
    %v303 = vunpack.c.l.b16 %v280
    %v304 = vunpack.c.l.b16 %v281
    %v305 = vunpack.c.l.b16 %v282
    %v306 = vunpack.c.l.b16 %v283
    %v307 = vpack.c.b16 %v300, %v299
    %v308 = vpack.c.b16 %v302, %v301
    %v309 = vpack.c.b16 %v304, %v303
    %v310 = vpack.c.b16 %v306, %v305
    %v316 = vsel %vm76, %v270, 0
    %v319 = vsel %vm76, %v271, 0
    %v322 = vsel %vm76, %v272, 0
    %v325 = vsel %vm76, %v273, 0
    %v328 = vsel %vm76, %v274, 0
    %v331 = vsel %vm76, %v275, 0
    %333 = vmatprep.subr.bf16.mxu0 0
    %334 = vmatpush1.bf16.msra.mxu0 %v307
    %335 = vmatprep.subr.bf16.mxu0 0
    %336 = vmatpush1.bf16.msra.mxu0 %v308
    %337 = vmatprep.subr.bf16.mxu0 0
    %338 = vmatpush1.bf16.msra.mxu0 %v309
    %339 = vmatprep.subr.bf16.mxu0 0
    %340 = vmatpush1.bf16.msra.mxu0 %v310
    %341 = vmatprep.subr.bf16.mxu0 0
    %342 = vmatpush1.bf16.msra.mxu0 0
    %343 = vmatprep.subr.bf16.mxu0 0
    %344 = vmatpush1.bf16.msra.mxu0 0
    %345 = vmatprep.subr.bf16.mxu0 0
    %346 = vmatpush1.bf16.msra.mxu0 0
    %347 = vmatprep.subr.bf16.mxu0 0
    %348 = vmatpush1.bf16.msra.mxu0 0
    %349 = vmatprep.subr.bf16.mxu0 0
    %350 = vmatpush1.bf16.msra.mxu0 0
    %351 = vmatprep.subr.bf16.mxu0 0
    %352 = vmatpush1.bf16.msra.mxu0 0
    %353 = vmatprep.subr.bf16.mxu0 0
    %354 = vmatpush1.bf16.msra.mxu0 0
    %355 = vmatprep.subr.bf16.mxu0 0
    %356 = vmatpush1.bf16.msra.mxu0 0
    %357 = vmatprep.subr.bf16.mxu0 0
    %358 = vmatpush1.bf16.msra.mxu0 0
    %359 = vmatprep.subr.bf16.mxu0 0
    %360 = vmatpush1.bf16.msra.mxu0 0
    %361 = vmatprep.subr.bf16.mxu0 0
    %362 = vmatpush1.bf16.msra.mxu0 0
    %363 = vmatprep.subr.bf16.mxu0 0
    %364 = vmatpush1.bf16.msra.mxu0 0
    %365 = vmatprep.mubr.bf16.mxu0 0
    %366 = vmatmul.mubr.bf16.gmra.mrb[0].mxu0 %v316
    %v367 = vpop.f32.mrb[0].mxu0
    %v368 = vadd.f32 %v289, %v367
    %v369 = vpop.f32.mrb[0].mxu0
    %v370 = vpop.f32.mrb[0].mxu0
    %v371 = vadd.f32 %v289, %v370
    %v372 = vpop.f32.mrb[0].mxu0
    %373 = vmatprep.mubr.bf16.mxu0 0
    %374 = vmatmul.mubr.bf16.gmra.mrb[0].mxu0 %v319
    %v375 = vpop.f32.mrb[0].mxu0
    %v376 = vadd.f32 %v289, %v375
    %v377 = vpop.f32.mrb[0].mxu0
    %v378 = vpop.f32.mrb[0].mxu0
    %v379 = vadd.f32 %v289, %v378
    %v380 = vpop.f32.mrb[0].mxu0
    %381 = vmatprep.mubr.bf16.mxu0 0
    %382 = vmatmul.mubr.bf16.gmra.mrb[0].mxu0 %v322
    %v383 = vpop.f32.mrb[0].mxu0
    %v384 = vadd.f32 %v289, %v383
    %v385 = vpop.f32.mrb[0].mxu0
    %v386 = vpop.f32.mrb[0].mxu0
    %v387 = vadd.f32 %v289, %v386
    %v388 = vpop.f32.mrb[0].mxu0
    %389 = vmatprep.mubr.bf16.mxu0 0
    %390 = vmatmul.mubr.bf16.gmra.mrb[0].mxu0 %v325
    %v391 = vpop.f32.mrb[0].mxu0
    %v392 = vadd.f32 %v289, %v391
    %v393 = vpop.f32.mrb[0].mxu0
    %v394 = vpop.f32.mrb[0].mxu0
    %v395 = vadd.f32 %v289, %v394
    %v396 = vpop.f32.mrb[0].mxu0
    %397 = vmatprep.mubr.bf16.mxu0 0
    %398 = vmatmul.mubr.bf16.gmra.mrb[0].mxu0 %v328
    %v399 = vpop.f32.mrb[0].mxu0
    %v400 = vadd.f32 %v289, %v399
    %v401 = vpop.f32.mrb[0].mxu0
    %v402 = vpop.f32.mrb[0].mxu0
    %v403 = vadd.f32 %v289, %v402
    %v404 = vpop.f32.mrb[0].mxu0
    %405 = vmatprep.mubr.bf16.mxu0 0
    %406 = vmatmul.mubr.bf16.gmra.mrb[0].mxu0 %v331
    %v407 = vpop.f32.mrb[0].mxu0
    %v408 = vadd.f32 %v289, %v407
    %v409 = vpop.f32.mrb[0].mxu0
    %v410 = vpop.f32.mrb[0].mxu0
    %v411 = vadd.f32 %v289, %v410
    %v412 = vpop.f32.mrb[0].mxu0
    %413 = vdwg.mxu0
    %s414 = scalar_lea.vmem %s4, 32
    %v415 = vld [vmem:[%s414] sm:$0xf]
    %v416 = vld [vmem:[%s414 + $0x4] sm:$0xf]
    %v417 = vld [vmem:[%s414 + $0x8] sm:$0xf]
    %v418 = vld [vmem:[%s414 + $0xc] sm:$0xf]
    %v419 = vld [vmem:[%s414 + $0x10] sm:$0xf]
    %v420 = vld [vmem:[%s414 + $0x14] sm:$0xf]
    %v421 = vld [vmem:[%s414 + $0x18] sm:$0xf]
    %v422 = vld [vmem:[%s414 + $0x1c] sm:$0xf]
    %s423 = scalar_lea.vmem %s5, 1
    %v424 = vld [vmem:[%s423] sm:$0x1]
    %v426 = vlaneseq
    %v427 = vshrl.u32 %v426, 7
    %v428 = vsub.s32 0, %v427
    %v429 = vrot.slane %v424, %v428
    %v439 = vunpack.c.l.b16 %v415
    %v440 = vunpack.c.l.b16 %v416
    %v441 = vunpack.c.l.b16 %v417
    %v442 = vunpack.c.l.b16 %v418
    %v443 = vunpack.c.l.b16 %v419
    %v444 = vunpack.c.l.b16 %v420
    %v445 = vunpack.c.l.b16 %v421
    %v446 = vunpack.c.l.b16 %v422
    %v447 = vpack.c.b16 %v440, %v439
    %v448 = vpack.c.b16 %v442, %v441
    %v449 = vpack.c.b16 %v444, %v443
    %v450 = vpack.c.b16 %v446, %v445
    %455 = vmatprep.subr.bf16.mxu0 0
    %456 = vmatpush1.bf16.msra.mxu0 %v447
    %457 = vmatprep.subr.bf16.mxu0 0
    %458 = vmatpush1.bf16.msra.mxu0 %v448
    %459 = vmatprep.subr.bf16.mxu0 0
    %460 = vmatpush1.bf16.msra.mxu0 %v449
    %461 = vmatprep.subr.bf16.mxu0 0
    %462 = vmatpush1.bf16.msra.mxu0 %v450
    %463 = vmatprep.subr.bf16.mxu0 0
    %464 = vmatpush1.bf16.msra.mxu0 0
    %465 = vmatprep.subr.bf16.mxu0 0
    %466 = vmatpush1.bf16.msra.mxu0 0
    %467 = vmatprep.subr.bf16.mxu0 0
    %468 = vmatpush1.bf16.msra.mxu0 0
    %469 = vmatprep.subr.bf16.mxu0 0
    %470 = vmatpush1.bf16.msra.mxu0 0
    %471 = vmatprep.subr.bf16.mxu0 0
    %472 = vmatpush1.bf16.msra.mxu0 0
    %473 = vmatprep.subr.bf16.mxu0 0
    %474 = vmatpush1.bf16.msra.mxu0 0
    %475 = vmatprep.subr.bf16.mxu0 0
    %476 = vmatpush1.bf16.msra.mxu0 0
    %477 = vmatprep.subr.bf16.mxu0 0
    %478 = vmatpush1.bf16.msra.mxu0 0
    %479 = vmatprep.subr.bf16.mxu0 0
    %480 = vmatpush1.bf16.msra.mxu0 0
    %481 = vmatprep.subr.bf16.mxu0 0
    %482 = vmatpush1.bf16.msra.mxu0 0
    %483 = vmatprep.subr.bf16.mxu0 0
    %484 = vmatpush1.bf16.msra.mxu0 0
    %485 = vmatprep.subr.bf16.mxu0 0
    %486 = vmatpush1.bf16.msra.mxu0 0
    %487 = vmatprep.mubr.bf16.mxu0 0
    %488 = vmatmul.mubr.bf16.gmra.mrb[0].mxu0 %v316
    %v489 = vpop.f32.mrb[0].mxu0
    %v490 = vadd.f32 %v429, %v489
    %v491 = vpop.f32.mrb[0].mxu0
    %v492 = vpop.f32.mrb[0].mxu0
    %v493 = vadd.f32 %v429, %v492
    %v494 = vpop.f32.mrb[0].mxu0
    %495 = vmatprep.mubr.bf16.mxu0 0
    %496 = vmatmul.mubr.bf16.gmra.mrb[0].mxu0 %v319
    %v497 = vpop.f32.mrb[0].mxu0
    %v498 = vadd.f32 %v429, %v497
    %v499 = vpop.f32.mrb[0].mxu0
    %v500 = vpop.f32.mrb[0].mxu0
    %v501 = vadd.f32 %v429, %v500
    %v502 = vpop.f32.mrb[0].mxu0
    %503 = vmatprep.mubr.bf16.mxu0 0
    %504 = vmatmul.mubr.bf16.gmra.mrb[0].mxu0 %v322
    %v505 = vpop.f32.mrb[0].mxu0
    %v506 = vadd.f32 %v429, %v505
    %v507 = vpop.f32.mrb[0].mxu0
    %v508 = vpop.f32.mrb[0].mxu0
    %v509 = vadd.f32 %v429, %v508
    %v510 = vpop.f32.mrb[0].mxu0
    %511 = vmatprep.mubr.bf16.mxu0 0
    %512 = vmatmul.mubr.bf16.gmra.mrb[0].mxu0 %v325
    %v513 = vpop.f32.mrb[0].mxu0
    %v514 = vadd.f32 %v429, %v513
    %v515 = vpop.f32.mrb[0].mxu0
    %v516 = vpop.f32.mrb[0].mxu0
    %v517 = vadd.f32 %v429, %v516
    %v518 = vpop.f32.mrb[0].mxu0
    %519 = vmatprep.mubr.bf16.mxu0 0
    %520 = vmatmul.mubr.bf16.gmra.mrb[0].mxu0 %v328
    %v521 = vpop.f32.mrb[0].mxu0
    %v522 = vadd.f32 %v429, %v521
    %v523 = vpop.f32.mrb[0].mxu0
    %v524 = vpop.f32.mrb[0].mxu0
    %v525 = vadd.f32 %v429, %v524
    %v526 = vpop.f32.mrb[0].mxu0
    %527 = vmatprep.mubr.bf16.mxu0 0
    %528 = vmatmul.mubr.bf16.gmra.mrb[0].mxu0 %v331
    %v529 = vpop.f32.mrb[0].mxu0
    %v530 = vadd.f32 %v429, %v529
    %v531 = vpop.f32.mrb[0].mxu0
    %v532 = vpop.f32.mrb[0].mxu0
    %v533 = vadd.f32 %v429, %v532
    %v534 = vpop.f32.mrb[0].mxu0
    %535 = vdwg.mxu0
    %s536 = scalar_lea.vmem %s4, 64
    %v537 = vld [vmem:[%s536] sm:$0xf]
    %v538 = vld [vmem:[%s536 + $0x4] sm:$0xf]
    %v539 = vld [vmem:[%s536 + $0x8] sm:$0xf]
    %v540 = vld [vmem:[%s536 + $0xc] sm:$0xf]
    %v541 = vld [vmem:[%s536 + $0x10] sm:$0xf]
    %v542 = vld [vmem:[%s536 + $0x14] sm:$0xf]
    %v543 = vld [vmem:[%s536 + $0x18] sm:$0xf]
    %v544 = vld [vmem:[%s536 + $0x1c] sm:$0xf]
    %s545 = scalar_lea.vmem %s5, 2
    %v546 = vld [vmem:[%s545] sm:$0x1]
    %v548 = vlaneseq
    %v549 = vshrl.u32 %v548, 7
    %v550 = vsub.s32 0, %v549
    %v551 = vrot.slane %v546, %v550
    %v561 = vunpack.c.l.b16 %v537
    %v562 = vunpack.c.l.b16 %v538
    %v563 = vunpack.c.l.b16 %v539
    %v564 = vunpack.c.l.b16 %v540
    %v565 = vunpack.c.l.b16 %v541
    %v566 = vunpack.c.l.b16 %v542
    %v567 = vunpack.c.l.b16 %v543
    %v568 = vunpack.c.l.b16 %v544
    %v569 = vpack.c.b16 %v562, %v561
    %v570 = vpack.c.b16 %v564, %v563
    %v571 = vpack.c.b16 %v566, %v565
    %v572 = vpack.c.b16 %v568, %v567
    %577 = vmatprep.subr.bf16.mxu0 0
    %578 = vmatpush1.bf16.msra.mxu0 %v569
    %579 = vmatprep.subr.bf16.mxu0 0
    %580 = vmatpush1.bf16.msra.mxu0 %v570
    %581 = vmatprep.subr.bf16.mxu0 0
    %582 = vmatpush1.bf16.msra.mxu0 %v571
    %583 = vmatprep.subr.bf16.mxu0 0
    %584 = vmatpush1.bf16.msra.mxu0 %v572
    %585 = vmatprep.subr.bf16.mxu0 0
    %586 = vmatpush1.bf16.msra.mxu0 0
    %587 = vmatprep.subr.bf16.mxu0 0
    %588 = vmatpush1.bf16.msra.mxu0 0
    %589 = vmatprep.subr.bf16.mxu0 0
    %590 = vmatpush1.bf16.msra.mxu0 0
    %591 = vmatprep.subr.bf16.mxu0 0
    %592 = vmatpush1.bf16.msra.mxu0 0
    %593 = vmatprep.subr.bf16.mxu0 0
    %594 = vmatpush1.bf16.msra.mxu0 0
    %595 = vmatprep.subr.bf16.mxu0 0
    %596 = vmatpush1.bf16.msra.mxu0 0
    %597 = vmatprep.subr.bf16.mxu0 0
    %598 = vmatpush1.bf16.msra.mxu0 0
    %599 = vmatprep.subr.bf16.mxu0 0
    %600 = vmatpush1.bf16.msra.mxu0 0
    %601 = vmatprep.subr.bf16.mxu0 0
    %602 = vmatpush1.bf16.msra.mxu0 0
    %603 = vmatprep.subr.bf16.mxu0 0
    %604 = vmatpush1.bf16.msra.mxu0 0
    %605 = vmatprep.subr.bf16.mxu0 0
    %606 = vmatpush1.bf16.msra.mxu0 0
    %607 = vmatprep.subr.bf16.mxu0 0
    %608 = vmatpush1.bf16.msra.mxu0 0
    %609 = vmatprep.mubr.bf16.mxu0 0
    %610 = vmatmul.mubr.bf16.gmra.mrb[0].mxu0 %v316
    %v611 = vpop.f32.mrb[0].mxu0
    %v612 = vadd.f32 %v551, %v611
    %v613 = vpop.f32.mrb[0].mxu0
    %v614 = vpop.f32.mrb[0].mxu0
    %v615 = vadd.f32 %v551, %v614
    %v616 = vpop.f32.mrb[0].mxu0
    %617 = vmatprep.mubr.bf16.mxu0 0
    %618 = vmatmul.mubr.bf16.gmra.mrb[0].mxu0 %v319
    %v619 = vpop.f32.mrb[0].mxu0
    %v620 = vadd.f32 %v551, %v619
    %v621 = vpop.f32.mrb[0].mxu0
    %v622 = vpop.f32.mrb[0].mxu0
    %v623 = vadd.f32 %v551, %v622
    %v624 = vpop.f32.mrb[0].mxu0
    %625 = vmatprep.mubr.bf16.mxu0 0
    %626 = vmatmul.mubr.bf16.gmra.mrb[0].mxu0 %v322
    %v627 = vpop.f32.mrb[0].mxu0
    %v628 = vadd.f32 %v551, %v627
    %v629 = vpop.f32.mrb[0].mxu0
    %v630 = vpop.f32.mrb[0].mxu0
    %v631 = vadd.f32 %v551, %v630
    %v632 = vpop.f32.mrb[0].mxu0
    %633 = vmatprep.mubr.bf16.mxu0 0
    %634 = vmatmul.mubr.bf16.gmra.mrb[0].mxu0 %v325
    %v635 = vpop.f32.mrb[0].mxu0
    %v636 = vadd.f32 %v551, %v635
    %v637 = vpop.f32.mrb[0].mxu0
    %v638 = vpop.f32.mrb[0].mxu0
    %v639 = vadd.f32 %v551, %v638
    %v640 = vpop.f32.mrb[0].mxu0
    %641 = vmatprep.mubr.bf16.mxu0 0
    %642 = vmatmul.mubr.bf16.gmra.mrb[0].mxu0 %v328
    %v643 = vpop.f32.mrb[0].mxu0
    %v644 = vadd.f32 %v551, %v643
    %v645 = vpop.f32.mrb[0].mxu0
    %v646 = vpop.f32.mrb[0].mxu0
    %v647 = vadd.f32 %v551, %v646
    %v648 = vpop.f32.mrb[0].mxu0
    %649 = vmatprep.mubr.bf16.mxu0 0
    %650 = vmatmul.mubr.bf16.gmra.mrb[0].mxu0 %v331
    %v651 = vpop.f32.mrb[0].mxu0
    %v652 = vadd.f32 %v551, %v651
    %v653 = vpop.f32.mrb[0].mxu0
    %v654 = vpop.f32.mrb[0].mxu0
    %v655 = vadd.f32 %v551, %v654
    %v656 = vpop.f32.mrb[0].mxu0
    %657 = vdwg.mxu0
    %v658 = vpack.c.bf16 %v371, %v368
    %v659 = vpack.c.bf16 %v376, %v376
    %v660 = vpack.c.bf16 %v384, %v379
    %v661 = vpack.c.bf16 %v387, %v387
    %v662 = vpack.c.bf16 %v395, %v392
    %v663 = vpack.c.bf16 %v400, %v400
    %v664 = vpack.c.bf16 %v408, %v403
    %v665 = vpack.c.bf16 %v411, %v411
    %v666 = vpack.c.bf16 %v493, %v490
    %v667 = vpack.c.bf16 %v498, %v498
    %v668 = vpack.c.bf16 %v506, %v501
    %v669 = vpack.c.bf16 %v509, %v509
    %v670 = vpack.c.bf16 %v517, %v514
    %v671 = vpack.c.bf16 %v522, %v522
    %v672 = vpack.c.bf16 %v530, %v525
    %v673 = vpack.c.bf16 %v533, %v533
    %v674 = vpack.c.bf16 %v615, %v612
    %v675 = vpack.c.bf16 %v620, %v620
    %v676 = vpack.c.bf16 %v628, %v623
    %v677 = vpack.c.bf16 %v631, %v631
    %v678 = vpack.c.bf16 %v639, %v636
    %v679 = vpack.c.bf16 %v644, %v644
    %v680 = vpack.c.bf16 %v652, %v647
    %v681 = vpack.c.bf16 %v655, %v655
    %vm682 = vcmask 130048
    %v684 = vsel %vm682, %v658, 0
    %v687 = vsel %vm682, %v659, 0
    %v690 = vsel %vm682, %v666, 0
    %v693 = vsel %vm682, %v667, 0
    %695 = vmatprep.subr.bf16.mxu0 0
    %696 = vmatpush1.bf16.xpose.msra.mxu0 %v690
    %697 = vmatprep.subr.bf16.mxu0 0
    %698 = vmatpush1.bf16.xpose.msra.mxu0 %v693
    %699 = vmatprep.subr.bf16.mxu0 0
    %700 = vmatpush1.bf16.xpose.msra.mxu0 0
    %701 = vmatprep.subr.bf16.mxu0 0
    %702 = vmatpush1.bf16.xpose.msra.mxu0 0
    %703 = vmatprep.subr.bf16.mxu0 0
    %704 = vmatpush1.bf16.xpose.msra.mxu0 0
    %705 = vmatprep.subr.bf16.mxu0 0
    %706 = vmatpush1.bf16.xpose.msra.mxu0 0
    %707 = vmatprep.subr.bf16.mxu0 0
    %708 = vmatpush1.bf16.xpose.msra.mxu0 0
    %709 = vmatprep.subr.bf16.mxu0 0
    %710 = vmatpush1.bf16.xpose.msra.mxu0 0
    %711 = vmatprep.subr.bf16.mxu0 0
    %712 = vmatpush1.bf16.xpose.msra.mxu0 0
    %713 = vmatprep.subr.bf16.mxu0 0
    %714 = vmatpush1.bf16.xpose.msra.mxu0 0
    %715 = vmatprep.subr.bf16.mxu0 0
    %716 = vmatpush1.bf16.xpose.msra.mxu0 0
    %717 = vmatprep.subr.bf16.mxu0 0
    %718 = vmatpush1.bf16.xpose.msra.mxu0 0
    %719 = vmatprep.subr.bf16.mxu0 0
    %720 = vmatpush1.bf16.xpose.msra.mxu0 0
    %721 = vmatprep.subr.bf16.mxu0 0
    %722 = vmatpush1.bf16.xpose.msra.mxu0 0
    %723 = vmatprep.subr.bf16.mxu0 0
    %724 = vmatpush1.bf16.xpose.msra.mxu0 0
    %725 = vmatprep.subr.bf16.mxu0 0
    %726 = vmatpush1.bf16.xpose.msra.mxu0 0
    %727 = vmatprep.mubr.bf16.mxu0 0
    %728 = vmatmul.mubr.bf16.gmra.mrb[0].mxu0 %v684
    %v729 = vpop.f32.mrb[0].mxu0
    %v730 = vadd.f32 0.0, %v729
    %v731 = vpop.f32.mrb[0].mxu0
    %v732 = vpop.f32.mrb[0].mxu0
    %v733 = vadd.f32 0.0, %v732
    %v734 = vpop.f32.mrb[0].mxu0
    %735 = vmatprep.mubr.bf16.mxu0 0
    %736 = vmatmul.mubr.bf16.gmra.mrb[0].mxu0 %v687
    %v737 = vpop.f32.mrb[0].mxu0
    %v738 = vadd.f32 0.0, %v737
    %v739 = vpop.f32.mrb[0].mxu0
    %v740 = vpop.f32.mrb[0].mxu0
    %v741 = vpop.f32.mrb[0].mxu0
    %742 = vdwg.mxu0
    %v744 = vsel %vm682, %v660, 0
    %v747 = vsel %vm682, %v661, 0
    %v750 = vsel %vm682, %v668, 0
    %v753 = vsel %vm682, %v669, 0
    %755 = vmatprep.subr.bf16.mxu0 0
    %756 = vmatpush1.bf16.xpose.msra.mxu0 %v750
    %757 = vmatprep.subr.bf16.mxu0 0
    %758 = vmatpush1.bf16.xpose.msra.mxu0 %v753
    %759 = vmatprep.subr.bf16.mxu0 0
    %760 = vmatpush1.bf16.xpose.msra.mxu0 0
    %761 = vmatprep.subr.bf16.mxu0 0
    %762 = vmatpush1.bf16.xpose.msra.mxu0 0
    %763 = vmatprep.subr.bf16.mxu0 0
    %764 = vmatpush1.bf16.xpose.msra.mxu0 0
    %765 = vmatprep.subr.bf16.mxu0 0
    %766 = vmatpush1.bf16.xpose.msra.mxu0 0
    %767 = vmatprep.subr.bf16.mxu0 0
    %768 = vmatpush1.bf16.xpose.msra.mxu0 0
    %769 = vmatprep.subr.bf16.mxu0 0
    %770 = vmatpush1.bf16.xpose.msra.mxu0 0
    %771 = vmatprep.subr.bf16.mxu0 0
    %772 = vmatpush1.bf16.xpose.msra.mxu0 0
    %773 = vmatprep.subr.bf16.mxu0 0
    %774 = vmatpush1.bf16.xpose.msra.mxu0 0
    %775 = vmatprep.subr.bf16.mxu0 0
    %776 = vmatpush1.bf16.xpose.msra.mxu0 0
    %777 = vmatprep.subr.bf16.mxu0 0
    %778 = vmatpush1.bf16.xpose.msra.mxu0 0
    %779 = vmatprep.subr.bf16.mxu0 0
    %780 = vmatpush1.bf16.xpose.msra.mxu0 0
    %781 = vmatprep.subr.bf16.mxu0 0
    %782 = vmatpush1.bf16.xpose.msra.mxu0 0
    %783 = vmatprep.subr.bf16.mxu0 0
    %784 = vmatpush1.bf16.xpose.msra.mxu0 0
    %785 = vmatprep.subr.bf16.mxu0 0
    %786 = vmatpush1.bf16.xpose.msra.mxu0 0
    %787 = vmatprep.mubr.bf16.mxu0 0
    %788 = vmatmul.mubr.bf16.gmra.mrb[0].mxu0 %v744
    %v789 = vpop.f32.mrb[0].mxu0
    %v790 = vadd.f32 0.0, %v789
    %v791 = vpop.f32.mrb[0].mxu0
    %v792 = vpop.f32.mrb[0].mxu0
    %v793 = vadd.f32 0.0, %v792
    %v794 = vpop.f32.mrb[0].mxu0
    %795 = vmatprep.mubr.bf16.mxu0 0
    %796 = vmatmul.mubr.bf16.gmra.mrb[0].mxu0 %v747
    %v797 = vpop.f32.mrb[0].mxu0
    %v798 = vadd.f32 0.0, %v797
    %v799 = vpop.f32.mrb[0].mxu0
    %v800 = vpop.f32.mrb[0].mxu0
    %v801 = vpop.f32.mrb[0].mxu0
    %802 = vdwg.mxu0
    %v804 = vsel %vm682, %v662, 0
    %v807 = vsel %vm682, %v663, 0
    %v810 = vsel %vm682, %v670, 0
    %v813 = vsel %vm682, %v671, 0
    %815 = vmatprep.subr.bf16.mxu0 0
    %816 = vmatpush1.bf16.xpose.msra.mxu0 %v810
    %817 = vmatprep.subr.bf16.mxu0 0
    %818 = vmatpush1.bf16.xpose.msra.mxu0 %v813
    %819 = vmatprep.subr.bf16.mxu0 0
    %820 = vmatpush1.bf16.xpose.msra.mxu0 0
    %821 = vmatprep.subr.bf16.mxu0 0
    %822 = vmatpush1.bf16.xpose.msra.mxu0 0
    %823 = vmatprep.subr.bf16.mxu0 0
    %824 = vmatpush1.bf16.xpose.msra.mxu0 0
    %825 = vmatprep.subr.bf16.mxu0 0
    %826 = vmatpush1.bf16.xpose.msra.mxu0 0
    %827 = vmatprep.subr.bf16.mxu0 0
    %828 = vmatpush1.bf16.xpose.msra.mxu0 0
    %829 = vmatprep.subr.bf16.mxu0 0
    %830 = vmatpush1.bf16.xpose.msra.mxu0 0
    %831 = vmatprep.subr.bf16.mxu0 0
    %832 = vmatpush1.bf16.xpose.msra.mxu0 0
    %833 = vmatprep.subr.bf16.mxu0 0
    %834 = vmatpush1.bf16.xpose.msra.mxu0 0
    %835 = vmatprep.subr.bf16.mxu0 0
    %836 = vmatpush1.bf16.xpose.msra.mxu0 0
    %837 = vmatprep.subr.bf16.mxu0 0
    %838 = vmatpush1.bf16.xpose.msra.mxu0 0
    %839 = vmatprep.subr.bf16.mxu0 0
    %840 = vmatpush1.bf16.xpose.msra.mxu0 0
    %841 = vmatprep.subr.bf16.mxu0 0
    %842 = vmatpush1.bf16.xpose.msra.mxu0 0
    %843 = vmatprep.subr.bf16.mxu0 0
    %844 = vmatpush1.bf16.xpose.msra.mxu0 0
    %845 = vmatprep.subr.bf16.mxu0 0
    %846 = vmatpush1.bf16.xpose.msra.mxu0 0
    %847 = vmatprep.mubr.bf16.mxu0 0
    %848 = vmatmul.mubr.bf16.gmra.mrb[0].mxu0 %v804
    %v849 = vpop.f32.mrb[0].mxu0
    %v850 = vadd.f32 0.0, %v849
    %v851 = vpop.f32.mrb[0].mxu0
    %v852 = vpop.f32.mrb[0].mxu0
    %v853 = vadd.f32 0.0, %v852
    %v854 = vpop.f32.mrb[0].mxu0
    %855 = vmatprep.mubr.bf16.mxu0 0
    %856 = vmatmul.mubr.bf16.gmra.mrb[0].mxu0 %v807
    %v857 = vpop.f32.mrb[0].mxu0
    %v858 = vadd.f32 0.0, %v857
    %v859 = vpop.f32.mrb[0].mxu0
    %v860 = vpop.f32.mrb[0].mxu0
    %v861 = vpop.f32.mrb[0].mxu0
    %862 = vdwg.mxu0
    %v864 = vsel %vm682, %v664, 0
    %v867 = vsel %vm682, %v665, 0
    %v870 = vsel %vm682, %v672, 0
    %v873 = vsel %vm682, %v673, 0
    %875 = vmatprep.subr.bf16.mxu0 0
    %876 = vmatpush1.bf16.xpose.msra.mxu0 %v870
    %877 = vmatprep.subr.bf16.mxu0 0
    %878 = vmatpush1.bf16.xpose.msra.mxu0 %v873
    %879 = vmatprep.subr.bf16.mxu0 0
    %880 = vmatpush1.bf16.xpose.msra.mxu0 0
    %881 = vmatprep.subr.bf16.mxu0 0
    %882 = vmatpush1.bf16.xpose.msra.mxu0 0
    %883 = vmatprep.subr.bf16.mxu0 0
    %884 = vmatpush1.bf16.xpose.msra.mxu0 0
    %885 = vmatprep.subr.bf16.mxu0 0
    %886 = vmatpush1.bf16.xpose.msra.mxu0 0
    %887 = vmatprep.subr.bf16.mxu0 0
    %888 = vmatpush1.bf16.xpose.msra.mxu0 0
    %889 = vmatprep.subr.bf16.mxu0 0
    %890 = vmatpush1.bf16.xpose.msra.mxu0 0
    %891 = vmatprep.subr.bf16.mxu0 0
    %892 = vmatpush1.bf16.xpose.msra.mxu0 0
    %893 = vmatprep.subr.bf16.mxu0 0
    %894 = vmatpush1.bf16.xpose.msra.mxu0 0
    %895 = vmatprep.subr.bf16.mxu0 0
    %896 = vmatpush1.bf16.xpose.msra.mxu0 0
    %897 = vmatprep.subr.bf16.mxu0 0
    %898 = vmatpush1.bf16.xpose.msra.mxu0 0
    %899 = vmatprep.subr.bf16.mxu0 0
    %900 = vmatpush1.bf16.xpose.msra.mxu0 0
    %901 = vmatprep.subr.bf16.mxu0 0
    %902 = vmatpush1.bf16.xpose.msra.mxu0 0
    %903 = vmatprep.subr.bf16.mxu0 0
    %904 = vmatpush1.bf16.xpose.msra.mxu0 0
    %905 = vmatprep.subr.bf16.mxu0 0
    %906 = vmatpush1.bf16.xpose.msra.mxu0 0
    %907 = vmatprep.mubr.bf16.mxu0 0
    %908 = vmatmul.mubr.bf16.gmra.mrb[0].mxu0 %v864
    %v909 = vpop.f32.mrb[0].mxu0
    %v910 = vadd.f32 0.0, %v909
    %v911 = vpop.f32.mrb[0].mxu0
    %v912 = vpop.f32.mrb[0].mxu0
    %v913 = vadd.f32 0.0, %v912
    %v914 = vpop.f32.mrb[0].mxu0
    %915 = vmatprep.mubr.bf16.mxu0 0
    %916 = vmatmul.mubr.bf16.gmra.mrb[0].mxu0 %v867
    %v917 = vpop.f32.mrb[0].mxu0
    %v918 = vadd.f32 0.0, %v917
    %v919 = vpop.f32.mrb[0].mxu0
    %v920 = vpop.f32.mrb[0].mxu0
    %v921 = vpop.f32.mrb[0].mxu0
    %922 = vdwg.mxu0
    %v923 = vmul.f32 %v730, 0.25
    %v924 = vmul.f32 %v733, 0.25
    %v925 = vmul.f32 %v738, 0.25
    %v926 = vmul.f32 %v790, 0.25
    %v927 = vmul.f32 %v793, 0.25
    %v928 = vmul.f32 %v798, 0.25
    %v929 = vmul.f32 %v850, 0.25
    %v930 = vmul.f32 %v853, 0.25
    %v931 = vmul.f32 %v858, 0.25
    %v932 = vmul.f32 %v910, 0.25
    %v933 = vmul.f32 %v913, 0.25
    %v934 = vmul.f32 %v918, 0.25
    %v935 = vadd.f32 %v923, %v73
    %v936 = vadd.f32 %v924, %v73
    %v937 = vadd.f32 %v925, %v73
    %v938 = vadd.f32 %v926, %v73
    %v939 = vadd.f32 %v927, %v73
    %v940 = vadd.f32 %v928, %v73
    %v941 = vadd.f32 %v929, %v73
    %v942 = vadd.f32 %v930, %v73
    %v943 = vadd.f32 %v931, %v73
    %v944 = vadd.f32 %v932, %v73
    %v945 = vadd.f32 %v933, %v73
    %v946 = vadd.f32 %v934, %v73
    %vm947 = vcmask 195584
    %v948 = vsel %vm947, %v935, -inf
    %949 = vmax.xlane.f32.xlu0 %v948
    %v950 = vpop.xlane.xlu0 %949
    %v951 = vsel %vm947, %v936, -inf
    %952 = vmax.xlane.f32.xlu0 %v951
    %v953 = vpop.xlane.xlu0 %952
    %v954 = vsel %vm947, %v937, -inf
    %955 = vmax.xlane.f32.xlu0 %v954
    %v956 = vpop.xlane.xlu0 %955
    %v957 = vsel %vm947, %v938, -inf
    %958 = vmax.xlane.f32.xlu0 %v957
    %v959 = vpop.xlane.xlu0 %958
    %v960 = vsel %vm947, %v939, -inf
    %961 = vmax.xlane.f32.xlu0 %v960
    %v962 = vpop.xlane.xlu0 %961
    %v963 = vsel %vm947, %v940, -inf
    %964 = vmax.xlane.f32.xlu0 %v963
    %v965 = vpop.xlane.xlu0 %964
    %v966 = vsel %vm947, %v941, -inf
    %967 = vmax.xlane.f32.xlu0 %v966
    %v968 = vpop.xlane.xlu0 %967
    %v969 = vsel %vm947, %v942, -inf
    %970 = vmax.xlane.f32.xlu0 %v969
    %v971 = vpop.xlane.xlu0 %970
    %v972 = vsel %vm947, %v943, -inf
    %973 = vmax.xlane.f32.xlu0 %v972
    %v974 = vpop.xlane.xlu0 %973
    %v975 = vsel %vm947, %v944, -inf
    %976 = vmax.xlane.f32.xlu0 %v975
    %v977 = vpop.xlane.xlu0 %976
    %v978 = vsel %vm947, %v945, -inf
    %979 = vmax.xlane.f32.xlu0 %v978
    %v980 = vpop.xlane.xlu0 %979
    %v981 = vsel %vm947, %v946, -inf
    %982 = vmax.xlane.f32.xlu0 %v981
    %v983 = vpop.xlane.xlu0 %982
    %v984 = vsub.f32 %v935, %v950
    %v985 = vsub.f32 %v936, %v953
    %v986 = vsub.f32 %v937, %v956
    %v987 = vsub.f32 %v938, %v959
    %v988 = vsub.f32 %v939, %v962
    %v989 = vsub.f32 %v940, %v965
    %v990 = vsub.f32 %v941, %v968
    %v991 = vsub.f32 %v942, %v971
    %v992 = vsub.f32 %v943, %v974
    %v993 = vsub.f32 %v944, %v977
    %v994 = vsub.f32 %v945, %v980
    %v995 = vsub.f32 %v946, %v983
    %v996 = vmul.f32 %v984, 1.442695
    %v997 = vpow.pop %v996
    %v998 = vmul.f32 %v985, 1.442695
    %v999 = vpow.pop %v998
    %v1000 = vmul.f32 %v986, 1.442695
    %v1001 = vpow.pop %v1000
    %v1002 = vmul.f32 %v987, 1.442695
    %v1003 = vpow.pop %v1002
    %v1004 = vmul.f32 %v988, 1.442695
    %v1005 = vpow.pop %v1004
    %v1006 = vmul.f32 %v989, 1.442695
    %v1007 = vpow.pop %v1006
    %v1008 = vmul.f32 %v990, 1.442695
    %v1009 = vpow.pop %v1008
    %v1010 = vmul.f32 %v991, 1.442695
    %v1011 = vpow.pop %v1010
    %v1012 = vmul.f32 %v992, 1.442695
    %v1013 = vpow.pop %v1012
    %v1014 = vmul.f32 %v993, 1.442695
    %v1015 = vpow.pop %v1014
    %v1016 = vmul.f32 %v994, 1.442695
    %v1017 = vpow.pop %v1016
    %v1018 = vmul.f32 %v995, 1.442695
    %v1019 = vpow.pop %v1018
    %v1020 = vsel %vm947, %v997, 0.0
    %1021 = vadd.xlane.f32.xlu0 %v1020
    %v1022 = vpop.xlane.xlu0 %1021
    %v1023 = vsel %vm947, %v999, 0.0
    %1024 = vadd.xlane.f32.xlu0 %v1023
    %v1025 = vpop.xlane.xlu0 %1024
    %v1026 = vsel %vm947, %v1001, 0.0
    %1027 = vadd.xlane.f32.xlu0 %v1026
    %v1028 = vpop.xlane.xlu0 %1027
    %v1029 = vsel %vm947, %v1003, 0.0
    %1030 = vadd.xlane.f32.xlu0 %v1029
    %v1031 = vpop.xlane.xlu0 %1030
    %v1032 = vsel %vm947, %v1005, 0.0
    %1033 = vadd.xlane.f32.xlu0 %v1032
    %v1034 = vpop.xlane.xlu0 %1033
    %v1035 = vsel %vm947, %v1007, 0.0
    %1036 = vadd.xlane.f32.xlu0 %v1035
    %v1037 = vpop.xlane.xlu0 %1036
    %v1038 = vsel %vm947, %v1009, 0.0
    %1039 = vadd.xlane.f32.xlu0 %v1038
    %v1040 = vpop.xlane.xlu0 %1039
    %v1041 = vsel %vm947, %v1011, 0.0
    %1042 = vadd.xlane.f32.xlu0 %v1041
    %v1043 = vpop.xlane.xlu0 %1042
    %v1044 = vsel %vm947, %v1013, 0.0
    %1045 = vadd.xlane.f32.xlu0 %v1044
    %v1046 = vpop.xlane.xlu0 %1045
    %v1047 = vsel %vm947, %v1015, 0.0
    %1048 = vadd.xlane.f32.xlu0 %v1047
    %v1049 = vpop.xlane.xlu0 %1048
    %v1050 = vsel %vm947, %v1017, 0.0
    %1051 = vadd.xlane.f32.xlu0 %v1050
    %v1052 = vpop.xlane.xlu0 %1051
    %v1053 = vsel %vm947, %v1019, 0.0
    %1054 = vadd.xlane.f32.xlu0 %v1053
    %v1055 = vpop.xlane.xlu0 %1054
    %v1056 = vrcp.pop %v1022
    %v1057 = vrcp.pop %v1025
    %v1058 = vrcp.pop %v1028
    %v1059 = vrcp.pop %v1031
    %v1060 = vrcp.pop %v1034
    %v1061 = vrcp.pop %v1037
    %v1062 = vrcp.pop %v1040
    %v1063 = vrcp.pop %v1043
    %v1064 = vrcp.pop %v1046
    %v1065 = vrcp.pop %v1049
    %v1066 = vrcp.pop %v1052
    %v1067 = vrcp.pop %v1055
    %v1068 = vmul.f32 %v997, %v1056
    %v1069 = vmul.f32 %v999, %v1057
    %v1070 = vmul.f32 %v1001, %v1058
    %v1071 = vmul.f32 %v1003, %v1059
    %v1072 = vmul.f32 %v1005, %v1060
    %v1073 = vmul.f32 %v1007, %v1061
    %v1074 = vmul.f32 %v1009, %v1062
    %v1075 = vmul.f32 %v1011, %v1063
    %v1076 = vmul.f32 %v1013, %v1064
    %v1077 = vmul.f32 %v1015, %v1065
    %v1078 = vmul.f32 %v1017, %v1066
    %v1079 = vmul.f32 %v1019, %v1067
    %v1080 = vpack.c.bf16 %v1069, %v1068
    %v1081 = vpack.c.bf16 %v1070, %v1070
    %v1082 = vpack.c.bf16 %v1072, %v1071
    %v1083 = vpack.c.bf16 %v1073, %v1073
    %v1084 = vpack.c.bf16 %v1075, %v1074
    %v1085 = vpack.c.bf16 %v1076, %v1076
    %v1086 = vpack.c.bf16 %v1078, %v1077
    %v1087 = vpack.c.bf16 %v1079, %v1079
    %v1089 = vsel %vm947, %v1080, 0
    %v1092 = vsel %vm947, %v1081, 0
    %vm1094 = vcmask 1043456
    %v1096 = vsel %vm1094, %v675, 0
    %1098 = vmatprep.subr.bf16.mxu0 0
    %1099 = vmatpush1.bf16.msra.mxu0 %v674
    %1100 = vmatprep.subr.bf16.mxu0 0
    %1101 = vmatpush1.bf16.msra.mxu0 %v1096
    %1102 = vmatprep.subr.bf16.mxu0 0
    %1103 = vmatpush1.bf16.msra.mxu0 0
    %1104 = vmatprep.subr.bf16.mxu0 0
    %1105 = vmatpush1.bf16.msra.mxu0 0
    %1106 = vmatprep.subr.bf16.mxu0 0
    %1107 = vmatpush1.bf16.msra.mxu0 0
    %1108 = vmatprep.subr.bf16.mxu0 0
    %1109 = vmatpush1.bf16.msra.mxu0 0
    %1110 = vmatprep.subr.bf16.mxu0 0
    %1111 = vmatpush1.bf16.msra.mxu0 0
    %1112 = vmatprep.subr.bf16.mxu0 0
    %1113 = vmatpush1.bf16.msra.mxu0 0
    %1114 = vmatprep.subr.bf16.mxu0 0
    %1115 = vmatpush1.bf16.msra.mxu0 0
    %1116 = vmatprep.subr.bf16.mxu0 0
    %1117 = vmatpush1.bf16.msra.mxu0 0
    %1118 = vmatprep.subr.bf16.mxu0 0
    %1119 = vmatpush1.bf16.msra.mxu0 0
    %1120 = vmatprep.subr.bf16.mxu0 0
    %1121 = vmatpush1.bf16.msra.mxu0 0
    %1122 = vmatprep.subr.bf16.mxu0 0
    %1123 = vmatpush1.bf16.msra.mxu0 0
    %1124 = vmatprep.subr.bf16.mxu0 0
    %1125 = vmatpush1.bf16.msra.mxu0 0
    %1126 = vmatprep.subr.bf16.mxu0 0
    %1127 = vmatpush1.bf16.msra.mxu0 0
    %1128 = vmatprep.subr.bf16.mxu0 0
    %1129 = vmatpush1.bf16.msra.mxu0 0
    %1130 = vmatprep.mubr.bf16.mxu0 0
    %1131 = vmatmul.mubr.bf16.gmra.mrb[0].mxu0 %v1089
    %v1132 = vpop.f32.mrb[0].mxu0
    %v1133 = vadd.f32 0.0, %v1132
    %v1134 = vpop.f32.mrb[0].mxu0
    %v1135 = vpop.f32.mrb[0].mxu0
    %v1136 = vadd.f32 0.0, %v1135
    %v1137 = vpop.f32.mrb[0].mxu0
    %1138 = vmatprep.mubr.bf16.mxu0 0
    %1139 = vmatmul.mubr.bf16.gmra.mrb[0].mxu0 %v1092
    %v1140 = vpop.f32.mrb[0].mxu0
    %v1141 = vadd.f32 0.0, %v1140
    %v1142 = vpop.f32.mrb[0].mxu0
    %v1143 = vpop.f32.mrb[0].mxu0
    %v1144 = vpop.f32.mrb[0].mxu0
    %1145 = vdwg.mxu0
    %v1147 = vsel %vm947, %v1082, 0
    %v1150 = vsel %vm947, %v1083, 0
    %v1153 = vsel %vm1094, %v677, 0
    %1155 = vmatprep.subr.bf16.mxu0 0
    %1156 = vmatpush1.bf16.msra.mxu0 %v676
    %1157 = vmatprep.subr.bf16.mxu0 0
    %1158 = vmatpush1.bf16.msra.mxu0 %v1153
    %1159 = vmatprep.subr.bf16.mxu0 0
    %1160 = vmatpush1.bf16.msra.mxu0 0
    %1161 = vmatprep.subr.bf16.mxu0 0
    %1162 = vmatpush1.bf16.msra.mxu0 0
    %1163 = vmatprep.subr.bf16.mxu0 0
    %1164 = vmatpush1.bf16.msra.mxu0 0
    %1165 = vmatprep.subr.bf16.mxu0 0
    %1166 = vmatpush1.bf16.msra.mxu0 0
    %1167 = vmatprep.subr.bf16.mxu0 0
    %1168 = vmatpush1.bf16.msra.mxu0 0
    %1169 = vmatprep.subr.bf16.mxu0 0
    %1170 = vmatpush1.bf16.msra.mxu0 0
    %1171 = vmatprep.subr.bf16.mxu0 0
    %1172 = vmatpush1.bf16.msra.mxu0 0
    %1173 = vmatprep.subr.bf16.mxu0 0
    %1174 = vmatpush1.bf16.msra.mxu0 0
    %1175 = vmatprep.subr.bf16.mxu0 0
    %1176 = vmatpush1.bf16.msra.mxu0 0
    %1177 = vmatprep.subr.bf16.mxu0 0
    %1178 = vmatpush1.bf16.msra.mxu0 0
    %1179 = vmatprep.subr.bf16.mxu0 0
    %1180 = vmatpush1.bf16.msra.mxu0 0
    %1181 = vmatprep.subr.bf16.mxu0 0
    %1182 = vmatpush1.bf16.msra.mxu0 0
    %1183 = vmatprep.subr.bf16.mxu0 0
    %1184 = vmatpush1.bf16.msra.mxu0 0
    %1185 = vmatprep.subr.bf16.mxu0 0
    %1186 = vmatpush1.bf16.msra.mxu0 0
    %1187 = vmatprep.mubr.bf16.mxu0 0
    %1188 = vmatmul.mubr.bf16.gmra.mrb[0].mxu0 %v1147
    %v1189 = vpop.f32.mrb[0].mxu0
    %v1190 = vadd.f32 0.0, %v1189
    %v1191 = vpop.f32.mrb[0].mxu0
    %v1192 = vpop.f32.mrb[0].mxu0
    %v1193 = vadd.f32 0.0, %v1192
    %v1194 = vpop.f32.mrb[0].mxu0
    %1195 = vmatprep.mubr.bf16.mxu0 0
    %1196 = vmatmul.mubr.bf16.gmra.mrb[0].mxu0 %v1150
    %v1197 = vpop.f32.mrb[0].mxu0
    %v1198 = vadd.f32 0.0, %v1197
    %v1199 = vpop.f32.mrb[0].mxu0
    %v1200 = vpop.f32.mrb[0].mxu0
    %v1201 = vpop.f32.mrb[0].mxu0
    %1202 = vdwg.mxu0
    %v1204 = vsel %vm947, %v1084, 0
    %v1207 = vsel %vm947, %v1085, 0
    %v1210 = vsel %vm1094, %v679, 0
    %1212 = vmatprep.subr.bf16.mxu0 0
    %1213 = vmatpush1.bf16.msra.mxu0 %v678
    %1214 = vmatprep.subr.bf16.mxu0 0
    %1215 = vmatpush1.bf16.msra.mxu0 %v1210
    %1216 = vmatprep.subr.bf16.mxu0 0
    %1217 = vmatpush1.bf16.msra.mxu0 0
    %1218 = vmatprep.subr.bf16.mxu0 0
    %1219 = vmatpush1.bf16.msra.mxu0 0
    %1220 = vmatprep.subr.bf16.mxu0 0
    %1221 = vmatpush1.bf16.msra.mxu0 0
    %1222 = vmatprep.subr.bf16.mxu0 0
    %1223 = vmatpush1.bf16.msra.mxu0 0
    %1224 = vmatprep.subr.bf16.mxu0 0
    %1225 = vmatpush1.bf16.msra.mxu0 0
    %1226 = vmatprep.subr.bf16.mxu0 0
    %1227 = vmatpush1.bf16.msra.mxu0 0
    %1228 = vmatprep.subr.bf16.mxu0 0
    %1229 = vmatpush1.bf16.msra.mxu0 0
    %1230 = vmatprep.subr.bf16.mxu0 0
    %1231 = vmatpush1.bf16.msra.mxu0 0
    %1232 = vmatprep.subr.bf16.mxu0 0
    %1233 = vmatpush1.bf16.msra.mxu0 0
    %1234 = vmatprep.subr.bf16.mxu0 0
    %1235 = vmatpush1.bf16.msra.mxu0 0
    %1236 = vmatprep.subr.bf16.mxu0 0
    %1237 = vmatpush1.bf16.msra.mxu0 0
    %1238 = vmatprep.subr.bf16.mxu0 0
    %1239 = vmatpush1.bf16.msra.mxu0 0
    %1240 = vmatprep.subr.bf16.mxu0 0
    %1241 = vmatpush1.bf16.msra.mxu0 0
    %1242 = vmatprep.subr.bf16.mxu0 0
    %1243 = vmatpush1.bf16.msra.mxu0 0
    %1244 = vmatprep.mubr.bf16.mxu0 0
    %1245 = vmatmul.mubr.bf16.gmra.mrb[0].mxu0 %v1204
    %v1246 = vpop.f32.mrb[0].mxu0
    %v1247 = vadd.f32 0.0, %v1246
    %v1248 = vpop.f32.mrb[0].mxu0
    %v1249 = vpop.f32.mrb[0].mxu0
    %v1250 = vadd.f32 0.0, %v1249
    %v1251 = vpop.f32.mrb[0].mxu0
    %1252 = vmatprep.mubr.bf16.mxu0 0
    %1253 = vmatmul.mubr.bf16.gmra.mrb[0].mxu0 %v1207
    %v1254 = vpop.f32.mrb[0].mxu0
    %v1255 = vadd.f32 0.0, %v1254
    %v1256 = vpop.f32.mrb[0].mxu0
    %v1257 = vpop.f32.mrb[0].mxu0
    %v1258 = vpop.f32.mrb[0].mxu0
    %1259 = vdwg.mxu0
    %v1261 = vsel %vm947, %v1086, 0
    %v1264 = vsel %vm947, %v1087, 0
    %v1267 = vsel %vm1094, %v681, 0
    %1269 = vmatprep.subr.bf16.mxu0 0
    %1270 = vmatpush1.bf16.msra.mxu0 %v680
    %1271 = vmatprep.subr.bf16.mxu0 0
    %1272 = vmatpush1.bf16.msra.mxu0 %v1267
    %1273 = vmatprep.subr.bf16.mxu0 0
    %1274 = vmatpush1.bf16.msra.mxu0 0
    %1275 = vmatprep.subr.bf16.mxu0 0
    %1276 = vmatpush1.bf16.msra.mxu0 0
    %1277 = vmatprep.subr.bf16.mxu0 0
    %1278 = vmatpush1.bf16.msra.mxu0 0
    %1279 = vmatprep.subr.bf16.mxu0 0
    %1280 = vmatpush1.bf16.msra.mxu0 0
    %1281 = vmatprep.subr.bf16.mxu0 0
    %1282 = vmatpush1.bf16.msra.mxu0 0
    %1283 = vmatprep.subr.bf16.mxu0 0
    %1284 = vmatpush1.bf16.msra.mxu0 0
    %1285 = vmatprep.subr.bf16.mxu0 0
    %1286 = vmatpush1.bf16.msra.mxu0 0
    %1287 = vmatprep.subr.bf16.mxu0 0
    %1288 = vmatpush1.bf16.msra.mxu0 0
    %1289 = vmatprep.subr.bf16.mxu0 0
    %1290 = vmatpush1.bf16.msra.mxu0 0
    %1291 = vmatprep.subr.bf16.mxu0 0
    %1292 = vmatpush1.bf16.msra.mxu0 0
    %1293 = vmatprep.subr.bf16.mxu0 0
    %1294 = vmatpush1.bf16.msra.mxu0 0
    %1295 = vmatprep.subr.bf16.mxu0 0
    %1296 = vmatpush1.bf16.msra.mxu0 0
    %1297 = vmatprep.subr.bf16.mxu0 0
    %1298 = vmatpush1.bf16.msra.mxu0 0
    %1299 = vmatprep.subr.bf16.mxu0 0
    %1300 = vmatpush1.bf16.msra.mxu0 0
    %1301 = vmatprep.mubr.bf16.mxu0 0
    %1302 = vmatmul.mubr.bf16.gmra.mrb[0].mxu0 %v1261
    %v1303 = vpop.f32.mrb[0].mxu0
    %v1304 = vadd.f32 0.0, %v1303
    %v1305 = vpop.f32.mrb[0].mxu0
    %v1306 = vpop.f32.mrb[0].mxu0
    %v1307 = vadd.f32 0.0, %v1306
    %v1308 = vpop.f32.mrb[0].mxu0
    %1309 = vmatprep.mubr.bf16.mxu0 0
    %1310 = vmatmul.mubr.bf16.gmra.mrb[0].mxu0 %v1264
    %v1311 = vpop.f32.mrb[0].mxu0
    %v1312 = vadd.f32 0.0, %v1311
    %v1313 = vpop.f32.mrb[0].mxu0
    %v1314 = vpop.f32.mrb[0].mxu0
    %v1315 = vpop.f32.mrb[0].mxu0
    %1316 = vdwg.mxu0
    %1319 = vrot.lane.b32.xlu0 %v658, 112
    %v1320 = vpop.permute.xlu0 %1319
    %1321 = vrot.lane.b32.xlu0 %v659, 112
    %v1322 = vpop.permute.xlu0 %1321
    %1325 = vrot.lane.b32.xlu0 %v666, 112
    %v1326 = vpop.permute.xlu0 %1325
    %1327 = vrot.lane.b32.xlu0 %v667, 112
    %v1328 = vpop.permute.xlu0 %1327
    %v1330 = vsel %vm682, %v1320, 0
    %v1333 = vsel %vm682, %v1322, 0
    %v1336 = vsel %vm682, %v1326, 0
    %v1339 = vsel %vm682, %v1328, 0
    %1341 = vmatprep.subr.bf16.mxu0 0
    %1342 = vmatpush1.bf16.xpose.msra.mxu0 %v1336
    %1343 = vmatprep.subr.bf16.mxu0 0
    %1344 = vmatpush1.bf16.xpose.msra.mxu0 %v1339
    %1345 = vmatprep.subr.bf16.mxu0 0
    %1346 = vmatpush1.bf16.xpose.msra.mxu0 0
    %1347 = vmatprep.subr.bf16.mxu0 0
    %1348 = vmatpush1.bf16.xpose.msra.mxu0 0
    %1349 = vmatprep.subr.bf16.mxu0 0
    %1350 = vmatpush1.bf16.xpose.msra.mxu0 0
    %1351 = vmatprep.subr.bf16.mxu0 0
    %1352 = vmatpush1.bf16.xpose.msra.mxu0 0
    %1353 = vmatprep.subr.bf16.mxu0 0
    %1354 = vmatpush1.bf16.xpose.msra.mxu0 0
    %1355 = vmatprep.subr.bf16.mxu0 0
    %1356 = vmatpush1.bf16.xpose.msra.mxu0 0
    %1357 = vmatprep.subr.bf16.mxu0 0
    %1358 = vmatpush1.bf16.xpose.msra.mxu0 0
    %1359 = vmatprep.subr.bf16.mxu0 0
    %1360 = vmatpush1.bf16.xpose.msra.mxu0 0
    %1361 = vmatprep.subr.bf16.mxu0 0
    %1362 = vmatpush1.bf16.xpose.msra.mxu0 0
    %1363 = vmatprep.subr.bf16.mxu0 0
    %1364 = vmatpush1.bf16.xpose.msra.mxu0 0
    %1365 = vmatprep.subr.bf16.mxu0 0
    %1366 = vmatpush1.bf16.xpose.msra.mxu0 0
    %1367 = vmatprep.subr.bf16.mxu0 0
    %1368 = vmatpush1.bf16.xpose.msra.mxu0 0
    %1369 = vmatprep.subr.bf16.mxu0 0
    %1370 = vmatpush1.bf16.xpose.msra.mxu0 0
    %1371 = vmatprep.subr.bf16.mxu0 0
    %1372 = vmatpush1.bf16.xpose.msra.mxu0 0
    %1373 = vmatprep.mubr.bf16.mxu0 0
    %1374 = vmatmul.mubr.bf16.gmra.mrb[0].mxu0 %v1330
    %v1375 = vpop.f32.mrb[0].mxu0
    %v1376 = vadd.f32 0.0, %v1375
    %v1377 = vpop.f32.mrb[0].mxu0
    %v1378 = vpop.f32.mrb[0].mxu0
    %v1379 = vadd.f32 0.0, %v1378
    %v1380 = vpop.f32.mrb[0].mxu0
    %1381 = vmatprep.mubr.bf16.mxu0 0
    %1382 = vmatmul.mubr.bf16.gmra.mrb[0].mxu0 %v1333
    %v1383 = vpop.f32.mrb[0].mxu0
    %v1384 = vadd.f32 0.0, %v1383
    %v1385 = vpop.f32.mrb[0].mxu0
    %v1386 = vpop.f32.mrb[0].mxu0
    %v1387 = vpop.f32.mrb[0].mxu0
    %1388 = vdwg.mxu0
    %1391 = vrot.lane.b32.xlu0 %v660, 112
    %v1392 = vpop.permute.xlu0 %1391
    %1393 = vrot.lane.b32.xlu0 %v661, 112
    %v1394 = vpop.permute.xlu0 %1393
    %1397 = vrot.lane.b32.xlu0 %v668, 112
    %v1398 = vpop.permute.xlu0 %1397
    %1399 = vrot.lane.b32.xlu0 %v669, 112
    %v1400 = vpop.permute.xlu0 %1399
    %v1402 = vsel %vm682, %v1392, 0
    %v1405 = vsel %vm682, %v1394, 0
    %v1408 = vsel %vm682, %v1398, 0
    %v1411 = vsel %vm682, %v1400, 0
    %1413 = vmatprep.subr.bf16.mxu0 0
    %1414 = vmatpush1.bf16.xpose.msra.mxu0 %v1408
    %1415 = vmatprep.subr.bf16.mxu0 0
    %1416 = vmatpush1.bf16.xpose.msra.mxu0 %v1411
    %1417 = vmatprep.subr.bf16.mxu0 0
    %1418 = vmatpush1.bf16.xpose.msra.mxu0 0
    %1419 = vmatprep.subr.bf16.mxu0 0
    %1420 = vmatpush1.bf16.xpose.msra.mxu0 0
    %1421 = vmatprep.subr.bf16.mxu0 0
    %1422 = vmatpush1.bf16.xpose.msra.mxu0 0
    %1423 = vmatprep.subr.bf16.mxu0 0
    %1424 = vmatpush1.bf16.xpose.msra.mxu0 0
    %1425 = vmatprep.subr.bf16.mxu0 0
    %1426 = vmatpush1.bf16.xpose.msra.mxu0 0
    %1427 = vmatprep.subr.bf16.mxu0 0
    %1428 = vmatpush1.bf16.xpose.msra.mxu0 0
    %1429 = vmatprep.subr.bf16.mxu0 0
    %1430 = vmatpush1.bf16.xpose.msra.mxu0 0
    %1431 = vmatprep.subr.bf16.mxu0 0
    %1432 = vmatpush1.bf16.xpose.msra.mxu0 0
    %1433 = vmatprep.subr.bf16.mxu0 0
    %1434 = vmatpush1.bf16.xpose.msra.mxu0 0
    %1435 = vmatprep.subr.bf16.mxu0 0
    %1436 = vmatpush1.bf16.xpose.msra.mxu0 0
    %1437 = vmatprep.subr.bf16.mxu0 0
    %1438 = vmatpush1.bf16.xpose.msra.mxu0 0
    %1439 = vmatprep.subr.bf16.mxu0 0
    %1440 = vmatpush1.bf16.xpose.msra.mxu0 0
    %1441 = vmatprep.subr.bf16.mxu0 0
    %1442 = vmatpush1.bf16.xpose.msra.mxu0 0
    %1443 = vmatprep.subr.bf16.mxu0 0
    %1444 = vmatpush1.bf16.xpose.msra.mxu0 0
    %1445 = vmatprep.mubr.bf16.mxu0 0
    %1446 = vmatmul.mubr.bf16.gmra.mrb[0].mxu0 %v1402
    %v1447 = vpop.f32.mrb[0].mxu0
    %v1448 = vadd.f32 0.0, %v1447
    %v1449 = vpop.f32.mrb[0].mxu0
    %v1450 = vpop.f32.mrb[0].mxu0
    %v1451 = vadd.f32 0.0, %v1450
    %v1452 = vpop.f32.mrb[0].mxu0
    %1453 = vmatprep.mubr.bf16.mxu0 0
    %1454 = vmatmul.mubr.bf16.gmra.mrb[0].mxu0 %v1405
    %v1455 = vpop.f32.mrb[0].mxu0
    %v1456 = vadd.f32 0.0, %v1455
    %v1457 = vpop.f32.mrb[0].mxu0
    %v1458 = vpop.f32.mrb[0].mxu0
    %v1459 = vpop.f32.mrb[0].mxu0
    %1460 = vdwg.mxu0
    %1463 = vrot.lane.b32.xlu0 %v662, 112
    %v1464 = vpop.permute.xlu0 %1463
    %1465 = vrot.lane.b32.xlu0 %v663, 112
    %v1466 = vpop.permute.xlu0 %1465
    %1469 = vrot.lane.b32.xlu0 %v670, 112
    %v1470 = vpop.permute.xlu0 %1469
    %1471 = vrot.lane.b32.xlu0 %v671, 112
    %v1472 = vpop.permute.xlu0 %1471
    %v1474 = vsel %vm682, %v1464, 0
    %v1477 = vsel %vm682, %v1466, 0
    %v1480 = vsel %vm682, %v1470, 0
    %v1483 = vsel %vm682, %v1472, 0
    %1485 = vmatprep.subr.bf16.mxu0 0
    %1486 = vmatpush1.bf16.xpose.msra.mxu0 %v1480
    %1487 = vmatprep.subr.bf16.mxu0 0
    %1488 = vmatpush1.bf16.xpose.msra.mxu0 %v1483
    %1489 = vmatprep.subr.bf16.mxu0 0
    %1490 = vmatpush1.bf16.xpose.msra.mxu0 0
    %1491 = vmatprep.subr.bf16.mxu0 0
    %1492 = vmatpush1.bf16.xpose.msra.mxu0 0
    %1493 = vmatprep.subr.bf16.mxu0 0
    %1494 = vmatpush1.bf16.xpose.msra.mxu0 0
    %1495 = vmatprep.subr.bf16.mxu0 0
    %1496 = vmatpush1.bf16.xpose.msra.mxu0 0
    %1497 = vmatprep.subr.bf16.mxu0 0
    %1498 = vmatpush1.bf16.xpose.msra.mxu0 0
    %1499 = vmatprep.subr.bf16.mxu0 0
    %1500 = vmatpush1.bf16.xpose.msra.mxu0 0
    %1501 = vmatprep.subr.bf16.mxu0 0
    %1502 = vmatpush1.bf16.xpose.msra.mxu0 0
    %1503 = vmatprep.subr.bf16.mxu0 0
    %1504 = vmatpush1.bf16.xpose.msra.mxu0 0
    %1505 = vmatprep.subr.bf16.mxu0 0
    %1506 = vmatpush1.bf16.xpose.msra.mxu0 0
    %1507 = vmatprep.subr.bf16.mxu0 0
    %1508 = vmatpush1.bf16.xpose.msra.mxu0 0
    %1509 = vmatprep.subr.bf16.mxu0 0
    %1510 = vmatpush1.bf16.xpose.msra.mxu0 0
    %1511 = vmatprep.subr.bf16.mxu0 0
    %1512 = vmatpush1.bf16.xpose.msra.mxu0 0
    %1513 = vmatprep.subr.bf16.mxu0 0
    %1514 = vmatpush1.bf16.xpose.msra.mxu0 0
    %1515 = vmatprep.subr.bf16.mxu0 0
    %1516 = vmatpush1.bf16.xpose.msra.mxu0 0
    %1517 = vmatprep.mubr.bf16.mxu0 0
    %1518 = vmatmul.mubr.bf16.gmra.mrb[0].mxu0 %v1474
    %v1519 = vpop.f32.mrb[0].mxu0
    %v1520 = vadd.f32 0.0, %v1519
    %v1521 = vpop.f32.mrb[0].mxu0
    %v1522 = vpop.f32.mrb[0].mxu0
    %v1523 = vadd.f32 0.0, %v1522
    %v1524 = vpop.f32.mrb[0].mxu0
    %1525 = vmatprep.mubr.bf16.mxu0 0
    %1526 = vmatmul.mubr.bf16.gmra.mrb[0].mxu0 %v1477
    %v1527 = vpop.f32.mrb[0].mxu0
    %v1528 = vadd.f32 0.0, %v1527
    %v1529 = vpop.f32.mrb[0].mxu0
    %v1530 = vpop.f32.mrb[0].mxu0
    %v1531 = vpop.f32.mrb[0].mxu0
    %1532 = vdwg.mxu0
    %1535 = vrot.lane.b32.xlu0 %v664, 112
    %v1536 = vpop.permute.xlu0 %1535
    %1537 = vrot.lane.b32.xlu0 %v665, 112
    %v1538 = vpop.permute.xlu0 %1537
    %1541 = vrot.lane.b32.xlu0 %v672, 112
    %v1542 = vpop.permute.xlu0 %1541
    %1543 = vrot.lane.b32.xlu0 %v673, 112
    %v1544 = vpop.permute.xlu0 %1543
    %v1546 = vsel %vm682, %v1536, 0
    %v1549 = vsel %vm682, %v1538, 0
    %v1552 = vsel %vm682, %v1542, 0
    %v1555 = vsel %vm682, %v1544, 0
    %1557 = vmatprep.subr.bf16.mxu0 0
    %1558 = vmatpush1.bf16.xpose.msra.mxu0 %v1552
    %1559 = vmatprep.subr.bf16.mxu0 0
    %1560 = vmatpush1.bf16.xpose.msra.mxu0 %v1555
    %1561 = vmatprep.subr.bf16.mxu0 0
    %1562 = vmatpush1.bf16.xpose.msra.mxu0 0
    %1563 = vmatprep.subr.bf16.mxu0 0
    %1564 = vmatpush1.bf16.xpose.msra.mxu0 0
    %1565 = vmatprep.subr.bf16.mxu0 0
    %1566 = vmatpush1.bf16.xpose.msra.mxu0 0
    %1567 = vmatprep.subr.bf16.mxu0 0
    %1568 = vmatpush1.bf16.xpose.msra.mxu0 0
    %1569 = vmatprep.subr.bf16.mxu0 0
    %1570 = vmatpush1.bf16.xpose.msra.mxu0 0
    %1571 = vmatprep.subr.bf16.mxu0 0
    %1572 = vmatpush1.bf16.xpose.msra.mxu0 0
    %1573 = vmatprep.subr.bf16.mxu0 0
    %1574 = vmatpush1.bf16.xpose.msra.mxu0 0
    %1575 = vmatprep.subr.bf16.mxu0 0
    %1576 = vmatpush1.bf16.xpose.msra.mxu0 0
    %1577 = vmatprep.subr.bf16.mxu0 0
    %1578 = vmatpush1.bf16.xpose.msra.mxu0 0
    %1579 = vmatprep.subr.bf16.mxu0 0
    %1580 = vmatpush1.bf16.xpose.msra.mxu0 0
    %1581 = vmatprep.subr.bf16.mxu0 0
    %1582 = vmatpush1.bf16.xpose.msra.mxu0 0
    %1583 = vmatprep.subr.bf16.mxu0 0
    %1584 = vmatpush1.bf16.xpose.msra.mxu0 0
    %1585 = vmatprep.subr.bf16.mxu0 0
    %1586 = vmatpush1.bf16.xpose.msra.mxu0 0
    %1587 = vmatprep.subr.bf16.mxu0 0
    %1588 = vmatpush1.bf16.xpose.msra.mxu0 0
    %1589 = vmatprep.mubr.bf16.mxu0 0
    %1590 = vmatmul.mubr.bf16.gmra.mrb[0].mxu0 %v1546
    %v1591 = vpop.f32.mrb[0].mxu0
    %v1592 = vadd.f32 0.0, %v1591
    %v1593 = vpop.f32.mrb[0].mxu0
    %v1594 = vpop.f32.mrb[0].mxu0
    %v1595 = vadd.f32 0.0, %v1594
    %v1596 = vpop.f32.mrb[0].mxu0
    %1597 = vmatprep.mubr.bf16.mxu0 0
    %1598 = vmatmul.mubr.bf16.gmra.mrb[0].mxu0 %v1549
    %v1599 = vpop.f32.mrb[0].mxu0
    %v1600 = vadd.f32 0.0, %v1599
    %v1601 = vpop.f32.mrb[0].mxu0
    %v1602 = vpop.f32.mrb[0].mxu0
    %v1603 = vpop.f32.mrb[0].mxu0
    %1604 = vdwg.mxu0
    %v1605 = vmul.f32 %v1376, 0.25
    %v1606 = vmul.f32 %v1379, 0.25
    %v1607 = vmul.f32 %v1384, 0.25
    %v1608 = vmul.f32 %v1448, 0.25
    %v1609 = vmul.f32 %v1451, 0.25
    %v1610 = vmul.f32 %v1456, 0.25
    %v1611 = vmul.f32 %v1520, 0.25
    %v1612 = vmul.f32 %v1523, 0.25
    %v1613 = vmul.f32 %v1528, 0.25
    %v1614 = vmul.f32 %v1592, 0.25
    %v1615 = vmul.f32 %v1595, 0.25
    %v1616 = vmul.f32 %v1600, 0.25
    %v1617 = vadd.f32 %v1605, %v73
    %v1618 = vadd.f32 %v1606, %v73
    %v1619 = vadd.f32 %v1607, %v73
    %v1620 = vadd.f32 %v1608, %v73
    %v1621 = vadd.f32 %v1609, %v73
    %v1622 = vadd.f32 %v1610, %v73
    %v1623 = vadd.f32 %v1611, %v73
    %v1624 = vadd.f32 %v1612, %v73
    %v1625 = vadd.f32 %v1613, %v73
    %v1626 = vadd.f32 %v1614, %v73
    %v1627 = vadd.f32 %v1615, %v73
    %v1628 = vadd.f32 %v1616, %v73
    %v1629 = vsel %vm947, %v1617, -inf
    %1630 = vmax.xlane.f32.xlu0 %v1629
    %v1631 = vpop.xlane.xlu0 %1630
    %v1632 = vsel %vm947, %v1618, -inf
    %1633 = vmax.xlane.f32.xlu0 %v1632
    %v1634 = vpop.xlane.xlu0 %1633
    %v1635 = vsel %vm947, %v1619, -inf
    %1636 = vmax.xlane.f32.xlu0 %v1635
    %v1637 = vpop.xlane.xlu0 %1636
    %v1638 = vsel %vm947, %v1620, -inf
    %1639 = vmax.xlane.f32.xlu0 %v1638
    %v1640 = vpop.xlane.xlu0 %1639
    %v1641 = vsel %vm947, %v1621, -inf
    %1642 = vmax.xlane.f32.xlu0 %v1641
    %v1643 = vpop.xlane.xlu0 %1642
    %v1644 = vsel %vm947, %v1622, -inf
    %1645 = vmax.xlane.f32.xlu0 %v1644
    %v1646 = vpop.xlane.xlu0 %1645
    %v1647 = vsel %vm947, %v1623, -inf
    %1648 = vmax.xlane.f32.xlu0 %v1647
    %v1649 = vpop.xlane.xlu0 %1648
    %v1650 = vsel %vm947, %v1624, -inf
    %1651 = vmax.xlane.f32.xlu0 %v1650
    %v1652 = vpop.xlane.xlu0 %1651
    %v1653 = vsel %vm947, %v1625, -inf
    %1654 = vmax.xlane.f32.xlu0 %v1653
    %v1655 = vpop.xlane.xlu0 %1654
    %v1656 = vsel %vm947, %v1626, -inf
    %1657 = vmax.xlane.f32.xlu0 %v1656
    %v1658 = vpop.xlane.xlu0 %1657
    %v1659 = vsel %vm947, %v1627, -inf
    %1660 = vmax.xlane.f32.xlu0 %v1659
    %v1661 = vpop.xlane.xlu0 %1660
    %v1662 = vsel %vm947, %v1628, -inf
    %1663 = vmax.xlane.f32.xlu0 %v1662
    %v1664 = vpop.xlane.xlu0 %1663
    %v1665 = vsub.f32 %v1617, %v1631
    %v1666 = vsub.f32 %v1618, %v1634
    %v1667 = vsub.f32 %v1619, %v1637
    %v1668 = vsub.f32 %v1620, %v1640
    %v1669 = vsub.f32 %v1621, %v1643
    %v1670 = vsub.f32 %v1622, %v1646
    %v1671 = vsub.f32 %v1623, %v1649
    %v1672 = vsub.f32 %v1624, %v1652
    %v1673 = vsub.f32 %v1625, %v1655
    %v1674 = vsub.f32 %v1626, %v1658
    %v1675 = vsub.f32 %v1627, %v1661
    %v1676 = vsub.f32 %v1628, %v1664
    %v1677 = vmul.f32 %v1665, 1.442695
    %v1678 = vpow.pop %v1677
    %v1679 = vmul.f32 %v1666, 1.442695
    %v1680 = vpow.pop %v1679
    %v1681 = vmul.f32 %v1667, 1.442695
    %v1682 = vpow.pop %v1681
    %v1683 = vmul.f32 %v1668, 1.442695
    %v1684 = vpow.pop %v1683
    %v1685 = vmul.f32 %v1669, 1.442695
    %v1686 = vpow.pop %v1685
    %v1687 = vmul.f32 %v1670, 1.442695
    %v1688 = vpow.pop %v1687
    %v1689 = vmul.f32 %v1671, 1.442695
    %v1690 = vpow.pop %v1689
    %v1691 = vmul.f32 %v1672, 1.442695
    %v1692 = vpow.pop %v1691
    %v1693 = vmul.f32 %v1673, 1.442695
    %v1694 = vpow.pop %v1693
    %v1695 = vmul.f32 %v1674, 1.442695
    %v1696 = vpow.pop %v1695
    %v1697 = vmul.f32 %v1675, 1.442695
    %v1698 = vpow.pop %v1697
    %v1699 = vmul.f32 %v1676, 1.442695
    %v1700 = vpow.pop %v1699
    %v1701 = vsel %vm947, %v1678, 0.0
    %1702 = vadd.xlane.f32.xlu0 %v1701
    %v1703 = vpop.xlane.xlu0 %1702
    %v1704 = vsel %vm947, %v1680, 0.0
    %1705 = vadd.xlane.f32.xlu0 %v1704
    %v1706 = vpop.xlane.xlu0 %1705
    %v1707 = vsel %vm947, %v1682, 0.0
    %1708 = vadd.xlane.f32.xlu0 %v1707
    %v1709 = vpop.xlane.xlu0 %1708
    %v1710 = vsel %vm947, %v1684, 0.0
    %1711 = vadd.xlane.f32.xlu0 %v1710
    %v1712 = vpop.xlane.xlu0 %1711
    %v1713 = vsel %vm947, %v1686, 0.0
    %1714 = vadd.xlane.f32.xlu0 %v1713
    %v1715 = vpop.xlane.xlu0 %1714
    %v1716 = vsel %vm947, %v1688, 0.0
    %1717 = vadd.xlane.f32.xlu0 %v1716
    %v1718 = vpop.xlane.xlu0 %1717
    %v1719 = vsel %vm947, %v1690, 0.0
    %1720 = vadd.xlane.f32.xlu0 %v1719
    %v1721 = vpop.xlane.xlu0 %1720
    %v1722 = vsel %vm947, %v1692, 0.0
    %1723 = vadd.xlane.f32.xlu0 %v1722
    %v1724 = vpop.xlane.xlu0 %1723
    %v1725 = vsel %vm947, %v1694, 0.0
    %1726 = vadd.xlane.f32.xlu0 %v1725
    %v1727 = vpop.xlane.xlu0 %1726
    %v1728 = vsel %vm947, %v1696, 0.0
    %1729 = vadd.xlane.f32.xlu0 %v1728
    %v1730 = vpop.xlane.xlu0 %1729
    %v1731 = vsel %vm947, %v1698, 0.0
    %1732 = vadd.xlane.f32.xlu0 %v1731
    %v1733 = vpop.xlane.xlu0 %1732
    %v1734 = vsel %vm947, %v1700, 0.0
    %1735 = vadd.xlane.f32.xlu0 %v1734
    %v1736 = vpop.xlane.xlu0 %1735
    %v1737 = vrcp.pop %v1703
    %v1738 = vrcp.pop %v1706
    %v1739 = vrcp.pop %v1709
    %v1740 = vrcp.pop %v1712
    %v1741 = vrcp.pop %v1715
    %v1742 = vrcp.pop %v1718
    %v1743 = vrcp.pop %v1721
    %v1744 = vrcp.pop %v1724
    %v1745 = vrcp.pop %v1727
    %v1746 = vrcp.pop %v1730
    %v1747 = vrcp.pop %v1733
    %v1748 = vrcp.pop %v1736
    %v1749 = vmul.f32 %v1678, %v1737
    %v1750 = vmul.f32 %v1680, %v1738
    %v1751 = vmul.f32 %v1682, %v1739
    %v1752 = vmul.f32 %v1684, %v1740
    %v1753 = vmul.f32 %v1686, %v1741
    %v1754 = vmul.f32 %v1688, %v1742
    %v1755 = vmul.f32 %v1690, %v1743
    %v1756 = vmul.f32 %v1692, %v1744
    %v1757 = vmul.f32 %v1694, %v1745
    %v1758 = vmul.f32 %v1696, %v1746
    %v1759 = vmul.f32 %v1698, %v1747
    %v1760 = vmul.f32 %v1700, %v1748
    %v1761 = vpack.c.bf16 %v1750, %v1749
    %v1762 = vpack.c.bf16 %v1751, %v1751
    %v1763 = vpack.c.bf16 %v1753, %v1752
    %v1764 = vpack.c.bf16 %v1754, %v1754
    %v1765 = vpack.c.bf16 %v1756, %v1755
    %v1766 = vpack.c.bf16 %v1757, %v1757
    %v1767 = vpack.c.bf16 %v1759, %v1758
    %v1768 = vpack.c.bf16 %v1760, %v1760
    %1771 = vrot.lane.b32.xlu0 %v674, 112
    %v1772 = vpop.permute.xlu0 %1771
    %1773 = vrot.lane.b32.xlu0 %v675, 112
    %v1774 = vpop.permute.xlu0 %1773
    %v1777 = vsel %vm947, %v1761, 0
    %v1780 = vsel %vm947, %v1762, 0
    %v1783 = vsel %vm1094, %v1774, 0
    %1785 = vmatprep.subr.bf16.mxu0 0
    %1786 = vmatpush1.bf16.msra.mxu0 %v1772
    %1787 = vmatprep.subr.bf16.mxu0 0
    %1788 = vmatpush1.bf16.msra.mxu0 %v1783
    %1789 = vmatprep.subr.bf16.mxu0 0
    %1790 = vmatpush1.bf16.msra.mxu0 0
    %1791 = vmatprep.subr.bf16.mxu0 0
    %1792 = vmatpush1.bf16.msra.mxu0 0
    %1793 = vmatprep.subr.bf16.mxu0 0
    %1794 = vmatpush1.bf16.msra.mxu0 0
    %1795 = vmatprep.subr.bf16.mxu0 0
    %1796 = vmatpush1.bf16.msra.mxu0 0
    %1797 = vmatprep.subr.bf16.mxu0 0
    %1798 = vmatpush1.bf16.msra.mxu0 0
    %1799 = vmatprep.subr.bf16.mxu0 0
    %1800 = vmatpush1.bf16.msra.mxu0 0
    %1801 = vmatprep.subr.bf16.mxu0 0
    %1802 = vmatpush1.bf16.msra.mxu0 0
    %1803 = vmatprep.subr.bf16.mxu0 0
    %1804 = vmatpush1.bf16.msra.mxu0 0
    %1805 = vmatprep.subr.bf16.mxu0 0
    %1806 = vmatpush1.bf16.msra.mxu0 0
    %1807 = vmatprep.subr.bf16.mxu0 0
    %1808 = vmatpush1.bf16.msra.mxu0 0
    %1809 = vmatprep.subr.bf16.mxu0 0
    %1810 = vmatpush1.bf16.msra.mxu0 0
    %1811 = vmatprep.subr.bf16.mxu0 0
    %1812 = vmatpush1.bf16.msra.mxu0 0
    %1813 = vmatprep.subr.bf16.mxu0 0
    %1814 = vmatpush1.bf16.msra.mxu0 0
    %1815 = vmatprep.subr.bf16.mxu0 0
    %1816 = vmatpush1.bf16.msra.mxu0 0
    %1817 = vmatprep.mubr.bf16.mxu0 0
    %1818 = vmatmul.mubr.bf16.gmra.mrb[0].mxu0 %v1777
    %v1819 = vpop.f32.mrb[0].mxu0
    %v1820 = vadd.f32 0.0, %v1819
    %v1821 = vpop.f32.mrb[0].mxu0
    %v1822 = vpop.f32.mrb[0].mxu0
    %v1823 = vadd.f32 0.0, %v1822
    %v1824 = vpop.f32.mrb[0].mxu0
    %1825 = vmatprep.mubr.bf16.mxu0 0
    %1826 = vmatmul.mubr.bf16.gmra.mrb[0].mxu0 %v1780
    %v1827 = vpop.f32.mrb[0].mxu0
    %v1828 = vadd.f32 0.0, %v1827
    %v1829 = vpop.f32.mrb[0].mxu0
    %v1830 = vpop.f32.mrb[0].mxu0
    %v1831 = vpop.f32.mrb[0].mxu0
    %1832 = vdwg.mxu0
    %1835 = vrot.lane.b32.xlu0 %v676, 112
    %v1836 = vpop.permute.xlu0 %1835
    %1837 = vrot.lane.b32.xlu0 %v677, 112
    %v1838 = vpop.permute.xlu0 %1837
    %v1841 = vsel %vm947, %v1763, 0
    %v1844 = vsel %vm947, %v1764, 0
    %v1847 = vsel %vm1094, %v1838, 0
    %1849 = vmatprep.subr.bf16.mxu0 0
    %1850 = vmatpush1.bf16.msra.mxu0 %v1836
    %1851 = vmatprep.subr.bf16.mxu0 0
    %1852 = vmatpush1.bf16.msra.mxu0 %v1847
    %1853 = vmatprep.subr.bf16.mxu0 0
    %1854 = vmatpush1.bf16.msra.mxu0 0
    %1855 = vmatprep.subr.bf16.mxu0 0
    %1856 = vmatpush1.bf16.msra.mxu0 0
    %1857 = vmatprep.subr.bf16.mxu0 0
    %1858 = vmatpush1.bf16.msra.mxu0 0
    %1859 = vmatprep.subr.bf16.mxu0 0
    %1860 = vmatpush1.bf16.msra.mxu0 0
    %1861 = vmatprep.subr.bf16.mxu0 0
    %1862 = vmatpush1.bf16.msra.mxu0 0
    %1863 = vmatprep.subr.bf16.mxu0 0
    %1864 = vmatpush1.bf16.msra.mxu0 0
    %1865 = vmatprep.subr.bf16.mxu0 0
    %1866 = vmatpush1.bf16.msra.mxu0 0
    %1867 = vmatprep.subr.bf16.mxu0 0
    %1868 = vmatpush1.bf16.msra.mxu0 0
    %1869 = vmatprep.subr.bf16.mxu0 0
    %1870 = vmatpush1.bf16.msra.mxu0 0
    %1871 = vmatprep.subr.bf16.mxu0 0
    %1872 = vmatpush1.bf16.msra.mxu0 0
    %1873 = vmatprep.subr.bf16.mxu0 0
    %1874 = vmatpush1.bf16.msra.mxu0 0
    %1875 = vmatprep.subr.bf16.mxu0 0
    %1876 = vmatpush1.bf16.msra.mxu0 0
    %1877 = vmatprep.subr.bf16.mxu0 0
    %1878 = vmatpush1.bf16.msra.mxu0 0
    %1879 = vmatprep.subr.bf16.mxu0 0
    %1880 = vmatpush1.bf16.msra.mxu0 0
    %1881 = vmatprep.mubr.bf16.mxu0 0
    %1882 = vmatmul.mubr.bf16.gmra.mrb[0].mxu0 %v1841
    %v1883 = vpop.f32.mrb[0].mxu0
    %v1884 = vadd.f32 0.0, %v1883
    %v1885 = vpop.f32.mrb[0].mxu0
    %v1886 = vpop.f32.mrb[0].mxu0
    %v1887 = vadd.f32 0.0, %v1886
    %v1888 = vpop.f32.mrb[0].mxu0
    %1889 = vmatprep.mubr.bf16.mxu0 0
    %1890 = vmatmul.mubr.bf16.gmra.mrb[0].mxu0 %v1844
    %v1891 = vpop.f32.mrb[0].mxu0
    %v1892 = vadd.f32 0.0, %v1891
    %v1893 = vpop.f32.mrb[0].mxu0
    %v1894 = vpop.f32.mrb[0].mxu0
    %v1895 = vpop.f32.mrb[0].mxu0
    %1896 = vdwg.mxu0
    %1899 = vrot.lane.b32.xlu0 %v678, 112
    %v1900 = vpop.permute.xlu0 %1899
    %1901 = vrot.lane.b32.xlu0 %v679, 112
    %v1902 = vpop.permute.xlu0 %1901
    %v1905 = vsel %vm947, %v1765, 0
    %v1908 = vsel %vm947, %v1766, 0
    %v1911 = vsel %vm1094, %v1902, 0
    %1913 = vmatprep.subr.bf16.mxu0 0
    %1914 = vmatpush1.bf16.msra.mxu0 %v1900
    %1915 = vmatprep.subr.bf16.mxu0 0
    %1916 = vmatpush1.bf16.msra.mxu0 %v1911
    %1917 = vmatprep.subr.bf16.mxu0 0
    %1918 = vmatpush1.bf16.msra.mxu0 0
    %1919 = vmatprep.subr.bf16.mxu0 0
    %1920 = vmatpush1.bf16.msra.mxu0 0
    %1921 = vmatprep.subr.bf16.mxu0 0
    %1922 = vmatpush1.bf16.msra.mxu0 0
    %1923 = vmatprep.subr.bf16.mxu0 0
    %1924 = vmatpush1.bf16.msra.mxu0 0
    %1925 = vmatprep.subr.bf16.mxu0 0
    %1926 = vmatpush1.bf16.msra.mxu0 0
    %1927 = vmatprep.subr.bf16.mxu0 0
    %1928 = vmatpush1.bf16.msra.mxu0 0
    %1929 = vmatprep.subr.bf16.mxu0 0
    %1930 = vmatpush1.bf16.msra.mxu0 0
    %1931 = vmatprep.subr.bf16.mxu0 0
    %1932 = vmatpush1.bf16.msra.mxu0 0
    %1933 = vmatprep.subr.bf16.mxu0 0
    %1934 = vmatpush1.bf16.msra.mxu0 0
    %1935 = vmatprep.subr.bf16.mxu0 0
    %1936 = vmatpush1.bf16.msra.mxu0 0
    %1937 = vmatprep.subr.bf16.mxu0 0
    %1938 = vmatpush1.bf16.msra.mxu0 0
    %1939 = vmatprep.subr.bf16.mxu0 0
    %1940 = vmatpush1.bf16.msra.mxu0 0
    %1941 = vmatprep.subr.bf16.mxu0 0
    %1942 = vmatpush1.bf16.msra.mxu0 0
    %1943 = vmatprep.subr.bf16.mxu0 0
    %1944 = vmatpush1.bf16.msra.mxu0 0
    %1945 = vmatprep.mubr.bf16.mxu0 0
    %1946 = vmatmul.mubr.bf16.gmra.mrb[0].mxu0 %v1905
    %v1947 = vpop.f32.mrb[0].mxu0
    %v1948 = vadd.f32 0.0, %v1947
    %v1949 = vpop.f32.mrb[0].mxu0
    %v1950 = vpop.f32.mrb[0].mxu0
    %v1951 = vadd.f32 0.0, %v1950
    %v1952 = vpop.f32.mrb[0].mxu0
    %1953 = vmatprep.mubr.bf16.mxu0 0
    %1954 = vmatmul.mubr.bf16.gmra.mrb[0].mxu0 %v1908
    %v1955 = vpop.f32.mrb[0].mxu0
    %v1956 = vadd.f32 0.0, %v1955
    %v1957 = vpop.f32.mrb[0].mxu0
    %v1958 = vpop.f32.mrb[0].mxu0
    %v1959 = vpop.f32.mrb[0].mxu0
    %1960 = vdwg.mxu0
    %1963 = vrot.lane.b32.xlu0 %v680, 112
    %v1964 = vpop.permute.xlu0 %1963
    %1965 = vrot.lane.b32.xlu0 %v681, 112
    %v1966 = vpop.permute.xlu0 %1965
    %v1969 = vsel %vm947, %v1767, 0
    %v1972 = vsel %vm947, %v1768, 0
    %v1975 = vsel %vm1094, %v1966, 0
    %1977 = vmatprep.subr.bf16.mxu0 0
    %1978 = vmatpush1.bf16.msra.mxu0 %v1964
    %1979 = vmatprep.subr.bf16.mxu0 0
    %1980 = vmatpush1.bf16.msra.mxu0 %v1975
    %1981 = vmatprep.subr.bf16.mxu0 0
    %1982 = vmatpush1.bf16.msra.mxu0 0
    %1983 = vmatprep.subr.bf16.mxu0 0
    %1984 = vmatpush1.bf16.msra.mxu0 0
    %1985 = vmatprep.subr.bf16.mxu0 0
    %1986 = vmatpush1.bf16.msra.mxu0 0
    %1987 = vmatprep.subr.bf16.mxu0 0
    %1988 = vmatpush1.bf16.msra.mxu0 0
    %1989 = vmatprep.subr.bf16.mxu0 0
    %1990 = vmatpush1.bf16.msra.mxu0 0
    %1991 = vmatprep.subr.bf16.mxu0 0
    %1992 = vmatpush1.bf16.msra.mxu0 0
    %1993 = vmatprep.subr.bf16.mxu0 0
    %1994 = vmatpush1.bf16.msra.mxu0 0
    %1995 = vmatprep.subr.bf16.mxu0 0
    %1996 = vmatpush1.bf16.msra.mxu0 0
    %1997 = vmatprep.subr.bf16.mxu0 0
    %1998 = vmatpush1.bf16.msra.mxu0 0
    %1999 = vmatprep.subr.bf16.mxu0 0
    %2000 = vmatpush1.bf16.msra.mxu0 0
    %2001 = vmatprep.subr.bf16.mxu0 0
    %2002 = vmatpush1.bf16.msra.mxu0 0
    %2003 = vmatprep.subr.bf16.mxu0 0
    %2004 = vmatpush1.bf16.msra.mxu0 0
    %2005 = vmatprep.subr.bf16.mxu0 0
    %2006 = vmatpush1.bf16.msra.mxu0 0
    %2007 = vmatprep.subr.bf16.mxu0 0
    %2008 = vmatpush1.bf16.msra.mxu0 0
    %2009 = vmatprep.mubr.bf16.mxu0 0
    %2010 = vmatmul.mubr.bf16.gmra.mrb[0].mxu0 %v1969
    %v2011 = vpop.f32.mrb[0].mxu0
    %v2012 = vadd.f32 0.0, %v2011
    %v2013 = vpop.f32.mrb[0].mxu0
    %v2014 = vpop.f32.mrb[0].mxu0
    %v2015 = vadd.f32 0.0, %v2014
    %v2016 = vpop.f32.mrb[0].mxu0
    %2017 = vmatprep.mubr.bf16.mxu0 0
    %2018 = vmatmul.mubr.bf16.gmra.mrb[0].mxu0 %v1972
    %v2019 = vpop.f32.mrb[0].mxu0
    %v2020 = vadd.f32 0.0, %v2019
    %v2021 = vpop.f32.mrb[0].mxu0
    %v2022 = vpop.f32.mrb[0].mxu0
    %v2023 = vpop.f32.mrb[0].mxu0
    %2024 = vdwg.mxu0
    %2025 = vrot.lane.b32.xlu0 %v658, 96
    %v2026 = vpop.permute.xlu0 %2025
    %2027 = vrot.lane.b32.xlu0 %v659, 96
    %v2028 = vpop.permute.xlu0 %2027
    %2029 = vrot.lane.b32.xlu0 %v666, 96
    %v2030 = vpop.permute.xlu0 %2029
    %2031 = vrot.lane.b32.xlu0 %v667, 96
    %v2032 = vpop.permute.xlu0 %2031
    %v2034 = vsel %vm682, %v2026, 0
    %v2037 = vsel %vm682, %v2028, 0
    %v2040 = vsel %vm682, %v2030, 0
    %v2043 = vsel %vm682, %v2032, 0
    %2045 = vmatprep.subr.bf16.mxu0 0
    %2046 = vmatpush1.bf16.xpose.msra.mxu0 %v2040
    %2047 = vmatprep.subr.bf16.mxu0 0
    %2048 = vmatpush1.bf16.xpose.msra.mxu0 %v2043
    %2049 = vmatprep.subr.bf16.mxu0 0
    %2050 = vmatpush1.bf16.xpose.msra.mxu0 0
    %2051 = vmatprep.subr.bf16.mxu0 0
    %2052 = vmatpush1.bf16.xpose.msra.mxu0 0
    %2053 = vmatprep.subr.bf16.mxu0 0
    %2054 = vmatpush1.bf16.xpose.msra.mxu0 0
    %2055 = vmatprep.subr.bf16.mxu0 0
    %2056 = vmatpush1.bf16.xpose.msra.mxu0 0
    %2057 = vmatprep.subr.bf16.mxu0 0
    %2058 = vmatpush1.bf16.xpose.msra.mxu0 0
    %2059 = vmatprep.subr.bf16.mxu0 0
    %2060 = vmatpush1.bf16.xpose.msra.mxu0 0
    %2061 = vmatprep.subr.bf16.mxu0 0
    %2062 = vmatpush1.bf16.xpose.msra.mxu0 0
    %2063 = vmatprep.subr.bf16.mxu0 0
    %2064 = vmatpush1.bf16.xpose.msra.mxu0 0
    %2065 = vmatprep.subr.bf16.mxu0 0
    %2066 = vmatpush1.bf16.xpose.msra.mxu0 0
    %2067 = vmatprep.subr.bf16.mxu0 0
    %2068 = vmatpush1.bf16.xpose.msra.mxu0 0
    %2069 = vmatprep.subr.bf16.mxu0 0
    %2070 = vmatpush1.bf16.xpose.msra.mxu0 0
    %2071 = vmatprep.subr.bf16.mxu0 0
    %2072 = vmatpush1.bf16.xpose.msra.mxu0 0
    %2073 = vmatprep.subr.bf16.mxu0 0
    %2074 = vmatpush1.bf16.xpose.msra.mxu0 0
    %2075 = vmatprep.subr.bf16.mxu0 0
    %2076 = vmatpush1.bf16.xpose.msra.mxu0 0
    %2077 = vmatprep.mubr.bf16.mxu0 0
    %2078 = vmatmul.mubr.bf16.gmra.mrb[0].mxu0 %v2034
    %v2079 = vpop.f32.mrb[0].mxu0
    %v2080 = vadd.f32 0.0, %v2079
    %v2081 = vpop.f32.mrb[0].mxu0
    %v2082 = vpop.f32.mrb[0].mxu0
    %v2083 = vadd.f32 0.0, %v2082
    %v2084 = vpop.f32.mrb[0].mxu0
    %2085 = vmatprep.mubr.bf16.mxu0 0
    %2086 = vmatmul.mubr.bf16.gmra.mrb[0].mxu0 %v2037
    %v2087 = vpop.f32.mrb[0].mxu0
    %v2088 = vadd.f32 0.0, %v2087
    %v2089 = vpop.f32.mrb[0].mxu0
    %v2090 = vpop.f32.mrb[0].mxu0
    %v2091 = vpop.f32.mrb[0].mxu0
    %2092 = vdwg.mxu0
    %2093 = vrot.lane.b32.xlu0 %v660, 96
    %v2094 = vpop.permute.xlu0 %2093
    %2095 = vrot.lane.b32.xlu0 %v661, 96
    %v2096 = vpop.permute.xlu0 %2095
    %2097 = vrot.lane.b32.xlu0 %v668, 96
    %v2098 = vpop.permute.xlu0 %2097
    %2099 = vrot.lane.b32.xlu0 %v669, 96
    %v2100 = vpop.permute.xlu0 %2099
    %v2102 = vsel %vm682, %v2094, 0
    %v2105 = vsel %vm682, %v2096, 0
    %v2108 = vsel %vm682, %v2098, 0
    %v2111 = vsel %vm682, %v2100, 0
    %2113 = vmatprep.subr.bf16.mxu0 0
    %2114 = vmatpush1.bf16.xpose.msra.mxu0 %v2108
    %2115 = vmatprep.subr.bf16.mxu0 0
    %2116 = vmatpush1.bf16.xpose.msra.mxu0 %v2111
    %2117 = vmatprep.subr.bf16.mxu0 0
    %2118 = vmatpush1.bf16.xpose.msra.mxu0 0
    %2119 = vmatprep.subr.bf16.mxu0 0
    %2120 = vmatpush1.bf16.xpose.msra.mxu0 0
    %2121 = vmatprep.subr.bf16.mxu0 0
    %2122 = vmatpush1.bf16.xpose.msra.mxu0 0
    %2123 = vmatprep.subr.bf16.mxu0 0
    %2124 = vmatpush1.bf16.xpose.msra.mxu0 0
    %2125 = vmatprep.subr.bf16.mxu0 0
    %2126 = vmatpush1.bf16.xpose.msra.mxu0 0
    %2127 = vmatprep.subr.bf16.mxu0 0
    %2128 = vmatpush1.bf16.xpose.msra.mxu0 0
    %2129 = vmatprep.subr.bf16.mxu0 0
    %2130 = vmatpush1.bf16.xpose.msra.mxu0 0
    %2131 = vmatprep.subr.bf16.mxu0 0
    %2132 = vmatpush1.bf16.xpose.msra.mxu0 0
    %2133 = vmatprep.subr.bf16.mxu0 0
    %2134 = vmatpush1.bf16.xpose.msra.mxu0 0
    %2135 = vmatprep.subr.bf16.mxu0 0
    %2136 = vmatpush1.bf16.xpose.msra.mxu0 0
    %2137 = vmatprep.subr.bf16.mxu0 0
    %2138 = vmatpush1.bf16.xpose.msra.mxu0 0
    %2139 = vmatprep.subr.bf16.mxu0 0
    %2140 = vmatpush1.bf16.xpose.msra.mxu0 0
    %2141 = vmatprep.subr.bf16.mxu0 0
    %2142 = vmatpush1.bf16.xpose.msra.mxu0 0
    %2143 = vmatprep.subr.bf16.mxu0 0
    %2144 = vmatpush1.bf16.xpose.msra.mxu0 0
    %2145 = vmatprep.mubr.bf16.mxu0 0
    %2146 = vmatmul.mubr.bf16.gmra.mrb[0].mxu0 %v2102
    %v2147 = vpop.f32.mrb[0].mxu0
    %v2148 = vadd.f32 0.0, %v2147
    %v2149 = vpop.f32.mrb[0].mxu0
    %v2150 = vpop.f32.mrb[0].mxu0
    %v2151 = vadd.f32 0.0, %v2150
    %v2152 = vpop.f32.mrb[0].mxu0
    %2153 = vmatprep.mubr.bf16.mxu0 0
    %2154 = vmatmul.mubr.bf16.gmra.mrb[0].mxu0 %v2105
    %v2155 = vpop.f32.mrb[0].mxu0
    %v2156 = vadd.f32 0.0, %v2155
    %v2157 = vpop.f32.mrb[0].mxu0
    %v2158 = vpop.f32.mrb[0].mxu0
    %v2159 = vpop.f32.mrb[0].mxu0
    %2160 = vdwg.mxu0
    %2161 = vrot.lane.b32.xlu0 %v662, 96
    %v2162 = vpop.permute.xlu0 %2161
    %2163 = vrot.lane.b32.xlu0 %v663, 96
    %v2164 = vpop.permute.xlu0 %2163
    %2165 = vrot.lane.b32.xlu0 %v670, 96
    %v2166 = vpop.permute.xlu0 %2165
    %2167 = vrot.lane.b32.xlu0 %v671, 96
    %v2168 = vpop.permute.xlu0 %2167
    %v2170 = vsel %vm682, %v2162, 0
    %v2173 = vsel %vm682, %v2164, 0
    %v2176 = vsel %vm682, %v2166, 0
    %v2179 = vsel %vm682, %v2168, 0
    %2181 = vmatprep.subr.bf16.mxu0 0
    %2182 = vmatpush1.bf16.xpose.msra.mxu0 %v2176
    %2183 = vmatprep.subr.bf16.mxu0 0
    %2184 = vmatpush1.bf16.xpose.msra.mxu0 %v2179
    %2185 = vmatprep.subr.bf16.mxu0 0
    %2186 = vmatpush1.bf16.xpose.msra.mxu0 0
    %2187 = vmatprep.subr.bf16.mxu0 0
    %2188 = vmatpush1.bf16.xpose.msra.mxu0 0
    %2189 = vmatprep.subr.bf16.mxu0 0
    %2190 = vmatpush1.bf16.xpose.msra.mxu0 0
    %2191 = vmatprep.subr.bf16.mxu0 0
    %2192 = vmatpush1.bf16.xpose.msra.mxu0 0
    %2193 = vmatprep.subr.bf16.mxu0 0
    %2194 = vmatpush1.bf16.xpose.msra.mxu0 0
    %2195 = vmatprep.subr.bf16.mxu0 0
    %2196 = vmatpush1.bf16.xpose.msra.mxu0 0
    %2197 = vmatprep.subr.bf16.mxu0 0
    %2198 = vmatpush1.bf16.xpose.msra.mxu0 0
    %2199 = vmatprep.subr.bf16.mxu0 0
    %2200 = vmatpush1.bf16.xpose.msra.mxu0 0
    %2201 = vmatprep.subr.bf16.mxu0 0
    %2202 = vmatpush1.bf16.xpose.msra.mxu0 0
    %2203 = vmatprep.subr.bf16.mxu0 0
    %2204 = vmatpush1.bf16.xpose.msra.mxu0 0
    %2205 = vmatprep.subr.bf16.mxu0 0
    %2206 = vmatpush1.bf16.xpose.msra.mxu0 0
    %2207 = vmatprep.subr.bf16.mxu0 0
    %2208 = vmatpush1.bf16.xpose.msra.mxu0 0
    %2209 = vmatprep.subr.bf16.mxu0 0
    %2210 = vmatpush1.bf16.xpose.msra.mxu0 0
    %2211 = vmatprep.subr.bf16.mxu0 0
    %2212 = vmatpush1.bf16.xpose.msra.mxu0 0
    %2213 = vmatprep.mubr.bf16.mxu0 0
    %2214 = vmatmul.mubr.bf16.gmra.mrb[0].mxu0 %v2170
    %v2215 = vpop.f32.mrb[0].mxu0
    %v2216 = vadd.f32 0.0, %v2215
    %v2217 = vpop.f32.mrb[0].mxu0
    %v2218 = vpop.f32.mrb[0].mxu0
    %v2219 = vadd.f32 0.0, %v2218
    %v2220 = vpop.f32.mrb[0].mxu0
    %2221 = vmatprep.mubr.bf16.mxu0 0
    %2222 = vmatmul.mubr.bf16.gmra.mrb[0].mxu0 %v2173
    %v2223 = vpop.f32.mrb[0].mxu0
    %v2224 = vadd.f32 0.0, %v2223
    %v2225 = vpop.f32.mrb[0].mxu0
    %v2226 = vpop.f32.mrb[0].mxu0
    %v2227 = vpop.f32.mrb[0].mxu0
    %2228 = vdwg.mxu0
    %2229 = vrot.lane.b32.xlu0 %v664, 96
    %v2230 = vpop.permute.xlu0 %2229
    %2231 = vrot.lane.b32.xlu0 %v665, 96
    %v2232 = vpop.permute.xlu0 %2231
    %2233 = vrot.lane.b32.xlu0 %v672, 96
    %v2234 = vpop.permute.xlu0 %2233
    %2235 = vrot.lane.b32.xlu0 %v673, 96
    %v2236 = vpop.permute.xlu0 %2235
    %v2238 = vsel %vm682, %v2230, 0
    %v2241 = vsel %vm682, %v2232, 0
    %v2244 = vsel %vm682, %v2234, 0
    %v2247 = vsel %vm682, %v2236, 0
    %2249 = vmatprep.subr.bf16.mxu0 0
    %2250 = vmatpush1.bf16.xpose.msra.mxu0 %v2244
    %2251 = vmatprep.subr.bf16.mxu0 0
    %2252 = vmatpush1.bf16.xpose.msra.mxu0 %v2247
    %2253 = vmatprep.subr.bf16.mxu0 0
    %2254 = vmatpush1.bf16.xpose.msra.mxu0 0
    %2255 = vmatprep.subr.bf16.mxu0 0
    %2256 = vmatpush1.bf16.xpose.msra.mxu0 0
    %2257 = vmatprep.subr.bf16.mxu0 0
    %2258 = vmatpush1.bf16.xpose.msra.mxu0 0
    %2259 = vmatprep.subr.bf16.mxu0 0
    %2260 = vmatpush1.bf16.xpose.msra.mxu0 0
    %2261 = vmatprep.subr.bf16.mxu0 0
    %2262 = vmatpush1.bf16.xpose.msra.mxu0 0
    %2263 = vmatprep.subr.bf16.mxu0 0
    %2264 = vmatpush1.bf16.xpose.msra.mxu0 0
    %2265 = vmatprep.subr.bf16.mxu0 0
    %2266 = vmatpush1.bf16.xpose.msra.mxu0 0
    %2267 = vmatprep.subr.bf16.mxu0 0
    %2268 = vmatpush1.bf16.xpose.msra.mxu0 0
    %2269 = vmatprep.subr.bf16.mxu0 0
    %2270 = vmatpush1.bf16.xpose.msra.mxu0 0
    %2271 = vmatprep.subr.bf16.mxu0 0
    %2272 = vmatpush1.bf16.xpose.msra.mxu0 0
    %2273 = vmatprep.subr.bf16.mxu0 0
    %2274 = vmatpush1.bf16.xpose.msra.mxu0 0
    %2275 = vmatprep.subr.bf16.mxu0 0
    %2276 = vmatpush1.bf16.xpose.msra.mxu0 0
    %2277 = vmatprep.subr.bf16.mxu0 0
    %2278 = vmatpush1.bf16.xpose.msra.mxu0 0
    %2279 = vmatprep.subr.bf16.mxu0 0
    %2280 = vmatpush1.bf16.xpose.msra.mxu0 0
    %2281 = vmatprep.mubr.bf16.mxu0 0
    %2282 = vmatmul.mubr.bf16.gmra.mrb[0].mxu0 %v2238
    %v2283 = vpop.f32.mrb[0].mxu0
    %v2284 = vadd.f32 0.0, %v2283
    %v2285 = vpop.f32.mrb[0].mxu0
    %v2286 = vpop.f32.mrb[0].mxu0
    %v2287 = vadd.f32 0.0, %v2286
    %v2288 = vpop.f32.mrb[0].mxu0
    %2289 = vmatprep.mubr.bf16.mxu0 0
    %2290 = vmatmul.mubr.bf16.gmra.mrb[0].mxu0 %v2241
    %v2291 = vpop.f32.mrb[0].mxu0
    %v2292 = vadd.f32 0.0, %v2291
    %v2293 = vpop.f32.mrb[0].mxu0
    %v2294 = vpop.f32.mrb[0].mxu0
    %v2295 = vpop.f32.mrb[0].mxu0
    %2296 = vdwg.mxu0
    %v2297 = vmul.f32 %v2080, 0.25
    %v2298 = vmul.f32 %v2083, 0.25
    %v2299 = vmul.f32 %v2088, 0.25
    %v2300 = vmul.f32 %v2148, 0.25
    %v2301 = vmul.f32 %v2151, 0.25
    %v2302 = vmul.f32 %v2156, 0.25
    %v2303 = vmul.f32 %v2216, 0.25
    %v2304 = vmul.f32 %v2219, 0.25
    %v2305 = vmul.f32 %v2224, 0.25
    %v2306 = vmul.f32 %v2284, 0.25
    %v2307 = vmul.f32 %v2287, 0.25
    %v2308 = vmul.f32 %v2292, 0.25
    %v2309 = vadd.f32 %v2297, %v73
    %v2310 = vadd.f32 %v2298, %v73
    %v2311 = vadd.f32 %v2299, %v73
    %v2312 = vadd.f32 %v2300, %v73
    %v2313 = vadd.f32 %v2301, %v73
    %v2314 = vadd.f32 %v2302, %v73
    %v2315 = vadd.f32 %v2303, %v73
    %v2316 = vadd.f32 %v2304, %v73
    %v2317 = vadd.f32 %v2305, %v73
    %v2318 = vadd.f32 %v2306, %v73
    %v2319 = vadd.f32 %v2307, %v73
    %v2320 = vadd.f32 %v2308, %v73
    %v2321 = vsel %vm947, %v2309, -inf
    %2322 = vmax.xlane.f32.xlu0 %v2321
    %v2323 = vpop.xlane.xlu0 %2322
    %v2324 = vsel %vm947, %v2310, -inf
    %2325 = vmax.xlane.f32.xlu0 %v2324
    %v2326 = vpop.xlane.xlu0 %2325
    %v2327 = vsel %vm947, %v2311, -inf
    %2328 = vmax.xlane.f32.xlu0 %v2327
    %v2329 = vpop.xlane.xlu0 %2328
    %v2330 = vsel %vm947, %v2312, -inf
    %2331 = vmax.xlane.f32.xlu0 %v2330
    %v2332 = vpop.xlane.xlu0 %2331
    %v2333 = vsel %vm947, %v2313, -inf
    %2334 = vmax.xlane.f32.xlu0 %v2333
    %v2335 = vpop.xlane.xlu0 %2334
    %v2336 = vsel %vm947, %v2314, -inf
    %2337 = vmax.xlane.f32.xlu0 %v2336
    %v2338 = vpop.xlane.xlu0 %2337
    %v2339 = vsel %vm947, %v2315, -inf
    %2340 = vmax.xlane.f32.xlu0 %v2339
    %v2341 = vpop.xlane.xlu0 %2340
    %v2342 = vsel %vm947, %v2316, -inf
    %2343 = vmax.xlane.f32.xlu0 %v2342
    %v2344 = vpop.xlane.xlu0 %2343
    %v2345 = vsel %vm947, %v2317, -inf
    %2346 = vmax.xlane.f32.xlu0 %v2345
    %v2347 = vpop.xlane.xlu0 %2346
    %v2348 = vsel %vm947, %v2318, -inf
    %2349 = vmax.xlane.f32.xlu0 %v2348
    %v2350 = vpop.xlane.xlu0 %2349
    %v2351 = vsel %vm947, %v2319, -inf
    %2352 = vmax.xlane.f32.xlu0 %v2351
    %v2353 = vpop.xlane.xlu0 %2352
    %v2354 = vsel %vm947, %v2320, -inf
    %2355 = vmax.xlane.f32.xlu0 %v2354
    %v2356 = vpop.xlane.xlu0 %2355
    %v2357 = vsub.f32 %v2309, %v2323
    %v2358 = vsub.f32 %v2310, %v2326
    %v2359 = vsub.f32 %v2311, %v2329
    %v2360 = vsub.f32 %v2312, %v2332
    %v2361 = vsub.f32 %v2313, %v2335
    %v2362 = vsub.f32 %v2314, %v2338
    %v2363 = vsub.f32 %v2315, %v2341
    %v2364 = vsub.f32 %v2316, %v2344
    %v2365 = vsub.f32 %v2317, %v2347
    %v2366 = vsub.f32 %v2318, %v2350
    %v2367 = vsub.f32 %v2319, %v2353
    %v2368 = vsub.f32 %v2320, %v2356
    %v2369 = vmul.f32 %v2357, 1.442695
    %v2370 = vpow.pop %v2369
    %v2371 = vmul.f32 %v2358, 1.442695
    %v2372 = vpow.pop %v2371
    %v2373 = vmul.f32 %v2359, 1.442695
    %v2374 = vpow.pop %v2373
    %v2375 = vmul.f32 %v2360, 1.442695
    %v2376 = vpow.pop %v2375
    %v2377 = vmul.f32 %v2361, 1.442695
    %v2378 = vpow.pop %v2377
    %v2379 = vmul.f32 %v2362, 1.442695
    %v2380 = vpow.pop %v2379
    %v2381 = vmul.f32 %v2363, 1.442695
    %v2382 = vpow.pop %v2381
    %v2383 = vmul.f32 %v2364, 1.442695
    %v2384 = vpow.pop %v2383
    %v2385 = vmul.f32 %v2365, 1.442695
    %v2386 = vpow.pop %v2385
    %v2387 = vmul.f32 %v2366, 1.442695
    %v2388 = vpow.pop %v2387
    %v2389 = vmul.f32 %v2367, 1.442695
    %v2390 = vpow.pop %v2389
    %v2391 = vmul.f32 %v2368, 1.442695
    %v2392 = vpow.pop %v2391
    %v2393 = vsel %vm947, %v2370, 0.0
    %2394 = vadd.xlane.f32.xlu0 %v2393
    %v2395 = vpop.xlane.xlu0 %2394
    %v2396 = vsel %vm947, %v2372, 0.0
    %2397 = vadd.xlane.f32.xlu0 %v2396
    %v2398 = vpop.xlane.xlu0 %2397
    %v2399 = vsel %vm947, %v2374, 0.0
    %2400 = vadd.xlane.f32.xlu0 %v2399
    %v2401 = vpop.xlane.xlu0 %2400
    %v2402 = vsel %vm947, %v2376, 0.0
    %2403 = vadd.xlane.f32.xlu0 %v2402
    %v2404 = vpop.xlane.xlu0 %2403
    %v2405 = vsel %vm947, %v2378, 0.0
    %2406 = vadd.xlane.f32.xlu0 %v2405
    %v2407 = vpop.xlane.xlu0 %2406
    %v2408 = vsel %vm947, %v2380, 0.0
    %2409 = vadd.xlane.f32.xlu0 %v2408
    %v2410 = vpop.xlane.xlu0 %2409
    %v2411 = vsel %vm947, %v2382, 0.0
    %2412 = vadd.xlane.f32.xlu0 %v2411
    %v2413 = vpop.xlane.xlu0 %2412
    %v2414 = vsel %vm947, %v2384, 0.0
    %2415 = vadd.xlane.f32.xlu0 %v2414
    %v2416 = vpop.xlane.xlu0 %2415
    %v2417 = vsel %vm947, %v2386, 0.0
    %2418 = vadd.xlane.f32.xlu0 %v2417
    %v2419 = vpop.xlane.xlu0 %2418
    %v2420 = vsel %vm947, %v2388, 0.0
    %2421 = vadd.xlane.f32.xlu0 %v2420
    %v2422 = vpop.xlane.xlu0 %2421
    %v2423 = vsel %vm947, %v2390, 0.0
    %2424 = vadd.xlane.f32.xlu0 %v2423
    %v2425 = vpop.xlane.xlu0 %2424
    %v2426 = vsel %vm947, %v2392, 0.0
    %2427 = vadd.xlane.f32.xlu0 %v2426
    %v2428 = vpop.xlane.xlu0 %2427
    %v2429 = vrcp.pop %v2395
    %v2430 = vrcp.pop %v2398
    %v2431 = vrcp.pop %v2401
    %v2432 = vrcp.pop %v2404
    %v2433 = vrcp.pop %v2407
    %v2434 = vrcp.pop %v2410
    %v2435 = vrcp.pop %v2413
    %v2436 = vrcp.pop %v2416
    %v2437 = vrcp.pop %v2419
    %v2438 = vrcp.pop %v2422
    %v2439 = vrcp.pop %v2425
    %v2440 = vrcp.pop %v2428
    %v2441 = vmul.f32 %v2370, %v2429
    %v2442 = vmul.f32 %v2372, %v2430
    %v2443 = vmul.f32 %v2374, %v2431
    %v2444 = vmul.f32 %v2376, %v2432
    %v2445 = vmul.f32 %v2378, %v2433
    %v2446 = vmul.f32 %v2380, %v2434
    %v2447 = vmul.f32 %v2382, %v2435
    %v2448 = vmul.f32 %v2384, %v2436
    %v2449 = vmul.f32 %v2386, %v2437
    %v2450 = vmul.f32 %v2388, %v2438
    %v2451 = vmul.f32 %v2390, %v2439
    %v2452 = vmul.f32 %v2392, %v2440
    %v2453 = vpack.c.bf16 %v2442, %v2441
    %v2454 = vpack.c.bf16 %v2443, %v2443
    %v2455 = vpack.c.bf16 %v2445, %v2444
    %v2456 = vpack.c.bf16 %v2446, %v2446
    %v2457 = vpack.c.bf16 %v2448, %v2447
    %v2458 = vpack.c.bf16 %v2449, %v2449
    %v2459 = vpack.c.bf16 %v2451, %v2450
    %v2460 = vpack.c.bf16 %v2452, %v2452
    %2461 = vrot.lane.b32.xlu0 %v674, 96
    %v2462 = vpop.permute.xlu0 %2461
    %2463 = vrot.lane.b32.xlu0 %v675, 96
    %v2464 = vpop.permute.xlu0 %2463
    %v2467 = vsel %vm947, %v2453, 0
    %v2470 = vsel %vm947, %v2454, 0
    %v2473 = vsel %vm1094, %v2464, 0
    %2475 = vmatprep.subr.bf16.mxu0 0
    %2476 = vmatpush1.bf16.msra.mxu0 %v2462
    %2477 = vmatprep.subr.bf16.mxu0 0
    %2478 = vmatpush1.bf16.msra.mxu0 %v2473
    %2479 = vmatprep.subr.bf16.mxu0 0
    %2480 = vmatpush1.bf16.msra.mxu0 0
    %2481 = vmatprep.subr.bf16.mxu0 0
    %2482 = vmatpush1.bf16.msra.mxu0 0
    %2483 = vmatprep.subr.bf16.mxu0 0
    %2484 = vmatpush1.bf16.msra.mxu0 0
    %2485 = vmatprep.subr.bf16.mxu0 0
    %2486 = vmatpush1.bf16.msra.mxu0 0
    %2487 = vmatprep.subr.bf16.mxu0 0
    %2488 = vmatpush1.bf16.msra.mxu0 0
    %2489 = vmatprep.subr.bf16.mxu0 0
    %2490 = vmatpush1.bf16.msra.mxu0 0
    %2491 = vmatprep.subr.bf16.mxu0 0
    %2492 = vmatpush1.bf16.msra.mxu0 0
    %2493 = vmatprep.subr.bf16.mxu0 0
    %2494 = vmatpush1.bf16.msra.mxu0 0
    %2495 = vmatprep.subr.bf16.mxu0 0
    %2496 = vmatpush1.bf16.msra.mxu0 0
    %2497 = vmatprep.subr.bf16.mxu0 0
    %2498 = vmatpush1.bf16.msra.mxu0 0
    %2499 = vmatprep.subr.bf16.mxu0 0
    %2500 = vmatpush1.bf16.msra.mxu0 0
    %2501 = vmatprep.subr.bf16.mxu0 0
    %2502 = vmatpush1.bf16.msra.mxu0 0
    %2503 = vmatprep.subr.bf16.mxu0 0
    %2504 = vmatpush1.bf16.msra.mxu0 0
    %2505 = vmatprep.subr.bf16.mxu0 0
    %2506 = vmatpush1.bf16.msra.mxu0 0
    %2507 = vmatprep.mubr.bf16.mxu0 0
    %2508 = vmatmul.mubr.bf16.gmra.mrb[0].mxu0 %v2467
    %v2509 = vpop.f32.mrb[0].mxu0
    %v2510 = vadd.f32 0.0, %v2509
    %v2511 = vpop.f32.mrb[0].mxu0
    %v2512 = vpop.f32.mrb[0].mxu0
    %v2513 = vadd.f32 0.0, %v2512
    %v2514 = vpop.f32.mrb[0].mxu0
    %2515 = vmatprep.mubr.bf16.mxu0 0
    %2516 = vmatmul.mubr.bf16.gmra.mrb[0].mxu0 %v2470
    %v2517 = vpop.f32.mrb[0].mxu0
    %v2518 = vadd.f32 0.0, %v2517
    %v2519 = vpop.f32.mrb[0].mxu0
    %v2520 = vpop.f32.mrb[0].mxu0
    %v2521 = vpop.f32.mrb[0].mxu0
    %2522 = vdwg.mxu0
    %2523 = vrot.lane.b32.xlu0 %v676, 96
    %v2524 = vpop.permute.xlu0 %2523
    %2525 = vrot.lane.b32.xlu0 %v677, 96
    %v2526 = vpop.permute.xlu0 %2525
    %v2529 = vsel %vm947, %v2455, 0
    %v2532 = vsel %vm947, %v2456, 0
    %v2535 = vsel %vm1094, %v2526, 0
    %2537 = vmatprep.subr.bf16.mxu0 0
    %2538 = vmatpush1.bf16.msra.mxu0 %v2524
    %2539 = vmatprep.subr.bf16.mxu0 0
    %2540 = vmatpush1.bf16.msra.mxu0 %v2535
    %2541 = vmatprep.subr.bf16.mxu0 0
    %2542 = vmatpush1.bf16.msra.mxu0 0
    %2543 = vmatprep.subr.bf16.mxu0 0
    %2544 = vmatpush1.bf16.msra.mxu0 0
    %2545 = vmatprep.subr.bf16.mxu0 0
    %2546 = vmatpush1.bf16.msra.mxu0 0
    %2547 = vmatprep.subr.bf16.mxu0 0
    %2548 = vmatpush1.bf16.msra.mxu0 0
    %2549 = vmatprep.subr.bf16.mxu0 0
    %2550 = vmatpush1.bf16.msra.mxu0 0
    %2551 = vmatprep.subr.bf16.mxu0 0
    %2552 = vmatpush1.bf16.msra.mxu0 0
    %2553 = vmatprep.subr.bf16.mxu0 0
    %2554 = vmatpush1.bf16.msra.mxu0 0
    %2555 = vmatprep.subr.bf16.mxu0 0
    %2556 = vmatpush1.bf16.msra.mxu0 0
    %2557 = vmatprep.subr.bf16.mxu0 0
    %2558 = vmatpush1.bf16.msra.mxu0 0
    %2559 = vmatprep.subr.bf16.mxu0 0
    %2560 = vmatpush1.bf16.msra.mxu0 0
    %2561 = vmatprep.subr.bf16.mxu0 0
    %2562 = vmatpush1.bf16.msra.mxu0 0
    %2563 = vmatprep.subr.bf16.mxu0 0
    %2564 = vmatpush1.bf16.msra.mxu0 0
    %2565 = vmatprep.subr.bf16.mxu0 0
    %2566 = vmatpush1.bf16.msra.mxu0 0
    %2567 = vmatprep.subr.bf16.mxu0 0
    %2568 = vmatpush1.bf16.msra.mxu0 0
    %2569 = vmatprep.mubr.bf16.mxu0 0
    %2570 = vmatmul.mubr.bf16.gmra.mrb[0].mxu0 %v2529
    %v2571 = vpop.f32.mrb[0].mxu0
    %v2572 = vadd.f32 0.0, %v2571
    %v2573 = vpop.f32.mrb[0].mxu0
    %v2574 = vpop.f32.mrb[0].mxu0
    %v2575 = vadd.f32 0.0, %v2574
    %v2576 = vpop.f32.mrb[0].mxu0
    %2577 = vmatprep.mubr.bf16.mxu0 0
    %2578 = vmatmul.mubr.bf16.gmra.mrb[0].mxu0 %v2532
    %v2579 = vpop.f32.mrb[0].mxu0
    %v2580 = vadd.f32 0.0, %v2579
    %v2581 = vpop.f32.mrb[0].mxu0
    %v2582 = vpop.f32.mrb[0].mxu0
    %v2583 = vpop.f32.mrb[0].mxu0
    %2584 = vdwg.mxu0
    %2585 = vrot.lane.b32.xlu0 %v678, 96
    %v2586 = vpop.permute.xlu0 %2585
    %2587 = vrot.lane.b32.xlu0 %v679, 96
    %v2588 = vpop.permute.xlu0 %2587
    %v2591 = vsel %vm947, %v2457, 0
    %v2594 = vsel %vm947, %v2458, 0
    %v2597 = vsel %vm1094, %v2588, 0
    %2599 = vmatprep.subr.bf16.mxu0 0
    %2600 = vmatpush1.bf16.msra.mxu0 %v2586
    %2601 = vmatprep.subr.bf16.mxu0 0
    %2602 = vmatpush1.bf16.msra.mxu0 %v2597
    %2603 = vmatprep.subr.bf16.mxu0 0
    %2604 = vmatpush1.bf16.msra.mxu0 0
    %2605 = vmatprep.subr.bf16.mxu0 0
    %2606 = vmatpush1.bf16.msra.mxu0 0
    %2607 = vmatprep.subr.bf16.mxu0 0
    %2608 = vmatpush1.bf16.msra.mxu0 0
    %2609 = vmatprep.subr.bf16.mxu0 0
    %2610 = vmatpush1.bf16.msra.mxu0 0
    %2611 = vmatprep.subr.bf16.mxu0 0
    %2612 = vmatpush1.bf16.msra.mxu0 0
    %2613 = vmatprep.subr.bf16.mxu0 0
    %2614 = vmatpush1.bf16.msra.mxu0 0
    %2615 = vmatprep.subr.bf16.mxu0 0
    %2616 = vmatpush1.bf16.msra.mxu0 0
    %2617 = vmatprep.subr.bf16.mxu0 0
    %2618 = vmatpush1.bf16.msra.mxu0 0
    %2619 = vmatprep.subr.bf16.mxu0 0
    %2620 = vmatpush1.bf16.msra.mxu0 0
    %2621 = vmatprep.subr.bf16.mxu0 0
    %2622 = vmatpush1.bf16.msra.mxu0 0
    %2623 = vmatprep.subr.bf16.mxu0 0
    %2624 = vmatpush1.bf16.msra.mxu0 0
    %2625 = vmatprep.subr.bf16.mxu0 0
    %2626 = vmatpush1.bf16.msra.mxu0 0
    %2627 = vmatprep.subr.bf16.mxu0 0
    %2628 = vmatpush1.bf16.msra.mxu0 0
    %2629 = vmatprep.subr.bf16.mxu0 0
    %2630 = vmatpush1.bf16.msra.mxu0 0
    %2631 = vmatprep.mubr.bf16.mxu0 0
    %2632 = vmatmul.mubr.bf16.gmra.mrb[0].mxu0 %v2591
    %v2633 = vpop.f32.mrb[0].mxu0
    %v2634 = vadd.f32 0.0, %v2633
    %v2635 = vpop.f32.mrb[0].mxu0
    %v2636 = vpop.f32.mrb[0].mxu0
    %v2637 = vadd.f32 0.0, %v2636
    %v2638 = vpop.f32.mrb[0].mxu0
    %2639 = vmatprep.mubr.bf16.mxu0 0
    %2640 = vmatmul.mubr.bf16.gmra.mrb[0].mxu0 %v2594
    %v2641 = vpop.f32.mrb[0].mxu0
    %v2642 = vadd.f32 0.0, %v2641
    %v2643 = vpop.f32.mrb[0].mxu0
    %v2644 = vpop.f32.mrb[0].mxu0
    %v2645 = vpop.f32.mrb[0].mxu0
    %2646 = vdwg.mxu0
    %2647 = vrot.lane.b32.xlu0 %v680, 96
    %v2648 = vpop.permute.xlu0 %2647
    %2649 = vrot.lane.b32.xlu0 %v681, 96
    %v2650 = vpop.permute.xlu0 %2649
    %v2653 = vsel %vm947, %v2459, 0
    %v2656 = vsel %vm947, %v2460, 0
    %v2659 = vsel %vm1094, %v2650, 0
    %2661 = vmatprep.subr.bf16.mxu0 0
    %2662 = vmatpush1.bf16.msra.mxu0 %v2648
    %2663 = vmatprep.subr.bf16.mxu0 0
    %2664 = vmatpush1.bf16.msra.mxu0 %v2659
    %2665 = vmatprep.subr.bf16.mxu0 0
    %2666 = vmatpush1.bf16.msra.mxu0 0
    %2667 = vmatprep.subr.bf16.mxu0 0
    %2668 = vmatpush1.bf16.msra.mxu0 0
    %2669 = vmatprep.subr.bf16.mxu0 0
    %2670 = vmatpush1.bf16.msra.mxu0 0
    %2671 = vmatprep.subr.bf16.mxu0 0
    %2672 = vmatpush1.bf16.msra.mxu0 0
    %2673 = vmatprep.subr.bf16.mxu0 0
    %2674 = vmatpush1.bf16.msra.mxu0 0
    %2675 = vmatprep.subr.bf16.mxu0 0
    %2676 = vmatpush1.bf16.msra.mxu0 0
    %2677 = vmatprep.subr.bf16.mxu0 0
    %2678 = vmatpush1.bf16.msra.mxu0 0
    %2679 = vmatprep.subr.bf16.mxu0 0
    %2680 = vmatpush1.bf16.msra.mxu0 0
    %2681 = vmatprep.subr.bf16.mxu0 0
    %2682 = vmatpush1.bf16.msra.mxu0 0
    %2683 = vmatprep.subr.bf16.mxu0 0
    %2684 = vmatpush1.bf16.msra.mxu0 0
    %2685 = vmatprep.subr.bf16.mxu0 0
    %2686 = vmatpush1.bf16.msra.mxu0 0
    %2687 = vmatprep.subr.bf16.mxu0 0
    %2688 = vmatpush1.bf16.msra.mxu0 0
    %2689 = vmatprep.subr.bf16.mxu0 0
    %2690 = vmatpush1.bf16.msra.mxu0 0
    %2691 = vmatprep.subr.bf16.mxu0 0
    %2692 = vmatpush1.bf16.msra.mxu0 0
    %2693 = vmatprep.mubr.bf16.mxu0 0
    %2694 = vmatmul.mubr.bf16.gmra.mrb[0].mxu0 %v2653
    %v2695 = vpop.f32.mrb[0].mxu0
    %v2696 = vadd.f32 0.0, %v2695
    %v2697 = vpop.f32.mrb[0].mxu0
    %v2698 = vpop.f32.mrb[0].mxu0
    %v2699 = vadd.f32 0.0, %v2698
    %v2700 = vpop.f32.mrb[0].mxu0
    %2701 = vmatprep.mubr.bf16.mxu0 0
    %2702 = vmatmul.mubr.bf16.gmra.mrb[0].mxu0 %v2656
    %v2703 = vpop.f32.mrb[0].mxu0
    %v2704 = vadd.f32 0.0, %v2703
    %v2705 = vpop.f32.mrb[0].mxu0
    %v2706 = vpop.f32.mrb[0].mxu0
    %v2707 = vpop.f32.mrb[0].mxu0
    %2708 = vdwg.mxu0
    %2709 = vrot.lane.b32.xlu0 %v658, 80
    %v2710 = vpop.permute.xlu0 %2709
    %2711 = vrot.lane.b32.xlu0 %v659, 80
    %v2712 = vpop.permute.xlu0 %2711
    %2713 = vrot.lane.b32.xlu0 %v666, 80
    %v2714 = vpop.permute.xlu0 %2713
    %2715 = vrot.lane.b32.xlu0 %v667, 80
    %v2716 = vpop.permute.xlu0 %2715
    %v2718 = vsel %vm682, %v2710, 0
    %v2721 = vsel %vm682, %v2712, 0
    %v2724 = vsel %vm682, %v2714, 0
    %v2727 = vsel %vm682, %v2716, 0
    %2729 = vmatprep.subr.bf16.mxu0 0
    %2730 = vmatpush1.bf16.xpose.msra.mxu0 %v2724
    %2731 = vmatprep.subr.bf16.mxu0 0
    %2732 = vmatpush1.bf16.xpose.msra.mxu0 %v2727
    %2733 = vmatprep.subr.bf16.mxu0 0
    %2734 = vmatpush1.bf16.xpose.msra.mxu0 0
    %2735 = vmatprep.subr.bf16.mxu0 0
    %2736 = vmatpush1.bf16.xpose.msra.mxu0 0
    %2737 = vmatprep.subr.bf16.mxu0 0
    %2738 = vmatpush1.bf16.xpose.msra.mxu0 0
    %2739 = vmatprep.subr.bf16.mxu0 0
    %2740 = vmatpush1.bf16.xpose.msra.mxu0 0
    %2741 = vmatprep.subr.bf16.mxu0 0
    %2742 = vmatpush1.bf16.xpose.msra.mxu0 0
    %2743 = vmatprep.subr.bf16.mxu0 0
    %2744 = vmatpush1.bf16.xpose.msra.mxu0 0
    %2745 = vmatprep.subr.bf16.mxu0 0
    %2746 = vmatpush1.bf16.xpose.msra.mxu0 0
    %2747 = vmatprep.subr.bf16.mxu0 0
    %2748 = vmatpush1.bf16.xpose.msra.mxu0 0
    %2749 = vmatprep.subr.bf16.mxu0 0
    %2750 = vmatpush1.bf16.xpose.msra.mxu0 0
    %2751 = vmatprep.subr.bf16.mxu0 0
    %2752 = vmatpush1.bf16.xpose.msra.mxu0 0
    %2753 = vmatprep.subr.bf16.mxu0 0
    %2754 = vmatpush1.bf16.xpose.msra.mxu0 0
    %2755 = vmatprep.subr.bf16.mxu0 0
    %2756 = vmatpush1.bf16.xpose.msra.mxu0 0
    %2757 = vmatprep.subr.bf16.mxu0 0
    %2758 = vmatpush1.bf16.xpose.msra.mxu0 0
    %2759 = vmatprep.subr.bf16.mxu0 0
    %2760 = vmatpush1.bf16.xpose.msra.mxu0 0
    %2761 = vmatprep.mubr.bf16.mxu0 0
    %2762 = vmatmul.mubr.bf16.gmra.mrb[0].mxu0 %v2718
    %v2763 = vpop.f32.mrb[0].mxu0
    %v2764 = vadd.f32 0.0, %v2763
    %v2765 = vpop.f32.mrb[0].mxu0
    %v2766 = vpop.f32.mrb[0].mxu0
    %v2767 = vadd.f32 0.0, %v2766
    %v2768 = vpop.f32.mrb[0].mxu0
    %2769 = vmatprep.mubr.bf16.mxu0 0
    %2770 = vmatmul.mubr.bf16.gmra.mrb[0].mxu0 %v2721
    %v2771 = vpop.f32.mrb[0].mxu0
    %v2772 = vadd.f32 0.0, %v2771
    %v2773 = vpop.f32.mrb[0].mxu0
    %v2774 = vpop.f32.mrb[0].mxu0
    %v2775 = vpop.f32.mrb[0].mxu0
    %2776 = vdwg.mxu0
    %2777 = vrot.lane.b32.xlu0 %v660, 80
    %v2778 = vpop.permute.xlu0 %2777
    %2779 = vrot.lane.b32.xlu0 %v661, 80
    %v2780 = vpop.permute.xlu0 %2779
    %2781 = vrot.lane.b32.xlu0 %v668, 80
    %v2782 = vpop.permute.xlu0 %2781
    %2783 = vrot.lane.b32.xlu0 %v669, 80
    %v2784 = vpop.permute.xlu0 %2783
    %v2786 = vsel %vm682, %v2778, 0
    %v2789 = vsel %vm682, %v2780, 0
    %v2792 = vsel %vm682, %v2782, 0
    %v2795 = vsel %vm682, %v2784, 0
    %2797 = vmatprep.subr.bf16.mxu0 0
    %2798 = vmatpush1.bf16.xpose.msra.mxu0 %v2792
    %2799 = vmatprep.subr.bf16.mxu0 0
    %2800 = vmatpush1.bf16.xpose.msra.mxu0 %v2795
    %2801 = vmatprep.subr.bf16.mxu0 0
    %2802 = vmatpush1.bf16.xpose.msra.mxu0 0
    %2803 = vmatprep.subr.bf16.mxu0 0
    %2804 = vmatpush1.bf16.xpose.msra.mxu0 0
    %2805 = vmatprep.subr.bf16.mxu0 0
    %2806 = vmatpush1.bf16.xpose.msra.mxu0 0
    %2807 = vmatprep.subr.bf16.mxu0 0
    %2808 = vmatpush1.bf16.xpose.msra.mxu0 0
    %2809 = vmatprep.subr.bf16.mxu0 0
    %2810 = vmatpush1.bf16.xpose.msra.mxu0 0
    %2811 = vmatprep.subr.bf16.mxu0 0
    %2812 = vmatpush1.bf16.xpose.msra.mxu0 0
    %2813 = vmatprep.subr.bf16.mxu0 0
    %2814 = vmatpush1.bf16.xpose.msra.mxu0 0
    %2815 = vmatprep.subr.bf16.mxu0 0
    %2816 = vmatpush1.bf16.xpose.msra.mxu0 0
    %2817 = vmatprep.subr.bf16.mxu0 0
    %2818 = vmatpush1.bf16.xpose.msra.mxu0 0
    %2819 = vmatprep.subr.bf16.mxu0 0
    %2820 = vmatpush1.bf16.xpose.msra.mxu0 0
    %2821 = vmatprep.subr.bf16.mxu0 0
    %2822 = vmatpush1.bf16.xpose.msra.mxu0 0
    %2823 = vmatprep.subr.bf16.mxu0 0
    %2824 = vmatpush1.bf16.xpose.msra.mxu0 0
    %2825 = vmatprep.subr.bf16.mxu0 0
    %2826 = vmatpush1.bf16.xpose.msra.mxu0 0
    %2827 = vmatprep.subr.bf16.mxu0 0
    %2828 = vmatpush1.bf16.xpose.msra.mxu0 0
    %2829 = vmatprep.mubr.bf16.mxu0 0
    %2830 = vmatmul.mubr.bf16.gmra.mrb[0].mxu0 %v2786
    %v2831 = vpop.f32.mrb[0].mxu0
    %v2832 = vadd.f32 0.0, %v2831
    %v2833 = vpop.f32.mrb[0].mxu0
    %v2834 = vpop.f32.mrb[0].mxu0
    %v2835 = vadd.f32 0.0, %v2834
    %v2836 = vpop.f32.mrb[0].mxu0
    %2837 = vmatprep.mubr.bf16.mxu0 0
    %2838 = vmatmul.mubr.bf16.gmra.mrb[0].mxu0 %v2789
    %v2839 = vpop.f32.mrb[0].mxu0
    %v2840 = vadd.f32 0.0, %v2839
    %v2841 = vpop.f32.mrb[0].mxu0
    %v2842 = vpop.f32.mrb[0].mxu0
    %v2843 = vpop.f32.mrb[0].mxu0
    %2844 = vdwg.mxu0
    %2845 = vrot.lane.b32.xlu0 %v662, 80
    %v2846 = vpop.permute.xlu0 %2845
    %2847 = vrot.lane.b32.xlu0 %v663, 80
    %v2848 = vpop.permute.xlu0 %2847
    %2849 = vrot.lane.b32.xlu0 %v670, 80
    %v2850 = vpop.permute.xlu0 %2849
    %2851 = vrot.lane.b32.xlu0 %v671, 80
    %v2852 = vpop.permute.xlu0 %2851
    %v2854 = vsel %vm682, %v2846, 0
    %v2857 = vsel %vm682, %v2848, 0
    %v2860 = vsel %vm682, %v2850, 0
    %v2863 = vsel %vm682, %v2852, 0
    %2865 = vmatprep.subr.bf16.mxu0 0
    %2866 = vmatpush1.bf16.xpose.msra.mxu0 %v2860
    %2867 = vmatprep.subr.bf16.mxu0 0
    %2868 = vmatpush1.bf16.xpose.msra.mxu0 %v2863
    %2869 = vmatprep.subr.bf16.mxu0 0
    %2870 = vmatpush1.bf16.xpose.msra.mxu0 0
    %2871 = vmatprep.subr.bf16.mxu0 0
    %2872 = vmatpush1.bf16.xpose.msra.mxu0 0
    %2873 = vmatprep.subr.bf16.mxu0 0
    %2874 = vmatpush1.bf16.xpose.msra.mxu0 0
    %2875 = vmatprep.subr.bf16.mxu0 0
    %2876 = vmatpush1.bf16.xpose.msra.mxu0 0
    %2877 = vmatprep.subr.bf16.mxu0 0
    %2878 = vmatpush1.bf16.xpose.msra.mxu0 0
    %2879 = vmatprep.subr.bf16.mxu0 0
    %2880 = vmatpush1.bf16.xpose.msra.mxu0 0
    %2881 = vmatprep.subr.bf16.mxu0 0
    %2882 = vmatpush1.bf16.xpose.msra.mxu0 0
    %2883 = vmatprep.subr.bf16.mxu0 0
    %2884 = vmatpush1.bf16.xpose.msra.mxu0 0
    %2885 = vmatprep.subr.bf16.mxu0 0
    %2886 = vmatpush1.bf16.xpose.msra.mxu0 0
    %2887 = vmatprep.subr.bf16.mxu0 0
    %2888 = vmatpush1.bf16.xpose.msra.mxu0 0
    %2889 = vmatprep.subr.bf16.mxu0 0
    %2890 = vmatpush1.bf16.xpose.msra.mxu0 0
    %2891 = vmatprep.subr.bf16.mxu0 0
    %2892 = vmatpush1.bf16.xpose.msra.mxu0 0
    %2893 = vmatprep.subr.bf16.mxu0 0
    %2894 = vmatpush1.bf16.xpose.msra.mxu0 0
    %2895 = vmatprep.subr.bf16.mxu0 0
    %2896 = vmatpush1.bf16.xpose.msra.mxu0 0
    %2897 = vmatprep.mubr.bf16.mxu0 0
    %2898 = vmatmul.mubr.bf16.gmra.mrb[0].mxu0 %v2854
    %v2899 = vpop.f32.mrb[0].mxu0
    %v2900 = vadd.f32 0.0, %v2899
    %v2901 = vpop.f32.mrb[0].mxu0
    %v2902 = vpop.f32.mrb[0].mxu0
    %v2903 = vadd.f32 0.0, %v2902
    %v2904 = vpop.f32.mrb[0].mxu0
    %2905 = vmatprep.mubr.bf16.mxu0 0
    %2906 = vmatmul.mubr.bf16.gmra.mrb[0].mxu0 %v2857
    %v2907 = vpop.f32.mrb[0].mxu0
    %v2908 = vadd.f32 0.0, %v2907
    %v2909 = vpop.f32.mrb[0].mxu0
    %v2910 = vpop.f32.mrb[0].mxu0
    %v2911 = vpop.f32.mrb[0].mxu0
    %2912 = vdwg.mxu0
    %2913 = vrot.lane.b32.xlu0 %v664, 80
    %v2914 = vpop.permute.xlu0 %2913
    %2915 = vrot.lane.b32.xlu0 %v665, 80
    %v2916 = vpop.permute.xlu0 %2915
    %2917 = vrot.lane.b32.xlu0 %v672, 80
    %v2918 = vpop.permute.xlu0 %2917
    %2919 = vrot.lane.b32.xlu0 %v673, 80
    %v2920 = vpop.permute.xlu0 %2919
    %v2922 = vsel %vm682, %v2914, 0
    %v2925 = vsel %vm682, %v2916, 0
    %v2928 = vsel %vm682, %v2918, 0
    %v2931 = vsel %vm682, %v2920, 0
    %2933 = vmatprep.subr.bf16.mxu0 0
    %2934 = vmatpush1.bf16.xpose.msra.mxu0 %v2928
    %2935 = vmatprep.subr.bf16.mxu0 0
    %2936 = vmatpush1.bf16.xpose.msra.mxu0 %v2931
    %2937 = vmatprep.subr.bf16.mxu0 0
    %2938 = vmatpush1.bf16.xpose.msra.mxu0 0
    %2939 = vmatprep.subr.bf16.mxu0 0
    %2940 = vmatpush1.bf16.xpose.msra.mxu0 0
    %2941 = vmatprep.subr.bf16.mxu0 0
    %2942 = vmatpush1.bf16.xpose.msra.mxu0 0
    %2943 = vmatprep.subr.bf16.mxu0 0
    %2944 = vmatpush1.bf16.xpose.msra.mxu0 0
    %2945 = vmatprep.subr.bf16.mxu0 0
    %2946 = vmatpush1.bf16.xpose.msra.mxu0 0
    %2947 = vmatprep.subr.bf16.mxu0 0
    %2948 = vmatpush1.bf16.xpose.msra.mxu0 0
    %2949 = vmatprep.subr.bf16.mxu0 0
    %2950 = vmatpush1.bf16.xpose.msra.mxu0 0
    %2951 = vmatprep.subr.bf16.mxu0 0
    %2952 = vmatpush1.bf16.xpose.msra.mxu0 0
    %2953 = vmatprep.subr.bf16.mxu0 0
    %2954 = vmatpush1.bf16.xpose.msra.mxu0 0
    %2955 = vmatprep.subr.bf16.mxu0 0
    %2956 = vmatpush1.bf16.xpose.msra.mxu0 0
    %2957 = vmatprep.subr.bf16.mxu0 0
    %2958 = vmatpush1.bf16.xpose.msra.mxu0 0
    %2959 = vmatprep.subr.bf16.mxu0 0
    %2960 = vmatpush1.bf16.xpose.msra.mxu0 0
    %2961 = vmatprep.subr.bf16.mxu0 0
    %2962 = vmatpush1.bf16.xpose.msra.mxu0 0
    %2963 = vmatprep.subr.bf16.mxu0 0
    %2964 = vmatpush1.bf16.xpose.msra.mxu0 0
    %2965 = vmatprep.mubr.bf16.mxu0 0
    %2966 = vmatmul.mubr.bf16.gmra.mrb[0].mxu0 %v2922
    %v2967 = vpop.f32.mrb[0].mxu0
    %v2968 = vadd.f32 0.0, %v2967
    %v2969 = vpop.f32.mrb[0].mxu0
    %v2970 = vpop.f32.mrb[0].mxu0
    %v2971 = vadd.f32 0.0, %v2970
    %v2972 = vpop.f32.mrb[0].mxu0
    %2973 = vmatprep.mubr.bf16.mxu0 0
    %2974 = vmatmul.mubr.bf16.gmra.mrb[0].mxu0 %v2925
    %v2975 = vpop.f32.mrb[0].mxu0
    %v2976 = vadd.f32 0.0, %v2975
    %v2977 = vpop.f32.mrb[0].mxu0
    %v2978 = vpop.f32.mrb[0].mxu0
    %v2979 = vpop.f32.mrb[0].mxu0
    %2980 = vdwg.mxu0
    %v2981 = vmul.f32 %v2764, 0.25
    %v2982 = vmul.f32 %v2767, 0.25
    %v2983 = vmul.f32 %v2772, 0.25
    %v2984 = vmul.f32 %v2832, 0.25
    %v2985 = vmul.f32 %v2835, 0.25
    %v2986 = vmul.f32 %v2840, 0.25
    %v2987 = vmul.f32 %v2900, 0.25
    %v2988 = vmul.f32 %v2903, 0.25
    %v2989 = vmul.f32 %v2908, 0.25
    %v2990 = vmul.f32 %v2968, 0.25
    %v2991 = vmul.f32 %v2971, 0.25
    %v2992 = vmul.f32 %v2976, 0.25
    %v2993 = vadd.f32 %v2981, %v73
    %v2994 = vadd.f32 %v2982, %v73
    %v2995 = vadd.f32 %v2983, %v73
    %v2996 = vadd.f32 %v2984, %v73
    %v2997 = vadd.f32 %v2985, %v73
    %v2998 = vadd.f32 %v2986, %v73
    %v2999 = vadd.f32 %v2987, %v73
    %v3000 = vadd.f32 %v2988, %v73
    %v3001 = vadd.f32 %v2989, %v73
    %v3002 = vadd.f32 %v2990, %v73
    %v3003 = vadd.f32 %v2991, %v73
    %v3004 = vadd.f32 %v2992, %v73
    %v3005 = vsel %vm947, %v2993, -inf
    %3006 = vmax.xlane.f32.xlu0 %v3005
    %v3007 = vpop.xlane.xlu0 %3006
    %v3008 = vsel %vm947, %v2994, -inf
    %3009 = vmax.xlane.f32.xlu0 %v3008
    %v3010 = vpop.xlane.xlu0 %3009
    %v3011 = vsel %vm947, %v2995, -inf
    %3012 = vmax.xlane.f32.xlu0 %v3011
    %v3013 = vpop.xlane.xlu0 %3012
    %v3014 = vsel %vm947, %v2996, -inf
    %3015 = vmax.xlane.f32.xlu0 %v3014
    %v3016 = vpop.xlane.xlu0 %3015
    %v3017 = vsel %vm947, %v2997, -inf
    %3018 = vmax.xlane.f32.xlu0 %v3017
    %v3019 = vpop.xlane.xlu0 %3018
    %v3020 = vsel %vm947, %v2998, -inf
    %3021 = vmax.xlane.f32.xlu0 %v3020
    %v3022 = vpop.xlane.xlu0 %3021
    %v3023 = vsel %vm947, %v2999, -inf
    %3024 = vmax.xlane.f32.xlu0 %v3023
    %v3025 = vpop.xlane.xlu0 %3024
    %v3026 = vsel %vm947, %v3000, -inf
    %3027 = vmax.xlane.f32.xlu0 %v3026
    %v3028 = vpop.xlane.xlu0 %3027
    %v3029 = vsel %vm947, %v3001, -inf
    %3030 = vmax.xlane.f32.xlu0 %v3029
    %v3031 = vpop.xlane.xlu0 %3030
    %v3032 = vsel %vm947, %v3002, -inf
    %3033 = vmax.xlane.f32.xlu0 %v3032
    %v3034 = vpop.xlane.xlu0 %3033
    %v3035 = vsel %vm947, %v3003, -inf
    %3036 = vmax.xlane.f32.xlu0 %v3035
    %v3037 = vpop.xlane.xlu0 %3036
    %v3038 = vsel %vm947, %v3004, -inf
    %3039 = vmax.xlane.f32.xlu0 %v3038
    %v3040 = vpop.xlane.xlu0 %3039
    %v3041 = vsub.f32 %v2993, %v3007
    %v3042 = vsub.f32 %v2994, %v3010
    %v3043 = vsub.f32 %v2995, %v3013
    %v3044 = vsub.f32 %v2996, %v3016
    %v3045 = vsub.f32 %v2997, %v3019
    %v3046 = vsub.f32 %v2998, %v3022
    %v3047 = vsub.f32 %v2999, %v3025
    %v3048 = vsub.f32 %v3000, %v3028
    %v3049 = vsub.f32 %v3001, %v3031
    %v3050 = vsub.f32 %v3002, %v3034
    %v3051 = vsub.f32 %v3003, %v3037
    %v3052 = vsub.f32 %v3004, %v3040
    %v3053 = vmul.f32 %v3041, 1.442695
    %v3054 = vpow.pop %v3053
    %v3055 = vmul.f32 %v3042, 1.442695
    %v3056 = vpow.pop %v3055
    %v3057 = vmul.f32 %v3043, 1.442695
    %v3058 = vpow.pop %v3057
    %v3059 = vmul.f32 %v3044, 1.442695
    %v3060 = vpow.pop %v3059
    %v3061 = vmul.f32 %v3045, 1.442695
    %v3062 = vpow.pop %v3061
    %v3063 = vmul.f32 %v3046, 1.442695
    %v3064 = vpow.pop %v3063
    %v3065 = vmul.f32 %v3047, 1.442695
    %v3066 = vpow.pop %v3065
    %v3067 = vmul.f32 %v3048, 1.442695
    %v3068 = vpow.pop %v3067
    %v3069 = vmul.f32 %v3049, 1.442695
    %v3070 = vpow.pop %v3069
    %v3071 = vmul.f32 %v3050, 1.442695
    %v3072 = vpow.pop %v3071
    %v3073 = vmul.f32 %v3051, 1.442695
    %v3074 = vpow.pop %v3073
    %v3075 = vmul.f32 %v3052, 1.442695
    %v3076 = vpow.pop %v3075
    %v3077 = vsel %vm947, %v3054, 0.0
    %3078 = vadd.xlane.f32.xlu0 %v3077
    %v3079 = vpop.xlane.xlu0 %3078
    %v3080 = vsel %vm947, %v3056, 0.0
    %3081 = vadd.xlane.f32.xlu0 %v3080
    %v3082 = vpop.xlane.xlu0 %3081
    %v3083 = vsel %vm947, %v3058, 0.0
    %3084 = vadd.xlane.f32.xlu0 %v3083
    %v3085 = vpop.xlane.xlu0 %3084
    %v3086 = vsel %vm947, %v3060, 0.0
    %3087 = vadd.xlane.f32.xlu0 %v3086
    %v3088 = vpop.xlane.xlu0 %3087
    %v3089 = vsel %vm947, %v3062, 0.0
    %3090 = vadd.xlane.f32.xlu0 %v3089
    %v3091 = vpop.xlane.xlu0 %3090
    %v3092 = vsel %vm947, %v3064, 0.0
    %3093 = vadd.xlane.f32.xlu0 %v3092
    %v3094 = vpop.xlane.xlu0 %3093
    %v3095 = vsel %vm947, %v3066, 0.0
    %3096 = vadd.xlane.f32.xlu0 %v3095
    %v3097 = vpop.xlane.xlu0 %3096
    %v3098 = vsel %vm947, %v3068, 0.0
    %3099 = vadd.xlane.f32.xlu0 %v3098
    %v3100 = vpop.xlane.xlu0 %3099
    %v3101 = vsel %vm947, %v3070, 0.0
    %3102 = vadd.xlane.f32.xlu0 %v3101
    %v3103 = vpop.xlane.xlu0 %3102
    %v3104 = vsel %vm947, %v3072, 0.0
    %3105 = vadd.xlane.f32.xlu0 %v3104
    %v3106 = vpop.xlane.xlu0 %3105
    %v3107 = vsel %vm947, %v3074, 0.0
    %3108 = vadd.xlane.f32.xlu0 %v3107
    %v3109 = vpop.xlane.xlu0 %3108
    %v3110 = vsel %vm947, %v3076, 0.0
    %3111 = vadd.xlane.f32.xlu0 %v3110
    %v3112 = vpop.xlane.xlu0 %3111
    %v3113 = vrcp.pop %v3079
    %v3114 = vrcp.pop %v3082
    %v3115 = vrcp.pop %v3085
    %v3116 = vrcp.pop %v3088
    %v3117 = vrcp.pop %v3091
    %v3118 = vrcp.pop %v3094
    %v3119 = vrcp.pop %v3097
    %v3120 = vrcp.pop %v3100
    %v3121 = vrcp.pop %v3103
    %v3122 = vrcp.pop %v3106
    %v3123 = vrcp.pop %v3109
    %v3124 = vrcp.pop %v3112
    %v3125 = vmul.f32 %v3054, %v3113
    %v3126 = vmul.f32 %v3056, %v3114
    %v3127 = vmul.f32 %v3058, %v3115
    %v3128 = vmul.f32 %v3060, %v3116
    %v3129 = vmul.f32 %v3062, %v3117
    %v3130 = vmul.f32 %v3064, %v3118
    %v3131 = vmul.f32 %v3066, %v3119
    %v3132 = vmul.f32 %v3068, %v3120
    %v3133 = vmul.f32 %v3070, %v3121
    %v3134 = vmul.f32 %v3072, %v3122
    %v3135 = vmul.f32 %v3074, %v3123
    %v3136 = vmul.f32 %v3076, %v3124
    %v3137 = vpack.c.bf16 %v3126, %v3125
    %v3138 = vpack.c.bf16 %v3127, %v3127
    %v3139 = vpack.c.bf16 %v3129, %v3128
    %v3140 = vpack.c.bf16 %v3130, %v3130
    %v3141 = vpack.c.bf16 %v3132, %v3131
    %v3142 = vpack.c.bf16 %v3133, %v3133
    %v3143 = vpack.c.bf16 %v3135, %v3134
    %v3144 = vpack.c.bf16 %v3136, %v3136
    %3145 = vrot.lane.b32.xlu0 %v674, 80
    %v3146 = vpop.permute.xlu0 %3145
    %3147 = vrot.lane.b32.xlu0 %v675, 80
    %v3148 = vpop.permute.xlu0 %3147
    %v3151 = vsel %vm947, %v3137, 0
    %v3154 = vsel %vm947, %v3138, 0
    %v3157 = vsel %vm1094, %v3148, 0
    %3159 = vmatprep.subr.bf16.mxu0 0
    %3160 = vmatpush1.bf16.msra.mxu0 %v3146
    %3161 = vmatprep.subr.bf16.mxu0 0
    %3162 = vmatpush1.bf16.msra.mxu0 %v3157
    %3163 = vmatprep.subr.bf16.mxu0 0
    %3164 = vmatpush1.bf16.msra.mxu0 0
    %3165 = vmatprep.subr.bf16.mxu0 0
    %3166 = vmatpush1.bf16.msra.mxu0 0
    %3167 = vmatprep.subr.bf16.mxu0 0
    %3168 = vmatpush1.bf16.msra.mxu0 0
    %3169 = vmatprep.subr.bf16.mxu0 0
    %3170 = vmatpush1.bf16.msra.mxu0 0
    %3171 = vmatprep.subr.bf16.mxu0 0
    %3172 = vmatpush1.bf16.msra.mxu0 0
    %3173 = vmatprep.subr.bf16.mxu0 0
    %3174 = vmatpush1.bf16.msra.mxu0 0
    %3175 = vmatprep.subr.bf16.mxu0 0
    %3176 = vmatpush1.bf16.msra.mxu0 0
    %3177 = vmatprep.subr.bf16.mxu0 0
    %3178 = vmatpush1.bf16.msra.mxu0 0
    %3179 = vmatprep.subr.bf16.mxu0 0
    %3180 = vmatpush1.bf16.msra.mxu0 0
    %3181 = vmatprep.subr.bf16.mxu0 0
    %3182 = vmatpush1.bf16.msra.mxu0 0
    %3183 = vmatprep.subr.bf16.mxu0 0
    %3184 = vmatpush1.bf16.msra.mxu0 0
    %3185 = vmatprep.subr.bf16.mxu0 0
    %3186 = vmatpush1.bf16.msra.mxu0 0
    %3187 = vmatprep.subr.bf16.mxu0 0
    %3188 = vmatpush1.bf16.msra.mxu0 0
    %3189 = vmatprep.subr.bf16.mxu0 0
    %3190 = vmatpush1.bf16.msra.mxu0 0
    %3191 = vmatprep.mubr.bf16.mxu0 0
    %3192 = vmatmul.mubr.bf16.gmra.mrb[0].mxu0 %v3151
    %v3193 = vpop.f32.mrb[0].mxu0
    %v3194 = vadd.f32 0.0, %v3193
    %v3195 = vpop.f32.mrb[0].mxu0
    %v3196 = vpop.f32.mrb[0].mxu0
    %v3197 = vadd.f32 0.0, %v3196
    %v3198 = vpop.f32.mrb[0].mxu0
    %3199 = vmatprep.mubr.bf16.mxu0 0
    %3200 = vmatmul.mubr.bf16.gmra.mrb[0].mxu0 %v3154
    %v3201 = vpop.f32.mrb[0].mxu0
    %v3202 = vadd.f32 0.0, %v3201
    %v3203 = vpop.f32.mrb[0].mxu0
    %v3204 = vpop.f32.mrb[0].mxu0
    %v3205 = vpop.f32.mrb[0].mxu0
    %3206 = vdwg.mxu0
    %3207 = vrot.lane.b32.xlu0 %v676, 80
    %v3208 = vpop.permute.xlu0 %3207
    %3209 = vrot.lane.b32.xlu0 %v677, 80
    %v3210 = vpop.permute.xlu0 %3209
    %v3213 = vsel %vm947, %v3139, 0
    %v3216 = vsel %vm947, %v3140, 0
    %v3219 = vsel %vm1094, %v3210, 0
    %3221 = vmatprep.subr.bf16.mxu0 0
    %3222 = vmatpush1.bf16.msra.mxu0 %v3208
    %3223 = vmatprep.subr.bf16.mxu0 0
    %3224 = vmatpush1.bf16.msra.mxu0 %v3219
    %3225 = vmatprep.subr.bf16.mxu0 0
    %3226 = vmatpush1.bf16.msra.mxu0 0
    %3227 = vmatprep.subr.bf16.mxu0 0
    %3228 = vmatpush1.bf16.msra.mxu0 0
    %3229 = vmatprep.subr.bf16.mxu0 0
    %3230 = vmatpush1.bf16.msra.mxu0 0
    %3231 = vmatprep.subr.bf16.mxu0 0
    %3232 = vmatpush1.bf16.msra.mxu0 0
    %3233 = vmatprep.subr.bf16.mxu0 0
    %3234 = vmatpush1.bf16.msra.mxu0 0
    %3235 = vmatprep.subr.bf16.mxu0 0
    %3236 = vmatpush1.bf16.msra.mxu0 0
    %3237 = vmatprep.subr.bf16.mxu0 0
    %3238 = vmatpush1.bf16.msra.mxu0 0
    %3239 = vmatprep.subr.bf16.mxu0 0
    %3240 = vmatpush1.bf16.msra.mxu0 0
    %3241 = vmatprep.subr.bf16.mxu0 0
    %3242 = vmatpush1.bf16.msra.mxu0 0
    %3243 = vmatprep.subr.bf16.mxu0 0
    %3244 = vmatpush1.bf16.msra.mxu0 0
    %3245 = vmatprep.subr.bf16.mxu0 0
    %3246 = vmatpush1.bf16.msra.mxu0 0
    %3247 = vmatprep.subr.bf16.mxu0 0
    %3248 = vmatpush1.bf16.msra.mxu0 0
    %3249 = vmatprep.subr.bf16.mxu0 0
    %3250 = vmatpush1.bf16.msra.mxu0 0
    %3251 = vmatprep.subr.bf16.mxu0 0
    %3252 = vmatpush1.bf16.msra.mxu0 0
    %3253 = vmatprep.mubr.bf16.mxu0 0
    %3254 = vmatmul.mubr.bf16.gmra.mrb[0].mxu0 %v3213
    %v3255 = vpop.f32.mrb[0].mxu0
    %v3256 = vadd.f32 0.0, %v3255
    %v3257 = vpop.f32.mrb[0].mxu0
    %v3258 = vpop.f32.mrb[0].mxu0
    %v3259 = vadd.f32 0.0, %v3258
    %v3260 = vpop.f32.mrb[0].mxu0
    %3261 = vmatprep.mubr.bf16.mxu0 0
    %3262 = vmatmul.mubr.bf16.gmra.mrb[0].mxu0 %v3216
    %v3263 = vpop.f32.mrb[0].mxu0
    %v3264 = vadd.f32 0.0, %v3263
    %v3265 = vpop.f32.mrb[0].mxu0
    %v3266 = vpop.f32.mrb[0].mxu0
    %v3267 = vpop.f32.mrb[0].mxu0
    %3268 = vdwg.mxu0
    %3269 = vrot.lane.b32.xlu0 %v678, 80
    %v3270 = vpop.permute.xlu0 %3269
    %3271 = vrot.lane.b32.xlu0 %v679, 80
    %v3272 = vpop.permute.xlu0 %3271
    %v3275 = vsel %vm947, %v3141, 0
    %v3278 = vsel %vm947, %v3142, 0
    %v3281 = vsel %vm1094, %v3272, 0
    %3283 = vmatprep.subr.bf16.mxu0 0
    %3284 = vmatpush1.bf16.msra.mxu0 %v3270
    %3285 = vmatprep.subr.bf16.mxu0 0
    %3286 = vmatpush1.bf16.msra.mxu0 %v3281
    %3287 = vmatprep.subr.bf16.mxu0 0
    %3288 = vmatpush1.bf16.msra.mxu0 0
    %3289 = vmatprep.subr.bf16.mxu0 0
    %3290 = vmatpush1.bf16.msra.mxu0 0
    %3291 = vmatprep.subr.bf16.mxu0 0
    %3292 = vmatpush1.bf16.msra.mxu0 0
    %3293 = vmatprep.subr.bf16.mxu0 0
    %3294 = vmatpush1.bf16.msra.mxu0 0
    %3295 = vmatprep.subr.bf16.mxu0 0
    %3296 = vmatpush1.bf16.msra.mxu0 0
    %3297 = vmatprep.subr.bf16.mxu0 0
    %3298 = vmatpush1.bf16.msra.mxu0 0
    %3299 = vmatprep.subr.bf16.mxu0 0
    %3300 = vmatpush1.bf16.msra.mxu0 0
    %3301 = vmatprep.subr.bf16.mxu0 0
    %3302 = vmatpush1.bf16.msra.mxu0 0
    %3303 = vmatprep.subr.bf16.mxu0 0
    %3304 = vmatpush1.bf16.msra.mxu0 0
    %3305 = vmatprep.subr.bf16.mxu0 0
    %3306 = vmatpush1.bf16.msra.mxu0 0
    %3307 = vmatprep.subr.bf16.mxu0 0
    %3308 = vmatpush1.bf16.msra.mxu0 0
    %3309 = vmatprep.subr.bf16.mxu0 0
    %3310 = vmatpush1.bf16.msra.mxu0 0
    %3311 = vmatprep.subr.bf16.mxu0 0
    %3312 = vmatpush1.bf16.msra.mxu0 0
    %3313 = vmatprep.subr.bf16.mxu0 0
    %3314 = vmatpush1.bf16.msra.mxu0 0
    %3315 = vmatprep.mubr.bf16.mxu0 0
    %3316 = vmatmul.mubr.bf16.gmra.mrb[0].mxu0 %v3275
    %v3317 = vpop.f32.mrb[0].mxu0
    %v3318 = vadd.f32 0.0, %v3317
    %v3319 = vpop.f32.mrb[0].mxu0
    %v3320 = vpop.f32.mrb[0].mxu0
    %v3321 = vadd.f32 0.0, %v3320
    %v3322 = vpop.f32.mrb[0].mxu0
    %3323 = vmatprep.mubr.bf16.mxu0 0
    %3324 = vmatmul.mubr.bf16.gmra.mrb[0].mxu0 %v3278
    %v3325 = vpop.f32.mrb[0].mxu0
    %v3326 = vadd.f32 0.0, %v3325
    %v3327 = vpop.f32.mrb[0].mxu0
    %v3328 = vpop.f32.mrb[0].mxu0
    %v3329 = vpop.f32.mrb[0].mxu0
    %3330 = vdwg.mxu0
    %3331 = vrot.lane.b32.xlu0 %v680, 80
    %v3332 = vpop.permute.xlu0 %3331
    %3333 = vrot.lane.b32.xlu0 %v681, 80
    %v3334 = vpop.permute.xlu0 %3333
    %v3337 = vsel %vm947, %v3143, 0
    %v3340 = vsel %vm947, %v3144, 0
    %v3343 = vsel %vm1094, %v3334, 0
    %3345 = vmatprep.subr.bf16.mxu0 0
    %3346 = vmatpush1.bf16.msra.mxu0 %v3332
    %3347 = vmatprep.subr.bf16.mxu0 0
    %3348 = vmatpush1.bf16.msra.mxu0 %v3343
    %3349 = vmatprep.subr.bf16.mxu0 0
    %3350 = vmatpush1.bf16.msra.mxu0 0
    %3351 = vmatprep.subr.bf16.mxu0 0
    %3352 = vmatpush1.bf16.msra.mxu0 0
    %3353 = vmatprep.subr.bf16.mxu0 0
    %3354 = vmatpush1.bf16.msra.mxu0 0
    %3355 = vmatprep.subr.bf16.mxu0 0
    %3356 = vmatpush1.bf16.msra.mxu0 0
    %3357 = vmatprep.subr.bf16.mxu0 0
    %3358 = vmatpush1.bf16.msra.mxu0 0
    %3359 = vmatprep.subr.bf16.mxu0 0
    %3360 = vmatpush1.bf16.msra.mxu0 0
    %3361 = vmatprep.subr.bf16.mxu0 0
    %3362 = vmatpush1.bf16.msra.mxu0 0
    %3363 = vmatprep.subr.bf16.mxu0 0
    %3364 = vmatpush1.bf16.msra.mxu0 0
    %3365 = vmatprep.subr.bf16.mxu0 0
    %3366 = vmatpush1.bf16.msra.mxu0 0
    %3367 = vmatprep.subr.bf16.mxu0 0
    %3368 = vmatpush1.bf16.msra.mxu0 0
    %3369 = vmatprep.subr.bf16.mxu0 0
    %3370 = vmatpush1.bf16.msra.mxu0 0
    %3371 = vmatprep.subr.bf16.mxu0 0
    %3372 = vmatpush1.bf16.msra.mxu0 0
    %3373 = vmatprep.subr.bf16.mxu0 0
    %3374 = vmatpush1.bf16.msra.mxu0 0
    %3375 = vmatprep.subr.bf16.mxu0 0
    %3376 = vmatpush1.bf16.msra.mxu0 0
    %3377 = vmatprep.mubr.bf16.mxu0 0
    %3378 = vmatmul.mubr.bf16.gmra.mrb[0].mxu0 %v3337
    %v3379 = vpop.f32.mrb[0].mxu0
    %v3380 = vadd.f32 0.0, %v3379
    %v3381 = vpop.f32.mrb[0].mxu0
    %v3382 = vpop.f32.mrb[0].mxu0
    %v3383 = vadd.f32 0.0, %v3382
    %v3384 = vpop.f32.mrb[0].mxu0
    %3385 = vmatprep.mubr.bf16.mxu0 0
    %3386 = vmatmul.mubr.bf16.gmra.mrb[0].mxu0 %v3340
    %v3387 = vpop.f32.mrb[0].mxu0
    %v3388 = vadd.f32 0.0, %v3387
    %v3389 = vpop.f32.mrb[0].mxu0
    %v3390 = vpop.f32.mrb[0].mxu0
    %v3391 = vpop.f32.mrb[0].mxu0
    %3392 = vdwg.mxu0
    %3405 = vrot.lane.b32.xlu0 %v1820, 16
    %v3406 = vpop.permute.xlu0 %3405
    %3407 = vrot.lane.b32.xlu0 %v1823, 16
    %v3408 = vpop.permute.xlu0 %3407
    %3409 = vrot.lane.b32.xlu0 %v1828, 16
    %v3410 = vpop.permute.xlu0 %3409
    %3411 = vrot.lane.b32.xlu0 %v1884, 16
    %v3412 = vpop.permute.xlu0 %3411
    %3413 = vrot.lane.b32.xlu0 %v1887, 16
    %v3414 = vpop.permute.xlu0 %3413
    %3415 = vrot.lane.b32.xlu0 %v1892, 16
    %v3416 = vpop.permute.xlu0 %3415
    %3417 = vrot.lane.b32.xlu0 %v1948, 16
    %v3418 = vpop.permute.xlu0 %3417
    %3419 = vrot.lane.b32.xlu0 %v1951, 16
    %v3420 = vpop.permute.xlu0 %3419
    %3421 = vrot.lane.b32.xlu0 %v1956, 16
    %v3422 = vpop.permute.xlu0 %3421
    %3423 = vrot.lane.b32.xlu0 %v2012, 16
    %v3424 = vpop.permute.xlu0 %3423
    %3425 = vrot.lane.b32.xlu0 %v2015, 16
    %v3426 = vpop.permute.xlu0 %3425
    %3427 = vrot.lane.b32.xlu0 %v2020, 16
    %v3428 = vpop.permute.xlu0 %3427
    %3453 = vrot.lane.b32.xlu0 %v2510, 32
    %v3454 = vpop.permute.xlu0 %3453
    %3455 = vrot.lane.b32.xlu0 %v2513, 32
    %v3456 = vpop.permute.xlu0 %3455
    %3457 = vrot.lane.b32.xlu0 %v2518, 32
    %v3458 = vpop.permute.xlu0 %3457
    %3459 = vrot.lane.b32.xlu0 %v2572, 32
    %v3460 = vpop.permute.xlu0 %3459
    %3461 = vrot.lane.b32.xlu0 %v2575, 32
    %v3462 = vpop.permute.xlu0 %3461
    %3463 = vrot.lane.b32.xlu0 %v2580, 32
    %v3464 = vpop.permute.xlu0 %3463
    %3465 = vrot.lane.b32.xlu0 %v2634, 32
    %v3466 = vpop.permute.xlu0 %3465
    %3467 = vrot.lane.b32.xlu0 %v2637, 32
    %v3468 = vpop.permute.xlu0 %3467
    %3469 = vrot.lane.b32.xlu0 %v2642, 32
    %v3470 = vpop.permute.xlu0 %3469
    %3471 = vrot.lane.b32.xlu0 %v2696, 32
    %v3472 = vpop.permute.xlu0 %3471
    %3473 = vrot.lane.b32.xlu0 %v2699, 32
    %v3474 = vpop.permute.xlu0 %3473
    %3475 = vrot.lane.b32.xlu0 %v2704, 32
    %v3476 = vpop.permute.xlu0 %3475
    %3501 = vrot.lane.b32.xlu0 %v3194, 48
    %v3502 = vpop.permute.xlu0 %3501
    %3503 = vrot.lane.b32.xlu0 %v3197, 48
    %v3504 = vpop.permute.xlu0 %3503
    %3505 = vrot.lane.b32.xlu0 %v3202, 48
    %v3506 = vpop.permute.xlu0 %3505
    %3507 = vrot.lane.b32.xlu0 %v3256, 48
    %v3508 = vpop.permute.xlu0 %3507
    %3509 = vrot.lane.b32.xlu0 %v3259, 48
    %v3510 = vpop.permute.xlu0 %3509
    %3511 = vrot.lane.b32.xlu0 %v3264, 48
    %v3512 = vpop.permute.xlu0 %3511
    %3513 = vrot.lane.b32.xlu0 %v3318, 48
    %v3514 = vpop.permute.xlu0 %3513
    %3515 = vrot.lane.b32.xlu0 %v3321, 48
    %v3516 = vpop.permute.xlu0 %3515
    %3517 = vrot.lane.b32.xlu0 %v3326, 48
    %v3518 = vpop.permute.xlu0 %3517
    %3519 = vrot.lane.b32.xlu0 %v3380, 48
    %v3520 = vpop.permute.xlu0 %3519
    %3521 = vrot.lane.b32.xlu0 %v3383, 48
    %v3522 = vpop.permute.xlu0 %3521
    %3523 = vrot.lane.b32.xlu0 %v3388, 48
    %v3524 = vpop.permute.xlu0 %3523
    %v3537 = vsel %vm682, %v1133, %v3406
    %v3538 = vsel %vm682, %v1136, %v3408
    %v3539 = vsel %vm682, %v1141, %v3410
    %v3540 = vsel %vm682, %v1190, %v3412
    %v3541 = vsel %vm682, %v1193, %v3414
    %v3542 = vsel %vm682, %v1198, %v3416
    %v3543 = vsel %vm682, %v1247, %v3418
    %v3544 = vsel %vm682, %v1250, %v3420
    %v3545 = vsel %vm682, %v1255, %v3422
    %v3546 = vsel %vm682, %v1304, %v3424
    %v3547 = vsel %vm682, %v1307, %v3426
    %v3548 = vsel %vm682, %v1312, %v3428
    %vm3549 = vcmask 261120
    %v3550 = vsel %vm3549, %v3537, %v3454
    %v3551 = vsel %vm3549, %v3538, %v3456
    %v3552 = vsel %vm3549, %v3539, %v3458
    %v3553 = vsel %vm3549, %v3540, %v3460
    %v3554 = vsel %vm3549, %v3541, %v3462
    %v3555 = vsel %vm3549, %v3542, %v3464
    %v3556 = vsel %vm3549, %v3543, %v3466
    %v3557 = vsel %vm3549, %v3544, %v3468
    %v3558 = vsel %vm3549, %v3545, %v3470
    %v3559 = vsel %vm3549, %v3546, %v3472
    %v3560 = vsel %vm3549, %v3547, %v3474
    %v3561 = vsel %vm3549, %v3548, %v3476
    %vm3562 = vcmask 392192
    %v3563 = vsel %vm3562, %v3550, %v3502
    %v3564 = vsel %vm3562, %v3551, %v3504
    %v3565 = vsel %vm3562, %v3552, %v3506
    %v3566 = vsel %vm3562, %v3553, %v3508
    %v3567 = vsel %vm3562, %v3554, %v3510
    %v3568 = vsel %vm3562, %v3555, %v3512
    %v3569 = vsel %vm3562, %v3556, %v3514
    %v3570 = vsel %vm3562, %v3557, %v3516
    %v3571 = vsel %vm3562, %v3558, %v3518
    %v3572 = vsel %vm3562, %v3559, %v3520
    %v3573 = vsel %vm3562, %v3560, %v3522
    %v3574 = vsel %vm3562, %v3561, %v3524
    %v3575 = vpack.c.bf16 %v3564, %v3563
    %v3576 = vpack.c.bf16 %v3566, %v3565
    %v3577 = vpack.c.bf16 %v3568, %v3567
    %v3578 = vpack.c.bf16 %v3570, %v3569
    %v3579 = vpack.c.bf16 %v3572, %v3571
    %v3580 = vpack.c.bf16 %v3574, %v3573
    %v3581 = vld [vmem:[%s6] sm:$0xf]
    %v3582 = vld [vmem:[%s6 + $0x4] sm:$0xf]
    %v3583 = vld [vmem:[%s6 + $0x8] sm:$0xf]
    %v3584 = vld [vmem:[%s6 + $0xc] sm:$0xf]
    %v3585 = vld [vmem:[%s6 + $0x10] sm:$0xf]
    %v3586 = vld [vmem:[%s6 + $0x14] sm:$0xf]
    %v3587 = vld [vmem:[%s6 + $0x18] sm:$0xf]
    %v3588 = vld [vmem:[%s6 + $0x1c] sm:$0xf]
    %v3597 = vunpack.c.l.b16 %v3581
    %v3598 = vunpack.c.l.b16 %v3582
    %v3599 = vunpack.c.l.b16 %v3583
    %v3600 = vunpack.c.l.b16 %v3584
    %v3601 = vunpack.c.l.b16 %v3585
    %v3602 = vunpack.c.l.b16 %v3586
    %v3603 = vunpack.c.l.b16 %v3587
    %v3604 = vunpack.c.l.b16 %v3588
    %v3605 = vpack.c.b16 %v3598, %v3597
    %v3606 = vpack.c.b16 %v3600, %v3599
    %v3607 = vpack.c.b16 %v3602, %v3601
    %v3608 = vpack.c.b16 %v3604, %v3603
    %v3614 = vsel %vm76, %v3575, 0
    %v3617 = vsel %vm76, %v3576, 0
    %v3620 = vsel %vm76, %v3577, 0
    %v3623 = vsel %vm76, %v3578, 0
    %v3626 = vsel %vm76, %v3579, 0
    %v3629 = vsel %vm76, %v3580, 0
    %3631 = vmatprep.subr.bf16.mxu0 0
    %3632 = vmatpush1.bf16.msra.mxu0 %v3605
    %3633 = vmatprep.subr.bf16.mxu0 0
    %3634 = vmatpush1.bf16.msra.mxu0 %v3606
    %3635 = vmatprep.subr.bf16.mxu0 0
    %3636 = vmatpush1.bf16.msra.mxu0 %v3607
    %3637 = vmatprep.subr.bf16.mxu0 0
    %3638 = vmatpush1.bf16.msra.mxu0 %v3608
    %3639 = vmatprep.subr.bf16.mxu0 0
    %3640 = vmatpush1.bf16.msra.mxu0 0
    %3641 = vmatprep.subr.bf16.mxu0 0
    %3642 = vmatpush1.bf16.msra.mxu0 0
    %3643 = vmatprep.subr.bf16.mxu0 0
    %3644 = vmatpush1.bf16.msra.mxu0 0
    %3645 = vmatprep.subr.bf16.mxu0 0
    %3646 = vmatpush1.bf16.msra.mxu0 0
    %3647 = vmatprep.subr.bf16.mxu0 0
    %3648 = vmatpush1.bf16.msra.mxu0 0
    %3649 = vmatprep.subr.bf16.mxu0 0
    %3650 = vmatpush1.bf16.msra.mxu0 0
    %3651 = vmatprep.subr.bf16.mxu0 0
    %3652 = vmatpush1.bf16.msra.mxu0 0
    %3653 = vmatprep.subr.bf16.mxu0 0
    %3654 = vmatpush1.bf16.msra.mxu0 0
    %3655 = vmatprep.subr.bf16.mxu0 0
    %3656 = vmatpush1.bf16.msra.mxu0 0
    %3657 = vmatprep.subr.bf16.mxu0 0
    %3658 = vmatpush1.bf16.msra.mxu0 0
    %3659 = vmatprep.subr.bf16.mxu0 0
    %3660 = vmatpush1.bf16.msra.mxu0 0
    %3661 = vmatprep.subr.bf16.mxu0 0
    %3662 = vmatpush1.bf16.msra.mxu0 0
    %3663 = vmatprep.mubr.bf16.mxu0 0
    %3664 = vmatmul.mubr.bf16.gmra.mrb[0].mxu0 %v3614
    %v3665 = vpop.f32.mrb[0].mxu0
    %v3666 = vadd.f32 0.0, %v3665
    %v3667 = vpop.f32.mrb[0].mxu0
    %v3668 = vpop.f32.mrb[0].mxu0
    %v3669 = vadd.f32 0.0, %v3668
    %v3670 = vpop.f32.mrb[0].mxu0
    %3671 = vmatprep.mubr.bf16.mxu0 0
    %3672 = vmatmul.mubr.bf16.gmra.mrb[0].mxu0 %v3617
    %v3673 = vpop.f32.mrb[0].mxu0
    %v3674 = vadd.f32 0.0, %v3673
    %v3675 = vpop.f32.mrb[0].mxu0
    %v3676 = vpop.f32.mrb[0].mxu0
    %v3677 = vadd.f32 0.0, %v3676
    %v3678 = vpop.f32.mrb[0].mxu0
    %3679 = vmatprep.mubr.bf16.mxu0 0
    %3680 = vmatmul.mubr.bf16.gmra.mrb[0].mxu0 %v3620
    %v3681 = vpop.f32.mrb[0].mxu0
    %v3682 = vadd.f32 0.0, %v3681
    %v3683 = vpop.f32.mrb[0].mxu0
    %v3684 = vpop.f32.mrb[0].mxu0
    %v3685 = vadd.f32 0.0, %v3684
    %v3686 = vpop.f32.mrb[0].mxu0
    %3687 = vmatprep.mubr.bf16.mxu0 0
    %3688 = vmatmul.mubr.bf16.gmra.mrb[0].mxu0 %v3623
    %v3689 = vpop.f32.mrb[0].mxu0
    %v3690 = vadd.f32 0.0, %v3689
    %v3691 = vpop.f32.mrb[0].mxu0
    %v3692 = vpop.f32.mrb[0].mxu0
    %v3693 = vadd.f32 0.0, %v3692
    %v3694 = vpop.f32.mrb[0].mxu0
    %3695 = vmatprep.mubr.bf16.mxu0 0
    %3696 = vmatmul.mubr.bf16.gmra.mrb[0].mxu0 %v3626
    %v3697 = vpop.f32.mrb[0].mxu0
    %v3698 = vadd.f32 0.0, %v3697
    %v3699 = vpop.f32.mrb[0].mxu0
    %v3700 = vpop.f32.mrb[0].mxu0
    %v3701 = vadd.f32 0.0, %v3700
    %v3702 = vpop.f32.mrb[0].mxu0
    %3703 = vmatprep.mubr.bf16.mxu0 0
    %3704 = vmatmul.mubr.bf16.gmra.mrb[0].mxu0 %v3629
    %v3705 = vpop.f32.mrb[0].mxu0
    %v3706 = vadd.f32 0.0, %v3705
    %v3707 = vpop.f32.mrb[0].mxu0
    %v3708 = vpop.f32.mrb[0].mxu0
    %v3709 = vadd.f32 0.0, %v3708
    %v3710 = vpop.f32.mrb[0].mxu0
    %3711 = vdwg.mxu0
    %v3712 = vadd.f32 %v58, %v3666
    %v3713 = vadd.f32 %v59, %v3669
    %v3714 = vadd.f32 %v60, %v3674
    %v3715 = vadd.f32 %v61, %v3677
    %v3716 = vadd.f32 %v62, %v3682
    %v3717 = vadd.f32 %v63, %v3685
    %v3718 = vadd.f32 %v64, %v3690
    %v3719 = vadd.f32 %v65, %v3693
    %v3720 = vadd.f32 %v66, %v3698
    %v3721 = vadd.f32 %v67, %v3701
    %v3722 = vadd.f32 %v68, %v3706
    %v3723 = vadd.f32 %v69, %v3709
    %v3724 = vld [vmem:[%s7] sm:$0x1]
    %v3726 = vlaneseq
    %v3727 = vshrl.u32 %v3726, 7
    %v3728 = vsub.s32 0, %v3727
    %v3729 = vrot.slane %v3724, %v3728
    %v3731 = vadd.f32 %v3712, %v3729
    %v3732 = vadd.f32 %v3713, %v3729
    %v3733 = vadd.f32 %v3714, %v3729
    %v3734 = vadd.f32 %v3715, %v3729
    %v3735 = vadd.f32 %v3716, %v3729
    %v3736 = vadd.f32 %v3717, %v3729
    %v3737 = vadd.f32 %v3718, %v3729
    %v3738 = vadd.f32 %v3719, %v3729
    %v3739 = vadd.f32 %v3720, %v3729
    %v3740 = vadd.f32 %v3721, %v3729
    %v3741 = vadd.f32 %v3722, %v3729
    %v3742 = vadd.f32 %v3723, %v3729
    %s3743 = scalar_lea.vmem %s2, 1
    %v3744 = vld [vmem:[%s3743] sm:$0x1]
    %s3745 = scalar_lea.vmem %s3, 1
    %v3746 = vld [vmem:[%s3745] sm:$0x1]
    %v3747 = vsel %vm76, %v3731, 0.0
    %3748 = vadd.xlane.f32.xlu0 %v3747
    %v3749 = vpop.xlane.xlu0 %3748
    %v3750 = vsel %vm76, %v3732, 0.0
    %3751 = vadd.xlane.f32.xlu0 %v3750
    %v3752 = vpop.xlane.xlu0 %3751
    %v3753 = vsel %vm76, %v3733, 0.0
    %3754 = vadd.xlane.f32.xlu0 %v3753
    %v3755 = vpop.xlane.xlu0 %3754
    %v3756 = vsel %vm76, %v3734, 0.0
    %3757 = vadd.xlane.f32.xlu0 %v3756
    %v3758 = vpop.xlane.xlu0 %3757
    %v3759 = vsel %vm76, %v3735, 0.0
    %3760 = vadd.xlane.f32.xlu0 %v3759
    %v3761 = vpop.xlane.xlu0 %3760
    %v3762 = vsel %vm76, %v3736, 0.0
    %3763 = vadd.xlane.f32.xlu0 %v3762
    %v3764 = vpop.xlane.xlu0 %3763
    %v3765 = vsel %vm76, %v3737, 0.0
    %3766 = vadd.xlane.f32.xlu0 %v3765
    %v3767 = vpop.xlane.xlu0 %3766
    %v3768 = vsel %vm76, %v3738, 0.0
    %3769 = vadd.xlane.f32.xlu0 %v3768
    %v3770 = vpop.xlane.xlu0 %3769
    %v3771 = vsel %vm76, %v3739, 0.0
    %3772 = vadd.xlane.f32.xlu0 %v3771
    %v3773 = vpop.xlane.xlu0 %3772
    %v3774 = vsel %vm76, %v3740, 0.0
    %3775 = vadd.xlane.f32.xlu0 %v3774
    %v3776 = vpop.xlane.xlu0 %3775
    %v3777 = vsel %vm76, %v3741, 0.0
    %3778 = vadd.xlane.f32.xlu0 %v3777
    %v3779 = vpop.xlane.xlu0 %3778
    %v3780 = vsel %vm76, %v3742, 0.0
    %3781 = vadd.xlane.f32.xlu0 %v3780
    %v3782 = vpop.xlane.xlu0 %3781
    %v3783 = vmul.f32 %v3749, %v113
    %v3784 = vmul.f32 %v3752, %v113
    %v3785 = vmul.f32 %v3755, %v113
    %v3786 = vmul.f32 %v3758, %v113
    %v3787 = vmul.f32 %v3761, %v113
    %v3788 = vmul.f32 %v3764, %v113
    %v3789 = vmul.f32 %v3767, %v113
    %v3790 = vmul.f32 %v3770, %v113
    %v3791 = vmul.f32 %v3773, %v113
    %v3792 = vmul.f32 %v3776, %v113
    %v3793 = vmul.f32 %v3779, %v113
    %v3794 = vmul.f32 %v3782, %v113
    %v3795 = vsub.f32 %v3731, %v3783
    %v3796 = vsub.f32 %v3732, %v3784
    %v3797 = vsub.f32 %v3733, %v3785
    %v3798 = vsub.f32 %v3734, %v3786
    %v3799 = vsub.f32 %v3735, %v3787
    %v3800 = vsub.f32 %v3736, %v3788
    %v3801 = vsub.f32 %v3737, %v3789
    %v3802 = vsub.f32 %v3738, %v3790
    %v3803 = vsub.f32 %v3739, %v3791
    %v3804 = vsub.f32 %v3740, %v3792
    %v3805 = vsub.f32 %v3741, %v3793
    %v3806 = vsub.f32 %v3742, %v3794
    %v3807 = vmul.f32 %v3795, %v3795
    %v3808 = vmul.f32 %v3796, %v3796
    %v3809 = vmul.f32 %v3797, %v3797
    %v3810 = vmul.f32 %v3798, %v3798
    %v3811 = vmul.f32 %v3799, %v3799
    %v3812 = vmul.f32 %v3800, %v3800
    %v3813 = vmul.f32 %v3801, %v3801
    %v3814 = vmul.f32 %v3802, %v3802
    %v3815 = vmul.f32 %v3803, %v3803
    %v3816 = vmul.f32 %v3804, %v3804
    %v3817 = vmul.f32 %v3805, %v3805
    %v3818 = vmul.f32 %v3806, %v3806
    %v3819 = vsel %vm76, %v3807, 0.0
    %3820 = vadd.xlane.f32.xlu0 %v3819
    %v3821 = vpop.xlane.xlu0 %3820
    %v3822 = vsel %vm76, %v3808, 0.0
    %3823 = vadd.xlane.f32.xlu0 %v3822
    %v3824 = vpop.xlane.xlu0 %3823
    %v3825 = vsel %vm76, %v3809, 0.0
    %3826 = vadd.xlane.f32.xlu0 %v3825
    %v3827 = vpop.xlane.xlu0 %3826
    %v3828 = vsel %vm76, %v3810, 0.0
    %3829 = vadd.xlane.f32.xlu0 %v3828
    %v3830 = vpop.xlane.xlu0 %3829
    %v3831 = vsel %vm76, %v3811, 0.0
    %3832 = vadd.xlane.f32.xlu0 %v3831
    %v3833 = vpop.xlane.xlu0 %3832
    %v3834 = vsel %vm76, %v3812, 0.0
    %3835 = vadd.xlane.f32.xlu0 %v3834
    %v3836 = vpop.xlane.xlu0 %3835
    %v3837 = vsel %vm76, %v3813, 0.0
    %3838 = vadd.xlane.f32.xlu0 %v3837
    %v3839 = vpop.xlane.xlu0 %3838
    %v3840 = vsel %vm76, %v3814, 0.0
    %3841 = vadd.xlane.f32.xlu0 %v3840
    %v3842 = vpop.xlane.xlu0 %3841
    %v3843 = vsel %vm76, %v3815, 0.0
    %3844 = vadd.xlane.f32.xlu0 %v3843
    %v3845 = vpop.xlane.xlu0 %3844
    %v3846 = vsel %vm76, %v3816, 0.0
    %3847 = vadd.xlane.f32.xlu0 %v3846
    %v3848 = vpop.xlane.xlu0 %3847
    %v3849 = vsel %vm76, %v3817, 0.0
    %3850 = vadd.xlane.f32.xlu0 %v3849
    %v3851 = vpop.xlane.xlu0 %3850
    %v3852 = vsel %vm76, %v3818, 0.0
    %3853 = vadd.xlane.f32.xlu0 %v3852
    %v3854 = vpop.xlane.xlu0 %3853
    %v3855 = vmul.f32 %v3821, %v113
    %v3856 = vmul.f32 %v3824, %v113
    %v3857 = vmul.f32 %v3827, %v113
    %v3858 = vmul.f32 %v3830, %v113
    %v3859 = vmul.f32 %v3833, %v113
    %v3860 = vmul.f32 %v3836, %v113
    %v3861 = vmul.f32 %v3839, %v113
    %v3862 = vmul.f32 %v3842, %v113
    %v3863 = vmul.f32 %v3845, %v113
    %v3864 = vmul.f32 %v3848, %v113
    %v3865 = vmul.f32 %v3851, %v113
    %v3866 = vmul.f32 %v3854, %v113
    %v3867 = vadd.f32 %v3855, 1e-06
    %v3868 = vadd.f32 %v3856, 1e-06
    %v3869 = vadd.f32 %v3857, 1e-06
    %v3870 = vadd.f32 %v3858, 1e-06
    %v3871 = vadd.f32 %v3859, 1e-06
    %v3872 = vadd.f32 %v3860, 1e-06
    %v3873 = vadd.f32 %v3861, 1e-06
    %v3874 = vadd.f32 %v3862, 1e-06
    %v3875 = vadd.f32 %v3863, 1e-06
    %v3876 = vadd.f32 %v3864, 1e-06
    %v3877 = vadd.f32 %v3865, 1e-06
    %v3878 = vadd.f32 %v3866, 1e-06
    %v3879 = vrsqrt.pop %v3867
    %v3880 = vrsqrt.pop %v3868
    %v3881 = vrsqrt.pop %v3869
    %v3882 = vrsqrt.pop %v3870
    %v3883 = vrsqrt.pop %v3871
    %v3884 = vrsqrt.pop %v3872
    %v3885 = vrsqrt.pop %v3873
    %v3886 = vrsqrt.pop %v3874
    %v3887 = vrsqrt.pop %v3875
    %v3888 = vrsqrt.pop %v3876
    %v3889 = vrsqrt.pop %v3877
    %v3890 = vrsqrt.pop %v3878
    %v3891 = vmul.f32 %v3795, %v3879
    %v3892 = vmul.f32 %v3796, %v3880
    %v3893 = vmul.f32 %v3797, %v3881
    %v3894 = vmul.f32 %v3798, %v3882
    %v3895 = vmul.f32 %v3799, %v3883
    %v3896 = vmul.f32 %v3800, %v3884
    %v3897 = vmul.f32 %v3801, %v3885
    %v3898 = vmul.f32 %v3802, %v3886
    %v3899 = vmul.f32 %v3803, %v3887
    %v3900 = vmul.f32 %v3804, %v3888
    %v3901 = vmul.f32 %v3805, %v3889
    %v3902 = vmul.f32 %v3806, %v3890
    %v3904 = vlaneseq
    %v3905 = vshrl.u32 %v3904, 7
    %v3906 = vsub.s32 0, %v3905
    %v3907 = vrot.slane %v3744, %v3906
    %v3909 = vmul.f32 %v3891, %v3907
    %v3910 = vmul.f32 %v3892, %v3907
    %v3911 = vmul.f32 %v3893, %v3907
    %v3912 = vmul.f32 %v3894, %v3907
    %v3913 = vmul.f32 %v3895, %v3907
    %v3914 = vmul.f32 %v3896, %v3907
    %v3915 = vmul.f32 %v3897, %v3907
    %v3916 = vmul.f32 %v3898, %v3907
    %v3917 = vmul.f32 %v3899, %v3907
    %v3918 = vmul.f32 %v3900, %v3907
    %v3919 = vmul.f32 %v3901, %v3907
    %v3920 = vmul.f32 %v3902, %v3907
    %v3922 = vlaneseq
    %v3923 = vshrl.u32 %v3922, 7
    %v3924 = vsub.s32 0, %v3923
    %v3925 = vrot.slane %v3746, %v3924
    %v3927 = vadd.f32 %v3909, %v3925
    %v3928 = vadd.f32 %v3910, %v3925
    %v3929 = vadd.f32 %v3911, %v3925
    %v3930 = vadd.f32 %v3912, %v3925
    %v3931 = vadd.f32 %v3913, %v3925
    %v3932 = vadd.f32 %v3914, %v3925
    %v3933 = vadd.f32 %v3915, %v3925
    %v3934 = vadd.f32 %v3916, %v3925
    %v3935 = vadd.f32 %v3917, %v3925
    %v3936 = vadd.f32 %v3918, %v3925
    %v3937 = vadd.f32 %v3919, %v3925
    %v3938 = vadd.f32 %v3920, %v3925
    %v3939 = vpack.c.bf16 %v3928, %v3927
    %v3940 = vpack.c.bf16 %v3930, %v3929
    %v3941 = vpack.c.bf16 %v3932, %v3931
    %v3942 = vpack.c.bf16 %v3934, %v3933
    %v3943 = vpack.c.bf16 %v3936, %v3935
    %v3944 = vpack.c.bf16 %v3938, %v3937
    %v3945 = vld [vmem:[%s8] sm:$0xff]
    %v3946 = vld [vmem:[%s8 + $0x8] sm:$0xff]
    %v3947 = vld [vmem:[%s8 + $0x10] sm:$0xff]
    %v3948 = vld [vmem:[%s8 + $0x18] sm:$0xff]
    %v3949 = vld [vmem:[%s8 + $0x20] sm:$0xff]
    %v3950 = vld [vmem:[%s8 + $0x28] sm:$0xff]
    %v3951 = vld [vmem:[%s8 + $0x30] sm:$0xff]
    %v3952 = vld [vmem:[%s8 + $0x38] sm:$0xff]
    %v3953 = vld [vmem:[%s9] sm:$0x3]
    %v3955 = vlaneseq
    %v3956 = vshrl.u32 %v3955, 7
    %v3957 = vsub.s32 0, %v3956
    %v3958 = vrot.slane %v3953, %v3957
    %v3959 = vlaneseq
    %v3960 = vshrl.u32 %v3959, 7
    %v3961 = vsub.s32 1, %v3960
    %v3962 = vrot.slane %v3953, %v3961
    %v3973 = vunpack.c.l.b16 %v3945
    %v3974 = vunpack.c.h.b16 %v3945
    %v3975 = vunpack.c.l.b16 %v3946
    %v3976 = vunpack.c.h.b16 %v3946
    %v3977 = vunpack.c.l.b16 %v3947
    %v3978 = vunpack.c.h.b16 %v3947
    %v3979 = vunpack.c.l.b16 %v3948
    %v3980 = vunpack.c.h.b16 %v3948
    %v3981 = vunpack.c.l.b16 %v3949
    %v3982 = vunpack.c.h.b16 %v3949
    %v3983 = vunpack.c.l.b16 %v3950
    %v3984 = vunpack.c.h.b16 %v3950
    %v3985 = vunpack.c.l.b16 %v3951
    %v3986 = vunpack.c.h.b16 %v3951
    %v3987 = vunpack.c.l.b16 %v3952
    %v3988 = vunpack.c.h.b16 %v3952
    %v3989 = vpack.c.b16 %v3975, %v3973
    %v3990 = vpack.c.b16 %v3976, %v3974
    %v3991 = vpack.c.b16 %v3979, %v3977
    %v3992 = vpack.c.b16 %v3980, %v3978
    %v3993 = vpack.c.b16 %v3983, %v3981
    %v3994 = vpack.c.b16 %v3984, %v3982
    %v3995 = vpack.c.b16 %v3987, %v3985
    %v3996 = vpack.c.b16 %v3988, %v3986
    %v4006 = vsel %vm76, %v3939, 0
    %v4009 = vsel %vm76, %v3940, 0
    %v4012 = vsel %vm76, %v3941, 0
    %v4015 = vsel %vm76, %v3942, 0
    %v4018 = vsel %vm76, %v3943, 0
    %v4021 = vsel %vm76, %v3944, 0
    %4023 = vmatprep.subr.bf16.mxu0 %v3990
    %4024 = vmatpush1.bf16.msra.mxu0 %v3989
    %4025 = vmatprep.subr.bf16.mxu0 %v3992
    %4026 = vmatpush1.bf16.msra.mxu0 %v3991
    %4027 = vmatprep.subr.bf16.mxu0 %v3994
    %4028 = vmatpush1.bf16.msra.mxu0 %v3993
    %4029 = vmatprep.subr.bf16.mxu0 %v3996
    %4030 = vmatpush1.bf16.msra.mxu0 %v3995
    %4031 = vmatprep.subr.bf16.mxu0 0
    %4032 = vmatpush1.bf16.msra.mxu0 0
    %4033 = vmatprep.subr.bf16.mxu0 0
    %4034 = vmatpush1.bf16.msra.mxu0 0
    %4035 = vmatprep.subr.bf16.mxu0 0
    %4036 = vmatpush1.bf16.msra.mxu0 0
    %4037 = vmatprep.subr.bf16.mxu0 0
    %4038 = vmatpush1.bf16.msra.mxu0 0
    %4039 = vmatprep.subr.bf16.mxu0 0
    %4040 = vmatpush1.bf16.msra.mxu0 0
    %4041 = vmatprep.subr.bf16.mxu0 0
    %4042 = vmatpush1.bf16.msra.mxu0 0
    %4043 = vmatprep.subr.bf16.mxu0 0
    %4044 = vmatpush1.bf16.msra.mxu0 0
    %4045 = vmatprep.subr.bf16.mxu0 0
    %4046 = vmatpush1.bf16.msra.mxu0 0
    %4047 = vmatprep.subr.bf16.mxu0 0
    %4048 = vmatpush1.bf16.msra.mxu0 0
    %4049 = vmatprep.subr.bf16.mxu0 0
    %4050 = vmatpush1.bf16.msra.mxu0 0
    %4051 = vmatprep.subr.bf16.mxu0 0
    %4052 = vmatpush1.bf16.msra.mxu0 0
    %4053 = vmatprep.subr.bf16.mxu0 0
    %4054 = vmatpush1.bf16.msra.mxu0 0
    %4055 = vmatprep.mubr.bf16.mxu0 0
    %4056 = vmatmul.mubr.bf16.gmra.mrb[0].mxu0 %v4006
    %v4057 = vpop.f32.mrb[0].mxu0
    %v4058 = vadd.f32 %v3958, %v4057
    %v4059 = vpop.f32.mrb[0].mxu0
    %v4060 = vadd.f32 %v3962, %v4059
    %v4061 = vpop.f32.mrb[0].mxu0
    %v4062 = vadd.f32 %v3958, %v4061
    %v4063 = vpop.f32.mrb[0].mxu0
    %v4064 = vadd.f32 %v3962, %v4063
    %4065 = vmatprep.mubr.bf16.mxu0 0
    %4066 = vmatmul.mubr.bf16.gmra.mrb[0].mxu0 %v4009
    %v4067 = vpop.f32.mrb[0].mxu0
    %v4068 = vadd.f32 %v3958, %v4067
    %v4069 = vpop.f32.mrb[0].mxu0
    %v4070 = vadd.f32 %v3962, %v4069
    %v4071 = vpop.f32.mrb[0].mxu0
    %v4072 = vadd.f32 %v3958, %v4071
    %v4073 = vpop.f32.mrb[0].mxu0
    %v4074 = vadd.f32 %v3962, %v4073
    %4075 = vmatprep.mubr.bf16.mxu0 0
    %4076 = vmatmul.mubr.bf16.gmra.mrb[0].mxu0 %v4012
    %v4077 = vpop.f32.mrb[0].mxu0
    %v4078 = vadd.f32 %v3958, %v4077
    %v4079 = vpop.f32.mrb[0].mxu0
    %v4080 = vadd.f32 %v3962, %v4079
    %v4081 = vpop.f32.mrb[0].mxu0
    %v4082 = vadd.f32 %v3958, %v4081
    %v4083 = vpop.f32.mrb[0].mxu0
    %v4084 = vadd.f32 %v3962, %v4083
    %4085 = vmatprep.mubr.bf16.mxu0 0
    %4086 = vmatmul.mubr.bf16.gmra.mrb[0].mxu0 %v4015
    %v4087 = vpop.f32.mrb[0].mxu0
    %v4088 = vadd.f32 %v3958, %v4087
    %v4089 = vpop.f32.mrb[0].mxu0
    %v4090 = vadd.f32 %v3962, %v4089
    %v4091 = vpop.f32.mrb[0].mxu0
    %v4092 = vadd.f32 %v3958, %v4091
    %v4093 = vpop.f32.mrb[0].mxu0
    %v4094 = vadd.f32 %v3962, %v4093
    %4095 = vmatprep.mubr.bf16.mxu0 0
    %4096 = vmatmul.mubr.bf16.gmra.mrb[0].mxu0 %v4018
    %v4097 = vpop.f32.mrb[0].mxu0
    %v4098 = vadd.f32 %v3958, %v4097
    %v4099 = vpop.f32.mrb[0].mxu0
    %v4100 = vadd.f32 %v3962, %v4099
    %v4101 = vpop.f32.mrb[0].mxu0
    %v4102 = vadd.f32 %v3958, %v4101
    %v4103 = vpop.f32.mrb[0].mxu0
    %v4104 = vadd.f32 %v3962, %v4103
    %4105 = vmatprep.mubr.bf16.mxu0 0
    %4106 = vmatmul.mubr.bf16.gmra.mrb[0].mxu0 %v4021
    %v4107 = vpop.f32.mrb[0].mxu0
    %v4108 = vadd.f32 %v3958, %v4107
    %v4109 = vpop.f32.mrb[0].mxu0
    %v4110 = vadd.f32 %v3962, %v4109
    %v4111 = vpop.f32.mrb[0].mxu0
    %v4112 = vadd.f32 %v3958, %v4111
    %v4113 = vpop.f32.mrb[0].mxu0
    %v4114 = vadd.f32 %v3962, %v4113
    %4115 = vdwg.mxu0
    %v4116 = vmul.f32 %v4058, 0.5
    %v4117 = vmul.f32 %v4060, 0.5
    %v4118 = vmul.f32 %v4062, 0.5
    %v4119 = vmul.f32 %v4064, 0.5
    %v4120 = vmul.f32 %v4068, 0.5
    %v4121 = vmul.f32 %v4070, 0.5
    %v4122 = vmul.f32 %v4072, 0.5
    %v4123 = vmul.f32 %v4074, 0.5
    %v4124 = vmul.f32 %v4078, 0.5
    %v4125 = vmul.f32 %v4080, 0.5
    %v4126 = vmul.f32 %v4082, 0.5
    %v4127 = vmul.f32 %v4084, 0.5
    %v4128 = vmul.f32 %v4088, 0.5
    %v4129 = vmul.f32 %v4090, 0.5
    %v4130 = vmul.f32 %v4092, 0.5
    %v4131 = vmul.f32 %v4094, 0.5
    %v4132 = vmul.f32 %v4098, 0.5
    %v4133 = vmul.f32 %v4100, 0.5
    %v4134 = vmul.f32 %v4102, 0.5
    %v4135 = vmul.f32 %v4104, 0.5
    %v4136 = vmul.f32 %v4108, 0.5
    %v4137 = vmul.f32 %v4110, 0.5
    %v4138 = vmul.f32 %v4112, 0.5
    %v4139 = vmul.f32 %v4114, 0.5
    %v4140 = vmul.f32 %v4058, 0.70710677
    %v4141 = vmul.f32 %v4060, 0.70710677
    %v4142 = vmul.f32 %v4062, 0.70710677
    %v4143 = vmul.f32 %v4064, 0.70710677
    %v4144 = vmul.f32 %v4068, 0.70710677
    %v4145 = vmul.f32 %v4070, 0.70710677
    %v4146 = vmul.f32 %v4072, 0.70710677
    %v4147 = vmul.f32 %v4074, 0.70710677
    %v4148 = vmul.f32 %v4078, 0.70710677
    %v4149 = vmul.f32 %v4080, 0.70710677
    %v4150 = vmul.f32 %v4082, 0.70710677
    %v4151 = vmul.f32 %v4084, 0.70710677
    %v4152 = vmul.f32 %v4088, 0.70710677
    %v4153 = vmul.f32 %v4090, 0.70710677
    %v4154 = vmul.f32 %v4092, 0.70710677
    %v4155 = vmul.f32 %v4094, 0.70710677
    %v4156 = vmul.f32 %v4098, 0.70710677
    %v4157 = vmul.f32 %v4100, 0.70710677
    %v4158 = vmul.f32 %v4102, 0.70710677
    %v4159 = vmul.f32 %v4104, 0.70710677
    %v4160 = vmul.f32 %v4108, 0.70710677
    %v4161 = vmul.f32 %v4110, 0.70710677
    %v4162 = vmul.f32 %v4112, 0.70710677
    %v4163 = vmul.f32 %v4114, 0.70710677
    %vm4164 = vcmp.ge.f32.partialorder %v4140, 0.0
    %vm4165 = vcmp.ge.f32.partialorder %v4141, 0.0
    %vm4166 = vcmp.ge.f32.partialorder %v4142, 0.0
    %vm4167 = vcmp.ge.f32.partialorder %v4143, 0.0
    %vm4168 = vcmp.ge.f32.partialorder %v4144, 0.0
    %vm4169 = vcmp.ge.f32.partialorder %v4145, 0.0
    %vm4170 = vcmp.ge.f32.partialorder %v4146, 0.0
    %vm4171 = vcmp.ge.f32.partialorder %v4147, 0.0
    %vm4172 = vcmp.ge.f32.partialorder %v4148, 0.0
    %vm4173 = vcmp.ge.f32.partialorder %v4149, 0.0
    %vm4174 = vcmp.ge.f32.partialorder %v4150, 0.0
    %vm4175 = vcmp.ge.f32.partialorder %v4151, 0.0
    %vm4176 = vcmp.ge.f32.partialorder %v4152, 0.0
    %vm4177 = vcmp.ge.f32.partialorder %v4153, 0.0
    %vm4178 = vcmp.ge.f32.partialorder %v4154, 0.0
    %vm4179 = vcmp.ge.f32.partialorder %v4155, 0.0
    %vm4180 = vcmp.ge.f32.partialorder %v4156, 0.0
    %vm4181 = vcmp.ge.f32.partialorder %v4157, 0.0
    %vm4182 = vcmp.ge.f32.partialorder %v4158, 0.0
    %vm4183 = vcmp.ge.f32.partialorder %v4159, 0.0
    %vm4184 = vcmp.ge.f32.partialorder %v4160, 0.0
    %vm4185 = vcmp.ge.f32.partialorder %v4161, 0.0
    %vm4186 = vcmp.ge.f32.partialorder %v4162, 0.0
    %vm4187 = vcmp.ge.f32.partialorder %v4163, 0.0
    %v4188 = vsel %vm4164, 1.0, -1.0
    %v4189 = vsel %vm4165, 1.0, -1.0
    %v4190 = vsel %vm4166, 1.0, -1.0
    %v4191 = vsel %vm4167, 1.0, -1.0
    %v4192 = vsel %vm4168, 1.0, -1.0
    %v4193 = vsel %vm4169, 1.0, -1.0
    %v4194 = vsel %vm4170, 1.0, -1.0
    %v4195 = vsel %vm4171, 1.0, -1.0
    %v4196 = vsel %vm4172, 1.0, -1.0
    %v4197 = vsel %vm4173, 1.0, -1.0
    %v4198 = vsel %vm4174, 1.0, -1.0
    %v4199 = vsel %vm4175, 1.0, -1.0
    %v4200 = vsel %vm4176, 1.0, -1.0
    %v4201 = vsel %vm4177, 1.0, -1.0
    %v4202 = vsel %vm4178, 1.0, -1.0
    %v4203 = vsel %vm4179, 1.0, -1.0
    %v4204 = vsel %vm4180, 1.0, -1.0
    %v4205 = vsel %vm4181, 1.0, -1.0
    %v4206 = vsel %vm4182, 1.0, -1.0
    %v4207 = vsel %vm4183, 1.0, -1.0
    %v4208 = vsel %vm4184, 1.0, -1.0
    %v4209 = vsel %vm4185, 1.0, -1.0
    %v4210 = vsel %vm4186, 1.0, -1.0
    %v4211 = vsel %vm4187, 1.0, -1.0
    %v4212 = vand.u32 2147483647, %v4140
    %v4213 = vand.u32 2147483647, %v4141
    %v4214 = vand.u32 2147483647, %v4142
    %v4215 = vand.u32 2147483647, %v4143
    %v4216 = vand.u32 2147483647, %v4144
    %v4217 = vand.u32 2147483647, %v4145
    %v4218 = vand.u32 2147483647, %v4146
    %v4219 = vand.u32 2147483647, %v4147
    %v4220 = vand.u32 2147483647, %v4148
    %v4221 = vand.u32 2147483647, %v4149
    %v4222 = vand.u32 2147483647, %v4150
    %v4223 = vand.u32 2147483647, %v4151
    %v4224 = vand.u32 2147483647, %v4152
    %v4225 = vand.u32 2147483647, %v4153
    %v4226 = vand.u32 2147483647, %v4154
    %v4227 = vand.u32 2147483647, %v4155
    %v4228 = vand.u32 2147483647, %v4156
    %v4229 = vand.u32 2147483647, %v4157
    %v4230 = vand.u32 2147483647, %v4158
    %v4231 = vand.u32 2147483647, %v4159
    %v4232 = vand.u32 2147483647, %v4160
    %v4233 = vand.u32 2147483647, %v4161
    %v4234 = vand.u32 2147483647, %v4162
    %v4235 = vand.u32 2147483647, %v4163
    %v4236 = vmul.f32 %v4212, 0.3275911
    %v4237 = vmul.f32 %v4213, 0.3275911
    %v4238 = vmul.f32 %v4214, 0.3275911
    %v4239 = vmul.f32 %v4215, 0.3275911
    %v4240 = vmul.f32 %v4216, 0.3275911
    %v4241 = vmul.f32 %v4217, 0.3275911
    %v4242 = vmul.f32 %v4218, 0.3275911
    %v4243 = vmul.f32 %v4219, 0.3275911
    %v4244 = vmul.f32 %v4220, 0.3275911
    %v4245 = vmul.f32 %v4221, 0.3275911
    %v4246 = vmul.f32 %v4222, 0.3275911
    %v4247 = vmul.f32 %v4223, 0.3275911
    %v4248 = vmul.f32 %v4224, 0.3275911
    %v4249 = vmul.f32 %v4225, 0.3275911
    %v4250 = vmul.f32 %v4226, 0.3275911
    %v4251 = vmul.f32 %v4227, 0.3275911
    %v4252 = vmul.f32 %v4228, 0.3275911
    %v4253 = vmul.f32 %v4229, 0.3275911
    %v4254 = vmul.f32 %v4230, 0.3275911
    %v4255 = vmul.f32 %v4231, 0.3275911
    %v4256 = vmul.f32 %v4232, 0.3275911
    %v4257 = vmul.f32 %v4233, 0.3275911
    %v4258 = vmul.f32 %v4234, 0.3275911
    %v4259 = vmul.f32 %v4235, 0.3275911
    %v4260 = vadd.f32 %v4236, 1.0
    %v4261 = vadd.f32 %v4237, 1.0
    %v4262 = vadd.f32 %v4238, 1.0
    %v4263 = vadd.f32 %v4239, 1.0
    %v4264 = vadd.f32 %v4240, 1.0
    %v4265 = vadd.f32 %v4241, 1.0
    %v4266 = vadd.f32 %v4242, 1.0
    %v4267 = vadd.f32 %v4243, 1.0
    %v4268 = vadd.f32 %v4244, 1.0
    %v4269 = vadd.f32 %v4245, 1.0
    %v4270 = vadd.f32 %v4246, 1.0
    %v4271 = vadd.f32 %v4247, 1.0
    %v4272 = vadd.f32 %v4248, 1.0
    %v4273 = vadd.f32 %v4249, 1.0
    %v4274 = vadd.f32 %v4250, 1.0
    %v4275 = vadd.f32 %v4251, 1.0
    %v4276 = vadd.f32 %v4252, 1.0
    %v4277 = vadd.f32 %v4253, 1.0
    %v4278 = vadd.f32 %v4254, 1.0
    %v4279 = vadd.f32 %v4255, 1.0
    %v4280 = vadd.f32 %v4256, 1.0
    %v4281 = vadd.f32 %v4257, 1.0
    %v4282 = vadd.f32 %v4258, 1.0
    %v4283 = vadd.f32 %v4259, 1.0
    %v4284 = vrcp.pop %v4260
    %v4285 = vmul.f32 1.0, %v4284
    %v4286 = vrcp.pop %v4261
    %v4287 = vmul.f32 1.0, %v4286
    %v4288 = vrcp.pop %v4262
    %v4289 = vmul.f32 1.0, %v4288
    %v4290 = vrcp.pop %v4263
    %v4291 = vmul.f32 1.0, %v4290
    %v4292 = vrcp.pop %v4264
    %v4293 = vmul.f32 1.0, %v4292
    %v4294 = vrcp.pop %v4265
    %v4295 = vmul.f32 1.0, %v4294
    %v4296 = vrcp.pop %v4266
    %v4297 = vmul.f32 1.0, %v4296
    %v4298 = vrcp.pop %v4267
    %v4299 = vmul.f32 1.0, %v4298
    %v4300 = vrcp.pop %v4268
    %v4301 = vmul.f32 1.0, %v4300
    %v4302 = vrcp.pop %v4269
    %v4303 = vmul.f32 1.0, %v4302
    %v4304 = vrcp.pop %v4270
    %v4305 = vmul.f32 1.0, %v4304
    %v4306 = vrcp.pop %v4271
    %v4307 = vmul.f32 1.0, %v4306
    %v4308 = vrcp.pop %v4272
    %v4309 = vmul.f32 1.0, %v4308
    %v4310 = vrcp.pop %v4273
    %v4311 = vmul.f32 1.0, %v4310
    %v4312 = vrcp.pop %v4274
    %v4313 = vmul.f32 1.0, %v4312
    %v4314 = vrcp.pop %v4275
    %v4315 = vmul.f32 1.0, %v4314
    %v4316 = vrcp.pop %v4276
    %v4317 = vmul.f32 1.0, %v4316
    %v4318 = vrcp.pop %v4277
    %v4319 = vmul.f32 1.0, %v4318
    %v4320 = vrcp.pop %v4278
    %v4321 = vmul.f32 1.0, %v4320
    %v4322 = vrcp.pop %v4279
    %v4323 = vmul.f32 1.0, %v4322
    %v4324 = vrcp.pop %v4280
    %v4325 = vmul.f32 1.0, %v4324
    %v4326 = vrcp.pop %v4281
    %v4327 = vmul.f32 1.0, %v4326
    %v4328 = vrcp.pop %v4282
    %v4329 = vmul.f32 1.0, %v4328
    %v4330 = vrcp.pop %v4283
    %v4331 = vmul.f32 1.0, %v4330
    %v4332 = vmul.f32 %v4285, 1.0614054
    %v4333 = vmul.f32 %v4287, 1.0614054
    %v4334 = vmul.f32 %v4289, 1.0614054
    %v4335 = vmul.f32 %v4291, 1.0614054
    %v4336 = vmul.f32 %v4293, 1.0614054
    %v4337 = vmul.f32 %v4295, 1.0614054
    %v4338 = vmul.f32 %v4297, 1.0614054
    %v4339 = vmul.f32 %v4299, 1.0614054
    %v4340 = vmul.f32 %v4301, 1.0614054
    %v4341 = vmul.f32 %v4303, 1.0614054
    %v4342 = vmul.f32 %v4305, 1.0614054
    %v4343 = vmul.f32 %v4307, 1.0614054
    %v4344 = vmul.f32 %v4309, 1.0614054
    %v4345 = vmul.f32 %v4311, 1.0614054
    %v4346 = vmul.f32 %v4313, 1.0614054
    %v4347 = vmul.f32 %v4315, 1.0614054
    %v4348 = vmul.f32 %v4317, 1.0614054
    %v4349 = vmul.f32 %v4319, 1.0614054
    %v4350 = vmul.f32 %v4321, 1.0614054
    %v4351 = vmul.f32 %v4323, 1.0614054
    %v4352 = vmul.f32 %v4325, 1.0614054
    %v4353 = vmul.f32 %v4327, 1.0614054
    %v4354 = vmul.f32 %v4329, 1.0614054
    %v4355 = vmul.f32 %v4331, 1.0614054
    %v4356 = vadd.f32 %v4332, -1.4531521
    %v4357 = vadd.f32 %v4333, -1.4531521
    %v4358 = vadd.f32 %v4334, -1.4531521
    %v4359 = vadd.f32 %v4335, -1.4531521
    %v4360 = vadd.f32 %v4336, -1.4531521
    %v4361 = vadd.f32 %v4337, -1.4531521
    %v4362 = vadd.f32 %v4338, -1.4531521
    %v4363 = vadd.f32 %v4339, -1.4531521
    %v4364 = vadd.f32 %v4340, -1.4531521
    %v4365 = vadd.f32 %v4341, -1.4531521
    %v4366 = vadd.f32 %v4342, -1.4531521
    %v4367 = vadd.f32 %v4343, -1.4531521
    %v4368 = vadd.f32 %v4344, -1.4531521
    %v4369 = vadd.f32 %v4345, -1.4531521
    %v4370 = vadd.f32 %v4346, -1.4531521
    %v4371 = vadd.f32 %v4347, -1.4531521
    %v4372 = vadd.f32 %v4348, -1.4531521
    %v4373 = vadd.f32 %v4349, -1.4531521
    %v4374 = vadd.f32 %v4350, -1.4531521
    %v4375 = vadd.f32 %v4351, -1.4531521
    %v4376 = vadd.f32 %v4352, -1.4531521
    %v4377 = vadd.f32 %v4353, -1.4531521
    %v4378 = vadd.f32 %v4354, -1.4531521
    %v4379 = vadd.f32 %v4355, -1.4531521
    %v4380 = vmul.f32 %v4356, %v4285
    %v4381 = vmul.f32 %v4357, %v4287
    %v4382 = vmul.f32 %v4358, %v4289
    %v4383 = vmul.f32 %v4359, %v4291
    %v4384 = vmul.f32 %v4360, %v4293
    %v4385 = vmul.f32 %v4361, %v4295
    %v4386 = vmul.f32 %v4362, %v4297
    %v4387 = vmul.f32 %v4363, %v4299
    %v4388 = vmul.f32 %v4364, %v4301
    %v4389 = vmul.f32 %v4365, %v4303
    %v4390 = vmul.f32 %v4366, %v4305
    %v4391 = vmul.f32 %v4367, %v4307
    %v4392 = vmul.f32 %v4368, %v4309
    %v4393 = vmul.f32 %v4369, %v4311
    %v4394 = vmul.f32 %v4370, %v4313
    %v4395 = vmul.f32 %v4371, %v4315
    %v4396 = vmul.f32 %v4372, %v4317
    %v4397 = vmul.f32 %v4373, %v4319
    %v4398 = vmul.f32 %v4374, %v4321
    %v4399 = vmul.f32 %v4375, %v4323
    %v4400 = vmul.f32 %v4376, %v4325
    %v4401 = vmul.f32 %v4377, %v4327
    %v4402 = vmul.f32 %v4378, %v4329
    %v4403 = vmul.f32 %v4379, %v4331
    %v4404 = vadd.f32 %v4380, 1.4214138
    %v4405 = vadd.f32 %v4381, 1.4214138
    %v4406 = vadd.f32 %v4382, 1.4214138
    %v4407 = vadd.f32 %v4383, 1.4214138
    %v4408 = vadd.f32 %v4384, 1.4214138
    %v4409 = vadd.f32 %v4385, 1.4214138
    %v4410 = vadd.f32 %v4386, 1.4214138
    %v4411 = vadd.f32 %v4387, 1.4214138
    %v4412 = vadd.f32 %v4388, 1.4214138
    %v4413 = vadd.f32 %v4389, 1.4214138
    %v4414 = vadd.f32 %v4390, 1.4214138
    %v4415 = vadd.f32 %v4391, 1.4214138
    %v4416 = vadd.f32 %v4392, 1.4214138
    %v4417 = vadd.f32 %v4393, 1.4214138
    %v4418 = vadd.f32 %v4394, 1.4214138
    %v4419 = vadd.f32 %v4395, 1.4214138
    %v4420 = vadd.f32 %v4396, 1.4214138
    %v4421 = vadd.f32 %v4397, 1.4214138
    %v4422 = vadd.f32 %v4398, 1.4214138
    %v4423 = vadd.f32 %v4399, 1.4214138
    %v4424 = vadd.f32 %v4400, 1.4214138
    %v4425 = vadd.f32 %v4401, 1.4214138
    %v4426 = vadd.f32 %v4402, 1.4214138
    %v4427 = vadd.f32 %v4403, 1.4214138
    %v4428 = vmul.f32 %v4404, %v4285
    %v4429 = vmul.f32 %v4405, %v4287
    %v4430 = vmul.f32 %v4406, %v4289
    %v4431 = vmul.f32 %v4407, %v4291
    %v4432 = vmul.f32 %v4408, %v4293
    %v4433 = vmul.f32 %v4409, %v4295
    %v4434 = vmul.f32 %v4410, %v4297
    %v4435 = vmul.f32 %v4411, %v4299
    %v4436 = vmul.f32 %v4412, %v4301
    %v4437 = vmul.f32 %v4413, %v4303
    %v4438 = vmul.f32 %v4414, %v4305
    %v4439 = vmul.f32 %v4415, %v4307
    %v4440 = vmul.f32 %v4416, %v4309
    %v4441 = vmul.f32 %v4417, %v4311
    %v4442 = vmul.f32 %v4418, %v4313
    %v4443 = vmul.f32 %v4419, %v4315
    %v4444 = vmul.f32 %v4420, %v4317
    %v4445 = vmul.f32 %v4421, %v4319
    %v4446 = vmul.f32 %v4422, %v4321
    %v4447 = vmul.f32 %v4423, %v4323
    %v4448 = vmul.f32 %v4424, %v4325
    %v4449 = vmul.f32 %v4425, %v4327
    %v4450 = vmul.f32 %v4426, %v4329
    %v4451 = vmul.f32 %v4427, %v4331
    %v4452 = vadd.f32 %v4428, -0.28449672
    %v4453 = vadd.f32 %v4429, -0.28449672
    %v4454 = vadd.f32 %v4430, -0.28449672
    %v4455 = vadd.f32 %v4431, -0.28449672
    %v4456 = vadd.f32 %v4432, -0.28449672
    %v4457 = vadd.f32 %v4433, -0.28449672
    %v4458 = vadd.f32 %v4434, -0.28449672
    %v4459 = vadd.f32 %v4435, -0.28449672
    %v4460 = vadd.f32 %v4436, -0.28449672
    %v4461 = vadd.f32 %v4437, -0.28449672
    %v4462 = vadd.f32 %v4438, -0.28449672
    %v4463 = vadd.f32 %v4439, -0.28449672
    %v4464 = vadd.f32 %v4440, -0.28449672
    %v4465 = vadd.f32 %v4441, -0.28449672
    %v4466 = vadd.f32 %v4442, -0.28449672
    %v4467 = vadd.f32 %v4443, -0.28449672
    %v4468 = vadd.f32 %v4444, -0.28449672
    %v4469 = vadd.f32 %v4445, -0.28449672
    %v4470 = vadd.f32 %v4446, -0.28449672
    %v4471 = vadd.f32 %v4447, -0.28449672
    %v4472 = vadd.f32 %v4448, -0.28449672
    %v4473 = vadd.f32 %v4449, -0.28449672
    %v4474 = vadd.f32 %v4450, -0.28449672
    %v4475 = vadd.f32 %v4451, -0.28449672
    %v4476 = vmul.f32 %v4452, %v4285
    %v4477 = vmul.f32 %v4453, %v4287
    %v4478 = vmul.f32 %v4454, %v4289
    %v4479 = vmul.f32 %v4455, %v4291
    %v4480 = vmul.f32 %v4456, %v4293
    %v4481 = vmul.f32 %v4457, %v4295
    %v4482 = vmul.f32 %v4458, %v4297
    %v4483 = vmul.f32 %v4459, %v4299
    %v4484 = vmul.f32 %v4460, %v4301
    %v4485 = vmul.f32 %v4461, %v4303
    %v4486 = vmul.f32 %v4462, %v4305
    %v4487 = vmul.f32 %v4463, %v4307
    %v4488 = vmul.f32 %v4464, %v4309
    %v4489 = vmul.f32 %v4465, %v4311
    %v4490 = vmul.f32 %v4466, %v4313
    %v4491 = vmul.f32 %v4467, %v4315
    %v4492 = vmul.f32 %v4468, %v4317
    %v4493 = vmul.f32 %v4469, %v4319
    %v4494 = vmul.f32 %v4470, %v4321
    %v4495 = vmul.f32 %v4471, %v4323
    %v4496 = vmul.f32 %v4472, %v4325
    %v4497 = vmul.f32 %v4473, %v4327
    %v4498 = vmul.f32 %v4474, %v4329
    %v4499 = vmul.f32 %v4475, %v4331
    %v4500 = vadd.f32 %v4476, 0.2548296
    %v4501 = vadd.f32 %v4477, 0.2548296
    %v4502 = vadd.f32 %v4478, 0.2548296
    %v4503 = vadd.f32 %v4479, 0.2548296
    %v4504 = vadd.f32 %v4480, 0.2548296
    %v4505 = vadd.f32 %v4481, 0.2548296
    %v4506 = vadd.f32 %v4482, 0.2548296
    %v4507 = vadd.f32 %v4483, 0.2548296
    %v4508 = vadd.f32 %v4484, 0.2548296
    %v4509 = vadd.f32 %v4485, 0.2548296
    %v4510 = vadd.f32 %v4486, 0.2548296
    %v4511 = vadd.f32 %v4487, 0.2548296
    %v4512 = vadd.f32 %v4488, 0.2548296
    %v4513 = vadd.f32 %v4489, 0.2548296
    %v4514 = vadd.f32 %v4490, 0.2548296
    %v4515 = vadd.f32 %v4491, 0.2548296
    %v4516 = vadd.f32 %v4492, 0.2548296
    %v4517 = vadd.f32 %v4493, 0.2548296
    %v4518 = vadd.f32 %v4494, 0.2548296
    %v4519 = vadd.f32 %v4495, 0.2548296
    %v4520 = vadd.f32 %v4496, 0.2548296
    %v4521 = vadd.f32 %v4497, 0.2548296
    %v4522 = vadd.f32 %v4498, 0.2548296
    %v4523 = vadd.f32 %v4499, 0.2548296
    %v4524 = vmul.f32 %v4500, %v4285
    %v4525 = vmul.f32 %v4501, %v4287
    %v4526 = vmul.f32 %v4502, %v4289
    %v4527 = vmul.f32 %v4503, %v4291
    %v4528 = vmul.f32 %v4504, %v4293
    %v4529 = vmul.f32 %v4505, %v4295
    %v4530 = vmul.f32 %v4506, %v4297
    %v4531 = vmul.f32 %v4507, %v4299
    %v4532 = vmul.f32 %v4508, %v4301
    %v4533 = vmul.f32 %v4509, %v4303
    %v4534 = vmul.f32 %v4510, %v4305
    %v4535 = vmul.f32 %v4511, %v4307
    %v4536 = vmul.f32 %v4512, %v4309
    %v4537 = vmul.f32 %v4513, %v4311
    %v4538 = vmul.f32 %v4514, %v4313
    %v4539 = vmul.f32 %v4515, %v4315
    %v4540 = vmul.f32 %v4516, %v4317
    %v4541 = vmul.f32 %v4517, %v4319
    %v4542 = vmul.f32 %v4518, %v4321
    %v4543 = vmul.f32 %v4519, %v4323
    %v4544 = vmul.f32 %v4520, %v4325
    %v4545 = vmul.f32 %v4521, %v4327
    %v4546 = vmul.f32 %v4522, %v4329
    %v4547 = vmul.f32 %v4523, %v4331
    %v4548 = vsub.f32 0.0, %v4212
    %v4549 = vsub.f32 0.0, %v4213
    %v4550 = vsub.f32 0.0, %v4214
    %v4551 = vsub.f32 0.0, %v4215
    %v4552 = vsub.f32 0.0, %v4216
    %v4553 = vsub.f32 0.0, %v4217
    %v4554 = vsub.f32 0.0, %v4218
    %v4555 = vsub.f32 0.0, %v4219
    %v4556 = vsub.f32 0.0, %v4220
    %v4557 = vsub.f32 0.0, %v4221
    %v4558 = vsub.f32 0.0, %v4222
    %v4559 = vsub.f32 0.0, %v4223
    %v4560 = vsub.f32 0.0, %v4224
    %v4561 = vsub.f32 0.0, %v4225
    %v4562 = vsub.f32 0.0, %v4226
    %v4563 = vsub.f32 0.0, %v4227
    %v4564 = vsub.f32 0.0, %v4228
    %v4565 = vsub.f32 0.0, %v4229
    %v4566 = vsub.f32 0.0, %v4230
    %v4567 = vsub.f32 0.0, %v4231
    %v4568 = vsub.f32 0.0, %v4232
    %v4569 = vsub.f32 0.0, %v4233
    %v4570 = vsub.f32 0.0, %v4234
    %v4571 = vsub.f32 0.0, %v4235
    %v4572 = vmul.f32 %v4548, %v4212
    %v4573 = vmul.f32 %v4549, %v4213
    %v4574 = vmul.f32 %v4550, %v4214
    %v4575 = vmul.f32 %v4551, %v4215
    %v4576 = vmul.f32 %v4552, %v4216
    %v4577 = vmul.f32 %v4553, %v4217
    %v4578 = vmul.f32 %v4554, %v4218
    %v4579 = vmul.f32 %v4555, %v4219
    %v4580 = vmul.f32 %v4556, %v4220
    %v4581 = vmul.f32 %v4557, %v4221
    %v4582 = vmul.f32 %v4558, %v4222
    %v4583 = vmul.f32 %v4559, %v4223
    %v4584 = vmul.f32 %v4560, %v4224
    %v4585 = vmul.f32 %v4561, %v4225
    %v4586 = vmul.f32 %v4562, %v4226
    %v4587 = vmul.f32 %v4563, %v4227
    %v4588 = vmul.f32 %v4564, %v4228
    %v4589 = vmul.f32 %v4565, %v4229
    %v4590 = vmul.f32 %v4566, %v4230
    %v4591 = vmul.f32 %v4567, %v4231
    %v4592 = vmul.f32 %v4568, %v4232
    %v4593 = vmul.f32 %v4569, %v4233
    %v4594 = vmul.f32 %v4570, %v4234
    %v4595 = vmul.f32 %v4571, %v4235
    %v4596 = vmul.f32 %v4572, 1.442695
    %v4597 = vpow.pop %v4596
    %v4598 = vmul.f32 %v4573, 1.442695
    %v4599 = vpow.pop %v4598
    %v4600 = vmul.f32 %v4574, 1.442695
    %v4601 = vpow.pop %v4600
    %v4602 = vmul.f32 %v4575, 1.442695
    %v4603 = vpow.pop %v4602
    %v4604 = vmul.f32 %v4576, 1.442695
    %v4605 = vpow.pop %v4604
    %v4606 = vmul.f32 %v4577, 1.442695
    %v4607 = vpow.pop %v4606
    %v4608 = vmul.f32 %v4578, 1.442695
    %v4609 = vpow.pop %v4608
    %v4610 = vmul.f32 %v4579, 1.442695
    %v4611 = vpow.pop %v4610
    %v4612 = vmul.f32 %v4580, 1.442695
    %v4613 = vpow.pop %v4612
    %v4614 = vmul.f32 %v4581, 1.442695
    %v4615 = vpow.pop %v4614
    %v4616 = vmul.f32 %v4582, 1.442695
    %v4617 = vpow.pop %v4616
    %v4618 = vmul.f32 %v4583, 1.442695
    %v4619 = vpow.pop %v4618
    %v4620 = vmul.f32 %v4584, 1.442695
    %v4621 = vpow.pop %v4620
    %v4622 = vmul.f32 %v4585, 1.442695
    %v4623 = vpow.pop %v4622
    %v4624 = vmul.f32 %v4586, 1.442695
    %v4625 = vpow.pop %v4624
    %v4626 = vmul.f32 %v4587, 1.442695
    %v4627 = vpow.pop %v4626
    %v4628 = vmul.f32 %v4588, 1.442695
    %v4629 = vpow.pop %v4628
    %v4630 = vmul.f32 %v4589, 1.442695
    %v4631 = vpow.pop %v4630
    %v4632 = vmul.f32 %v4590, 1.442695
    %v4633 = vpow.pop %v4632
    %v4634 = vmul.f32 %v4591, 1.442695
    %v4635 = vpow.pop %v4634
    %v4636 = vmul.f32 %v4592, 1.442695
    %v4637 = vpow.pop %v4636
    %v4638 = vmul.f32 %v4593, 1.442695
    %v4639 = vpow.pop %v4638
    %v4640 = vmul.f32 %v4594, 1.442695
    %v4641 = vpow.pop %v4640
    %v4642 = vmul.f32 %v4595, 1.442695
    %v4643 = vpow.pop %v4642
    %v4644 = vmul.f32 %v4524, %v4597
    %v4645 = vmul.f32 %v4525, %v4599
    %v4646 = vmul.f32 %v4526, %v4601
    %v4647 = vmul.f32 %v4527, %v4603
    %v4648 = vmul.f32 %v4528, %v4605
    %v4649 = vmul.f32 %v4529, %v4607
    %v4650 = vmul.f32 %v4530, %v4609
    %v4651 = vmul.f32 %v4531, %v4611
    %v4652 = vmul.f32 %v4532, %v4613
    %v4653 = vmul.f32 %v4533, %v4615
    %v4654 = vmul.f32 %v4534, %v4617
    %v4655 = vmul.f32 %v4535, %v4619
    %v4656 = vmul.f32 %v4536, %v4621
    %v4657 = vmul.f32 %v4537, %v4623
    %v4658 = vmul.f32 %v4538, %v4625
    %v4659 = vmul.f32 %v4539, %v4627
    %v4660 = vmul.f32 %v4540, %v4629
    %v4661 = vmul.f32 %v4541, %v4631
    %v4662 = vmul.f32 %v4542, %v4633
    %v4663 = vmul.f32 %v4543, %v4635
    %v4664 = vmul.f32 %v4544, %v4637
    %v4665 = vmul.f32 %v4545, %v4639
    %v4666 = vmul.f32 %v4546, %v4641
    %v4667 = vmul.f32 %v4547, %v4643
    %v4668 = vsub.f32 1.0, %v4644
    %v4669 = vsub.f32 1.0, %v4645
    %v4670 = vsub.f32 1.0, %v4646
    %v4671 = vsub.f32 1.0, %v4647
    %v4672 = vsub.f32 1.0, %v4648
    %v4673 = vsub.f32 1.0, %v4649
    %v4674 = vsub.f32 1.0, %v4650
    %v4675 = vsub.f32 1.0, %v4651
    %v4676 = vsub.f32 1.0, %v4652
    %v4677 = vsub.f32 1.0, %v4653
    %v4678 = vsub.f32 1.0, %v4654
    %v4679 = vsub.f32 1.0, %v4655
    %v4680 = vsub.f32 1.0, %v4656
    %v4681 = vsub.f32 1.0, %v4657
    %v4682 = vsub.f32 1.0, %v4658
    %v4683 = vsub.f32 1.0, %v4659
    %v4684 = vsub.f32 1.0, %v4660
    %v4685 = vsub.f32 1.0, %v4661
    %v4686 = vsub.f32 1.0, %v4662
    %v4687 = vsub.f32 1.0, %v4663
    %v4688 = vsub.f32 1.0, %v4664
    %v4689 = vsub.f32 1.0, %v4665
    %v4690 = vsub.f32 1.0, %v4666
    %v4691 = vsub.f32 1.0, %v4667
    %v4692 = vmul.f32 %v4188, %v4668
    %v4693 = vmul.f32 %v4189, %v4669
    %v4694 = vmul.f32 %v4190, %v4670
    %v4695 = vmul.f32 %v4191, %v4671
    %v4696 = vmul.f32 %v4192, %v4672
    %v4697 = vmul.f32 %v4193, %v4673
    %v4698 = vmul.f32 %v4194, %v4674
    %v4699 = vmul.f32 %v4195, %v4675
    %v4700 = vmul.f32 %v4196, %v4676
    %v4701 = vmul.f32 %v4197, %v4677
    %v4702 = vmul.f32 %v4198, %v4678
    %v4703 = vmul.f32 %v4199, %v4679
    %v4704 = vmul.f32 %v4200, %v4680
    %v4705 = vmul.f32 %v4201, %v4681
    %v4706 = vmul.f32 %v4202, %v4682
    %v4707 = vmul.f32 %v4203, %v4683
    %v4708 = vmul.f32 %v4204, %v4684
    %v4709 = vmul.f32 %v4205, %v4685
    %v4710 = vmul.f32 %v4206, %v4686
    %v4711 = vmul.f32 %v4207, %v4687
    %v4712 = vmul.f32 %v4208, %v4688
    %v4713 = vmul.f32 %v4209, %v4689
    %v4714 = vmul.f32 %v4210, %v4690
    %v4715 = vmul.f32 %v4211, %v4691
    %v4716 = vadd.f32 %v4692, 1.0
    %v4717 = vadd.f32 %v4693, 1.0
    %v4718 = vadd.f32 %v4694, 1.0
    %v4719 = vadd.f32 %v4695, 1.0
    %v4720 = vadd.f32 %v4696, 1.0
    %v4721 = vadd.f32 %v4697, 1.0
    %v4722 = vadd.f32 %v4698, 1.0
    %v4723 = vadd.f32 %v4699, 1.0
    %v4724 = vadd.f32 %v4700, 1.0
    %v4725 = vadd.f32 %v4701, 1.0
    %v4726 = vadd.f32 %v4702, 1.0
    %v4727 = vadd.f32 %v4703, 1.0
    %v4728 = vadd.f32 %v4704, 1.0
    %v4729 = vadd.f32 %v4705, 1.0
    %v4730 = vadd.f32 %v4706, 1.0
    %v4731 = vadd.f32 %v4707, 1.0
    %v4732 = vadd.f32 %v4708, 1.0
    %v4733 = vadd.f32 %v4709, 1.0
    %v4734 = vadd.f32 %v4710, 1.0
    %v4735 = vadd.f32 %v4711, 1.0
    %v4736 = vadd.f32 %v4712, 1.0
    %v4737 = vadd.f32 %v4713, 1.0
    %v4738 = vadd.f32 %v4714, 1.0
    %v4739 = vadd.f32 %v4715, 1.0
    %v4740 = vmul.f32 %v4116, %v4716
    %v4741 = vmul.f32 %v4117, %v4717
    %v4742 = vmul.f32 %v4118, %v4718
    %v4743 = vmul.f32 %v4119, %v4719
    %v4744 = vmul.f32 %v4120, %v4720
    %v4745 = vmul.f32 %v4121, %v4721
    %v4746 = vmul.f32 %v4122, %v4722
    %v4747 = vmul.f32 %v4123, %v4723
    %v4748 = vmul.f32 %v4124, %v4724
    %v4749 = vmul.f32 %v4125, %v4725
    %v4750 = vmul.f32 %v4126, %v4726
    %v4751 = vmul.f32 %v4127, %v4727
    %v4752 = vmul.f32 %v4128, %v4728
    %v4753 = vmul.f32 %v4129, %v4729
    %v4754 = vmul.f32 %v4130, %v4730
    %v4755 = vmul.f32 %v4131, %v4731
    %v4756 = vmul.f32 %v4132, %v4732
    %v4757 = vmul.f32 %v4133, %v4733
    %v4758 = vmul.f32 %v4134, %v4734
    %v4759 = vmul.f32 %v4135, %v4735
    %v4760 = vmul.f32 %v4136, %v4736
    %v4761 = vmul.f32 %v4137, %v4737
    %v4762 = vmul.f32 %v4138, %v4738
    %v4763 = vmul.f32 %v4139, %v4739
    %v4764 = vpack.c.bf16 %v4742, %v4740
    %v4765 = vpack.c.bf16 %v4743, %v4741
    %v4766 = vpack.c.bf16 %v4746, %v4744
    %v4767 = vpack.c.bf16 %v4747, %v4745
    %v4768 = vpack.c.bf16 %v4750, %v4748
    %v4769 = vpack.c.bf16 %v4751, %v4749
    %v4770 = vpack.c.bf16 %v4754, %v4752
    %v4771 = vpack.c.bf16 %v4755, %v4753
    %v4772 = vpack.c.bf16 %v4758, %v4756
    %v4773 = vpack.c.bf16 %v4759, %v4757
    %v4774 = vpack.c.bf16 %v4762, %v4760
    %v4775 = vpack.c.bf16 %v4763, %v4761
    %v4776 = vld [vmem:[%s10] sm:$0xf]
    %v4777 = vld [vmem:[%s10 + $0x4] sm:$0xf]
    %v4778 = vld [vmem:[%s10 + $0x8] sm:$0xf]
    %v4779 = vld [vmem:[%s10 + $0xc] sm:$0xf]
    %v4780 = vld [vmem:[%s10 + $0x10] sm:$0xf]
    %v4781 = vld [vmem:[%s10 + $0x14] sm:$0xf]
    %v4782 = vld [vmem:[%s10 + $0x18] sm:$0xf]
    %v4783 = vld [vmem:[%s10 + $0x1c] sm:$0xf]
    %v4784 = vld [vmem:[%s10 + $0x20] sm:$0xf]
    %v4785 = vld [vmem:[%s10 + $0x24] sm:$0xf]
    %v4786 = vld [vmem:[%s10 + $0x28] sm:$0xf]
    %v4787 = vld [vmem:[%s10 + $0x2c] sm:$0xf]
    %v4788 = vld [vmem:[%s10 + $0x30] sm:$0xf]
    %v4789 = vld [vmem:[%s10 + $0x34] sm:$0xf]
    %v4790 = vld [vmem:[%s10 + $0x38] sm:$0xf]
    %v4791 = vld [vmem:[%s10 + $0x3c] sm:$0xf]
    %v4792 = vld [vmem:[%s10 + $0x40] sm:$0xf]
    %v4793 = vld [vmem:[%s10 + $0x44] sm:$0xf]
    %v4794 = vld [vmem:[%s10 + $0x48] sm:$0xf]
    %v4795 = vld [vmem:[%s10 + $0x4c] sm:$0xf]
    %v4796 = vld [vmem:[%s10 + $0x50] sm:$0xf]
    %v4797 = vld [vmem:[%s10 + $0x54] sm:$0xf]
    %v4798 = vld [vmem:[%s10 + $0x58] sm:$0xf]
    %v4799 = vld [vmem:[%s10 + $0x5c] sm:$0xf]
    %v4800 = vld [vmem:[%s10 + $0x60] sm:$0xf]
    %v4801 = vld [vmem:[%s10 + $0x64] sm:$0xf]
    %v4802 = vld [vmem:[%s10 + $0x68] sm:$0xf]
    %v4803 = vld [vmem:[%s10 + $0x6c] sm:$0xf]
    %v4804 = vld [vmem:[%s10 + $0x70] sm:$0xf]
    %v4805 = vld [vmem:[%s10 + $0x74] sm:$0xf]
    %v4806 = vld [vmem:[%s10 + $0x78] sm:$0xf]
    %v4807 = vld [vmem:[%s10 + $0x7c] sm:$0xf]
    %v4840 = vunpack.c.l.b16 %v4776
    %v4841 = vunpack.c.l.b16 %v4777
    %v4842 = vunpack.c.l.b16 %v4778
    %v4843 = vunpack.c.l.b16 %v4779
    %v4844 = vunpack.c.l.b16 %v4780
    %v4845 = vunpack.c.l.b16 %v4781
    %v4846 = vunpack.c.l.b16 %v4782
    %v4847 = vunpack.c.l.b16 %v4783
    %v4848 = vunpack.c.l.b16 %v4784
    %v4849 = vunpack.c.l.b16 %v4785
    %v4850 = vunpack.c.l.b16 %v4786
    %v4851 = vunpack.c.l.b16 %v4787
    %v4852 = vunpack.c.l.b16 %v4788
    %v4853 = vunpack.c.l.b16 %v4789
    %v4854 = vunpack.c.l.b16 %v4790
    %v4855 = vunpack.c.l.b16 %v4791
    %v4856 = vunpack.c.l.b16 %v4792
    %v4857 = vunpack.c.l.b16 %v4793
    %v4858 = vunpack.c.l.b16 %v4794
    %v4859 = vunpack.c.l.b16 %v4795
    %v4860 = vunpack.c.l.b16 %v4796
    %v4861 = vunpack.c.l.b16 %v4797
    %v4862 = vunpack.c.l.b16 %v4798
    %v4863 = vunpack.c.l.b16 %v4799
    %v4864 = vunpack.c.l.b16 %v4800
    %v4865 = vunpack.c.l.b16 %v4801
    %v4866 = vunpack.c.l.b16 %v4802
    %v4867 = vunpack.c.l.b16 %v4803
    %v4868 = vunpack.c.l.b16 %v4804
    %v4869 = vunpack.c.l.b16 %v4805
    %v4870 = vunpack.c.l.b16 %v4806
    %v4871 = vunpack.c.l.b16 %v4807
    %v4872 = vpack.c.b16 %v4841, %v4840
    %v4873 = vpack.c.b16 %v4843, %v4842
    %v4874 = vpack.c.b16 %v4845, %v4844
    %v4875 = vpack.c.b16 %v4847, %v4846
    %v4876 = vpack.c.b16 %v4849, %v4848
    %v4877 = vpack.c.b16 %v4851, %v4850
    %v4878 = vpack.c.b16 %v4853, %v4852
    %v4879 = vpack.c.b16 %v4855, %v4854
    %v4880 = vpack.c.b16 %v4857, %v4856
    %v4881 = vpack.c.b16 %v4859, %v4858
    %v4882 = vpack.c.b16 %v4861, %v4860
    %v4883 = vpack.c.b16 %v4863, %v4862
    %v4884 = vpack.c.b16 %v4865, %v4864
    %v4885 = vpack.c.b16 %v4867, %v4866
    %v4886 = vpack.c.b16 %v4869, %v4868
    %v4887 = vpack.c.b16 %v4871, %v4870
    %4904 = vmatprep.subr.bf16.mxu0 0
    %4905 = vmatpush1.bf16.msra.mxu0 %v4872
    %4906 = vmatprep.subr.bf16.mxu0 0
    %4907 = vmatpush1.bf16.msra.mxu0 %v4873
    %4908 = vmatprep.subr.bf16.mxu0 0
    %4909 = vmatpush1.bf16.msra.mxu0 %v4874
    %4910 = vmatprep.subr.bf16.mxu0 0
    %4911 = vmatpush1.bf16.msra.mxu0 %v4875
    %4912 = vmatprep.subr.bf16.mxu0 0
    %4913 = vmatpush1.bf16.msra.mxu0 %v4876
    %4914 = vmatprep.subr.bf16.mxu0 0
    %4915 = vmatpush1.bf16.msra.mxu0 %v4877
    %4916 = vmatprep.subr.bf16.mxu0 0
    %4917 = vmatpush1.bf16.msra.mxu0 %v4878
    %4918 = vmatprep.subr.bf16.mxu0 0
    %4919 = vmatpush1.bf16.msra.mxu0 %v4879
    %4920 = vmatprep.subr.bf16.mxu0 0
    %4921 = vmatpush1.bf16.msra.mxu0 %v4880
    %4922 = vmatprep.subr.bf16.mxu0 0
    %4923 = vmatpush1.bf16.msra.mxu0 %v4881
    %4924 = vmatprep.subr.bf16.mxu0 0
    %4925 = vmatpush1.bf16.msra.mxu0 %v4882
    %4926 = vmatprep.subr.bf16.mxu0 0
    %4927 = vmatpush1.bf16.msra.mxu0 %v4883
    %4928 = vmatprep.subr.bf16.mxu0 0
    %4929 = vmatpush1.bf16.msra.mxu0 %v4884
    %4930 = vmatprep.subr.bf16.mxu0 0
    %4931 = vmatpush1.bf16.msra.mxu0 %v4885
    %4932 = vmatprep.subr.bf16.mxu0 0
    %4933 = vmatpush1.bf16.msra.mxu0 %v4886
    %4934 = vmatprep.subr.bf16.mxu0 0
    %4935 = vmatpush1.bf16.msra.mxu0 %v4887
    %4936 = vmatprep.mubr.bf16.mxu0 %v4765
    %4937 = vmatmul.mubr.bf16.gmra.mrb[0].mxu0 %v4764
    %v4938 = vpop.f32.mrb[0].mxu0
    %v4939 = vadd.f32 0.0, %v4938
    %v4940 = vpop.f32.mrb[0].mxu0
    %v4941 = vpop.f32.mrb[0].mxu0
    %v4942 = vadd.f32 0.0, %v4941
    %v4943 = vpop.f32.mrb[0].mxu0
    %4944 = vmatprep.mubr.bf16.mxu0 %v4767
    %4945 = vmatmul.mubr.bf16.gmra.mrb[0].mxu0 %v4766
    %v4946 = vpop.f32.mrb[0].mxu0
    %v4947 = vadd.f32 0.0, %v4946
    %v4948 = vpop.f32.mrb[0].mxu0
    %v4949 = vpop.f32.mrb[0].mxu0
    %v4950 = vadd.f32 0.0, %v4949
    %v4951 = vpop.f32.mrb[0].mxu0
    %4952 = vmatprep.mubr.bf16.mxu0 %v4769
    %4953 = vmatmul.mubr.bf16.gmra.mrb[0].mxu0 %v4768
    %v4954 = vpop.f32.mrb[0].mxu0
    %v4955 = vadd.f32 0.0, %v4954
    %v4956 = vpop.f32.mrb[0].mxu0
    %v4957 = vpop.f32.mrb[0].mxu0
    %v4958 = vadd.f32 0.0, %v4957
    %v4959 = vpop.f32.mrb[0].mxu0
    %4960 = vmatprep.mubr.bf16.mxu0 %v4771
    %4961 = vmatmul.mubr.bf16.gmra.mrb[0].mxu0 %v4770
    %v4962 = vpop.f32.mrb[0].mxu0
    %v4963 = vadd.f32 0.0, %v4962
    %v4964 = vpop.f32.mrb[0].mxu0
    %v4965 = vpop.f32.mrb[0].mxu0
    %v4966 = vadd.f32 0.0, %v4965
    %v4967 = vpop.f32.mrb[0].mxu0
    %4968 = vmatprep.mubr.bf16.mxu0 %v4773
    %4969 = vmatmul.mubr.bf16.gmra.mrb[0].mxu0 %v4772
    %v4970 = vpop.f32.mrb[0].mxu0
    %v4971 = vadd.f32 0.0, %v4970
    %v4972 = vpop.f32.mrb[0].mxu0
    %v4973 = vpop.f32.mrb[0].mxu0
    %v4974 = vadd.f32 0.0, %v4973
    %v4975 = vpop.f32.mrb[0].mxu0
    %4976 = vmatprep.mubr.bf16.mxu0 %v4775
    %4977 = vmatmul.mubr.bf16.gmra.mrb[0].mxu0 %v4774
    %v4978 = vpop.f32.mrb[0].mxu0
    %v4979 = vadd.f32 0.0, %v4978
    %v4980 = vpop.f32.mrb[0].mxu0
    %v4981 = vpop.f32.mrb[0].mxu0
    %v4982 = vadd.f32 0.0, %v4981
    %v4983 = vpop.f32.mrb[0].mxu0
    %4984 = vdwg.mxu0
    %v4985 = vadd.f32 %v3731, %v4939
    %v4986 = vadd.f32 %v3732, %v4942
    %v4987 = vadd.f32 %v3733, %v4947
    %v4988 = vadd.f32 %v3734, %v4950
    %v4989 = vadd.f32 %v3735, %v4955
    %v4990 = vadd.f32 %v3736, %v4958
    %v4991 = vadd.f32 %v3737, %v4963
    %v4992 = vadd.f32 %v3738, %v4966
    %v4993 = vadd.f32 %v3739, %v4971
    %v4994 = vadd.f32 %v3740, %v4974
    %v4995 = vadd.f32 %v3741, %v4979
    %v4996 = vadd.f32 %v3742, %v4982
    %v4997 = vld [vmem:[%s11] sm:$0x1]
    %v4999 = vlaneseq
    %v5000 = vshrl.u32 %v4999, 7
    %v5001 = vsub.s32 0, %v5000
    %v5002 = vrot.slane %v4997, %v5001
    %v5004 = vadd.f32 %v4985, %v5002
    %v5005 = vadd.f32 %v4986, %v5002
    %v5006 = vadd.f32 %v4987, %v5002
    %v5007 = vadd.f32 %v4988, %v5002
    %v5008 = vadd.f32 %v4989, %v5002
    %v5009 = vadd.f32 %v4990, %v5002
    %v5010 = vadd.f32 %v4991, %v5002
    %v5011 = vadd.f32 %v4992, %v5002
    %v5012 = vadd.f32 %v4993, %v5002
    %v5013 = vadd.f32 %v4994, %v5002
    %v5014 = vadd.f32 %v4995, %v5002
    %v5015 = vadd.f32 %v4996, %v5002
    %s5016 = scalar_lea.vmem %s2, 2
    %v5017 = vld [vmem:[%s5016] sm:$0x1]
    %s5018 = scalar_lea.vmem %s3, 2
    %v5019 = vld [vmem:[%s5018] sm:$0x1]
    %v5020 = vsel %vm76, %v5004, 0.0
    %5021 = vadd.xlane.f32.xlu0 %v5020
    %v5022 = vpop.xlane.xlu0 %5021
    %v5023 = vsel %vm76, %v5005, 0.0
    %5024 = vadd.xlane.f32.xlu0 %v5023
    %v5025 = vpop.xlane.xlu0 %5024
    %v5026 = vsel %vm76, %v5006, 0.0
    %5027 = vadd.xlane.f32.xlu0 %v5026
    %v5028 = vpop.xlane.xlu0 %5027
    %v5029 = vsel %vm76, %v5007, 0.0
    %5030 = vadd.xlane.f32.xlu0 %v5029
    %v5031 = vpop.xlane.xlu0 %5030
    %v5032 = vsel %vm76, %v5008, 0.0
    %5033 = vadd.xlane.f32.xlu0 %v5032
    %v5034 = vpop.xlane.xlu0 %5033
    %v5035 = vsel %vm76, %v5009, 0.0
    %5036 = vadd.xlane.f32.xlu0 %v5035
    %v5037 = vpop.xlane.xlu0 %5036
    %v5038 = vsel %vm76, %v5010, 0.0
    %5039 = vadd.xlane.f32.xlu0 %v5038
    %v5040 = vpop.xlane.xlu0 %5039
    %v5041 = vsel %vm76, %v5011, 0.0
    %5042 = vadd.xlane.f32.xlu0 %v5041
    %v5043 = vpop.xlane.xlu0 %5042
    %v5044 = vsel %vm76, %v5012, 0.0
    %5045 = vadd.xlane.f32.xlu0 %v5044
    %v5046 = vpop.xlane.xlu0 %5045
    %v5047 = vsel %vm76, %v5013, 0.0
    %5048 = vadd.xlane.f32.xlu0 %v5047
    %v5049 = vpop.xlane.xlu0 %5048
    %v5050 = vsel %vm76, %v5014, 0.0
    %5051 = vadd.xlane.f32.xlu0 %v5050
    %v5052 = vpop.xlane.xlu0 %5051
    %v5053 = vsel %vm76, %v5015, 0.0
    %5054 = vadd.xlane.f32.xlu0 %v5053
    %v5055 = vpop.xlane.xlu0 %5054
    %v5056 = vmul.f32 %v5022, %v113
    %v5057 = vmul.f32 %v5025, %v113
    %v5058 = vmul.f32 %v5028, %v113
    %v5059 = vmul.f32 %v5031, %v113
    %v5060 = vmul.f32 %v5034, %v113
    %v5061 = vmul.f32 %v5037, %v113
    %v5062 = vmul.f32 %v5040, %v113
    %v5063 = vmul.f32 %v5043, %v113
    %v5064 = vmul.f32 %v5046, %v113
    %v5065 = vmul.f32 %v5049, %v113
    %v5066 = vmul.f32 %v5052, %v113
    %v5067 = vmul.f32 %v5055, %v113
    %v5068 = vsub.f32 %v5004, %v5056
    %v5069 = vsub.f32 %v5005, %v5057
    %v5070 = vsub.f32 %v5006, %v5058
    %v5071 = vsub.f32 %v5007, %v5059
    %v5072 = vsub.f32 %v5008, %v5060
    %v5073 = vsub.f32 %v5009, %v5061
    %v5074 = vsub.f32 %v5010, %v5062
    %v5075 = vsub.f32 %v5011, %v5063
    %v5076 = vsub.f32 %v5012, %v5064
    %v5077 = vsub.f32 %v5013, %v5065
    %v5078 = vsub.f32 %v5014, %v5066
    %v5079 = vsub.f32 %v5015, %v5067
    %v5080 = vmul.f32 %v5068, %v5068
    %v5081 = vmul.f32 %v5069, %v5069
    %v5082 = vmul.f32 %v5070, %v5070
    %v5083 = vmul.f32 %v5071, %v5071
    %v5084 = vmul.f32 %v5072, %v5072
    %v5085 = vmul.f32 %v5073, %v5073
    %v5086 = vmul.f32 %v5074, %v5074
    %v5087 = vmul.f32 %v5075, %v5075
    %v5088 = vmul.f32 %v5076, %v5076
    %v5089 = vmul.f32 %v5077, %v5077
    %v5090 = vmul.f32 %v5078, %v5078
    %v5091 = vmul.f32 %v5079, %v5079
    %v5092 = vsel %vm76, %v5080, 0.0
    %5093 = vadd.xlane.f32.xlu0 %v5092
    %v5094 = vpop.xlane.xlu0 %5093
    %v5095 = vsel %vm76, %v5081, 0.0
    %5096 = vadd.xlane.f32.xlu0 %v5095
    %v5097 = vpop.xlane.xlu0 %5096
    %v5098 = vsel %vm76, %v5082, 0.0
    %5099 = vadd.xlane.f32.xlu0 %v5098
    %v5100 = vpop.xlane.xlu0 %5099
    %v5101 = vsel %vm76, %v5083, 0.0
    %5102 = vadd.xlane.f32.xlu0 %v5101
    %v5103 = vpop.xlane.xlu0 %5102
    %v5104 = vsel %vm76, %v5084, 0.0
    %5105 = vadd.xlane.f32.xlu0 %v5104
    %v5106 = vpop.xlane.xlu0 %5105
    %v5107 = vsel %vm76, %v5085, 0.0
    %5108 = vadd.xlane.f32.xlu0 %v5107
    %v5109 = vpop.xlane.xlu0 %5108
    %v5110 = vsel %vm76, %v5086, 0.0
    %5111 = vadd.xlane.f32.xlu0 %v5110
    %v5112 = vpop.xlane.xlu0 %5111
    %v5113 = vsel %vm76, %v5087, 0.0
    %5114 = vadd.xlane.f32.xlu0 %v5113
    %v5115 = vpop.xlane.xlu0 %5114
    %v5116 = vsel %vm76, %v5088, 0.0
    %5117 = vadd.xlane.f32.xlu0 %v5116
    %v5118 = vpop.xlane.xlu0 %5117
    %v5119 = vsel %vm76, %v5089, 0.0
    %5120 = vadd.xlane.f32.xlu0 %v5119
    %v5121 = vpop.xlane.xlu0 %5120
    %v5122 = vsel %vm76, %v5090, 0.0
    %5123 = vadd.xlane.f32.xlu0 %v5122
    %v5124 = vpop.xlane.xlu0 %5123
    %v5125 = vsel %vm76, %v5091, 0.0
    %5126 = vadd.xlane.f32.xlu0 %v5125
    %v5127 = vpop.xlane.xlu0 %5126
    %v5128 = vmul.f32 %v5094, %v113
    %v5129 = vmul.f32 %v5097, %v113
    %v5130 = vmul.f32 %v5100, %v113
    %v5131 = vmul.f32 %v5103, %v113
    %v5132 = vmul.f32 %v5106, %v113
    %v5133 = vmul.f32 %v5109, %v113
    %v5134 = vmul.f32 %v5112, %v113
    %v5135 = vmul.f32 %v5115, %v113
    %v5136 = vmul.f32 %v5118, %v113
    %v5137 = vmul.f32 %v5121, %v113
    %v5138 = vmul.f32 %v5124, %v113
    %v5139 = vmul.f32 %v5127, %v113
    %v5140 = vadd.f32 %v5128, 1e-06
    %v5141 = vadd.f32 %v5129, 1e-06
    %v5142 = vadd.f32 %v5130, 1e-06
    %v5143 = vadd.f32 %v5131, 1e-06
    %v5144 = vadd.f32 %v5132, 1e-06
    %v5145 = vadd.f32 %v5133, 1e-06
    %v5146 = vadd.f32 %v5134, 1e-06
    %v5147 = vadd.f32 %v5135, 1e-06
    %v5148 = vadd.f32 %v5136, 1e-06
    %v5149 = vadd.f32 %v5137, 1e-06
    %v5150 = vadd.f32 %v5138, 1e-06
    %v5151 = vadd.f32 %v5139, 1e-06
    %v5152 = vrsqrt.pop %v5140
    %v5153 = vrsqrt.pop %v5141
    %v5154 = vrsqrt.pop %v5142
    %v5155 = vrsqrt.pop %v5143
    %v5156 = vrsqrt.pop %v5144
    %v5157 = vrsqrt.pop %v5145
    %v5158 = vrsqrt.pop %v5146
    %v5159 = vrsqrt.pop %v5147
    %v5160 = vrsqrt.pop %v5148
    %v5161 = vrsqrt.pop %v5149
    %v5162 = vrsqrt.pop %v5150
    %v5163 = vrsqrt.pop %v5151
    %v5164 = vmul.f32 %v5068, %v5152
    %v5165 = vmul.f32 %v5069, %v5153
    %v5166 = vmul.f32 %v5070, %v5154
    %v5167 = vmul.f32 %v5071, %v5155
    %v5168 = vmul.f32 %v5072, %v5156
    %v5169 = vmul.f32 %v5073, %v5157
    %v5170 = vmul.f32 %v5074, %v5158
    %v5171 = vmul.f32 %v5075, %v5159
    %v5172 = vmul.f32 %v5076, %v5160
    %v5173 = vmul.f32 %v5077, %v5161
    %v5174 = vmul.f32 %v5078, %v5162
    %v5175 = vmul.f32 %v5079, %v5163
    %v5177 = vlaneseq
    %v5178 = vshrl.u32 %v5177, 7
    %v5179 = vsub.s32 0, %v5178
    %v5180 = vrot.slane %v5017, %v5179
    %v5182 = vmul.f32 %v5164, %v5180
    %v5183 = vmul.f32 %v5165, %v5180
    %v5184 = vmul.f32 %v5166, %v5180
    %v5185 = vmul.f32 %v5167, %v5180
    %v5186 = vmul.f32 %v5168, %v5180
    %v5187 = vmul.f32 %v5169, %v5180
    %v5188 = vmul.f32 %v5170, %v5180
    %v5189 = vmul.f32 %v5171, %v5180
    %v5190 = vmul.f32 %v5172, %v5180
    %v5191 = vmul.f32 %v5173, %v5180
    %v5192 = vmul.f32 %v5174, %v5180
    %v5193 = vmul.f32 %v5175, %v5180
    %v5195 = vlaneseq
    %v5196 = vshrl.u32 %v5195, 7
    %v5197 = vsub.s32 0, %v5196
    %v5198 = vrot.slane %v5019, %v5197
    %v5200 = vadd.f32 %v5182, %v5198
    %v5201 = vadd.f32 %v5183, %v5198
    %v5202 = vadd.f32 %v5184, %v5198
    %v5203 = vadd.f32 %v5185, %v5198
    %v5204 = vadd.f32 %v5186, %v5198
    %v5205 = vadd.f32 %v5187, %v5198
    %v5206 = vadd.f32 %v5188, %v5198
    %v5207 = vadd.f32 %v5189, %v5198
    %v5208 = vadd.f32 %v5190, %v5198
    %v5209 = vadd.f32 %v5191, %v5198
    %v5210 = vadd.f32 %v5192, %v5198
    %v5211 = vadd.f32 %v5193, %v5198
    %v5212 = vpack.c.bf16 %v5201, %v5200
    %v5213 = vpack.c.bf16 %v5203, %v5202
    %v5214 = vpack.c.bf16 %v5205, %v5204
    %v5215 = vpack.c.bf16 %v5207, %v5206
    %v5216 = vpack.c.bf16 %v5209, %v5208
    %v5217 = vpack.c.bf16 %v5211, %v5210
    %s5218 = scalar_lea.vmem %s4, 96
    %v5219 = vld [vmem:[%s5218] sm:$0xf]
    %v5220 = vld [vmem:[%s5218 + $0x4] sm:$0xf]
    %v5221 = vld [vmem:[%s5218 + $0x8] sm:$0xf]
    %v5222 = vld [vmem:[%s5218 + $0xc] sm:$0xf]
    %v5223 = vld [vmem:[%s5218 + $0x10] sm:$0xf]
    %v5224 = vld [vmem:[%s5218 + $0x14] sm:$0xf]
    %v5225 = vld [vmem:[%s5218 + $0x18] sm:$0xf]
    %v5226 = vld [vmem:[%s5218 + $0x1c] sm:$0xf]
    %s5227 = scalar_lea.vmem %s5, 3
    %v5228 = vld [vmem:[%s5227] sm:$0x1]
    %v5230 = vlaneseq
    %v5231 = vshrl.u32 %v5230, 7
    %v5232 = vsub.s32 0, %v5231
    %v5233 = vrot.slane %v5228, %v5232
    %v5243 = vunpack.c.l.b16 %v5219
    %v5244 = vunpack.c.l.b16 %v5220
    %v5245 = vunpack.c.l.b16 %v5221
    %v5246 = vunpack.c.l.b16 %v5222
    %v5247 = vunpack.c.l.b16 %v5223
    %v5248 = vunpack.c.l.b16 %v5224
    %v5249 = vunpack.c.l.b16 %v5225
    %v5250 = vunpack.c.l.b16 %v5226
    %v5251 = vpack.c.b16 %v5244, %v5243
    %v5252 = vpack.c.b16 %v5246, %v5245
    %v5253 = vpack.c.b16 %v5248, %v5247
    %v5254 = vpack.c.b16 %v5250, %v5249
    %v5260 = vsel %vm76, %v5212, 0
    %v5263 = vsel %vm76, %v5213, 0
    %v5266 = vsel %vm76, %v5214, 0
    %v5269 = vsel %vm76, %v5215, 0
    %v5272 = vsel %vm76, %v5216, 0
    %v5275 = vsel %vm76, %v5217, 0
    %5277 = vmatprep.subr.bf16.mxu0 0
    %5278 = vmatpush1.bf16.msra.mxu0 %v5251
    %5279 = vmatprep.subr.bf16.mxu0 0
    %5280 = vmatpush1.bf16.msra.mxu0 %v5252
    %5281 = vmatprep.subr.bf16.mxu0 0
    %5282 = vmatpush1.bf16.msra.mxu0 %v5253
    %5283 = vmatprep.subr.bf16.mxu0 0
    %5284 = vmatpush1.bf16.msra.mxu0 %v5254
    %5285 = vmatprep.subr.bf16.mxu0 0
    %5286 = vmatpush1.bf16.msra.mxu0 0
    %5287 = vmatprep.subr.bf16.mxu0 0
    %5288 = vmatpush1.bf16.msra.mxu0 0
    %5289 = vmatprep.subr.bf16.mxu0 0
    %5290 = vmatpush1.bf16.msra.mxu0 0
    %5291 = vmatprep.subr.bf16.mxu0 0
    %5292 = vmatpush1.bf16.msra.mxu0 0
    %5293 = vmatprep.subr.bf16.mxu0 0
    %5294 = vmatpush1.bf16.msra.mxu0 0
    %5295 = vmatprep.subr.bf16.mxu0 0
    %5296 = vmatpush1.bf16.msra.mxu0 0
    %5297 = vmatprep.subr.bf16.mxu0 0
    %5298 = vmatpush1.bf16.msra.mxu0 0
    %5299 = vmatprep.subr.bf16.mxu0 0
    %5300 = vmatpush1.bf16.msra.mxu0 0
    %5301 = vmatprep.subr.bf16.mxu0 0
    %5302 = vmatpush1.bf16.msra.mxu0 0
    %5303 = vmatprep.subr.bf16.mxu0 0
    %5304 = vmatpush1.bf16.msra.mxu0 0
    %5305 = vmatprep.subr.bf16.mxu0 0
    %5306 = vmatpush1.bf16.msra.mxu0 0
    %5307 = vmatprep.subr.bf16.mxu0 0
    %5308 = vmatpush1.bf16.msra.mxu0 0
    %5309 = vmatprep.mubr.bf16.mxu0 0
    %5310 = vmatmul.mubr.bf16.gmra.mrb[0].mxu0 %v5260
    %v5311 = vpop.f32.mrb[0].mxu0
    %v5312 = vadd.f32 %v5233, %v5311
    %v5313 = vpop.f32.mrb[0].mxu0
    %v5314 = vpop.f32.mrb[0].mxu0
    %v5315 = vadd.f32 %v5233, %v5314
    %v5316 = vpop.f32.mrb[0].mxu0
    %5317 = vmatprep.mubr.bf16.mxu0 0
    %5318 = vmatmul.mubr.bf16.gmra.mrb[0].mxu0 %v5263
    %v5319 = vpop.f32.mrb[0].mxu0
    %v5320 = vadd.f32 %v5233, %v5319
    %v5321 = vpop.f32.mrb[0].mxu0
    %v5322 = vpop.f32.mrb[0].mxu0
    %v5323 = vadd.f32 %v5233, %v5322
    %v5324 = vpop.f32.mrb[0].mxu0
    %5325 = vmatprep.mubr.bf16.mxu0 0
    %5326 = vmatmul.mubr.bf16.gmra.mrb[0].mxu0 %v5266
    %v5327 = vpop.f32.mrb[0].mxu0
    %v5328 = vadd.f32 %v5233, %v5327
    %v5329 = vpop.f32.mrb[0].mxu0
    %v5330 = vpop.f32.mrb[0].mxu0
    %v5331 = vadd.f32 %v5233, %v5330
    %v5332 = vpop.f32.mrb[0].mxu0
    %5333 = vmatprep.mubr.bf16.mxu0 0
    %5334 = vmatmul.mubr.bf16.gmra.mrb[0].mxu0 %v5269
    %v5335 = vpop.f32.mrb[0].mxu0
    %v5336 = vadd.f32 %v5233, %v5335
    %v5337 = vpop.f32.mrb[0].mxu0
    %v5338 = vpop.f32.mrb[0].mxu0
    %v5339 = vadd.f32 %v5233, %v5338
    %v5340 = vpop.f32.mrb[0].mxu0
    %5341 = vmatprep.mubr.bf16.mxu0 0
    %5342 = vmatmul.mubr.bf16.gmra.mrb[0].mxu0 %v5272
    %v5343 = vpop.f32.mrb[0].mxu0
    %v5344 = vadd.f32 %v5233, %v5343
    %v5345 = vpop.f32.mrb[0].mxu0
    %v5346 = vpop.f32.mrb[0].mxu0
    %v5347 = vadd.f32 %v5233, %v5346
    %v5348 = vpop.f32.mrb[0].mxu0
    %5349 = vmatprep.mubr.bf16.mxu0 0
    %5350 = vmatmul.mubr.bf16.gmra.mrb[0].mxu0 %v5275
    %v5351 = vpop.f32.mrb[0].mxu0
    %v5352 = vadd.f32 %v5233, %v5351
    %v5353 = vpop.f32.mrb[0].mxu0
    %v5354 = vpop.f32.mrb[0].mxu0
    %v5355 = vadd.f32 %v5233, %v5354
    %v5356 = vpop.f32.mrb[0].mxu0
    %5357 = vdwg.mxu0
    %s5358 = scalar_lea.vmem %s4, 128
    %v5359 = vld [vmem:[%s5358] sm:$0xf]
    %v5360 = vld [vmem:[%s5358 + $0x4] sm:$0xf]
    %v5361 = vld [vmem:[%s5358 + $0x8] sm:$0xf]
    %v5362 = vld [vmem:[%s5358 + $0xc] sm:$0xf]
    %v5363 = vld [vmem:[%s5358 + $0x10] sm:$0xf]
    %v5364 = vld [vmem:[%s5358 + $0x14] sm:$0xf]
    %v5365 = vld [vmem:[%s5358 + $0x18] sm:$0xf]
    %v5366 = vld [vmem:[%s5358 + $0x1c] sm:$0xf]
    %s5367 = scalar_lea.vmem %s5, 4
    %v5368 = vld [vmem:[%s5367] sm:$0x1]
    %v5370 = vlaneseq
    %v5371 = vshrl.u32 %v5370, 7
    %v5372 = vsub.s32 0, %v5371
    %v5373 = vrot.slane %v5368, %v5372
    %v5383 = vunpack.c.l.b16 %v5359
    %v5384 = vunpack.c.l.b16 %v5360
    %v5385 = vunpack.c.l.b16 %v5361
    %v5386 = vunpack.c.l.b16 %v5362
    %v5387 = vunpack.c.l.b16 %v5363
    %v5388 = vunpack.c.l.b16 %v5364
    %v5389 = vunpack.c.l.b16 %v5365
    %v5390 = vunpack.c.l.b16 %v5366
    %v5391 = vpack.c.b16 %v5384, %v5383
    %v5392 = vpack.c.b16 %v5386, %v5385
    %v5393 = vpack.c.b16 %v5388, %v5387
    %v5394 = vpack.c.b16 %v5390, %v5389
    %5399 = vmatprep.subr.bf16.mxu0 0
    %5400 = vmatpush1.bf16.msra.mxu0 %v5391
    %5401 = vmatprep.subr.bf16.mxu0 0
    %5402 = vmatpush1.bf16.msra.mxu0 %v5392
    %5403 = vmatprep.subr.bf16.mxu0 0
    %5404 = vmatpush1.bf16.msra.mxu0 %v5393
    %5405 = vmatprep.subr.bf16.mxu0 0
    %5406 = vmatpush1.bf16.msra.mxu0 %v5394
    %5407 = vmatprep.subr.bf16.mxu0 0
    %5408 = vmatpush1.bf16.msra.mxu0 0
    %5409 = vmatprep.subr.bf16.mxu0 0
    %5410 = vmatpush1.bf16.msra.mxu0 0
    %5411 = vmatprep.subr.bf16.mxu0 0
    %5412 = vmatpush1.bf16.msra.mxu0 0
    %5413 = vmatprep.subr.bf16.mxu0 0
    %5414 = vmatpush1.bf16.msra.mxu0 0
    %5415 = vmatprep.subr.bf16.mxu0 0
    %5416 = vmatpush1.bf16.msra.mxu0 0
    %5417 = vmatprep.subr.bf16.mxu0 0
    %5418 = vmatpush1.bf16.msra.mxu0 0
    %5419 = vmatprep.subr.bf16.mxu0 0
    %5420 = vmatpush1.bf16.msra.mxu0 0
    %5421 = vmatprep.subr.bf16.mxu0 0
    %5422 = vmatpush1.bf16.msra.mxu0 0
    %5423 = vmatprep.subr.bf16.mxu0 0
    %5424 = vmatpush1.bf16.msra.mxu0 0
    %5425 = vmatprep.subr.bf16.mxu0 0
    %5426 = vmatpush1.bf16.msra.mxu0 0
    %5427 = vmatprep.subr.bf16.mxu0 0
    %5428 = vmatpush1.bf16.msra.mxu0 0
    %5429 = vmatprep.subr.bf16.mxu0 0
    %5430 = vmatpush1.bf16.msra.mxu0 0
    %5431 = vmatprep.mubr.bf16.mxu0 0
    %5432 = vmatmul.mubr.bf16.gmra.mrb[0].mxu0 %v5260
    %v5433 = vpop.f32.mrb[0].mxu0
    %v5434 = vadd.f32 %v5373, %v5433
    %v5435 = vpop.f32.mrb[0].mxu0
    %v5436 = vpop.f32.mrb[0].mxu0
    %v5437 = vadd.f32 %v5373, %v5436
    %v5438 = vpop.f32.mrb[0].mxu0
    %5439 = vmatprep.mubr.bf16.mxu0 0
    %5440 = vmatmul.mubr.bf16.gmra.mrb[0].mxu0 %v5263
    %v5441 = vpop.f32.mrb[0].mxu0
    %v5442 = vadd.f32 %v5373, %v5441
    %v5443 = vpop.f32.mrb[0].mxu0
    %v5444 = vpop.f32.mrb[0].mxu0
    %v5445 = vadd.f32 %v5373, %v5444
    %v5446 = vpop.f32.mrb[0].mxu0
    %5447 = vmatprep.mubr.bf16.mxu0 0
    %5448 = vmatmul.mubr.bf16.gmra.mrb[0].mxu0 %v5266
    %v5449 = vpop.f32.mrb[0].mxu0
    %v5450 = vadd.f32 %v5373, %v5449
    %v5451 = vpop.f32.mrb[0].mxu0
    %v5452 = vpop.f32.mrb[0].mxu0
    %v5453 = vadd.f32 %v5373, %v5452
    %v5454 = vpop.f32.mrb[0].mxu0
    %5455 = vmatprep.mubr.bf16.mxu0 0
    %5456 = vmatmul.mubr.bf16.gmra.mrb[0].mxu0 %v5269
    %v5457 = vpop.f32.mrb[0].mxu0
    %v5458 = vadd.f32 %v5373, %v5457
    %v5459 = vpop.f32.mrb[0].mxu0
    %v5460 = vpop.f32.mrb[0].mxu0
    %v5461 = vadd.f32 %v5373, %v5460
    %v5462 = vpop.f32.mrb[0].mxu0
    %5463 = vmatprep.mubr.bf16.mxu0 0
    %5464 = vmatmul.mubr.bf16.gmra.mrb[0].mxu0 %v5272
    %v5465 = vpop.f32.mrb[0].mxu0
    %v5466 = vadd.f32 %v5373, %v5465
    %v5467 = vpop.f32.mrb[0].mxu0
    %v5468 = vpop.f32.mrb[0].mxu0
    %v5469 = vadd.f32 %v5373, %v5468
    %v5470 = vpop.f32.mrb[0].mxu0
    %5471 = vmatprep.mubr.bf16.mxu0 0
    %5472 = vmatmul.mubr.bf16.gmra.mrb[0].mxu0 %v5275
    %v5473 = vpop.f32.mrb[0].mxu0
    %v5474 = vadd.f32 %v5373, %v5473
    %v5475 = vpop.f32.mrb[0].mxu0
    %v5476 = vpop.f32.mrb[0].mxu0
    %v5477 = vadd.f32 %v5373, %v5476
    %v5478 = vpop.f32.mrb[0].mxu0
    %5479 = vdwg.mxu0
    %s5480 = scalar_lea.vmem %s4, 160
    %v5481 = vld [vmem:[%s5480] sm:$0xf]
    %v5482 = vld [vmem:[%s5480 + $0x4] sm:$0xf]
    %v5483 = vld [vmem:[%s5480 + $0x8] sm:$0xf]
    %v5484 = vld [vmem:[%s5480 + $0xc] sm:$0xf]
    %v5485 = vld [vmem:[%s5480 + $0x10] sm:$0xf]
    %v5486 = vld [vmem:[%s5480 + $0x14] sm:$0xf]
    %v5487 = vld [vmem:[%s5480 + $0x18] sm:$0xf]
    %v5488 = vld [vmem:[%s5480 + $0x1c] sm:$0xf]
    %s5489 = scalar_lea.vmem %s5, 5
    %v5490 = vld [vmem:[%s5489] sm:$0x1]
    %v5492 = vlaneseq
    %v5493 = vshrl.u32 %v5492, 7
    %v5494 = vsub.s32 0, %v5493
    %v5495 = vrot.slane %v5490, %v5494
    %v5505 = vunpack.c.l.b16 %v5481
    %v5506 = vunpack.c.l.b16 %v5482
    %v5507 = vunpack.c.l.b16 %v5483
    %v5508 = vunpack.c.l.b16 %v5484
    %v5509 = vunpack.c.l.b16 %v5485
    %v5510 = vunpack.c.l.b16 %v5486
    %v5511 = vunpack.c.l.b16 %v5487
    %v5512 = vunpack.c.l.b16 %v5488
    %v5513 = vpack.c.b16 %v5506, %v5505
    %v5514 = vpack.c.b16 %v5508, %v5507
    %v5515 = vpack.c.b16 %v5510, %v5509
    %v5516 = vpack.c.b16 %v5512, %v5511
    %5521 = vmatprep.subr.bf16.mxu0 0
    %5522 = vmatpush1.bf16.msra.mxu0 %v5513
    %5523 = vmatprep.subr.bf16.mxu0 0
    %5524 = vmatpush1.bf16.msra.mxu0 %v5514
    %5525 = vmatprep.subr.bf16.mxu0 0
    %5526 = vmatpush1.bf16.msra.mxu0 %v5515
    %5527 = vmatprep.subr.bf16.mxu0 0
    %5528 = vmatpush1.bf16.msra.mxu0 %v5516
    %5529 = vmatprep.subr.bf16.mxu0 0
    %5530 = vmatpush1.bf16.msra.mxu0 0
    %5531 = vmatprep.subr.bf16.mxu0 0
    %5532 = vmatpush1.bf16.msra.mxu0 0
    %5533 = vmatprep.subr.bf16.mxu0 0
    %5534 = vmatpush1.bf16.msra.mxu0 0
    %5535 = vmatprep.subr.bf16.mxu0 0
    %5536 = vmatpush1.bf16.msra.mxu0 0
    %5537 = vmatprep.subr.bf16.mxu0 0
    %5538 = vmatpush1.bf16.msra.mxu0 0
    %5539 = vmatprep.subr.bf16.mxu0 0
    %5540 = vmatpush1.bf16.msra.mxu0 0
    %5541 = vmatprep.subr.bf16.mxu0 0
    %5542 = vmatpush1.bf16.msra.mxu0 0
    %5543 = vmatprep.subr.bf16.mxu0 0
    %5544 = vmatpush1.bf16.msra.mxu0 0
    %5545 = vmatprep.subr.bf16.mxu0 0
    %5546 = vmatpush1.bf16.msra.mxu0 0
    %5547 = vmatprep.subr.bf16.mxu0 0
    %5548 = vmatpush1.bf16.msra.mxu0 0
    %5549 = vmatprep.subr.bf16.mxu0 0
    %5550 = vmatpush1.bf16.msra.mxu0 0
    %5551 = vmatprep.subr.bf16.mxu0 0
    %5552 = vmatpush1.bf16.msra.mxu0 0
    %5553 = vmatprep.mubr.bf16.mxu0 0
    %5554 = vmatmul.mubr.bf16.gmra.mrb[0].mxu0 %v5260
    %v5555 = vpop.f32.mrb[0].mxu0
    %v5556 = vadd.f32 %v5495, %v5555
    %v5557 = vpop.f32.mrb[0].mxu0
    %v5558 = vpop.f32.mrb[0].mxu0
    %v5559 = vadd.f32 %v5495, %v5558
    %v5560 = vpop.f32.mrb[0].mxu0
    %5561 = vmatprep.mubr.bf16.mxu0 0
    %5562 = vmatmul.mubr.bf16.gmra.mrb[0].mxu0 %v5263
    %v5563 = vpop.f32.mrb[0].mxu0
    %v5564 = vadd.f32 %v5495, %v5563
    %v5565 = vpop.f32.mrb[0].mxu0
    %v5566 = vpop.f32.mrb[0].mxu0
    %v5567 = vadd.f32 %v5495, %v5566
    %v5568 = vpop.f32.mrb[0].mxu0
    %5569 = vmatprep.mubr.bf16.mxu0 0
    %5570 = vmatmul.mubr.bf16.gmra.mrb[0].mxu0 %v5266
    %v5571 = vpop.f32.mrb[0].mxu0
    %v5572 = vadd.f32 %v5495, %v5571
    %v5573 = vpop.f32.mrb[0].mxu0
    %v5574 = vpop.f32.mrb[0].mxu0
    %v5575 = vadd.f32 %v5495, %v5574
    %v5576 = vpop.f32.mrb[0].mxu0
    %5577 = vmatprep.mubr.bf16.mxu0 0
    %5578 = vmatmul.mubr.bf16.gmra.mrb[0].mxu0 %v5269
    %v5579 = vpop.f32.mrb[0].mxu0
    %v5580 = vadd.f32 %v5495, %v5579
    %v5581 = vpop.f32.mrb[0].mxu0
    %v5582 = vpop.f32.mrb[0].mxu0
    %v5583 = vadd.f32 %v5495, %v5582
    %v5584 = vpop.f32.mrb[0].mxu0
    %5585 = vmatprep.mubr.bf16.mxu0 0
    %5586 = vmatmul.mubr.bf16.gmra.mrb[0].mxu0 %v5272
    %v5587 = vpop.f32.mrb[0].mxu0
    %v5588 = vadd.f32 %v5495, %v5587
    %v5589 = vpop.f32.mrb[0].mxu0
    %v5590 = vpop.f32.mrb[0].mxu0
    %v5591 = vadd.f32 %v5495, %v5590
    %v5592 = vpop.f32.mrb[0].mxu0
    %5593 = vmatprep.mubr.bf16.mxu0 0
    %5594 = vmatmul.mubr.bf16.gmra.mrb[0].mxu0 %v5275
    %v5595 = vpop.f32.mrb[0].mxu0
    %v5596 = vadd.f32 %v5495, %v5595
    %v5597 = vpop.f32.mrb[0].mxu0
    %v5598 = vpop.f32.mrb[0].mxu0
    %v5599 = vadd.f32 %v5495, %v5598
    %v5600 = vpop.f32.mrb[0].mxu0
    %5601 = vdwg.mxu0
    %v5602 = vpack.c.bf16 %v5315, %v5312
    %v5603 = vpack.c.bf16 %v5320, %v5320
    %v5604 = vpack.c.bf16 %v5328, %v5323
    %v5605 = vpack.c.bf16 %v5331, %v5331
    %v5606 = vpack.c.bf16 %v5339, %v5336
    %v5607 = vpack.c.bf16 %v5344, %v5344
    %v5608 = vpack.c.bf16 %v5352, %v5347
    %v5609 = vpack.c.bf16 %v5355, %v5355
    %v5610 = vpack.c.bf16 %v5437, %v5434
    %v5611 = vpack.c.bf16 %v5442, %v5442
    %v5612 = vpack.c.bf16 %v5450, %v5445
    %v5613 = vpack.c.bf16 %v5453, %v5453
    %v5614 = vpack.c.bf16 %v5461, %v5458
    %v5615 = vpack.c.bf16 %v5466, %v5466
    %v5616 = vpack.c.bf16 %v5474, %v5469
    %v5617 = vpack.c.bf16 %v5477, %v5477
    %v5618 = vpack.c.bf16 %v5559, %v5556
    %v5619 = vpack.c.bf16 %v5564, %v5564
    %v5620 = vpack.c.bf16 %v5572, %v5567
    %v5621 = vpack.c.bf16 %v5575, %v5575
    %v5622 = vpack.c.bf16 %v5583, %v5580
    %v5623 = vpack.c.bf16 %v5588, %v5588
    %v5624 = vpack.c.bf16 %v5596, %v5591
    %v5625 = vpack.c.bf16 %v5599, %v5599
    %v5627 = vsel %vm682, %v5602, 0
    %v5630 = vsel %vm682, %v5603, 0
    %v5633 = vsel %vm682, %v5610, 0
    %v5636 = vsel %vm682, %v5611, 0
    %5638 = vmatprep.subr.bf16.mxu0 0
    %5639 = vmatpush1.bf16.xpose.msra.mxu0 %v5633
    %5640 = vmatprep.subr.bf16.mxu0 0
    %5641 = vmatpush1.bf16.xpose.msra.mxu0 %v5636
    %5642 = vmatprep.subr.bf16.mxu0 0
    %5643 = vmatpush1.bf16.xpose.msra.mxu0 0
    %5644 = vmatprep.subr.bf16.mxu0 0
    %5645 = vmatpush1.bf16.xpose.msra.mxu0 0
    %5646 = vmatprep.subr.bf16.mxu0 0
    %5647 = vmatpush1.bf16.xpose.msra.mxu0 0
    %5648 = vmatprep.subr.bf16.mxu0 0
    %5649 = vmatpush1.bf16.xpose.msra.mxu0 0
    %5650 = vmatprep.subr.bf16.mxu0 0
    %5651 = vmatpush1.bf16.xpose.msra.mxu0 0
    %5652 = vmatprep.subr.bf16.mxu0 0
    %5653 = vmatpush1.bf16.xpose.msra.mxu0 0
    %5654 = vmatprep.subr.bf16.mxu0 0
    %5655 = vmatpush1.bf16.xpose.msra.mxu0 0
    %5656 = vmatprep.subr.bf16.mxu0 0
    %5657 = vmatpush1.bf16.xpose.msra.mxu0 0
    %5658 = vmatprep.subr.bf16.mxu0 0
    %5659 = vmatpush1.bf16.xpose.msra.mxu0 0
    %5660 = vmatprep.subr.bf16.mxu0 0
    %5661 = vmatpush1.bf16.xpose.msra.mxu0 0
    %5662 = vmatprep.subr.bf16.mxu0 0
    %5663 = vmatpush1.bf16.xpose.msra.mxu0 0
    %5664 = vmatprep.subr.bf16.mxu0 0
    %5665 = vmatpush1.bf16.xpose.msra.mxu0 0
    %5666 = vmatprep.subr.bf16.mxu0 0
    %5667 = vmatpush1.bf16.xpose.msra.mxu0 0
    %5668 = vmatprep.subr.bf16.mxu0 0
    %5669 = vmatpush1.bf16.xpose.msra.mxu0 0
    %5670 = vmatprep.mubr.bf16.mxu0 0
    %5671 = vmatmul.mubr.bf16.gmra.mrb[0].mxu0 %v5627
    %v5672 = vpop.f32.mrb[0].mxu0
    %v5673 = vadd.f32 0.0, %v5672
    %v5674 = vpop.f32.mrb[0].mxu0
    %v5675 = vpop.f32.mrb[0].mxu0
    %v5676 = vadd.f32 0.0, %v5675
    %v5677 = vpop.f32.mrb[0].mxu0
    %5678 = vmatprep.mubr.bf16.mxu0 0
    %5679 = vmatmul.mubr.bf16.gmra.mrb[0].mxu0 %v5630
    %v5680 = vpop.f32.mrb[0].mxu0
    %v5681 = vadd.f32 0.0, %v5680
    %v5682 = vpop.f32.mrb[0].mxu0
    %v5683 = vpop.f32.mrb[0].mxu0
    %v5684 = vpop.f32.mrb[0].mxu0
    %5685 = vdwg.mxu0
    %v5687 = vsel %vm682, %v5604, 0
    %v5690 = vsel %vm682, %v5605, 0
    %v5693 = vsel %vm682, %v5612, 0
    %v5696 = vsel %vm682, %v5613, 0
    %5698 = vmatprep.subr.bf16.mxu0 0
    %5699 = vmatpush1.bf16.xpose.msra.mxu0 %v5693
    %5700 = vmatprep.subr.bf16.mxu0 0
    %5701 = vmatpush1.bf16.xpose.msra.mxu0 %v5696
    %5702 = vmatprep.subr.bf16.mxu0 0
    %5703 = vmatpush1.bf16.xpose.msra.mxu0 0
    %5704 = vmatprep.subr.bf16.mxu0 0
    %5705 = vmatpush1.bf16.xpose.msra.mxu0 0
    %5706 = vmatprep.subr.bf16.mxu0 0
    %5707 = vmatpush1.bf16.xpose.msra.mxu0 0
    %5708 = vmatprep.subr.bf16.mxu0 0
    %5709 = vmatpush1.bf16.xpose.msra.mxu0 0
    %5710 = vmatprep.subr.bf16.mxu0 0
    %5711 = vmatpush1.bf16.xpose.msra.mxu0 0
    %5712 = vmatprep.subr.bf16.mxu0 0
    %5713 = vmatpush1.bf16.xpose.msra.mxu0 0
    %5714 = vmatprep.subr.bf16.mxu0 0
    %5715 = vmatpush1.bf16.xpose.msra.mxu0 0
    %5716 = vmatprep.subr.bf16.mxu0 0
    %5717 = vmatpush1.bf16.xpose.msra.mxu0 0
    %5718 = vmatprep.subr.bf16.mxu0 0
    %5719 = vmatpush1.bf16.xpose.msra.mxu0 0
    %5720 = vmatprep.subr.bf16.mxu0 0
    %5721 = vmatpush1.bf16.xpose.msra.mxu0 0
    %5722 = vmatprep.subr.bf16.mxu0 0
    %5723 = vmatpush1.bf16.xpose.msra.mxu0 0
    %5724 = vmatprep.subr.bf16.mxu0 0
    %5725 = vmatpush1.bf16.xpose.msra.mxu0 0
    %5726 = vmatprep.subr.bf16.mxu0 0
    %5727 = vmatpush1.bf16.xpose.msra.mxu0 0
    %5728 = vmatprep.subr.bf16.mxu0 0
    %5729 = vmatpush1.bf16.xpose.msra.mxu0 0
    %5730 = vmatprep.mubr.bf16.mxu0 0
    %5731 = vmatmul.mubr.bf16.gmra.mrb[0].mxu0 %v5687
    %v5732 = vpop.f32.mrb[0].mxu0
    %v5733 = vadd.f32 0.0, %v5732
    %v5734 = vpop.f32.mrb[0].mxu0
    %v5735 = vpop.f32.mrb[0].mxu0
    %v5736 = vadd.f32 0.0, %v5735
    %v5737 = vpop.f32.mrb[0].mxu0
    %5738 = vmatprep.mubr.bf16.mxu0 0
    %5739 = vmatmul.mubr.bf16.gmra.mrb[0].mxu0 %v5690
    %v5740 = vpop.f32.mrb[0].mxu0
    %v5741 = vadd.f32 0.0, %v5740
    %v5742 = vpop.f32.mrb[0].mxu0
    %v5743 = vpop.f32.mrb[0].mxu0
    %v5744 = vpop.f32.mrb[0].mxu0
    %5745 = vdwg.mxu0
    %v5747 = vsel %vm682, %v5606, 0
    %v5750 = vsel %vm682, %v5607, 0
    %v5753 = vsel %vm682, %v5614, 0
    %v5756 = vsel %vm682, %v5615, 0
    %5758 = vmatprep.subr.bf16.mxu0 0
    %5759 = vmatpush1.bf16.xpose.msra.mxu0 %v5753
    %5760 = vmatprep.subr.bf16.mxu0 0
    %5761 = vmatpush1.bf16.xpose.msra.mxu0 %v5756
    %5762 = vmatprep.subr.bf16.mxu0 0
    %5763 = vmatpush1.bf16.xpose.msra.mxu0 0
    %5764 = vmatprep.subr.bf16.mxu0 0
    %5765 = vmatpush1.bf16.xpose.msra.mxu0 0
    %5766 = vmatprep.subr.bf16.mxu0 0
    %5767 = vmatpush1.bf16.xpose.msra.mxu0 0
    %5768 = vmatprep.subr.bf16.mxu0 0
    %5769 = vmatpush1.bf16.xpose.msra.mxu0 0
    %5770 = vmatprep.subr.bf16.mxu0 0
    %5771 = vmatpush1.bf16.xpose.msra.mxu0 0
    %5772 = vmatprep.subr.bf16.mxu0 0
    %5773 = vmatpush1.bf16.xpose.msra.mxu0 0
    %5774 = vmatprep.subr.bf16.mxu0 0
    %5775 = vmatpush1.bf16.xpose.msra.mxu0 0
    %5776 = vmatprep.subr.bf16.mxu0 0
    %5777 = vmatpush1.bf16.xpose.msra.mxu0 0
    %5778 = vmatprep.subr.bf16.mxu0 0
    %5779 = vmatpush1.bf16.xpose.msra.mxu0 0
    %5780 = vmatprep.subr.bf16.mxu0 0
    %5781 = vmatpush1.bf16.xpose.msra.mxu0 0
    %5782 = vmatprep.subr.bf16.mxu0 0
    %5783 = vmatpush1.bf16.xpose.msra.mxu0 0
    %5784 = vmatprep.subr.bf16.mxu0 0
    %5785 = vmatpush1.bf16.xpose.msra.mxu0 0
    %5786 = vmatprep.subr.bf16.mxu0 0
    %5787 = vmatpush1.bf16.xpose.msra.mxu0 0
    %5788 = vmatprep.subr.bf16.mxu0 0
    %5789 = vmatpush1.bf16.xpose.msra.mxu0 0
    %5790 = vmatprep.mubr.bf16.mxu0 0
    %5791 = vmatmul.mubr.bf16.gmra.mrb[0].mxu0 %v5747
    %v5792 = vpop.f32.mrb[0].mxu0
    %v5793 = vadd.f32 0.0, %v5792
    %v5794 = vpop.f32.mrb[0].mxu0
    %v5795 = vpop.f32.mrb[0].mxu0
    %v5796 = vadd.f32 0.0, %v5795
    %v5797 = vpop.f32.mrb[0].mxu0
    %5798 = vmatprep.mubr.bf16.mxu0 0
    %5799 = vmatmul.mubr.bf16.gmra.mrb[0].mxu0 %v5750
    %v5800 = vpop.f32.mrb[0].mxu0
    %v5801 = vadd.f32 0.0, %v5800
    %v5802 = vpop.f32.mrb[0].mxu0
    %v5803 = vpop.f32.mrb[0].mxu0
    %v5804 = vpop.f32.mrb[0].mxu0
    %5805 = vdwg.mxu0
    %v5807 = vsel %vm682, %v5608, 0
    %v5810 = vsel %vm682, %v5609, 0
    %v5813 = vsel %vm682, %v5616, 0
    %v5816 = vsel %vm682, %v5617, 0
    %5818 = vmatprep.subr.bf16.mxu0 0
    %5819 = vmatpush1.bf16.xpose.msra.mxu0 %v5813
    %5820 = vmatprep.subr.bf16.mxu0 0
    %5821 = vmatpush1.bf16.xpose.msra.mxu0 %v5816
    %5822 = vmatprep.subr.bf16.mxu0 0
    %5823 = vmatpush1.bf16.xpose.msra.mxu0 0
    %5824 = vmatprep.subr.bf16.mxu0 0
    %5825 = vmatpush1.bf16.xpose.msra.mxu0 0
    %5826 = vmatprep.subr.bf16.mxu0 0
    %5827 = vmatpush1.bf16.xpose.msra.mxu0 0
    %5828 = vmatprep.subr.bf16.mxu0 0
    %5829 = vmatpush1.bf16.xpose.msra.mxu0 0
    %5830 = vmatprep.subr.bf16.mxu0 0
    %5831 = vmatpush1.bf16.xpose.msra.mxu0 0
    %5832 = vmatprep.subr.bf16.mxu0 0
    %5833 = vmatpush1.bf16.xpose.msra.mxu0 0
    %5834 = vmatprep.subr.bf16.mxu0 0
    %5835 = vmatpush1.bf16.xpose.msra.mxu0 0
    %5836 = vmatprep.subr.bf16.mxu0 0
    %5837 = vmatpush1.bf16.xpose.msra.mxu0 0
    %5838 = vmatprep.subr.bf16.mxu0 0
    %5839 = vmatpush1.bf16.xpose.msra.mxu0 0
    %5840 = vmatprep.subr.bf16.mxu0 0
    %5841 = vmatpush1.bf16.xpose.msra.mxu0 0
    %5842 = vmatprep.subr.bf16.mxu0 0
    %5843 = vmatpush1.bf16.xpose.msra.mxu0 0
    %5844 = vmatprep.subr.bf16.mxu0 0
    %5845 = vmatpush1.bf16.xpose.msra.mxu0 0
    %5846 = vmatprep.subr.bf16.mxu0 0
    %5847 = vmatpush1.bf16.xpose.msra.mxu0 0
    %5848 = vmatprep.subr.bf16.mxu0 0
    %5849 = vmatpush1.bf16.xpose.msra.mxu0 0
    %5850 = vmatprep.mubr.bf16.mxu0 0
    %5851 = vmatmul.mubr.bf16.gmra.mrb[0].mxu0 %v5807
    %v5852 = vpop.f32.mrb[0].mxu0
    %v5853 = vadd.f32 0.0, %v5852
    %v5854 = vpop.f32.mrb[0].mxu0
    %v5855 = vpop.f32.mrb[0].mxu0
    %v5856 = vadd.f32 0.0, %v5855
    %v5857 = vpop.f32.mrb[0].mxu0
    %5858 = vmatprep.mubr.bf16.mxu0 0
    %5859 = vmatmul.mubr.bf16.gmra.mrb[0].mxu0 %v5810
    %v5860 = vpop.f32.mrb[0].mxu0
    %v5861 = vadd.f32 0.0, %v5860
    %v5862 = vpop.f32.mrb[0].mxu0
    %v5863 = vpop.f32.mrb[0].mxu0
    %v5864 = vpop.f32.mrb[0].mxu0
    %5865 = vdwg.mxu0
    %v5866 = vmul.f32 %v5673, 0.25
    %v5867 = vmul.f32 %v5676, 0.25
    %v5868 = vmul.f32 %v5681, 0.25
    %v5869 = vmul.f32 %v5733, 0.25
    %v5870 = vmul.f32 %v5736, 0.25
    %v5871 = vmul.f32 %v5741, 0.25
    %v5872 = vmul.f32 %v5793, 0.25
    %v5873 = vmul.f32 %v5796, 0.25
    %v5874 = vmul.f32 %v5801, 0.25
    %v5875 = vmul.f32 %v5853, 0.25
    %v5876 = vmul.f32 %v5856, 0.25
    %v5877 = vmul.f32 %v5861, 0.25
    %v5878 = vadd.f32 %v5866, %v73
    %v5879 = vadd.f32 %v5867, %v73
    %v5880 = vadd.f32 %v5868, %v73
    %v5881 = vadd.f32 %v5869, %v73
    %v5882 = vadd.f32 %v5870, %v73
    %v5883 = vadd.f32 %v5871, %v73
    %v5884 = vadd.f32 %v5872, %v73
    %v5885 = vadd.f32 %v5873, %v73
    %v5886 = vadd.f32 %v5874, %v73
    %v5887 = vadd.f32 %v5875, %v73
    %v5888 = vadd.f32 %v5876, %v73
    %v5889 = vadd.f32 %v5877, %v73
    %v5890 = vsel %vm947, %v5878, -inf
    %5891 = vmax.xlane.f32.xlu0 %v5890
    %v5892 = vpop.xlane.xlu0 %5891
    %v5893 = vsel %vm947, %v5879, -inf
    %5894 = vmax.xlane.f32.xlu0 %v5893
    %v5895 = vpop.xlane.xlu0 %5894
    %v5896 = vsel %vm947, %v5880, -inf
    %5897 = vmax.xlane.f32.xlu0 %v5896
    %v5898 = vpop.xlane.xlu0 %5897
    %v5899 = vsel %vm947, %v5881, -inf
    %5900 = vmax.xlane.f32.xlu0 %v5899
    %v5901 = vpop.xlane.xlu0 %5900
    %v5902 = vsel %vm947, %v5882, -inf
    %5903 = vmax.xlane.f32.xlu0 %v5902
    %v5904 = vpop.xlane.xlu0 %5903
    %v5905 = vsel %vm947, %v5883, -inf
    %5906 = vmax.xlane.f32.xlu0 %v5905
    %v5907 = vpop.xlane.xlu0 %5906
    %v5908 = vsel %vm947, %v5884, -inf
    %5909 = vmax.xlane.f32.xlu0 %v5908
    %v5910 = vpop.xlane.xlu0 %5909
    %v5911 = vsel %vm947, %v5885, -inf
    %5912 = vmax.xlane.f32.xlu0 %v5911
    %v5913 = vpop.xlane.xlu0 %5912
    %v5914 = vsel %vm947, %v5886, -inf
    %5915 = vmax.xlane.f32.xlu0 %v5914
    %v5916 = vpop.xlane.xlu0 %5915
    %v5917 = vsel %vm947, %v5887, -inf
    %5918 = vmax.xlane.f32.xlu0 %v5917
    %v5919 = vpop.xlane.xlu0 %5918
    %v5920 = vsel %vm947, %v5888, -inf
    %5921 = vmax.xlane.f32.xlu0 %v5920
    %v5922 = vpop.xlane.xlu0 %5921
    %v5923 = vsel %vm947, %v5889, -inf
    %5924 = vmax.xlane.f32.xlu0 %v5923
    %v5925 = vpop.xlane.xlu0 %5924
    %v5926 = vsub.f32 %v5878, %v5892
    %v5927 = vsub.f32 %v5879, %v5895
    %v5928 = vsub.f32 %v5880, %v5898
    %v5929 = vsub.f32 %v5881, %v5901
    %v5930 = vsub.f32 %v5882, %v5904
    %v5931 = vsub.f32 %v5883, %v5907
    %v5932 = vsub.f32 %v5884, %v5910
    %v5933 = vsub.f32 %v5885, %v5913
    %v5934 = vsub.f32 %v5886, %v5916
    %v5935 = vsub.f32 %v5887, %v5919
    %v5936 = vsub.f32 %v5888, %v5922
    %v5937 = vsub.f32 %v5889, %v5925
    %v5938 = vmul.f32 %v5926, 1.442695
    %v5939 = vpow.pop %v5938
    %v5940 = vmul.f32 %v5927, 1.442695
    %v5941 = vpow.pop %v5940
    %v5942 = vmul.f32 %v5928, 1.442695
    %v5943 = vpow.pop %v5942
    %v5944 = vmul.f32 %v5929, 1.442695
    %v5945 = vpow.pop %v5944
    %v5946 = vmul.f32 %v5930, 1.442695
    %v5947 = vpow.pop %v5946
    %v5948 = vmul.f32 %v5931, 1.442695
    %v5949 = vpow.pop %v5948
    %v5950 = vmul.f32 %v5932, 1.442695
    %v5951 = vpow.pop %v5950
    %v5952 = vmul.f32 %v5933, 1.442695
    %v5953 = vpow.pop %v5952
    %v5954 = vmul.f32 %v5934, 1.442695
    %v5955 = vpow.pop %v5954
    %v5956 = vmul.f32 %v5935, 1.442695
    %v5957 = vpow.pop %v5956
    %v5958 = vmul.f32 %v5936, 1.442695
    %v5959 = vpow.pop %v5958
    %v5960 = vmul.f32 %v5937, 1.442695
    %v5961 = vpow.pop %v5960
    %v5962 = vsel %vm947, %v5939, 0.0
    %5963 = vadd.xlane.f32.xlu0 %v5962
    %v5964 = vpop.xlane.xlu0 %5963
    %v5965 = vsel %vm947, %v5941, 0.0
    %5966 = vadd.xlane.f32.xlu0 %v5965
    %v5967 = vpop.xlane.xlu0 %5966
    %v5968 = vsel %vm947, %v5943, 0.0
    %5969 = vadd.xlane.f32.xlu0 %v5968
    %v5970 = vpop.xlane.xlu0 %5969
    %v5971 = vsel %vm947, %v5945, 0.0
    %5972 = vadd.xlane.f32.xlu0 %v5971
    %v5973 = vpop.xlane.xlu0 %5972
    %v5974 = vsel %vm947, %v5947, 0.0
    %5975 = vadd.xlane.f32.xlu0 %v5974
    %v5976 = vpop.xlane.xlu0 %5975
    %v5977 = vsel %vm947, %v5949, 0.0
    %5978 = vadd.xlane.f32.xlu0 %v5977
    %v5979 = vpop.xlane.xlu0 %5978
    %v5980 = vsel %vm947, %v5951, 0.0
    %5981 = vadd.xlane.f32.xlu0 %v5980
    %v5982 = vpop.xlane.xlu0 %5981
    %v5983 = vsel %vm947, %v5953, 0.0
    %5984 = vadd.xlane.f32.xlu0 %v5983
    %v5985 = vpop.xlane.xlu0 %5984
    %v5986 = vsel %vm947, %v5955, 0.0
    %5987 = vadd.xlane.f32.xlu0 %v5986
    %v5988 = vpop.xlane.xlu0 %5987
    %v5989 = vsel %vm947, %v5957, 0.0
    %5990 = vadd.xlane.f32.xlu0 %v5989
    %v5991 = vpop.xlane.xlu0 %5990
    %v5992 = vsel %vm947, %v5959, 0.0
    %5993 = vadd.xlane.f32.xlu0 %v5992
    %v5994 = vpop.xlane.xlu0 %5993
    %v5995 = vsel %vm947, %v5961, 0.0
    %5996 = vadd.xlane.f32.xlu0 %v5995
    %v5997 = vpop.xlane.xlu0 %5996
    %v5998 = vrcp.pop %v5964
    %v5999 = vrcp.pop %v5967
    %v6000 = vrcp.pop %v5970
    %v6001 = vrcp.pop %v5973
    %v6002 = vrcp.pop %v5976
    %v6003 = vrcp.pop %v5979
    %v6004 = vrcp.pop %v5982
    %v6005 = vrcp.pop %v5985
    %v6006 = vrcp.pop %v5988
    %v6007 = vrcp.pop %v5991
    %v6008 = vrcp.pop %v5994
    %v6009 = vrcp.pop %v5997
    %v6010 = vmul.f32 %v5939, %v5998
    %v6011 = vmul.f32 %v5941, %v5999
    %v6012 = vmul.f32 %v5943, %v6000
    %v6013 = vmul.f32 %v5945, %v6001
    %v6014 = vmul.f32 %v5947, %v6002
    %v6015 = vmul.f32 %v5949, %v6003
    %v6016 = vmul.f32 %v5951, %v6004
    %v6017 = vmul.f32 %v5953, %v6005
    %v6018 = vmul.f32 %v5955, %v6006
    %v6019 = vmul.f32 %v5957, %v6007
    %v6020 = vmul.f32 %v5959, %v6008
    %v6021 = vmul.f32 %v5961, %v6009
    %v6022 = vpack.c.bf16 %v6011, %v6010
    %v6023 = vpack.c.bf16 %v6012, %v6012
    %v6024 = vpack.c.bf16 %v6014, %v6013
    %v6025 = vpack.c.bf16 %v6015, %v6015
    %v6026 = vpack.c.bf16 %v6017, %v6016
    %v6027 = vpack.c.bf16 %v6018, %v6018
    %v6028 = vpack.c.bf16 %v6020, %v6019
    %v6029 = vpack.c.bf16 %v6021, %v6021
    %v6031 = vsel %vm947, %v6022, 0
    %v6034 = vsel %vm947, %v6023, 0
    %v6037 = vsel %vm1094, %v5619, 0
    %6039 = vmatprep.subr.bf16.mxu0 0
    %6040 = vmatpush1.bf16.msra.mxu0 %v5618
    %6041 = vmatprep.subr.bf16.mxu0 0
    %6042 = vmatpush1.bf16.msra.mxu0 %v6037
    %6043 = vmatprep.subr.bf16.mxu0 0
    %6044 = vmatpush1.bf16.msra.mxu0 0
    %6045 = vmatprep.subr.bf16.mxu0 0
    %6046 = vmatpush1.bf16.msra.mxu0 0
    %6047 = vmatprep.subr.bf16.mxu0 0
    %6048 = vmatpush1.bf16.msra.mxu0 0
    %6049 = vmatprep.subr.bf16.mxu0 0
    %6050 = vmatpush1.bf16.msra.mxu0 0
    %6051 = vmatprep.subr.bf16.mxu0 0
    %6052 = vmatpush1.bf16.msra.mxu0 0
    %6053 = vmatprep.subr.bf16.mxu0 0
    %6054 = vmatpush1.bf16.msra.mxu0 0
    %6055 = vmatprep.subr.bf16.mxu0 0
    %6056 = vmatpush1.bf16.msra.mxu0 0
    %6057 = vmatprep.subr.bf16.mxu0 0
    %6058 = vmatpush1.bf16.msra.mxu0 0
    %6059 = vmatprep.subr.bf16.mxu0 0
    %6060 = vmatpush1.bf16.msra.mxu0 0
    %6061 = vmatprep.subr.bf16.mxu0 0
    %6062 = vmatpush1.bf16.msra.mxu0 0
    %6063 = vmatprep.subr.bf16.mxu0 0
    %6064 = vmatpush1.bf16.msra.mxu0 0
    %6065 = vmatprep.subr.bf16.mxu0 0
    %6066 = vmatpush1.bf16.msra.mxu0 0
    %6067 = vmatprep.subr.bf16.mxu0 0
    %6068 = vmatpush1.bf16.msra.mxu0 0
    %6069 = vmatprep.subr.bf16.mxu0 0
    %6070 = vmatpush1.bf16.msra.mxu0 0
    %6071 = vmatprep.mubr.bf16.mxu0 0
    %6072 = vmatmul.mubr.bf16.gmra.mrb[0].mxu0 %v6031
    %v6073 = vpop.f32.mrb[0].mxu0
    %v6074 = vadd.f32 0.0, %v6073
    %v6075 = vpop.f32.mrb[0].mxu0
    %v6076 = vpop.f32.mrb[0].mxu0
    %v6077 = vadd.f32 0.0, %v6076
    %v6078 = vpop.f32.mrb[0].mxu0
    %6079 = vmatprep.mubr.bf16.mxu0 0
    %6080 = vmatmul.mubr.bf16.gmra.mrb[0].mxu0 %v6034
    %v6081 = vpop.f32.mrb[0].mxu0
    %v6082 = vadd.f32 0.0, %v6081
    %v6083 = vpop.f32.mrb[0].mxu0
    %v6084 = vpop.f32.mrb[0].mxu0
    %v6085 = vpop.f32.mrb[0].mxu0
    %6086 = vdwg.mxu0
    %v6088 = vsel %vm947, %v6024, 0
    %v6091 = vsel %vm947, %v6025, 0
    %v6094 = vsel %vm1094, %v5621, 0
    %6096 = vmatprep.subr.bf16.mxu0 0
    %6097 = vmatpush1.bf16.msra.mxu0 %v5620
    %6098 = vmatprep.subr.bf16.mxu0 0
    %6099 = vmatpush1.bf16.msra.mxu0 %v6094
    %6100 = vmatprep.subr.bf16.mxu0 0
    %6101 = vmatpush1.bf16.msra.mxu0 0
    %6102 = vmatprep.subr.bf16.mxu0 0
    %6103 = vmatpush1.bf16.msra.mxu0 0
    %6104 = vmatprep.subr.bf16.mxu0 0
    %6105 = vmatpush1.bf16.msra.mxu0 0
    %6106 = vmatprep.subr.bf16.mxu0 0
    %6107 = vmatpush1.bf16.msra.mxu0 0
    %6108 = vmatprep.subr.bf16.mxu0 0
    %6109 = vmatpush1.bf16.msra.mxu0 0
    %6110 = vmatprep.subr.bf16.mxu0 0
    %6111 = vmatpush1.bf16.msra.mxu0 0
    %6112 = vmatprep.subr.bf16.mxu0 0
    %6113 = vmatpush1.bf16.msra.mxu0 0
    %6114 = vmatprep.subr.bf16.mxu0 0
    %6115 = vmatpush1.bf16.msra.mxu0 0
    %6116 = vmatprep.subr.bf16.mxu0 0
    %6117 = vmatpush1.bf16.msra.mxu0 0
    %6118 = vmatprep.subr.bf16.mxu0 0
    %6119 = vmatpush1.bf16.msra.mxu0 0
    %6120 = vmatprep.subr.bf16.mxu0 0
    %6121 = vmatpush1.bf16.msra.mxu0 0
    %6122 = vmatprep.subr.bf16.mxu0 0
    %6123 = vmatpush1.bf16.msra.mxu0 0
    %6124 = vmatprep.subr.bf16.mxu0 0
    %6125 = vmatpush1.bf16.msra.mxu0 0
    %6126 = vmatprep.subr.bf16.mxu0 0
    %6127 = vmatpush1.bf16.msra.mxu0 0
    %6128 = vmatprep.mubr.bf16.mxu0 0
    %6129 = vmatmul.mubr.bf16.gmra.mrb[0].mxu0 %v6088
    %v6130 = vpop.f32.mrb[0].mxu0
    %v6131 = vadd.f32 0.0, %v6130
    %v6132 = vpop.f32.mrb[0].mxu0
    %v6133 = vpop.f32.mrb[0].mxu0
    %v6134 = vadd.f32 0.0, %v6133
    %v6135 = vpop.f32.mrb[0].mxu0
    %6136 = vmatprep.mubr.bf16.mxu0 0
    %6137 = vmatmul.mubr.bf16.gmra.mrb[0].mxu0 %v6091
    %v6138 = vpop.f32.mrb[0].mxu0
    %v6139 = vadd.f32 0.0, %v6138
    %v6140 = vpop.f32.mrb[0].mxu0
    %v6141 = vpop.f32.mrb[0].mxu0
    %v6142 = vpop.f32.mrb[0].mxu0
    %6143 = vdwg.mxu0
    %v6145 = vsel %vm947, %v6026, 0
    %v6148 = vsel %vm947, %v6027, 0
    %v6151 = vsel %vm1094, %v5623, 0
    %6153 = vmatprep.subr.bf16.mxu0 0
    %6154 = vmatpush1.bf16.msra.mxu0 %v5622
    %6155 = vmatprep.subr.bf16.mxu0 0
    %6156 = vmatpush1.bf16.msra.mxu0 %v6151
    %6157 = vmatprep.subr.bf16.mxu0 0
    %6158 = vmatpush1.bf16.msra.mxu0 0
    %6159 = vmatprep.subr.bf16.mxu0 0
    %6160 = vmatpush1.bf16.msra.mxu0 0
    %6161 = vmatprep.subr.bf16.mxu0 0
    %6162 = vmatpush1.bf16.msra.mxu0 0
    %6163 = vmatprep.subr.bf16.mxu0 0
    %6164 = vmatpush1.bf16.msra.mxu0 0
    %6165 = vmatprep.subr.bf16.mxu0 0
    %6166 = vmatpush1.bf16.msra.mxu0 0
    %6167 = vmatprep.subr.bf16.mxu0 0
    %6168 = vmatpush1.bf16.msra.mxu0 0
    %6169 = vmatprep.subr.bf16.mxu0 0
    %6170 = vmatpush1.bf16.msra.mxu0 0
    %6171 = vmatprep.subr.bf16.mxu0 0
    %6172 = vmatpush1.bf16.msra.mxu0 0
    %6173 = vmatprep.subr.bf16.mxu0 0
    %6174 = vmatpush1.bf16.msra.mxu0 0
    %6175 = vmatprep.subr.bf16.mxu0 0
    %6176 = vmatpush1.bf16.msra.mxu0 0
    %6177 = vmatprep.subr.bf16.mxu0 0
    %6178 = vmatpush1.bf16.msra.mxu0 0
    %6179 = vmatprep.subr.bf16.mxu0 0
    %6180 = vmatpush1.bf16.msra.mxu0 0
    %6181 = vmatprep.subr.bf16.mxu0 0
    %6182 = vmatpush1.bf16.msra.mxu0 0
    %6183 = vmatprep.subr.bf16.mxu0 0
    %6184 = vmatpush1.bf16.msra.mxu0 0
    %6185 = vmatprep.mubr.bf16.mxu0 0
    %6186 = vmatmul.mubr.bf16.gmra.mrb[0].mxu0 %v6145
    %v6187 = vpop.f32.mrb[0].mxu0
    %v6188 = vadd.f32 0.0, %v6187
    %v6189 = vpop.f32.mrb[0].mxu0
    %v6190 = vpop.f32.mrb[0].mxu0
    %v6191 = vadd.f32 0.0, %v6190
    %v6192 = vpop.f32.mrb[0].mxu0
    %6193 = vmatprep.mubr.bf16.mxu0 0
    %6194 = vmatmul.mubr.bf16.gmra.mrb[0].mxu0 %v6148
    %v6195 = vpop.f32.mrb[0].mxu0
    %v6196 = vadd.f32 0.0, %v6195
    %v6197 = vpop.f32.mrb[0].mxu0
    %v6198 = vpop.f32.mrb[0].mxu0
    %v6199 = vpop.f32.mrb[0].mxu0
    %6200 = vdwg.mxu0
    %v6202 = vsel %vm947, %v6028, 0
    %v6205 = vsel %vm947, %v6029, 0
    %v6208 = vsel %vm1094, %v5625, 0
    %6210 = vmatprep.subr.bf16.mxu0 0
    %6211 = vmatpush1.bf16.msra.mxu0 %v5624
    %6212 = vmatprep.subr.bf16.mxu0 0
    %6213 = vmatpush1.bf16.msra.mxu0 %v6208
    %6214 = vmatprep.subr.bf16.mxu0 0
    %6215 = vmatpush1.bf16.msra.mxu0 0
    %6216 = vmatprep.subr.bf16.mxu0 0
    %6217 = vmatpush1.bf16.msra.mxu0 0
    %6218 = vmatprep.subr.bf16.mxu0 0
    %6219 = vmatpush1.bf16.msra.mxu0 0
    %6220 = vmatprep.subr.bf16.mxu0 0
    %6221 = vmatpush1.bf16.msra.mxu0 0
    %6222 = vmatprep.subr.bf16.mxu0 0
    %6223 = vmatpush1.bf16.msra.mxu0 0
    %6224 = vmatprep.subr.bf16.mxu0 0
    %6225 = vmatpush1.bf16.msra.mxu0 0
    %6226 = vmatprep.subr.bf16.mxu0 0
    %6227 = vmatpush1.bf16.msra.mxu0 0
    %6228 = vmatprep.subr.bf16.mxu0 0
    %6229 = vmatpush1.bf16.msra.mxu0 0
    %6230 = vmatprep.subr.bf16.mxu0 0
    %6231 = vmatpush1.bf16.msra.mxu0 0
    %6232 = vmatprep.subr.bf16.mxu0 0
    %6233 = vmatpush1.bf16.msra.mxu0 0
    %6234 = vmatprep.subr.bf16.mxu0 0
    %6235 = vmatpush1.bf16.msra.mxu0 0
    %6236 = vmatprep.subr.bf16.mxu0 0
    %6237 = vmatpush1.bf16.msra.mxu0 0
    %6238 = vmatprep.subr.bf16.mxu0 0
    %6239 = vmatpush1.bf16.msra.mxu0 0
    %6240 = vmatprep.subr.bf16.mxu0 0
    %6241 = vmatpush1.bf16.msra.mxu0 0
    %6242 = vmatprep.mubr.bf16.mxu0 0
    %6243 = vmatmul.mubr.bf16.gmra.mrb[0].mxu0 %v6202
    %v6244 = vpop.f32.mrb[0].mxu0
    %v6245 = vadd.f32 0.0, %v6244
    %v6246 = vpop.f32.mrb[0].mxu0
    %v6247 = vpop.f32.mrb[0].mxu0
    %v6248 = vadd.f32 0.0, %v6247
    %v6249 = vpop.f32.mrb[0].mxu0
    %6250 = vmatprep.mubr.bf16.mxu0 0
    %6251 = vmatmul.mubr.bf16.gmra.mrb[0].mxu0 %v6205
    %v6252 = vpop.f32.mrb[0].mxu0
    %v6253 = vadd.f32 0.0, %v6252
    %v6254 = vpop.f32.mrb[0].mxu0
    %v6255 = vpop.f32.mrb[0].mxu0
    %v6256 = vpop.f32.mrb[0].mxu0
    %6257 = vdwg.mxu0
    %6260 = vrot.lane.b32.xlu0 %v5602, 112
    %v6261 = vpop.permute.xlu0 %6260
    %6262 = vrot.lane.b32.xlu0 %v5603, 112
    %v6263 = vpop.permute.xlu0 %6262
    %6266 = vrot.lane.b32.xlu0 %v5610, 112
    %v6267 = vpop.permute.xlu0 %6266
    %6268 = vrot.lane.b32.xlu0 %v5611, 112
    %v6269 = vpop.permute.xlu0 %6268
    %v6271 = vsel %vm682, %v6261, 0
    %v6274 = vsel %vm682, %v6263, 0
    %v6277 = vsel %vm682, %v6267, 0
    %v6280 = vsel %vm682, %v6269, 0
    %6282 = vmatprep.subr.bf16.mxu0 0
    %6283 = vmatpush1.bf16.xpose.msra.mxu0 %v6277
    %6284 = vmatprep.subr.bf16.mxu0 0
    %6285 = vmatpush1.bf16.xpose.msra.mxu0 %v6280
    %6286 = vmatprep.subr.bf16.mxu0 0
    %6287 = vmatpush1.bf16.xpose.msra.mxu0 0
    %6288 = vmatprep.subr.bf16.mxu0 0
    %6289 = vmatpush1.bf16.xpose.msra.mxu0 0
    %6290 = vmatprep.subr.bf16.mxu0 0
    %6291 = vmatpush1.bf16.xpose.msra.mxu0 0
    %6292 = vmatprep.subr.bf16.mxu0 0
    %6293 = vmatpush1.bf16.xpose.msra.mxu0 0
    %6294 = vmatprep.subr.bf16.mxu0 0
    %6295 = vmatpush1.bf16.xpose.msra.mxu0 0
    %6296 = vmatprep.subr.bf16.mxu0 0
    %6297 = vmatpush1.bf16.xpose.msra.mxu0 0
    %6298 = vmatprep.subr.bf16.mxu0 0
    %6299 = vmatpush1.bf16.xpose.msra.mxu0 0
    %6300 = vmatprep.subr.bf16.mxu0 0
    %6301 = vmatpush1.bf16.xpose.msra.mxu0 0
    %6302 = vmatprep.subr.bf16.mxu0 0
    %6303 = vmatpush1.bf16.xpose.msra.mxu0 0
    %6304 = vmatprep.subr.bf16.mxu0 0
    %6305 = vmatpush1.bf16.xpose.msra.mxu0 0
    %6306 = vmatprep.subr.bf16.mxu0 0
    %6307 = vmatpush1.bf16.xpose.msra.mxu0 0
    %6308 = vmatprep.subr.bf16.mxu0 0
    %6309 = vmatpush1.bf16.xpose.msra.mxu0 0
    %6310 = vmatprep.subr.bf16.mxu0 0
    %6311 = vmatpush1.bf16.xpose.msra.mxu0 0
    %6312 = vmatprep.subr.bf16.mxu0 0
    %6313 = vmatpush1.bf16.xpose.msra.mxu0 0
    %6314 = vmatprep.mubr.bf16.mxu0 0
    %6315 = vmatmul.mubr.bf16.gmra.mrb[0].mxu0 %v6271
    %v6316 = vpop.f32.mrb[0].mxu0
    %v6317 = vadd.f32 0.0, %v6316
    %v6318 = vpop.f32.mrb[0].mxu0
    %v6319 = vpop.f32.mrb[0].mxu0
    %v6320 = vadd.f32 0.0, %v6319
    %v6321 = vpop.f32.mrb[0].mxu0
    %6322 = vmatprep.mubr.bf16.mxu0 0
    %6323 = vmatmul.mubr.bf16.gmra.mrb[0].mxu0 %v6274
    %v6324 = vpop.f32.mrb[0].mxu0
    %v6325 = vadd.f32 0.0, %v6324
    %v6326 = vpop.f32.mrb[0].mxu0
    %v6327 = vpop.f32.mrb[0].mxu0
    %v6328 = vpop.f32.mrb[0].mxu0
    %6329 = vdwg.mxu0
    %6332 = vrot.lane.b32.xlu0 %v5604, 112
    %v6333 = vpop.permute.xlu0 %6332
    %6334 = vrot.lane.b32.xlu0 %v5605, 112
    %v6335 = vpop.permute.xlu0 %6334
    %6338 = vrot.lane.b32.xlu0 %v5612, 112
    %v6339 = vpop.permute.xlu0 %6338
    %6340 = vrot.lane.b32.xlu0 %v5613, 112
    %v6341 = vpop.permute.xlu0 %6340
    %v6343 = vsel %vm682, %v6333, 0
    %v6346 = vsel %vm682, %v6335, 0
    %v6349 = vsel %vm682, %v6339, 0
    %v6352 = vsel %vm682, %v6341, 0
    %6354 = vmatprep.subr.bf16.mxu0 0
    %6355 = vmatpush1.bf16.xpose.msra.mxu0 %v6349
    %6356 = vmatprep.subr.bf16.mxu0 0
    %6357 = vmatpush1.bf16.xpose.msra.mxu0 %v6352
    %6358 = vmatprep.subr.bf16.mxu0 0
    %6359 = vmatpush1.bf16.xpose.msra.mxu0 0
    %6360 = vmatprep.subr.bf16.mxu0 0
    %6361 = vmatpush1.bf16.xpose.msra.mxu0 0
    %6362 = vmatprep.subr.bf16.mxu0 0
    %6363 = vmatpush1.bf16.xpose.msra.mxu0 0
    %6364 = vmatprep.subr.bf16.mxu0 0
    %6365 = vmatpush1.bf16.xpose.msra.mxu0 0
    %6366 = vmatprep.subr.bf16.mxu0 0
    %6367 = vmatpush1.bf16.xpose.msra.mxu0 0
    %6368 = vmatprep.subr.bf16.mxu0 0
    %6369 = vmatpush1.bf16.xpose.msra.mxu0 0
    %6370 = vmatprep.subr.bf16.mxu0 0
    %6371 = vmatpush1.bf16.xpose.msra.mxu0 0
    %6372 = vmatprep.subr.bf16.mxu0 0
    %6373 = vmatpush1.bf16.xpose.msra.mxu0 0
    %6374 = vmatprep.subr.bf16.mxu0 0
    %6375 = vmatpush1.bf16.xpose.msra.mxu0 0
    %6376 = vmatprep.subr.bf16.mxu0 0
    %6377 = vmatpush1.bf16.xpose.msra.mxu0 0
    %6378 = vmatprep.subr.bf16.mxu0 0
    %6379 = vmatpush1.bf16.xpose.msra.mxu0 0
    %6380 = vmatprep.subr.bf16.mxu0 0
    %6381 = vmatpush1.bf16.xpose.msra.mxu0 0
    %6382 = vmatprep.subr.bf16.mxu0 0
    %6383 = vmatpush1.bf16.xpose.msra.mxu0 0
    %6384 = vmatprep.subr.bf16.mxu0 0
    %6385 = vmatpush1.bf16.xpose.msra.mxu0 0
    %6386 = vmatprep.mubr.bf16.mxu0 0
    %6387 = vmatmul.mubr.bf16.gmra.mrb[0].mxu0 %v6343
    %v6388 = vpop.f32.mrb[0].mxu0
    %v6389 = vadd.f32 0.0, %v6388
    %v6390 = vpop.f32.mrb[0].mxu0
    %v6391 = vpop.f32.mrb[0].mxu0
    %v6392 = vadd.f32 0.0, %v6391
    %v6393 = vpop.f32.mrb[0].mxu0
    %6394 = vmatprep.mubr.bf16.mxu0 0
    %6395 = vmatmul.mubr.bf16.gmra.mrb[0].mxu0 %v6346
    %v6396 = vpop.f32.mrb[0].mxu0
    %v6397 = vadd.f32 0.0, %v6396
    %v6398 = vpop.f32.mrb[0].mxu0
    %v6399 = vpop.f32.mrb[0].mxu0
    %v6400 = vpop.f32.mrb[0].mxu0
    %6401 = vdwg.mxu0
    %6404 = vrot.lane.b32.xlu0 %v5606, 112
    %v6405 = vpop.permute.xlu0 %6404
    %6406 = vrot.lane.b32.xlu0 %v5607, 112
    %v6407 = vpop.permute.xlu0 %6406
    %6410 = vrot.lane.b32.xlu0 %v5614, 112
    %v6411 = vpop.permute.xlu0 %6410
    %6412 = vrot.lane.b32.xlu0 %v5615, 112
    %v6413 = vpop.permute.xlu0 %6412
    %v6415 = vsel %vm682, %v6405, 0
    %v6418 = vsel %vm682, %v6407, 0
    %v6421 = vsel %vm682, %v6411, 0
    %v6424 = vsel %vm682, %v6413, 0
    %6426 = vmatprep.subr.bf16.mxu0 0
    %6427 = vmatpush1.bf16.xpose.msra.mxu0 %v6421
    %6428 = vmatprep.subr.bf16.mxu0 0
    %6429 = vmatpush1.bf16.xpose.msra.mxu0 %v6424
    %6430 = vmatprep.subr.bf16.mxu0 0
    %6431 = vmatpush1.bf16.xpose.msra.mxu0 0
    %6432 = vmatprep.subr.bf16.mxu0 0
    %6433 = vmatpush1.bf16.xpose.msra.mxu0 0
    %6434 = vmatprep.subr.bf16.mxu0 0
    %6435 = vmatpush1.bf16.xpose.msra.mxu0 0
    %6436 = vmatprep.subr.bf16.mxu0 0
    %6437 = vmatpush1.bf16.xpose.msra.mxu0 0
    %6438 = vmatprep.subr.bf16.mxu0 0
    %6439 = vmatpush1.bf16.xpose.msra.mxu0 0
    %6440 = vmatprep.subr.bf16.mxu0 0
    %6441 = vmatpush1.bf16.xpose.msra.mxu0 0
    %6442 = vmatprep.subr.bf16.mxu0 0
    %6443 = vmatpush1.bf16.xpose.msra.mxu0 0
    %6444 = vmatprep.subr.bf16.mxu0 0
    %6445 = vmatpush1.bf16.xpose.msra.mxu0 0
    %6446 = vmatprep.subr.bf16.mxu0 0
    %6447 = vmatpush1.bf16.xpose.msra.mxu0 0
    %6448 = vmatprep.subr.bf16.mxu0 0
    %6449 = vmatpush1.bf16.xpose.msra.mxu0 0
    %6450 = vmatprep.subr.bf16.mxu0 0
    %6451 = vmatpush1.bf16.xpose.msra.mxu0 0
    %6452 = vmatprep.subr.bf16.mxu0 0
    %6453 = vmatpush1.bf16.xpose.msra.mxu0 0
    %6454 = vmatprep.subr.bf16.mxu0 0
    %6455 = vmatpush1.bf16.xpose.msra.mxu0 0
    %6456 = vmatprep.subr.bf16.mxu0 0
    %6457 = vmatpush1.bf16.xpose.msra.mxu0 0
    %6458 = vmatprep.mubr.bf16.mxu0 0
    %6459 = vmatmul.mubr.bf16.gmra.mrb[0].mxu0 %v6415
    %v6460 = vpop.f32.mrb[0].mxu0
    %v6461 = vadd.f32 0.0, %v6460
    %v6462 = vpop.f32.mrb[0].mxu0
    %v6463 = vpop.f32.mrb[0].mxu0
    %v6464 = vadd.f32 0.0, %v6463
    %v6465 = vpop.f32.mrb[0].mxu0
    %6466 = vmatprep.mubr.bf16.mxu0 0
    %6467 = vmatmul.mubr.bf16.gmra.mrb[0].mxu0 %v6418
    %v6468 = vpop.f32.mrb[0].mxu0
    %v6469 = vadd.f32 0.0, %v6468
    %v6470 = vpop.f32.mrb[0].mxu0
    %v6471 = vpop.f32.mrb[0].mxu0
    %v6472 = vpop.f32.mrb[0].mxu0
    %6473 = vdwg.mxu0
    %6476 = vrot.lane.b32.xlu0 %v5608, 112
    %v6477 = vpop.permute.xlu0 %6476
    %6478 = vrot.lane.b32.xlu0 %v5609, 112
    %v6479 = vpop.permute.xlu0 %6478
    %6482 = vrot.lane.b32.xlu0 %v5616, 112
    %v6483 = vpop.permute.xlu0 %6482
    %6484 = vrot.lane.b32.xlu0 %v5617, 112
    %v6485 = vpop.permute.xlu0 %6484
    %v6487 = vsel %vm682, %v6477, 0
    %v6490 = vsel %vm682, %v6479, 0
    %v6493 = vsel %vm682, %v6483, 0
    %v6496 = vsel %vm682, %v6485, 0
    %6498 = vmatprep.subr.bf16.mxu0 0
    %6499 = vmatpush1.bf16.xpose.msra.mxu0 %v6493
    %6500 = vmatprep.subr.bf16.mxu0 0
    %6501 = vmatpush1.bf16.xpose.msra.mxu0 %v6496
    %6502 = vmatprep.subr.bf16.mxu0 0
    %6503 = vmatpush1.bf16.xpose.msra.mxu0 0
    %6504 = vmatprep.subr.bf16.mxu0 0
    %6505 = vmatpush1.bf16.xpose.msra.mxu0 0
    %6506 = vmatprep.subr.bf16.mxu0 0
    %6507 = vmatpush1.bf16.xpose.msra.mxu0 0
    %6508 = vmatprep.subr.bf16.mxu0 0
    %6509 = vmatpush1.bf16.xpose.msra.mxu0 0
    %6510 = vmatprep.subr.bf16.mxu0 0
    %6511 = vmatpush1.bf16.xpose.msra.mxu0 0
    %6512 = vmatprep.subr.bf16.mxu0 0
    %6513 = vmatpush1.bf16.xpose.msra.mxu0 0
    %6514 = vmatprep.subr.bf16.mxu0 0
    %6515 = vmatpush1.bf16.xpose.msra.mxu0 0
    %6516 = vmatprep.subr.bf16.mxu0 0
    %6517 = vmatpush1.bf16.xpose.msra.mxu0 0
    %6518 = vmatprep.subr.bf16.mxu0 0
    %6519 = vmatpush1.bf16.xpose.msra.mxu0 0
    %6520 = vmatprep.subr.bf16.mxu0 0
    %6521 = vmatpush1.bf16.xpose.msra.mxu0 0
    %6522 = vmatprep.subr.bf16.mxu0 0
    %6523 = vmatpush1.bf16.xpose.msra.mxu0 0
    %6524 = vmatprep.subr.bf16.mxu0 0
    %6525 = vmatpush1.bf16.xpose.msra.mxu0 0
    %6526 = vmatprep.subr.bf16.mxu0 0
    %6527 = vmatpush1.bf16.xpose.msra.mxu0 0
    %6528 = vmatprep.subr.bf16.mxu0 0
    %6529 = vmatpush1.bf16.xpose.msra.mxu0 0
    %6530 = vmatprep.mubr.bf16.mxu0 0
    %6531 = vmatmul.mubr.bf16.gmra.mrb[0].mxu0 %v6487
    %v6532 = vpop.f32.mrb[0].mxu0
    %v6533 = vadd.f32 0.0, %v6532
    %v6534 = vpop.f32.mrb[0].mxu0
    %v6535 = vpop.f32.mrb[0].mxu0
    %v6536 = vadd.f32 0.0, %v6535
    %v6537 = vpop.f32.mrb[0].mxu0
    %6538 = vmatprep.mubr.bf16.mxu0 0
    %6539 = vmatmul.mubr.bf16.gmra.mrb[0].mxu0 %v6490
    %v6540 = vpop.f32.mrb[0].mxu0
    %v6541 = vadd.f32 0.0, %v6540
    %v6542 = vpop.f32.mrb[0].mxu0
    %v6543 = vpop.f32.mrb[0].mxu0
    %v6544 = vpop.f32.mrb[0].mxu0
    %6545 = vdwg.mxu0
    %v6546 = vmul.f32 %v6317, 0.25
    %v6547 = vmul.f32 %v6320, 0.25
    %v6548 = vmul.f32 %v6325, 0.25
    %v6549 = vmul.f32 %v6389, 0.25
    %v6550 = vmul.f32 %v6392, 0.25
    %v6551 = vmul.f32 %v6397, 0.25
    %v6552 = vmul.f32 %v6461, 0.25
    %v6553 = vmul.f32 %v6464, 0.25
    %v6554 = vmul.f32 %v6469, 0.25
    %v6555 = vmul.f32 %v6533, 0.25
    %v6556 = vmul.f32 %v6536, 0.25
    %v6557 = vmul.f32 %v6541, 0.25
    %v6558 = vadd.f32 %v6546, %v73
    %v6559 = vadd.f32 %v6547, %v73
    %v6560 = vadd.f32 %v6548, %v73
    %v6561 = vadd.f32 %v6549, %v73
    %v6562 = vadd.f32 %v6550, %v73
    %v6563 = vadd.f32 %v6551, %v73
    %v6564 = vadd.f32 %v6552, %v73
    %v6565 = vadd.f32 %v6553, %v73
    %v6566 = vadd.f32 %v6554, %v73
    %v6567 = vadd.f32 %v6555, %v73
    %v6568 = vadd.f32 %v6556, %v73
    %v6569 = vadd.f32 %v6557, %v73
    %v6570 = vsel %vm947, %v6558, -inf
    %6571 = vmax.xlane.f32.xlu0 %v6570
    %v6572 = vpop.xlane.xlu0 %6571
    %v6573 = vsel %vm947, %v6559, -inf
    %6574 = vmax.xlane.f32.xlu0 %v6573
    %v6575 = vpop.xlane.xlu0 %6574
    %v6576 = vsel %vm947, %v6560, -inf
    %6577 = vmax.xlane.f32.xlu0 %v6576
    %v6578 = vpop.xlane.xlu0 %6577
    %v6579 = vsel %vm947, %v6561, -inf
    %6580 = vmax.xlane.f32.xlu0 %v6579
    %v6581 = vpop.xlane.xlu0 %6580
    %v6582 = vsel %vm947, %v6562, -inf
    %6583 = vmax.xlane.f32.xlu0 %v6582
    %v6584 = vpop.xlane.xlu0 %6583
    %v6585 = vsel %vm947, %v6563, -inf
    %6586 = vmax.xlane.f32.xlu0 %v6585
    %v6587 = vpop.xlane.xlu0 %6586
    %v6588 = vsel %vm947, %v6564, -inf
    %6589 = vmax.xlane.f32.xlu0 %v6588
    %v6590 = vpop.xlane.xlu0 %6589
    %v6591 = vsel %vm947, %v6565, -inf
    %6592 = vmax.xlane.f32.xlu0 %v6591
    %v6593 = vpop.xlane.xlu0 %6592
    %v6594 = vsel %vm947, %v6566, -inf
    %6595 = vmax.xlane.f32.xlu0 %v6594
    %v6596 = vpop.xlane.xlu0 %6595
    %v6597 = vsel %vm947, %v6567, -inf
    %6598 = vmax.xlane.f32.xlu0 %v6597
    %v6599 = vpop.xlane.xlu0 %6598
    %v6600 = vsel %vm947, %v6568, -inf
    %6601 = vmax.xlane.f32.xlu0 %v6600
    %v6602 = vpop.xlane.xlu0 %6601
    %v6603 = vsel %vm947, %v6569, -inf
    %6604 = vmax.xlane.f32.xlu0 %v6603
    %v6605 = vpop.xlane.xlu0 %6604
    %v6606 = vsub.f32 %v6558, %v6572
    %v6607 = vsub.f32 %v6559, %v6575
    %v6608 = vsub.f32 %v6560, %v6578
    %v6609 = vsub.f32 %v6561, %v6581
    %v6610 = vsub.f32 %v6562, %v6584
    %v6611 = vsub.f32 %v6563, %v6587
    %v6612 = vsub.f32 %v6564, %v6590
    %v6613 = vsub.f32 %v6565, %v6593
    %v6614 = vsub.f32 %v6566, %v6596
    %v6615 = vsub.f32 %v6567, %v6599
    %v6616 = vsub.f32 %v6568, %v6602
    %v6617 = vsub.f32 %v6569, %v6605
    %v6618 = vmul.f32 %v6606, 1.442695
    %v6619 = vpow.pop %v6618
    %v6620 = vmul.f32 %v6607, 1.442695
    %v6621 = vpow.pop %v6620
    %v6622 = vmul.f32 %v6608, 1.442695
    %v6623 = vpow.pop %v6622
    %v6624 = vmul.f32 %v6609, 1.442695
    %v6625 = vpow.pop %v6624
    %v6626 = vmul.f32 %v6610, 1.442695
    %v6627 = vpow.pop %v6626
    %v6628 = vmul.f32 %v6611, 1.442695
    %v6629 = vpow.pop %v6628
    %v6630 = vmul.f32 %v6612, 1.442695
    %v6631 = vpow.pop %v6630
    %v6632 = vmul.f32 %v6613, 1.442695
    %v6633 = vpow.pop %v6632
    %v6634 = vmul.f32 %v6614, 1.442695
    %v6635 = vpow.pop %v6634
    %v6636 = vmul.f32 %v6615, 1.442695
    %v6637 = vpow.pop %v6636
    %v6638 = vmul.f32 %v6616, 1.442695
    %v6639 = vpow.pop %v6638
    %v6640 = vmul.f32 %v6617, 1.442695
    %v6641 = vpow.pop %v6640
    %v6642 = vsel %vm947, %v6619, 0.0
    %6643 = vadd.xlane.f32.xlu0 %v6642
    %v6644 = vpop.xlane.xlu0 %6643
    %v6645 = vsel %vm947, %v6621, 0.0
    %6646 = vadd.xlane.f32.xlu0 %v6645
    %v6647 = vpop.xlane.xlu0 %6646
    %v6648 = vsel %vm947, %v6623, 0.0
    %6649 = vadd.xlane.f32.xlu0 %v6648
    %v6650 = vpop.xlane.xlu0 %6649
    %v6651 = vsel %vm947, %v6625, 0.0
    %6652 = vadd.xlane.f32.xlu0 %v6651
    %v6653 = vpop.xlane.xlu0 %6652
    %v6654 = vsel %vm947, %v6627, 0.0
    %6655 = vadd.xlane.f32.xlu0 %v6654
    %v6656 = vpop.xlane.xlu0 %6655
    %v6657 = vsel %vm947, %v6629, 0.0
    %6658 = vadd.xlane.f32.xlu0 %v6657
    %v6659 = vpop.xlane.xlu0 %6658
    %v6660 = vsel %vm947, %v6631, 0.0
    %6661 = vadd.xlane.f32.xlu0 %v6660
    %v6662 = vpop.xlane.xlu0 %6661
    %v6663 = vsel %vm947, %v6633, 0.0
    %6664 = vadd.xlane.f32.xlu0 %v6663
    %v6665 = vpop.xlane.xlu0 %6664
    %v6666 = vsel %vm947, %v6635, 0.0
    %6667 = vadd.xlane.f32.xlu0 %v6666
    %v6668 = vpop.xlane.xlu0 %6667
    %v6669 = vsel %vm947, %v6637, 0.0
    %6670 = vadd.xlane.f32.xlu0 %v6669
    %v6671 = vpop.xlane.xlu0 %6670
    %v6672 = vsel %vm947, %v6639, 0.0
    %6673 = vadd.xlane.f32.xlu0 %v6672
    %v6674 = vpop.xlane.xlu0 %6673
    %v6675 = vsel %vm947, %v6641, 0.0
    %6676 = vadd.xlane.f32.xlu0 %v6675
    %v6677 = vpop.xlane.xlu0 %6676
    %v6678 = vrcp.pop %v6644
    %v6679 = vrcp.pop %v6647
    %v6680 = vrcp.pop %v6650
    %v6681 = vrcp.pop %v6653
    %v6682 = vrcp.pop %v6656
    %v6683 = vrcp.pop %v6659
    %v6684 = vrcp.pop %v6662
    %v6685 = vrcp.pop %v6665
    %v6686 = vrcp.pop %v6668
    %v6687 = vrcp.pop %v6671
    %v6688 = vrcp.pop %v6674
    %v6689 = vrcp.pop %v6677
    %v6690 = vmul.f32 %v6619, %v6678
    %v6691 = vmul.f32 %v6621, %v6679
    %v6692 = vmul.f32 %v6623, %v6680
    %v6693 = vmul.f32 %v6625, %v6681
    %v6694 = vmul.f32 %v6627, %v6682
    %v6695 = vmul.f32 %v6629, %v6683
    %v6696 = vmul.f32 %v6631, %v6684
    %v6697 = vmul.f32 %v6633, %v6685
    %v6698 = vmul.f32 %v6635, %v6686
    %v6699 = vmul.f32 %v6637, %v6687
    %v6700 = vmul.f32 %v6639, %v6688
    %v6701 = vmul.f32 %v6641, %v6689
    %v6702 = vpack.c.bf16 %v6691, %v6690
    %v6703 = vpack.c.bf16 %v6692, %v6692
    %v6704 = vpack.c.bf16 %v6694, %v6693
    %v6705 = vpack.c.bf16 %v6695, %v6695
    %v6706 = vpack.c.bf16 %v6697, %v6696
    %v6707 = vpack.c.bf16 %v6698, %v6698
    %v6708 = vpack.c.bf16 %v6700, %v6699
    %v6709 = vpack.c.bf16 %v6701, %v6701
    %6712 = vrot.lane.b32.xlu0 %v5618, 112
    %v6713 = vpop.permute.xlu0 %6712
    %6714 = vrot.lane.b32.xlu0 %v5619, 112
    %v6715 = vpop.permute.xlu0 %6714
    %v6718 = vsel %vm947, %v6702, 0
    %v6721 = vsel %vm947, %v6703, 0
    %v6724 = vsel %vm1094, %v6715, 0
    %6726 = vmatprep.subr.bf16.mxu0 0
    %6727 = vmatpush1.bf16.msra.mxu0 %v6713
    %6728 = vmatprep.subr.bf16.mxu0 0
    %6729 = vmatpush1.bf16.msra.mxu0 %v6724
    %6730 = vmatprep.subr.bf16.mxu0 0
    %6731 = vmatpush1.bf16.msra.mxu0 0
    %6732 = vmatprep.subr.bf16.mxu0 0
    %6733 = vmatpush1.bf16.msra.mxu0 0
    %6734 = vmatprep.subr.bf16.mxu0 0
    %6735 = vmatpush1.bf16.msra.mxu0 0
    %6736 = vmatprep.subr.bf16.mxu0 0
    %6737 = vmatpush1.bf16.msra.mxu0 0
    %6738 = vmatprep.subr.bf16.mxu0 0
    %6739 = vmatpush1.bf16.msra.mxu0 0
    %6740 = vmatprep.subr.bf16.mxu0 0
    %6741 = vmatpush1.bf16.msra.mxu0 0
    %6742 = vmatprep.subr.bf16.mxu0 0
    %6743 = vmatpush1.bf16.msra.mxu0 0
    %6744 = vmatprep.subr.bf16.mxu0 0
    %6745 = vmatpush1.bf16.msra.mxu0 0
    %6746 = vmatprep.subr.bf16.mxu0 0
    %6747 = vmatpush1.bf16.msra.mxu0 0
    %6748 = vmatprep.subr.bf16.mxu0 0
    %6749 = vmatpush1.bf16.msra.mxu0 0
    %6750 = vmatprep.subr.bf16.mxu0 0
    %6751 = vmatpush1.bf16.msra.mxu0 0
    %6752 = vmatprep.subr.bf16.mxu0 0
    %6753 = vmatpush1.bf16.msra.mxu0 0
    %6754 = vmatprep.subr.bf16.mxu0 0
    %6755 = vmatpush1.bf16.msra.mxu0 0
    %6756 = vmatprep.subr.bf16.mxu0 0
    %6757 = vmatpush1.bf16.msra.mxu0 0
    %6758 = vmatprep.mubr.bf16.mxu0 0
    %6759 = vmatmul.mubr.bf16.gmra.mrb[0].mxu0 %v6718
    %v6760 = vpop.f32.mrb[0].mxu0
    %v6761 = vadd.f32 0.0, %v6760
    %v6762 = vpop.f32.mrb[0].mxu0
    %v6763 = vpop.f32.mrb[0].mxu0
    %v6764 = vadd.f32 0.0, %v6763
    %v6765 = vpop.f32.mrb[0].mxu0
    %6766 = vmatprep.mubr.bf16.mxu0 0
    %6767 = vmatmul.mubr.bf16.gmra.mrb[0].mxu0 %v6721
    %v6768 = vpop.f32.mrb[0].mxu0
    %v6769 = vadd.f32 0.0, %v6768
    %v6770 = vpop.f32.mrb[0].mxu0
    %v6771 = vpop.f32.mrb[0].mxu0
    %v6772 = vpop.f32.mrb[0].mxu0
    %6773 = vdwg.mxu0
    %6776 = vrot.lane.b32.xlu0 %v5620, 112
    %v6777 = vpop.permute.xlu0 %6776
    %6778 = vrot.lane.b32.xlu0 %v5621, 112
    %v6779 = vpop.permute.xlu0 %6778
    %v6782 = vsel %vm947, %v6704, 0
    %v6785 = vsel %vm947, %v6705, 0
    %v6788 = vsel %vm1094, %v6779, 0
    %6790 = vmatprep.subr.bf16.mxu0 0
    %6791 = vmatpush1.bf16.msra.mxu0 %v6777
    %6792 = vmatprep.subr.bf16.mxu0 0
    %6793 = vmatpush1.bf16.msra.mxu0 %v6788
    %6794 = vmatprep.subr.bf16.mxu0 0
    %6795 = vmatpush1.bf16.msra.mxu0 0
    %6796 = vmatprep.subr.bf16.mxu0 0
    %6797 = vmatpush1.bf16.msra.mxu0 0
    %6798 = vmatprep.subr.bf16.mxu0 0
    %6799 = vmatpush1.bf16.msra.mxu0 0
    %6800 = vmatprep.subr.bf16.mxu0 0
    %6801 = vmatpush1.bf16.msra.mxu0 0
    %6802 = vmatprep.subr.bf16.mxu0 0
    %6803 = vmatpush1.bf16.msra.mxu0 0
    %6804 = vmatprep.subr.bf16.mxu0 0
    %6805 = vmatpush1.bf16.msra.mxu0 0
    %6806 = vmatprep.subr.bf16.mxu0 0
    %6807 = vmatpush1.bf16.msra.mxu0 0
    %6808 = vmatprep.subr.bf16.mxu0 0
    %6809 = vmatpush1.bf16.msra.mxu0 0
    %6810 = vmatprep.subr.bf16.mxu0 0
    %6811 = vmatpush1.bf16.msra.mxu0 0
    %6812 = vmatprep.subr.bf16.mxu0 0
    %6813 = vmatpush1.bf16.msra.mxu0 0
    %6814 = vmatprep.subr.bf16.mxu0 0
    %6815 = vmatpush1.bf16.msra.mxu0 0
    %6816 = vmatprep.subr.bf16.mxu0 0
    %6817 = vmatpush1.bf16.msra.mxu0 0
    %6818 = vmatprep.subr.bf16.mxu0 0
    %6819 = vmatpush1.bf16.msra.mxu0 0
    %6820 = vmatprep.subr.bf16.mxu0 0
    %6821 = vmatpush1.bf16.msra.mxu0 0
    %6822 = vmatprep.mubr.bf16.mxu0 0
    %6823 = vmatmul.mubr.bf16.gmra.mrb[0].mxu0 %v6782
    %v6824 = vpop.f32.mrb[0].mxu0
    %v6825 = vadd.f32 0.0, %v6824
    %v6826 = vpop.f32.mrb[0].mxu0
    %v6827 = vpop.f32.mrb[0].mxu0
    %v6828 = vadd.f32 0.0, %v6827
    %v6829 = vpop.f32.mrb[0].mxu0
    %6830 = vmatprep.mubr.bf16.mxu0 0
    %6831 = vmatmul.mubr.bf16.gmra.mrb[0].mxu0 %v6785
    %v6832 = vpop.f32.mrb[0].mxu0
    %v6833 = vadd.f32 0.0, %v6832
    %v6834 = vpop.f32.mrb[0].mxu0
    %v6835 = vpop.f32.mrb[0].mxu0
    %v6836 = vpop.f32.mrb[0].mxu0
    %6837 = vdwg.mxu0
    %6840 = vrot.lane.b32.xlu0 %v5622, 112
    %v6841 = vpop.permute.xlu0 %6840
    %6842 = vrot.lane.b32.xlu0 %v5623, 112
    %v6843 = vpop.permute.xlu0 %6842
    %v6846 = vsel %vm947, %v6706, 0
    %v6849 = vsel %vm947, %v6707, 0
    %v6852 = vsel %vm1094, %v6843, 0
    %6854 = vmatprep.subr.bf16.mxu0 0
    %6855 = vmatpush1.bf16.msra.mxu0 %v6841
    %6856 = vmatprep.subr.bf16.mxu0 0
    %6857 = vmatpush1.bf16.msra.mxu0 %v6852
    %6858 = vmatprep.subr.bf16.mxu0 0
    %6859 = vmatpush1.bf16.msra.mxu0 0
    %6860 = vmatprep.subr.bf16.mxu0 0
    %6861 = vmatpush1.bf16.msra.mxu0 0
    %6862 = vmatprep.subr.bf16.mxu0 0
    %6863 = vmatpush1.bf16.msra.mxu0 0
    %6864 = vmatprep.subr.bf16.mxu0 0
    %6865 = vmatpush1.bf16.msra.mxu0 0
    %6866 = vmatprep.subr.bf16.mxu0 0
    %6867 = vmatpush1.bf16.msra.mxu0 0
    %6868 = vmatprep.subr.bf16.mxu0 0
    %6869 = vmatpush1.bf16.msra.mxu0 0
    %6870 = vmatprep.subr.bf16.mxu0 0
    %6871 = vmatpush1.bf16.msra.mxu0 0
    %6872 = vmatprep.subr.bf16.mxu0 0
    %6873 = vmatpush1.bf16.msra.mxu0 0
    %6874 = vmatprep.subr.bf16.mxu0 0
    %6875 = vmatpush1.bf16.msra.mxu0 0
    %6876 = vmatprep.subr.bf16.mxu0 0
    %6877 = vmatpush1.bf16.msra.mxu0 0
    %6878 = vmatprep.subr.bf16.mxu0 0
    %6879 = vmatpush1.bf16.msra.mxu0 0
    %6880 = vmatprep.subr.bf16.mxu0 0
    %6881 = vmatpush1.bf16.msra.mxu0 0
    %6882 = vmatprep.subr.bf16.mxu0 0
    %6883 = vmatpush1.bf16.msra.mxu0 0
    %6884 = vmatprep.subr.bf16.mxu0 0
    %6885 = vmatpush1.bf16.msra.mxu0 0
    %6886 = vmatprep.mubr.bf16.mxu0 0
    %6887 = vmatmul.mubr.bf16.gmra.mrb[0].mxu0 %v6846
    %v6888 = vpop.f32.mrb[0].mxu0
    %v6889 = vadd.f32 0.0, %v6888
    %v6890 = vpop.f32.mrb[0].mxu0
    %v6891 = vpop.f32.mrb[0].mxu0
    %v6892 = vadd.f32 0.0, %v6891
    %v6893 = vpop.f32.mrb[0].mxu0
    %6894 = vmatprep.mubr.bf16.mxu0 0
    %6895 = vmatmul.mubr.bf16.gmra.mrb[0].mxu0 %v6849
    %v6896 = vpop.f32.mrb[0].mxu0
    %v6897 = vadd.f32 0.0, %v6896
    %v6898 = vpop.f32.mrb[0].mxu0
    %v6899 = vpop.f32.mrb[0].mxu0
    %v6900 = vpop.f32.mrb[0].mxu0
    %6901 = vdwg.mxu0
    %6904 = vrot.lane.b32.xlu0 %v5624, 112
    %v6905 = vpop.permute.xlu0 %6904
    %6906 = vrot.lane.b32.xlu0 %v5625, 112
    %v6907 = vpop.permute.xlu0 %6906
    %v6910 = vsel %vm947, %v6708, 0
    %v6913 = vsel %vm947, %v6709, 0
    %v6916 = vsel %vm1094, %v6907, 0
    %6918 = vmatprep.subr.bf16.mxu0 0
    %6919 = vmatpush1.bf16.msra.mxu0 %v6905
    %6920 = vmatprep.subr.bf16.mxu0 0
    %6921 = vmatpush1.bf16.msra.mxu0 %v6916
    %6922 = vmatprep.subr.bf16.mxu0 0
    %6923 = vmatpush1.bf16.msra.mxu0 0
    %6924 = vmatprep.subr.bf16.mxu0 0
    %6925 = vmatpush1.bf16.msra.mxu0 0
    %6926 = vmatprep.subr.bf16.mxu0 0
    %6927 = vmatpush1.bf16.msra.mxu0 0
    %6928 = vmatprep.subr.bf16.mxu0 0
    %6929 = vmatpush1.bf16.msra.mxu0 0
    %6930 = vmatprep.subr.bf16.mxu0 0
    %6931 = vmatpush1.bf16.msra.mxu0 0
    %6932 = vmatprep.subr.bf16.mxu0 0
    %6933 = vmatpush1.bf16.msra.mxu0 0
    %6934 = vmatprep.subr.bf16.mxu0 0
    %6935 = vmatpush1.bf16.msra.mxu0 0
    %6936 = vmatprep.subr.bf16.mxu0 0
    %6937 = vmatpush1.bf16.msra.mxu0 0
    %6938 = vmatprep.subr.bf16.mxu0 0
    %6939 = vmatpush1.bf16.msra.mxu0 0
    %6940 = vmatprep.subr.bf16.mxu0 0
    %6941 = vmatpush1.bf16.msra.mxu0 0
    %6942 = vmatprep.subr.bf16.mxu0 0
    %6943 = vmatpush1.bf16.msra.mxu0 0
    %6944 = vmatprep.subr.bf16.mxu0 0
    %6945 = vmatpush1.bf16.msra.mxu0 0
    %6946 = vmatprep.subr.bf16.mxu0 0
    %6947 = vmatpush1.bf16.msra.mxu0 0
    %6948 = vmatprep.subr.bf16.mxu0 0
    %6949 = vmatpush1.bf16.msra.mxu0 0
    %6950 = vmatprep.mubr.bf16.mxu0 0
    %6951 = vmatmul.mubr.bf16.gmra.mrb[0].mxu0 %v6910
    %v6952 = vpop.f32.mrb[0].mxu0
    %v6953 = vadd.f32 0.0, %v6952
    %v6954 = vpop.f32.mrb[0].mxu0
    %v6955 = vpop.f32.mrb[0].mxu0
    %v6956 = vadd.f32 0.0, %v6955
    %v6957 = vpop.f32.mrb[0].mxu0
    %6958 = vmatprep.mubr.bf16.mxu0 0
    %6959 = vmatmul.mubr.bf16.gmra.mrb[0].mxu0 %v6913
    %v6960 = vpop.f32.mrb[0].mxu0
    %v6961 = vadd.f32 0.0, %v6960
    %v6962 = vpop.f32.mrb[0].mxu0
    %v6963 = vpop.f32.mrb[0].mxu0
    %v6964 = vpop.f32.mrb[0].mxu0
    %6965 = vdwg.mxu0
    %6966 = vrot.lane.b32.xlu0 %v5602, 96
    %v6967 = vpop.permute.xlu0 %6966
    %6968 = vrot.lane.b32.xlu0 %v5603, 96
    %v6969 = vpop.permute.xlu0 %6968
    %6970 = vrot.lane.b32.xlu0 %v5610, 96
    %v6971 = vpop.permute.xlu0 %6970
    %6972 = vrot.lane.b32.xlu0 %v5611, 96
    %v6973 = vpop.permute.xlu0 %6972
    %v6975 = vsel %vm682, %v6967, 0
    %v6978 = vsel %vm682, %v6969, 0
    %v6981 = vsel %vm682, %v6971, 0
    %v6984 = vsel %vm682, %v6973, 0
    %6986 = vmatprep.subr.bf16.mxu0 0
    %6987 = vmatpush1.bf16.xpose.msra.mxu0 %v6981
    %6988 = vmatprep.subr.bf16.mxu0 0
    %6989 = vmatpush1.bf16.xpose.msra.mxu0 %v6984
    %6990 = vmatprep.subr.bf16.mxu0 0
    %6991 = vmatpush1.bf16.xpose.msra.mxu0 0
    %6992 = vmatprep.subr.bf16.mxu0 0
    %6993 = vmatpush1.bf16.xpose.msra.mxu0 0
    %6994 = vmatprep.subr.bf16.mxu0 0
    %6995 = vmatpush1.bf16.xpose.msra.mxu0 0
    %6996 = vmatprep.subr.bf16.mxu0 0
    %6997 = vmatpush1.bf16.xpose.msra.mxu0 0
    %6998 = vmatprep.subr.bf16.mxu0 0
    %6999 = vmatpush1.bf16.xpose.msra.mxu0 0
    %7000 = vmatprep.subr.bf16.mxu0 0
    %7001 = vmatpush1.bf16.xpose.msra.mxu0 0
    %7002 = vmatprep.subr.bf16.mxu0 0
    %7003 = vmatpush1.bf16.xpose.msra.mxu0 0
    %7004 = vmatprep.subr.bf16.mxu0 0
    %7005 = vmatpush1.bf16.xpose.msra.mxu0 0
    %7006 = vmatprep.subr.bf16.mxu0 0
    %7007 = vmatpush1.bf16.xpose.msra.mxu0 0
    %7008 = vmatprep.subr.bf16.mxu0 0
    %7009 = vmatpush1.bf16.xpose.msra.mxu0 0
    %7010 = vmatprep.subr.bf16.mxu0 0
    %7011 = vmatpush1.bf16.xpose.msra.mxu0 0
    %7012 = vmatprep.subr.bf16.mxu0 0
    %7013 = vmatpush1.bf16.xpose.msra.mxu0 0
    %7014 = vmatprep.subr.bf16.mxu0 0
    %7015 = vmatpush1.bf16.xpose.msra.mxu0 0
    %7016 = vmatprep.subr.bf16.mxu0 0
    %7017 = vmatpush1.bf16.xpose.msra.mxu0 0
    %7018 = vmatprep.mubr.bf16.mxu0 0
    %7019 = vmatmul.mubr.bf16.gmra.mrb[0].mxu0 %v6975
    %v7020 = vpop.f32.mrb[0].mxu0
    %v7021 = vadd.f32 0.0, %v7020
    %v7022 = vpop.f32.mrb[0].mxu0
    %v7023 = vpop.f32.mrb[0].mxu0
    %v7024 = vadd.f32 0.0, %v7023
    %v7025 = vpop.f32.mrb[0].mxu0
    %7026 = vmatprep.mubr.bf16.mxu0 0
    %7027 = vmatmul.mubr.bf16.gmra.mrb[0].mxu0 %v6978
    %v7028 = vpop.f32.mrb[0].mxu0
    %v7029 = vadd.f32 0.0, %v7028
    %v7030 = vpop.f32.mrb[0].mxu0
    %v7031 = vpop.f32.mrb[0].mxu0
    %v7032 = vpop.f32.mrb[0].mxu0
    %7033 = vdwg.mxu0
    %7034 = vrot.lane.b32.xlu0 %v5604, 96
    %v7035 = vpop.permute.xlu0 %7034
    %7036 = vrot.lane.b32.xlu0 %v5605, 96
    %v7037 = vpop.permute.xlu0 %7036
    %7038 = vrot.lane.b32.xlu0 %v5612, 96
    %v7039 = vpop.permute.xlu0 %7038
    %7040 = vrot.lane.b32.xlu0 %v5613, 96
    %v7041 = vpop.permute.xlu0 %7040
    %v7043 = vsel %vm682, %v7035, 0
    %v7046 = vsel %vm682, %v7037, 0
    %v7049 = vsel %vm682, %v7039, 0
    %v7052 = vsel %vm682, %v7041, 0
    %7054 = vmatprep.subr.bf16.mxu0 0
    %7055 = vmatpush1.bf16.xpose.msra.mxu0 %v7049
    %7056 = vmatprep.subr.bf16.mxu0 0
    %7057 = vmatpush1.bf16.xpose.msra.mxu0 %v7052
    %7058 = vmatprep.subr.bf16.mxu0 0
    %7059 = vmatpush1.bf16.xpose.msra.mxu0 0
    %7060 = vmatprep.subr.bf16.mxu0 0
    %7061 = vmatpush1.bf16.xpose.msra.mxu0 0
    %7062 = vmatprep.subr.bf16.mxu0 0
    %7063 = vmatpush1.bf16.xpose.msra.mxu0 0
    %7064 = vmatprep.subr.bf16.mxu0 0
    %7065 = vmatpush1.bf16.xpose.msra.mxu0 0
    %7066 = vmatprep.subr.bf16.mxu0 0
    %7067 = vmatpush1.bf16.xpose.msra.mxu0 0
    %7068 = vmatprep.subr.bf16.mxu0 0
    %7069 = vmatpush1.bf16.xpose.msra.mxu0 0
    %7070 = vmatprep.subr.bf16.mxu0 0
    %7071 = vmatpush1.bf16.xpose.msra.mxu0 0
    %7072 = vmatprep.subr.bf16.mxu0 0
    %7073 = vmatpush1.bf16.xpose.msra.mxu0 0
    %7074 = vmatprep.subr.bf16.mxu0 0
    %7075 = vmatpush1.bf16.xpose.msra.mxu0 0
    %7076 = vmatprep.subr.bf16.mxu0 0
    %7077 = vmatpush1.bf16.xpose.msra.mxu0 0
    %7078 = vmatprep.subr.bf16.mxu0 0
    %7079 = vmatpush1.bf16.xpose.msra.mxu0 0
    %7080 = vmatprep.subr.bf16.mxu0 0
    %7081 = vmatpush1.bf16.xpose.msra.mxu0 0
    %7082 = vmatprep.subr.bf16.mxu0 0
    %7083 = vmatpush1.bf16.xpose.msra.mxu0 0
    %7084 = vmatprep.subr.bf16.mxu0 0
    %7085 = vmatpush1.bf16.xpose.msra.mxu0 0
    %7086 = vmatprep.mubr.bf16.mxu0 0
    %7087 = vmatmul.mubr.bf16.gmra.mrb[0].mxu0 %v7043
    %v7088 = vpop.f32.mrb[0].mxu0
    %v7089 = vadd.f32 0.0, %v7088
    %v7090 = vpop.f32.mrb[0].mxu0
    %v7091 = vpop.f32.mrb[0].mxu0
    %v7092 = vadd.f32 0.0, %v7091
    %v7093 = vpop.f32.mrb[0].mxu0
    %7094 = vmatprep.mubr.bf16.mxu0 0
    %7095 = vmatmul.mubr.bf16.gmra.mrb[0].mxu0 %v7046
    %v7096 = vpop.f32.mrb[0].mxu0
    %v7097 = vadd.f32 0.0, %v7096
    %v7098 = vpop.f32.mrb[0].mxu0
    %v7099 = vpop.f32.mrb[0].mxu0
    %v7100 = vpop.f32.mrb[0].mxu0
    %7101 = vdwg.mxu0
    %7102 = vrot.lane.b32.xlu0 %v5606, 96
    %v7103 = vpop.permute.xlu0 %7102
    %7104 = vrot.lane.b32.xlu0 %v5607, 96
    %v7105 = vpop.permute.xlu0 %7104
    %7106 = vrot.lane.b32.xlu0 %v5614, 96
    %v7107 = vpop.permute.xlu0 %7106
    %7108 = vrot.lane.b32.xlu0 %v5615, 96
    %v7109 = vpop.permute.xlu0 %7108
    %v7111 = vsel %vm682, %v7103, 0
    %v7114 = vsel %vm682, %v7105, 0
    %v7117 = vsel %vm682, %v7107, 0
    %v7120 = vsel %vm682, %v7109, 0
    %7122 = vmatprep.subr.bf16.mxu0 0
    %7123 = vmatpush1.bf16.xpose.msra.mxu0 %v7117
    %7124 = vmatprep.subr.bf16.mxu0 0
    %7125 = vmatpush1.bf16.xpose.msra.mxu0 %v7120
    %7126 = vmatprep.subr.bf16.mxu0 0
    %7127 = vmatpush1.bf16.xpose.msra.mxu0 0
    %7128 = vmatprep.subr.bf16.mxu0 0
    %7129 = vmatpush1.bf16.xpose.msra.mxu0 0
    %7130 = vmatprep.subr.bf16.mxu0 0
    %7131 = vmatpush1.bf16.xpose.msra.mxu0 0
    %7132 = vmatprep.subr.bf16.mxu0 0
    %7133 = vmatpush1.bf16.xpose.msra.mxu0 0
    %7134 = vmatprep.subr.bf16.mxu0 0
    %7135 = vmatpush1.bf16.xpose.msra.mxu0 0
    %7136 = vmatprep.subr.bf16.mxu0 0
    %7137 = vmatpush1.bf16.xpose.msra.mxu0 0
    %7138 = vmatprep.subr.bf16.mxu0 0
    %7139 = vmatpush1.bf16.xpose.msra.mxu0 0
    %7140 = vmatprep.subr.bf16.mxu0 0
    %7141 = vmatpush1.bf16.xpose.msra.mxu0 0
    %7142 = vmatprep.subr.bf16.mxu0 0
    %7143 = vmatpush1.bf16.xpose.msra.mxu0 0
    %7144 = vmatprep.subr.bf16.mxu0 0
    %7145 = vmatpush1.bf16.xpose.msra.mxu0 0
    %7146 = vmatprep.subr.bf16.mxu0 0
    %7147 = vmatpush1.bf16.xpose.msra.mxu0 0
    %7148 = vmatprep.subr.bf16.mxu0 0
    %7149 = vmatpush1.bf16.xpose.msra.mxu0 0
    %7150 = vmatprep.subr.bf16.mxu0 0
    %7151 = vmatpush1.bf16.xpose.msra.mxu0 0
    %7152 = vmatprep.subr.bf16.mxu0 0
    %7153 = vmatpush1.bf16.xpose.msra.mxu0 0
    %7154 = vmatprep.mubr.bf16.mxu0 0
    %7155 = vmatmul.mubr.bf16.gmra.mrb[0].mxu0 %v7111
    %v7156 = vpop.f32.mrb[0].mxu0
    %v7157 = vadd.f32 0.0, %v7156
    %v7158 = vpop.f32.mrb[0].mxu0
    %v7159 = vpop.f32.mrb[0].mxu0
    %v7160 = vadd.f32 0.0, %v7159
    %v7161 = vpop.f32.mrb[0].mxu0
    %7162 = vmatprep.mubr.bf16.mxu0 0
    %7163 = vmatmul.mubr.bf16.gmra.mrb[0].mxu0 %v7114
    %v7164 = vpop.f32.mrb[0].mxu0
    %v7165 = vadd.f32 0.0, %v7164
    %v7166 = vpop.f32.mrb[0].mxu0
    %v7167 = vpop.f32.mrb[0].mxu0
    %v7168 = vpop.f32.mrb[0].mxu0
    %7169 = vdwg.mxu0
    %7170 = vrot.lane.b32.xlu0 %v5608, 96
    %v7171 = vpop.permute.xlu0 %7170
    %7172 = vrot.lane.b32.xlu0 %v5609, 96
    %v7173 = vpop.permute.xlu0 %7172
    %7174 = vrot.lane.b32.xlu0 %v5616, 96
    %v7175 = vpop.permute.xlu0 %7174
    %7176 = vrot.lane.b32.xlu0 %v5617, 96
    %v7177 = vpop.permute.xlu0 %7176
    %v7179 = vsel %vm682, %v7171, 0
    %v7182 = vsel %vm682, %v7173, 0
    %v7185 = vsel %vm682, %v7175, 0
    %v7188 = vsel %vm682, %v7177, 0
    %7190 = vmatprep.subr.bf16.mxu0 0
    %7191 = vmatpush1.bf16.xpose.msra.mxu0 %v7185
    %7192 = vmatprep.subr.bf16.mxu0 0
    %7193 = vmatpush1.bf16.xpose.msra.mxu0 %v7188
    %7194 = vmatprep.subr.bf16.mxu0 0
    %7195 = vmatpush1.bf16.xpose.msra.mxu0 0
    %7196 = vmatprep.subr.bf16.mxu0 0
    %7197 = vmatpush1.bf16.xpose.msra.mxu0 0
    %7198 = vmatprep.subr.bf16.mxu0 0
    %7199 = vmatpush1.bf16.xpose.msra.mxu0 0
    %7200 = vmatprep.subr.bf16.mxu0 0
    %7201 = vmatpush1.bf16.xpose.msra.mxu0 0
    %7202 = vmatprep.subr.bf16.mxu0 0
    %7203 = vmatpush1.bf16.xpose.msra.mxu0 0
    %7204 = vmatprep.subr.bf16.mxu0 0
    %7205 = vmatpush1.bf16.xpose.msra.mxu0 0
    %7206 = vmatprep.subr.bf16.mxu0 0
    %7207 = vmatpush1.bf16.xpose.msra.mxu0 0
    %7208 = vmatprep.subr.bf16.mxu0 0
    %7209 = vmatpush1.bf16.xpose.msra.mxu0 0
    %7210 = vmatprep.subr.bf16.mxu0 0
    %7211 = vmatpush1.bf16.xpose.msra.mxu0 0
    %7212 = vmatprep.subr.bf16.mxu0 0
    %7213 = vmatpush1.bf16.xpose.msra.mxu0 0
    %7214 = vmatprep.subr.bf16.mxu0 0
    %7215 = vmatpush1.bf16.xpose.msra.mxu0 0
    %7216 = vmatprep.subr.bf16.mxu0 0
    %7217 = vmatpush1.bf16.xpose.msra.mxu0 0
    %7218 = vmatprep.subr.bf16.mxu0 0
    %7219 = vmatpush1.bf16.xpose.msra.mxu0 0
    %7220 = vmatprep.subr.bf16.mxu0 0
    %7221 = vmatpush1.bf16.xpose.msra.mxu0 0
    %7222 = vmatprep.mubr.bf16.mxu0 0
    %7223 = vmatmul.mubr.bf16.gmra.mrb[0].mxu0 %v7179
    %v7224 = vpop.f32.mrb[0].mxu0
    %v7225 = vadd.f32 0.0, %v7224
    %v7226 = vpop.f32.mrb[0].mxu0
    %v7227 = vpop.f32.mrb[0].mxu0
    %v7228 = vadd.f32 0.0, %v7227
    %v7229 = vpop.f32.mrb[0].mxu0
    %7230 = vmatprep.mubr.bf16.mxu0 0
    %7231 = vmatmul.mubr.bf16.gmra.mrb[0].mxu0 %v7182
    %v7232 = vpop.f32.mrb[0].mxu0
    %v7233 = vadd.f32 0.0, %v7232
    %v7234 = vpop.f32.mrb[0].mxu0
    %v7235 = vpop.f32.mrb[0].mxu0
    %v7236 = vpop.f32.mrb[0].mxu0
    %7237 = vdwg.mxu0
    %v7238 = vmul.f32 %v7021, 0.25
    %v7239 = vmul.f32 %v7024, 0.25
    %v7240 = vmul.f32 %v7029, 0.25
    %v7241 = vmul.f32 %v7089, 0.25
    %v7242 = vmul.f32 %v7092, 0.25
    %v7243 = vmul.f32 %v7097, 0.25
    %v7244 = vmul.f32 %v7157, 0.25
    %v7245 = vmul.f32 %v7160, 0.25
    %v7246 = vmul.f32 %v7165, 0.25
    %v7247 = vmul.f32 %v7225, 0.25
    %v7248 = vmul.f32 %v7228, 0.25
    %v7249 = vmul.f32 %v7233, 0.25
    %v7250 = vadd.f32 %v7238, %v73
    %v7251 = vadd.f32 %v7239, %v73
    %v7252 = vadd.f32 %v7240, %v73
    %v7253 = vadd.f32 %v7241, %v73
    %v7254 = vadd.f32 %v7242, %v73
    %v7255 = vadd.f32 %v7243, %v73
    %v7256 = vadd.f32 %v7244, %v73
    %v7257 = vadd.f32 %v7245, %v73
    %v7258 = vadd.f32 %v7246, %v73
    %v7259 = vadd.f32 %v7247, %v73
    %v7260 = vadd.f32 %v7248, %v73
    %v7261 = vadd.f32 %v7249, %v73
    %v7262 = vsel %vm947, %v7250, -inf
    %7263 = vmax.xlane.f32.xlu0 %v7262
    %v7264 = vpop.xlane.xlu0 %7263
    %v7265 = vsel %vm947, %v7251, -inf
    %7266 = vmax.xlane.f32.xlu0 %v7265
    %v7267 = vpop.xlane.xlu0 %7266
    %v7268 = vsel %vm947, %v7252, -inf
    %7269 = vmax.xlane.f32.xlu0 %v7268
    %v7270 = vpop.xlane.xlu0 %7269
    %v7271 = vsel %vm947, %v7253, -inf
    %7272 = vmax.xlane.f32.xlu0 %v7271
    %v7273 = vpop.xlane.xlu0 %7272
    %v7274 = vsel %vm947, %v7254, -inf
    %7275 = vmax.xlane.f32.xlu0 %v7274
    %v7276 = vpop.xlane.xlu0 %7275
    %v7277 = vsel %vm947, %v7255, -inf
    %7278 = vmax.xlane.f32.xlu0 %v7277
    %v7279 = vpop.xlane.xlu0 %7278
    %v7280 = vsel %vm947, %v7256, -inf
    %7281 = vmax.xlane.f32.xlu0 %v7280
    %v7282 = vpop.xlane.xlu0 %7281
    %v7283 = vsel %vm947, %v7257, -inf
    %7284 = vmax.xlane.f32.xlu0 %v7283
    %v7285 = vpop.xlane.xlu0 %7284
    %v7286 = vsel %vm947, %v7258, -inf
    %7287 = vmax.xlane.f32.xlu0 %v7286
    %v7288 = vpop.xlane.xlu0 %7287
    %v7289 = vsel %vm947, %v7259, -inf
    %7290 = vmax.xlane.f32.xlu0 %v7289
    %v7291 = vpop.xlane.xlu0 %7290
    %v7292 = vsel %vm947, %v7260, -inf
    %7293 = vmax.xlane.f32.xlu0 %v7292
    %v7294 = vpop.xlane.xlu0 %7293
    %v7295 = vsel %vm947, %v7261, -inf
    %7296 = vmax.xlane.f32.xlu0 %v7295
    %v7297 = vpop.xlane.xlu0 %7296
    %v7298 = vsub.f32 %v7250, %v7264
    %v7299 = vsub.f32 %v7251, %v7267
    %v7300 = vsub.f32 %v7252, %v7270
    %v7301 = vsub.f32 %v7253, %v7273
    %v7302 = vsub.f32 %v7254, %v7276
    %v7303 = vsub.f32 %v7255, %v7279
    %v7304 = vsub.f32 %v7256, %v7282
    %v7305 = vsub.f32 %v7257, %v7285
    %v7306 = vsub.f32 %v7258, %v7288
    %v7307 = vsub.f32 %v7259, %v7291
    %v7308 = vsub.f32 %v7260, %v7294
    %v7309 = vsub.f32 %v7261, %v7297
    %v7310 = vmul.f32 %v7298, 1.442695
    %v7311 = vpow.pop %v7310
    %v7312 = vmul.f32 %v7299, 1.442695
    %v7313 = vpow.pop %v7312
    %v7314 = vmul.f32 %v7300, 1.442695
    %v7315 = vpow.pop %v7314
    %v7316 = vmul.f32 %v7301, 1.442695
    %v7317 = vpow.pop %v7316
    %v7318 = vmul.f32 %v7302, 1.442695
    %v7319 = vpow.pop %v7318
    %v7320 = vmul.f32 %v7303, 1.442695
    %v7321 = vpow.pop %v7320
    %v7322 = vmul.f32 %v7304, 1.442695
    %v7323 = vpow.pop %v7322
    %v7324 = vmul.f32 %v7305, 1.442695
    %v7325 = vpow.pop %v7324
    %v7326 = vmul.f32 %v7306, 1.442695
    %v7327 = vpow.pop %v7326
    %v7328 = vmul.f32 %v7307, 1.442695
    %v7329 = vpow.pop %v7328
    %v7330 = vmul.f32 %v7308, 1.442695
    %v7331 = vpow.pop %v7330
    %v7332 = vmul.f32 %v7309, 1.442695
    %v7333 = vpow.pop %v7332
    %v7334 = vsel %vm947, %v7311, 0.0
    %7335 = vadd.xlane.f32.xlu0 %v7334
    %v7336 = vpop.xlane.xlu0 %7335
    %v7337 = vsel %vm947, %v7313, 0.0
    %7338 = vadd.xlane.f32.xlu0 %v7337
    %v7339 = vpop.xlane.xlu0 %7338
    %v7340 = vsel %vm947, %v7315, 0.0
    %7341 = vadd.xlane.f32.xlu0 %v7340
    %v7342 = vpop.xlane.xlu0 %7341
    %v7343 = vsel %vm947, %v7317, 0.0
    %7344 = vadd.xlane.f32.xlu0 %v7343
    %v7345 = vpop.xlane.xlu0 %7344
    %v7346 = vsel %vm947, %v7319, 0.0
    %7347 = vadd.xlane.f32.xlu0 %v7346
    %v7348 = vpop.xlane.xlu0 %7347
    %v7349 = vsel %vm947, %v7321, 0.0
    %7350 = vadd.xlane.f32.xlu0 %v7349
    %v7351 = vpop.xlane.xlu0 %7350
    %v7352 = vsel %vm947, %v7323, 0.0
    %7353 = vadd.xlane.f32.xlu0 %v7352
    %v7354 = vpop.xlane.xlu0 %7353
    %v7355 = vsel %vm947, %v7325, 0.0
    %7356 = vadd.xlane.f32.xlu0 %v7355
    %v7357 = vpop.xlane.xlu0 %7356
    %v7358 = vsel %vm947, %v7327, 0.0
    %7359 = vadd.xlane.f32.xlu0 %v7358
    %v7360 = vpop.xlane.xlu0 %7359
    %v7361 = vsel %vm947, %v7329, 0.0
    %7362 = vadd.xlane.f32.xlu0 %v7361
    %v7363 = vpop.xlane.xlu0 %7362
    %v7364 = vsel %vm947, %v7331, 0.0
    %7365 = vadd.xlane.f32.xlu0 %v7364
    %v7366 = vpop.xlane.xlu0 %7365
    %v7367 = vsel %vm947, %v7333, 0.0
    %7368 = vadd.xlane.f32.xlu0 %v7367
    %v7369 = vpop.xlane.xlu0 %7368
    %v7370 = vrcp.pop %v7336
    %v7371 = vrcp.pop %v7339
    %v7372 = vrcp.pop %v7342
    %v7373 = vrcp.pop %v7345
    %v7374 = vrcp.pop %v7348
    %v7375 = vrcp.pop %v7351
    %v7376 = vrcp.pop %v7354
    %v7377 = vrcp.pop %v7357
    %v7378 = vrcp.pop %v7360
    %v7379 = vrcp.pop %v7363
    %v7380 = vrcp.pop %v7366
    %v7381 = vrcp.pop %v7369
    %v7382 = vmul.f32 %v7311, %v7370
    %v7383 = vmul.f32 %v7313, %v7371
    %v7384 = vmul.f32 %v7315, %v7372
    %v7385 = vmul.f32 %v7317, %v7373
    %v7386 = vmul.f32 %v7319, %v7374
    %v7387 = vmul.f32 %v7321, %v7375
    %v7388 = vmul.f32 %v7323, %v7376
    %v7389 = vmul.f32 %v7325, %v7377
    %v7390 = vmul.f32 %v7327, %v7378
    %v7391 = vmul.f32 %v7329, %v7379
    %v7392 = vmul.f32 %v7331, %v7380
    %v7393 = vmul.f32 %v7333, %v7381
    %v7394 = vpack.c.bf16 %v7383, %v7382
    %v7395 = vpack.c.bf16 %v7384, %v7384
    %v7396 = vpack.c.bf16 %v7386, %v7385
    %v7397 = vpack.c.bf16 %v7387, %v7387
    %v7398 = vpack.c.bf16 %v7389, %v7388
    %v7399 = vpack.c.bf16 %v7390, %v7390
    %v7400 = vpack.c.bf16 %v7392, %v7391
    %v7401 = vpack.c.bf16 %v7393, %v7393
    %7402 = vrot.lane.b32.xlu0 %v5618, 96
    %v7403 = vpop.permute.xlu0 %7402
    %7404 = vrot.lane.b32.xlu0 %v5619, 96
    %v7405 = vpop.permute.xlu0 %7404
    %v7408 = vsel %vm947, %v7394, 0
    %v7411 = vsel %vm947, %v7395, 0
    %v7414 = vsel %vm1094, %v7405, 0
    %7416 = vmatprep.subr.bf16.mxu0 0
    %7417 = vmatpush1.bf16.msra.mxu0 %v7403
    %7418 = vmatprep.subr.bf16.mxu0 0
    %7419 = vmatpush1.bf16.msra.mxu0 %v7414
    %7420 = vmatprep.subr.bf16.mxu0 0
    %7421 = vmatpush1.bf16.msra.mxu0 0
    %7422 = vmatprep.subr.bf16.mxu0 0
    %7423 = vmatpush1.bf16.msra.mxu0 0
    %7424 = vmatprep.subr.bf16.mxu0 0
    %7425 = vmatpush1.bf16.msra.mxu0 0
    %7426 = vmatprep.subr.bf16.mxu0 0
    %7427 = vmatpush1.bf16.msra.mxu0 0
    %7428 = vmatprep.subr.bf16.mxu0 0
    %7429 = vmatpush1.bf16.msra.mxu0 0
    %7430 = vmatprep.subr.bf16.mxu0 0
    %7431 = vmatpush1.bf16.msra.mxu0 0
    %7432 = vmatprep.subr.bf16.mxu0 0
    %7433 = vmatpush1.bf16.msra.mxu0 0
    %7434 = vmatprep.subr.bf16.mxu0 0
    %7435 = vmatpush1.bf16.msra.mxu0 0
    %7436 = vmatprep.subr.bf16.mxu0 0
    %7437 = vmatpush1.bf16.msra.mxu0 0
    %7438 = vmatprep.subr.bf16.mxu0 0
    %7439 = vmatpush1.bf16.msra.mxu0 0
    %7440 = vmatprep.subr.bf16.mxu0 0
    %7441 = vmatpush1.bf16.msra.mxu0 0
    %7442 = vmatprep.subr.bf16.mxu0 0
    %7443 = vmatpush1.bf16.msra.mxu0 0
    %7444 = vmatprep.subr.bf16.mxu0 0
    %7445 = vmatpush1.bf16.msra.mxu0 0
    %7446 = vmatprep.subr.bf16.mxu0 0
    %7447 = vmatpush1.bf16.msra.mxu0 0
    %7448 = vmatprep.mubr.bf16.mxu0 0
    %7449 = vmatmul.mubr.bf16.gmra.mrb[0].mxu0 %v7408
    %v7450 = vpop.f32.mrb[0].mxu0
    %v7451 = vadd.f32 0.0, %v7450
    %v7452 = vpop.f32.mrb[0].mxu0
    %v7453 = vpop.f32.mrb[0].mxu0
    %v7454 = vadd.f32 0.0, %v7453
    %v7455 = vpop.f32.mrb[0].mxu0
    %7456 = vmatprep.mubr.bf16.mxu0 0
    %7457 = vmatmul.mubr.bf16.gmra.mrb[0].mxu0 %v7411
    %v7458 = vpop.f32.mrb[0].mxu0
    %v7459 = vadd.f32 0.0, %v7458
    %v7460 = vpop.f32.mrb[0].mxu0
    %v7461 = vpop.f32.mrb[0].mxu0
    %v7462 = vpop.f32.mrb[0].mxu0
    %7463 = vdwg.mxu0
    %7464 = vrot.lane.b32.xlu0 %v5620, 96
    %v7465 = vpop.permute.xlu0 %7464
    %7466 = vrot.lane.b32.xlu0 %v5621, 96
    %v7467 = vpop.permute.xlu0 %7466
    %v7470 = vsel %vm947, %v7396, 0
    %v7473 = vsel %vm947, %v7397, 0
    %v7476 = vsel %vm1094, %v7467, 0
    %7478 = vmatprep.subr.bf16.mxu0 0
    %7479 = vmatpush1.bf16.msra.mxu0 %v7465
    %7480 = vmatprep.subr.bf16.mxu0 0
    %7481 = vmatpush1.bf16.msra.mxu0 %v7476
    %7482 = vmatprep.subr.bf16.mxu0 0
    %7483 = vmatpush1.bf16.msra.mxu0 0
    %7484 = vmatprep.subr.bf16.mxu0 0
    %7485 = vmatpush1.bf16.msra.mxu0 0
    %7486 = vmatprep.subr.bf16.mxu0 0
    %7487 = vmatpush1.bf16.msra.mxu0 0
    %7488 = vmatprep.subr.bf16.mxu0 0
    %7489 = vmatpush1.bf16.msra.mxu0 0
    %7490 = vmatprep.subr.bf16.mxu0 0
    %7491 = vmatpush1.bf16.msra.mxu0 0
    %7492 = vmatprep.subr.bf16.mxu0 0
    %7493 = vmatpush1.bf16.msra.mxu0 0
    %7494 = vmatprep.subr.bf16.mxu0 0
    %7495 = vmatpush1.bf16.msra.mxu0 0
    %7496 = vmatprep.subr.bf16.mxu0 0
    %7497 = vmatpush1.bf16.msra.mxu0 0
    %7498 = vmatprep.subr.bf16.mxu0 0
    %7499 = vmatpush1.bf16.msra.mxu0 0
    %7500 = vmatprep.subr.bf16.mxu0 0
    %7501 = vmatpush1.bf16.msra.mxu0 0
    %7502 = vmatprep.subr.bf16.mxu0 0
    %7503 = vmatpush1.bf16.msra.mxu0 0
    %7504 = vmatprep.subr.bf16.mxu0 0
    %7505 = vmatpush1.bf16.msra.mxu0 0
    %7506 = vmatprep.subr.bf16.mxu0 0
    %7507 = vmatpush1.bf16.msra.mxu0 0
    %7508 = vmatprep.subr.bf16.mxu0 0
    %7509 = vmatpush1.bf16.msra.mxu0 0
    %7510 = vmatprep.mubr.bf16.mxu0 0
    %7511 = vmatmul.mubr.bf16.gmra.mrb[0].mxu0 %v7470
    %v7512 = vpop.f32.mrb[0].mxu0
    %v7513 = vadd.f32 0.0, %v7512
    %v7514 = vpop.f32.mrb[0].mxu0
    %v7515 = vpop.f32.mrb[0].mxu0
    %v7516 = vadd.f32 0.0, %v7515
    %v7517 = vpop.f32.mrb[0].mxu0
    %7518 = vmatprep.mubr.bf16.mxu0 0
    %7519 = vmatmul.mubr.bf16.gmra.mrb[0].mxu0 %v7473
    %v7520 = vpop.f32.mrb[0].mxu0
    %v7521 = vadd.f32 0.0, %v7520
    %v7522 = vpop.f32.mrb[0].mxu0
    %v7523 = vpop.f32.mrb[0].mxu0
    %v7524 = vpop.f32.mrb[0].mxu0
    %7525 = vdwg.mxu0
    %7526 = vrot.lane.b32.xlu0 %v5622, 96
    %v7527 = vpop.permute.xlu0 %7526
    %7528 = vrot.lane.b32.xlu0 %v5623, 96
    %v7529 = vpop.permute.xlu0 %7528
    %v7532 = vsel %vm947, %v7398, 0
    %v7535 = vsel %vm947, %v7399, 0
    %v7538 = vsel %vm1094, %v7529, 0
    %7540 = vmatprep.subr.bf16.mxu0 0
    %7541 = vmatpush1.bf16.msra.mxu0 %v7527
    %7542 = vmatprep.subr.bf16.mxu0 0
    %7543 = vmatpush1.bf16.msra.mxu0 %v7538
    %7544 = vmatprep.subr.bf16.mxu0 0
    %7545 = vmatpush1.bf16.msra.mxu0 0
    %7546 = vmatprep.subr.bf16.mxu0 0
    %7547 = vmatpush1.bf16.msra.mxu0 0
    %7548 = vmatprep.subr.bf16.mxu0 0
    %7549 = vmatpush1.bf16.msra.mxu0 0
    %7550 = vmatprep.subr.bf16.mxu0 0
    %7551 = vmatpush1.bf16.msra.mxu0 0
    %7552 = vmatprep.subr.bf16.mxu0 0
    %7553 = vmatpush1.bf16.msra.mxu0 0
    %7554 = vmatprep.subr.bf16.mxu0 0
    %7555 = vmatpush1.bf16.msra.mxu0 0
    %7556 = vmatprep.subr.bf16.mxu0 0
    %7557 = vmatpush1.bf16.msra.mxu0 0
    %7558 = vmatprep.subr.bf16.mxu0 0
    %7559 = vmatpush1.bf16.msra.mxu0 0
    %7560 = vmatprep.subr.bf16.mxu0 0
    %7561 = vmatpush1.bf16.msra.mxu0 0
    %7562 = vmatprep.subr.bf16.mxu0 0
    %7563 = vmatpush1.bf16.msra.mxu0 0
    %7564 = vmatprep.subr.bf16.mxu0 0
    %7565 = vmatpush1.bf16.msra.mxu0 0
    %7566 = vmatprep.subr.bf16.mxu0 0
    %7567 = vmatpush1.bf16.msra.mxu0 0
    %7568 = vmatprep.subr.bf16.mxu0 0
    %7569 = vmatpush1.bf16.msra.mxu0 0
    %7570 = vmatprep.subr.bf16.mxu0 0
    %7571 = vmatpush1.bf16.msra.mxu0 0
    %7572 = vmatprep.mubr.bf16.mxu0 0
    %7573 = vmatmul.mubr.bf16.gmra.mrb[0].mxu0 %v7532
    %v7574 = vpop.f32.mrb[0].mxu0
    %v7575 = vadd.f32 0.0, %v7574
    %v7576 = vpop.f32.mrb[0].mxu0
    %v7577 = vpop.f32.mrb[0].mxu0
    %v7578 = vadd.f32 0.0, %v7577
    %v7579 = vpop.f32.mrb[0].mxu0
    %7580 = vmatprep.mubr.bf16.mxu0 0
    %7581 = vmatmul.mubr.bf16.gmra.mrb[0].mxu0 %v7535
    %v7582 = vpop.f32.mrb[0].mxu0
    %v7583 = vadd.f32 0.0, %v7582
    %v7584 = vpop.f32.mrb[0].mxu0
    %v7585 = vpop.f32.mrb[0].mxu0
    %v7586 = vpop.f32.mrb[0].mxu0
    %7587 = vdwg.mxu0
    %7588 = vrot.lane.b32.xlu0 %v5624, 96
    %v7589 = vpop.permute.xlu0 %7588
    %7590 = vrot.lane.b32.xlu0 %v5625, 96
    %v7591 = vpop.permute.xlu0 %7590
    %v7594 = vsel %vm947, %v7400, 0
    %v7597 = vsel %vm947, %v7401, 0
    %v7600 = vsel %vm1094, %v7591, 0
    %7602 = vmatprep.subr.bf16.mxu0 0
    %7603 = vmatpush1.bf16.msra.mxu0 %v7589
    %7604 = vmatprep.subr.bf16.mxu0 0
    %7605 = vmatpush1.bf16.msra.mxu0 %v7600
    %7606 = vmatprep.subr.bf16.mxu0 0
    %7607 = vmatpush1.bf16.msra.mxu0 0
    %7608 = vmatprep.subr.bf16.mxu0 0
    %7609 = vmatpush1.bf16.msra.mxu0 0
    %7610 = vmatprep.subr.bf16.mxu0 0
    %7611 = vmatpush1.bf16.msra.mxu0 0
    %7612 = vmatprep.subr.bf16.mxu0 0
    %7613 = vmatpush1.bf16.msra.mxu0 0
    %7614 = vmatprep.subr.bf16.mxu0 0
    %7615 = vmatpush1.bf16.msra.mxu0 0
    %7616 = vmatprep.subr.bf16.mxu0 0
    %7617 = vmatpush1.bf16.msra.mxu0 0
    %7618 = vmatprep.subr.bf16.mxu0 0
    %7619 = vmatpush1.bf16.msra.mxu0 0
    %7620 = vmatprep.subr.bf16.mxu0 0
    %7621 = vmatpush1.bf16.msra.mxu0 0
    %7622 = vmatprep.subr.bf16.mxu0 0
    %7623 = vmatpush1.bf16.msra.mxu0 0
    %7624 = vmatprep.subr.bf16.mxu0 0
    %7625 = vmatpush1.bf16.msra.mxu0 0
    %7626 = vmatprep.subr.bf16.mxu0 0
    %7627 = vmatpush1.bf16.msra.mxu0 0
    %7628 = vmatprep.subr.bf16.mxu0 0
    %7629 = vmatpush1.bf16.msra.mxu0 0
    %7630 = vmatprep.subr.bf16.mxu0 0
    %7631 = vmatpush1.bf16.msra.mxu0 0
    %7632 = vmatprep.subr.bf16.mxu0 0
    %7633 = vmatpush1.bf16.msra.mxu0 0
    %7634 = vmatprep.mubr.bf16.mxu0 0
    %7635 = vmatmul.mubr.bf16.gmra.mrb[0].mxu0 %v7594
    %v7636 = vpop.f32.mrb[0].mxu0
    %v7637 = vadd.f32 0.0, %v7636
    %v7638 = vpop.f32.mrb[0].mxu0
    %v7639 = vpop.f32.mrb[0].mxu0
    %v7640 = vadd.f32 0.0, %v7639
    %v7641 = vpop.f32.mrb[0].mxu0
    %7642 = vmatprep.mubr.bf16.mxu0 0
    %7643 = vmatmul.mubr.bf16.gmra.mrb[0].mxu0 %v7597
    %v7644 = vpop.f32.mrb[0].mxu0
    %v7645 = vadd.f32 0.0, %v7644
    %v7646 = vpop.f32.mrb[0].mxu0
    %v7647 = vpop.f32.mrb[0].mxu0
    %v7648 = vpop.f32.mrb[0].mxu0
    %7649 = vdwg.mxu0
    %7650 = vrot.lane.b32.xlu0 %v5602, 80
    %v7651 = vpop.permute.xlu0 %7650
    %7652 = vrot.lane.b32.xlu0 %v5603, 80
    %v7653 = vpop.permute.xlu0 %7652
    %7654 = vrot.lane.b32.xlu0 %v5610, 80
    %v7655 = vpop.permute.xlu0 %7654
    %7656 = vrot.lane.b32.xlu0 %v5611, 80
    %v7657 = vpop.permute.xlu0 %7656
    %v7659 = vsel %vm682, %v7651, 0
    %v7662 = vsel %vm682, %v7653, 0
    %v7665 = vsel %vm682, %v7655, 0
    %v7668 = vsel %vm682, %v7657, 0
    %7670 = vmatprep.subr.bf16.mxu0 0
    %7671 = vmatpush1.bf16.xpose.msra.mxu0 %v7665
    %7672 = vmatprep.subr.bf16.mxu0 0
    %7673 = vmatpush1.bf16.xpose.msra.mxu0 %v7668
    %7674 = vmatprep.subr.bf16.mxu0 0
    %7675 = vmatpush1.bf16.xpose.msra.mxu0 0
    %7676 = vmatprep.subr.bf16.mxu0 0
    %7677 = vmatpush1.bf16.xpose.msra.mxu0 0
    %7678 = vmatprep.subr.bf16.mxu0 0
    %7679 = vmatpush1.bf16.xpose.msra.mxu0 0
    %7680 = vmatprep.subr.bf16.mxu0 0
    %7681 = vmatpush1.bf16.xpose.msra.mxu0 0
    %7682 = vmatprep.subr.bf16.mxu0 0
    %7683 = vmatpush1.bf16.xpose.msra.mxu0 0
    %7684 = vmatprep.subr.bf16.mxu0 0
    %7685 = vmatpush1.bf16.xpose.msra.mxu0 0
    %7686 = vmatprep.subr.bf16.mxu0 0
    %7687 = vmatpush1.bf16.xpose.msra.mxu0 0
    %7688 = vmatprep.subr.bf16.mxu0 0
    %7689 = vmatpush1.bf16.xpose.msra.mxu0 0
    %7690 = vmatprep.subr.bf16.mxu0 0
    %7691 = vmatpush1.bf16.xpose.msra.mxu0 0
    %7692 = vmatprep.subr.bf16.mxu0 0
    %7693 = vmatpush1.bf16.xpose.msra.mxu0 0
    %7694 = vmatprep.subr.bf16.mxu0 0
    %7695 = vmatpush1.bf16.xpose.msra.mxu0 0
    %7696 = vmatprep.subr.bf16.mxu0 0
    %7697 = vmatpush1.bf16.xpose.msra.mxu0 0
    %7698 = vmatprep.subr.bf16.mxu0 0
    %7699 = vmatpush1.bf16.xpose.msra.mxu0 0
    %7700 = vmatprep.subr.bf16.mxu0 0
    %7701 = vmatpush1.bf16.xpose.msra.mxu0 0
    %7702 = vmatprep.mubr.bf16.mxu0 0
    %7703 = vmatmul.mubr.bf16.gmra.mrb[0].mxu0 %v7659
    %v7704 = vpop.f32.mrb[0].mxu0
    %v7705 = vadd.f32 0.0, %v7704
    %v7706 = vpop.f32.mrb[0].mxu0
    %v7707 = vpop.f32.mrb[0].mxu0
    %v7708 = vadd.f32 0.0, %v7707
    %v7709 = vpop.f32.mrb[0].mxu0
    %7710 = vmatprep.mubr.bf16.mxu0 0
    %7711 = vmatmul.mubr.bf16.gmra.mrb[0].mxu0 %v7662
    %v7712 = vpop.f32.mrb[0].mxu0
    %v7713 = vadd.f32 0.0, %v7712
    %v7714 = vpop.f32.mrb[0].mxu0
    %v7715 = vpop.f32.mrb[0].mxu0
    %v7716 = vpop.f32.mrb[0].mxu0
    %7717 = vdwg.mxu0
    %7718 = vrot.lane.b32.xlu0 %v5604, 80
    %v7719 = vpop.permute.xlu0 %7718
    %7720 = vrot.lane.b32.xlu0 %v5605, 80
    %v7721 = vpop.permute.xlu0 %7720
    %7722 = vrot.lane.b32.xlu0 %v5612, 80
    %v7723 = vpop.permute.xlu0 %7722
    %7724 = vrot.lane.b32.xlu0 %v5613, 80
    %v7725 = vpop.permute.xlu0 %7724
    %v7727 = vsel %vm682, %v7719, 0
    %v7730 = vsel %vm682, %v7721, 0
    %v7733 = vsel %vm682, %v7723, 0
    %v7736 = vsel %vm682, %v7725, 0
    %7738 = vmatprep.subr.bf16.mxu0 0
    %7739 = vmatpush1.bf16.xpose.msra.mxu0 %v7733
    %7740 = vmatprep.subr.bf16.mxu0 0
    %7741 = vmatpush1.bf16.xpose.msra.mxu0 %v7736
    %7742 = vmatprep.subr.bf16.mxu0 0
    %7743 = vmatpush1.bf16.xpose.msra.mxu0 0
    %7744 = vmatprep.subr.bf16.mxu0 0
    %7745 = vmatpush1.bf16.xpose.msra.mxu0 0
    %7746 = vmatprep.subr.bf16.mxu0 0
    %7747 = vmatpush1.bf16.xpose.msra.mxu0 0
    %7748 = vmatprep.subr.bf16.mxu0 0
    %7749 = vmatpush1.bf16.xpose.msra.mxu0 0
    %7750 = vmatprep.subr.bf16.mxu0 0
    %7751 = vmatpush1.bf16.xpose.msra.mxu0 0
    %7752 = vmatprep.subr.bf16.mxu0 0
    %7753 = vmatpush1.bf16.xpose.msra.mxu0 0
    %7754 = vmatprep.subr.bf16.mxu0 0
    %7755 = vmatpush1.bf16.xpose.msra.mxu0 0
    %7756 = vmatprep.subr.bf16.mxu0 0
    %7757 = vmatpush1.bf16.xpose.msra.mxu0 0
    %7758 = vmatprep.subr.bf16.mxu0 0
    %7759 = vmatpush1.bf16.xpose.msra.mxu0 0
    %7760 = vmatprep.subr.bf16.mxu0 0
    %7761 = vmatpush1.bf16.xpose.msra.mxu0 0
    %7762 = vmatprep.subr.bf16.mxu0 0
    %7763 = vmatpush1.bf16.xpose.msra.mxu0 0
    %7764 = vmatprep.subr.bf16.mxu0 0
    %7765 = vmatpush1.bf16.xpose.msra.mxu0 0
    %7766 = vmatprep.subr.bf16.mxu0 0
    %7767 = vmatpush1.bf16.xpose.msra.mxu0 0
    %7768 = vmatprep.subr.bf16.mxu0 0
    %7769 = vmatpush1.bf16.xpose.msra.mxu0 0
    %7770 = vmatprep.mubr.bf16.mxu0 0
    %7771 = vmatmul.mubr.bf16.gmra.mrb[0].mxu0 %v7727
    %v7772 = vpop.f32.mrb[0].mxu0
    %v7773 = vadd.f32 0.0, %v7772
    %v7774 = vpop.f32.mrb[0].mxu0
    %v7775 = vpop.f32.mrb[0].mxu0
    %v7776 = vadd.f32 0.0, %v7775
    %v7777 = vpop.f32.mrb[0].mxu0
    %7778 = vmatprep.mubr.bf16.mxu0 0
    %7779 = vmatmul.mubr.bf16.gmra.mrb[0].mxu0 %v7730
    %v7780 = vpop.f32.mrb[0].mxu0
    %v7781 = vadd.f32 0.0, %v7780
    %v7782 = vpop.f32.mrb[0].mxu0
    %v7783 = vpop.f32.mrb[0].mxu0
    %v7784 = vpop.f32.mrb[0].mxu0
    %7785 = vdwg.mxu0
    %7786 = vrot.lane.b32.xlu0 %v5606, 80
    %v7787 = vpop.permute.xlu0 %7786
    %7788 = vrot.lane.b32.xlu0 %v5607, 80
    %v7789 = vpop.permute.xlu0 %7788
    %7790 = vrot.lane.b32.xlu0 %v5614, 80
    %v7791 = vpop.permute.xlu0 %7790
    %7792 = vrot.lane.b32.xlu0 %v5615, 80
    %v7793 = vpop.permute.xlu0 %7792
    %v7795 = vsel %vm682, %v7787, 0
    %v7798 = vsel %vm682, %v7789, 0
    %v7801 = vsel %vm682, %v7791, 0
    %v7804 = vsel %vm682, %v7793, 0
    %7806 = vmatprep.subr.bf16.mxu0 0
    %7807 = vmatpush1.bf16.xpose.msra.mxu0 %v7801
    %7808 = vmatprep.subr.bf16.mxu0 0
    %7809 = vmatpush1.bf16.xpose.msra.mxu0 %v7804
    %7810 = vmatprep.subr.bf16.mxu0 0
    %7811 = vmatpush1.bf16.xpose.msra.mxu0 0
    %7812 = vmatprep.subr.bf16.mxu0 0
    %7813 = vmatpush1.bf16.xpose.msra.mxu0 0
    %7814 = vmatprep.subr.bf16.mxu0 0
    %7815 = vmatpush1.bf16.xpose.msra.mxu0 0
    %7816 = vmatprep.subr.bf16.mxu0 0
    %7817 = vmatpush1.bf16.xpose.msra.mxu0 0
    %7818 = vmatprep.subr.bf16.mxu0 0
    %7819 = vmatpush1.bf16.xpose.msra.mxu0 0
    %7820 = vmatprep.subr.bf16.mxu0 0
    %7821 = vmatpush1.bf16.xpose.msra.mxu0 0
    %7822 = vmatprep.subr.bf16.mxu0 0
    %7823 = vmatpush1.bf16.xpose.msra.mxu0 0
    %7824 = vmatprep.subr.bf16.mxu0 0
    %7825 = vmatpush1.bf16.xpose.msra.mxu0 0
    %7826 = vmatprep.subr.bf16.mxu0 0
    %7827 = vmatpush1.bf16.xpose.msra.mxu0 0
    %7828 = vmatprep.subr.bf16.mxu0 0
    %7829 = vmatpush1.bf16.xpose.msra.mxu0 0
    %7830 = vmatprep.subr.bf16.mxu0 0
    %7831 = vmatpush1.bf16.xpose.msra.mxu0 0
    %7832 = vmatprep.subr.bf16.mxu0 0
    %7833 = vmatpush1.bf16.xpose.msra.mxu0 0
    %7834 = vmatprep.subr.bf16.mxu0 0
    %7835 = vmatpush1.bf16.xpose.msra.mxu0 0
    %7836 = vmatprep.subr.bf16.mxu0 0
    %7837 = vmatpush1.bf16.xpose.msra.mxu0 0
    %7838 = vmatprep.mubr.bf16.mxu0 0
    %7839 = vmatmul.mubr.bf16.gmra.mrb[0].mxu0 %v7795
    %v7840 = vpop.f32.mrb[0].mxu0
    %v7841 = vadd.f32 0.0, %v7840
    %v7842 = vpop.f32.mrb[0].mxu0
    %v7843 = vpop.f32.mrb[0].mxu0
    %v7844 = vadd.f32 0.0, %v7843
    %v7845 = vpop.f32.mrb[0].mxu0
    %7846 = vmatprep.mubr.bf16.mxu0 0
    %7847 = vmatmul.mubr.bf16.gmra.mrb[0].mxu0 %v7798
    %v7848 = vpop.f32.mrb[0].mxu0
    %v7849 = vadd.f32 0.0, %v7848
    %v7850 = vpop.f32.mrb[0].mxu0
    %v7851 = vpop.f32.mrb[0].mxu0
    %v7852 = vpop.f32.mrb[0].mxu0
    %7853 = vdwg.mxu0
    %7854 = vrot.lane.b32.xlu0 %v5608, 80
    %v7855 = vpop.permute.xlu0 %7854
    %7856 = vrot.lane.b32.xlu0 %v5609, 80
    %v7857 = vpop.permute.xlu0 %7856
    %7858 = vrot.lane.b32.xlu0 %v5616, 80
    %v7859 = vpop.permute.xlu0 %7858
    %7860 = vrot.lane.b32.xlu0 %v5617, 80
    %v7861 = vpop.permute.xlu0 %7860
    %v7863 = vsel %vm682, %v7855, 0
    %v7866 = vsel %vm682, %v7857, 0
    %v7869 = vsel %vm682, %v7859, 0
    %v7872 = vsel %vm682, %v7861, 0
    %7874 = vmatprep.subr.bf16.mxu0 0
    %7875 = vmatpush1.bf16.xpose.msra.mxu0 %v7869
    %7876 = vmatprep.subr.bf16.mxu0 0
    %7877 = vmatpush1.bf16.xpose.msra.mxu0 %v7872
    %7878 = vmatprep.subr.bf16.mxu0 0
    %7879 = vmatpush1.bf16.xpose.msra.mxu0 0
    %7880 = vmatprep.subr.bf16.mxu0 0
    %7881 = vmatpush1.bf16.xpose.msra.mxu0 0
    %7882 = vmatprep.subr.bf16.mxu0 0
    %7883 = vmatpush1.bf16.xpose.msra.mxu0 0
    %7884 = vmatprep.subr.bf16.mxu0 0
    %7885 = vmatpush1.bf16.xpose.msra.mxu0 0
    %7886 = vmatprep.subr.bf16.mxu0 0
    %7887 = vmatpush1.bf16.xpose.msra.mxu0 0
    %7888 = vmatprep.subr.bf16.mxu0 0
    %7889 = vmatpush1.bf16.xpose.msra.mxu0 0
    %7890 = vmatprep.subr.bf16.mxu0 0
    %7891 = vmatpush1.bf16.xpose.msra.mxu0 0
    %7892 = vmatprep.subr.bf16.mxu0 0
    %7893 = vmatpush1.bf16.xpose.msra.mxu0 0
    %7894 = vmatprep.subr.bf16.mxu0 0
    %7895 = vmatpush1.bf16.xpose.msra.mxu0 0
    %7896 = vmatprep.subr.bf16.mxu0 0
    %7897 = vmatpush1.bf16.xpose.msra.mxu0 0
    %7898 = vmatprep.subr.bf16.mxu0 0
    %7899 = vmatpush1.bf16.xpose.msra.mxu0 0
    %7900 = vmatprep.subr.bf16.mxu0 0
    %7901 = vmatpush1.bf16.xpose.msra.mxu0 0
    %7902 = vmatprep.subr.bf16.mxu0 0
    %7903 = vmatpush1.bf16.xpose.msra.mxu0 0
    %7904 = vmatprep.subr.bf16.mxu0 0
    %7905 = vmatpush1.bf16.xpose.msra.mxu0 0
    %7906 = vmatprep.mubr.bf16.mxu0 0
    %7907 = vmatmul.mubr.bf16.gmra.mrb[0].mxu0 %v7863
    %v7908 = vpop.f32.mrb[0].mxu0
    %v7909 = vadd.f32 0.0, %v7908
    %v7910 = vpop.f32.mrb[0].mxu0
    %v7911 = vpop.f32.mrb[0].mxu0
    %v7912 = vadd.f32 0.0, %v7911
    %v7913 = vpop.f32.mrb[0].mxu0
    %7914 = vmatprep.mubr.bf16.mxu0 0
    %7915 = vmatmul.mubr.bf16.gmra.mrb[0].mxu0 %v7866
    %v7916 = vpop.f32.mrb[0].mxu0
    %v7917 = vadd.f32 0.0, %v7916
    %v7918 = vpop.f32.mrb[0].mxu0
    %v7919 = vpop.f32.mrb[0].mxu0
    %v7920 = vpop.f32.mrb[0].mxu0
    %7921 = vdwg.mxu0
    %v7922 = vmul.f32 %v7705, 0.25
    %v7923 = vmul.f32 %v7708, 0.25
    %v7924 = vmul.f32 %v7713, 0.25
    %v7925 = vmul.f32 %v7773, 0.25
    %v7926 = vmul.f32 %v7776, 0.25
    %v7927 = vmul.f32 %v7781, 0.25
    %v7928 = vmul.f32 %v7841, 0.25
    %v7929 = vmul.f32 %v7844, 0.25
    %v7930 = vmul.f32 %v7849, 0.25
    %v7931 = vmul.f32 %v7909, 0.25
    %v7932 = vmul.f32 %v7912, 0.25
    %v7933 = vmul.f32 %v7917, 0.25
    %v7934 = vadd.f32 %v7922, %v73
    %v7935 = vadd.f32 %v7923, %v73
    %v7936 = vadd.f32 %v7924, %v73
    %v7937 = vadd.f32 %v7925, %v73
    %v7938 = vadd.f32 %v7926, %v73
    %v7939 = vadd.f32 %v7927, %v73
    %v7940 = vadd.f32 %v7928, %v73
    %v7941 = vadd.f32 %v7929, %v73
    %v7942 = vadd.f32 %v7930, %v73
    %v7943 = vadd.f32 %v7931, %v73
    %v7944 = vadd.f32 %v7932, %v73
    %v7945 = vadd.f32 %v7933, %v73
    %v7946 = vsel %vm947, %v7934, -inf
    %7947 = vmax.xlane.f32.xlu0 %v7946
    %v7948 = vpop.xlane.xlu0 %7947
    %v7949 = vsel %vm947, %v7935, -inf
    %7950 = vmax.xlane.f32.xlu0 %v7949
    %v7951 = vpop.xlane.xlu0 %7950
    %v7952 = vsel %vm947, %v7936, -inf
    %7953 = vmax.xlane.f32.xlu0 %v7952
    %v7954 = vpop.xlane.xlu0 %7953
    %v7955 = vsel %vm947, %v7937, -inf
    %7956 = vmax.xlane.f32.xlu0 %v7955
    %v7957 = vpop.xlane.xlu0 %7956
    %v7958 = vsel %vm947, %v7938, -inf
    %7959 = vmax.xlane.f32.xlu0 %v7958
    %v7960 = vpop.xlane.xlu0 %7959
    %v7961 = vsel %vm947, %v7939, -inf
    %7962 = vmax.xlane.f32.xlu0 %v7961
    %v7963 = vpop.xlane.xlu0 %7962
    %v7964 = vsel %vm947, %v7940, -inf
    %7965 = vmax.xlane.f32.xlu0 %v7964
    %v7966 = vpop.xlane.xlu0 %7965
    %v7967 = vsel %vm947, %v7941, -inf
    %7968 = vmax.xlane.f32.xlu0 %v7967
    %v7969 = vpop.xlane.xlu0 %7968
    %v7970 = vsel %vm947, %v7942, -inf
    %7971 = vmax.xlane.f32.xlu0 %v7970
    %v7972 = vpop.xlane.xlu0 %7971
    %v7973 = vsel %vm947, %v7943, -inf
    %7974 = vmax.xlane.f32.xlu0 %v7973
    %v7975 = vpop.xlane.xlu0 %7974
    %v7976 = vsel %vm947, %v7944, -inf
    %7977 = vmax.xlane.f32.xlu0 %v7976
    %v7978 = vpop.xlane.xlu0 %7977
    %v7979 = vsel %vm947, %v7945, -inf
    %7980 = vmax.xlane.f32.xlu0 %v7979
    %v7981 = vpop.xlane.xlu0 %7980
    %v7982 = vsub.f32 %v7934, %v7948
    %v7983 = vsub.f32 %v7935, %v7951
    %v7984 = vsub.f32 %v7936, %v7954
    %v7985 = vsub.f32 %v7937, %v7957
    %v7986 = vsub.f32 %v7938, %v7960
    %v7987 = vsub.f32 %v7939, %v7963
    %v7988 = vsub.f32 %v7940, %v7966
    %v7989 = vsub.f32 %v7941, %v7969
    %v7990 = vsub.f32 %v7942, %v7972
    %v7991 = vsub.f32 %v7943, %v7975
    %v7992 = vsub.f32 %v7944, %v7978
    %v7993 = vsub.f32 %v7945, %v7981
    %v7994 = vmul.f32 %v7982, 1.442695
    %v7995 = vpow.pop %v7994
    %v7996 = vmul.f32 %v7983, 1.442695
    %v7997 = vpow.pop %v7996
    %v7998 = vmul.f32 %v7984, 1.442695
    %v7999 = vpow.pop %v7998
    %v8000 = vmul.f32 %v7985, 1.442695
    %v8001 = vpow.pop %v8000
    %v8002 = vmul.f32 %v7986, 1.442695
    %v8003 = vpow.pop %v8002
    %v8004 = vmul.f32 %v7987, 1.442695
    %v8005 = vpow.pop %v8004
    %v8006 = vmul.f32 %v7988, 1.442695
    %v8007 = vpow.pop %v8006
    %v8008 = vmul.f32 %v7989, 1.442695
    %v8009 = vpow.pop %v8008
    %v8010 = vmul.f32 %v7990, 1.442695
    %v8011 = vpow.pop %v8010
    %v8012 = vmul.f32 %v7991, 1.442695
    %v8013 = vpow.pop %v8012
    %v8014 = vmul.f32 %v7992, 1.442695
    %v8015 = vpow.pop %v8014
    %v8016 = vmul.f32 %v7993, 1.442695
    %v8017 = vpow.pop %v8016
    %v8018 = vsel %vm947, %v7995, 0.0
    %8019 = vadd.xlane.f32.xlu0 %v8018
    %v8020 = vpop.xlane.xlu0 %8019
    %v8021 = vsel %vm947, %v7997, 0.0
    %8022 = vadd.xlane.f32.xlu0 %v8021
    %v8023 = vpop.xlane.xlu0 %8022
    %v8024 = vsel %vm947, %v7999, 0.0
    %8025 = vadd.xlane.f32.xlu0 %v8024
    %v8026 = vpop.xlane.xlu0 %8025
    %v8027 = vsel %vm947, %v8001, 0.0
    %8028 = vadd.xlane.f32.xlu0 %v8027
    %v8029 = vpop.xlane.xlu0 %8028
    %v8030 = vsel %vm947, %v8003, 0.0
    %8031 = vadd.xlane.f32.xlu0 %v8030
    %v8032 = vpop.xlane.xlu0 %8031
    %v8033 = vsel %vm947, %v8005, 0.0
    %8034 = vadd.xlane.f32.xlu0 %v8033
    %v8035 = vpop.xlane.xlu0 %8034
    %v8036 = vsel %vm947, %v8007, 0.0
    %8037 = vadd.xlane.f32.xlu0 %v8036
    %v8038 = vpop.xlane.xlu0 %8037
    %v8039 = vsel %vm947, %v8009, 0.0
    %8040 = vadd.xlane.f32.xlu0 %v8039
    %v8041 = vpop.xlane.xlu0 %8040
    %v8042 = vsel %vm947, %v8011, 0.0
    %8043 = vadd.xlane.f32.xlu0 %v8042
    %v8044 = vpop.xlane.xlu0 %8043
    %v8045 = vsel %vm947, %v8013, 0.0
    %8046 = vadd.xlane.f32.xlu0 %v8045
    %v8047 = vpop.xlane.xlu0 %8046
    %v8048 = vsel %vm947, %v8015, 0.0
    %8049 = vadd.xlane.f32.xlu0 %v8048
    %v8050 = vpop.xlane.xlu0 %8049
    %v8051 = vsel %vm947, %v8017, 0.0
    %8052 = vadd.xlane.f32.xlu0 %v8051
    %v8053 = vpop.xlane.xlu0 %8052
    %v8054 = vrcp.pop %v8020
    %v8055 = vrcp.pop %v8023
    %v8056 = vrcp.pop %v8026
    %v8057 = vrcp.pop %v8029
    %v8058 = vrcp.pop %v8032
    %v8059 = vrcp.pop %v8035
    %v8060 = vrcp.pop %v8038
    %v8061 = vrcp.pop %v8041
    %v8062 = vrcp.pop %v8044
    %v8063 = vrcp.pop %v8047
    %v8064 = vrcp.pop %v8050
    %v8065 = vrcp.pop %v8053
    %v8066 = vmul.f32 %v7995, %v8054
    %v8067 = vmul.f32 %v7997, %v8055
    %v8068 = vmul.f32 %v7999, %v8056
    %v8069 = vmul.f32 %v8001, %v8057
    %v8070 = vmul.f32 %v8003, %v8058
    %v8071 = vmul.f32 %v8005, %v8059
    %v8072 = vmul.f32 %v8007, %v8060
    %v8073 = vmul.f32 %v8009, %v8061
    %v8074 = vmul.f32 %v8011, %v8062
    %v8075 = vmul.f32 %v8013, %v8063
    %v8076 = vmul.f32 %v8015, %v8064
    %v8077 = vmul.f32 %v8017, %v8065
    %v8078 = vpack.c.bf16 %v8067, %v8066
    %v8079 = vpack.c.bf16 %v8068, %v8068
    %v8080 = vpack.c.bf16 %v8070, %v8069
    %v8081 = vpack.c.bf16 %v8071, %v8071
    %v8082 = vpack.c.bf16 %v8073, %v8072
    %v8083 = vpack.c.bf16 %v8074, %v8074
    %v8084 = vpack.c.bf16 %v8076, %v8075
    %v8085 = vpack.c.bf16 %v8077, %v8077
    %8086 = vrot.lane.b32.xlu0 %v5618, 80
    %v8087 = vpop.permute.xlu0 %8086
    %8088 = vrot.lane.b32.xlu0 %v5619, 80
    %v8089 = vpop.permute.xlu0 %8088
    %v8092 = vsel %vm947, %v8078, 0
    %v8095 = vsel %vm947, %v8079, 0
    %v8098 = vsel %vm1094, %v8089, 0
    %8100 = vmatprep.subr.bf16.mxu0 0
    %8101 = vmatpush1.bf16.msra.mxu0 %v8087
    %8102 = vmatprep.subr.bf16.mxu0 0
    %8103 = vmatpush1.bf16.msra.mxu0 %v8098
    %8104 = vmatprep.subr.bf16.mxu0 0
    %8105 = vmatpush1.bf16.msra.mxu0 0
    %8106 = vmatprep.subr.bf16.mxu0 0
    %8107 = vmatpush1.bf16.msra.mxu0 0
    %8108 = vmatprep.subr.bf16.mxu0 0
    %8109 = vmatpush1.bf16.msra.mxu0 0
    %8110 = vmatprep.subr.bf16.mxu0 0
    %8111 = vmatpush1.bf16.msra.mxu0 0
    %8112 = vmatprep.subr.bf16.mxu0 0
    %8113 = vmatpush1.bf16.msra.mxu0 0
    %8114 = vmatprep.subr.bf16.mxu0 0
    %8115 = vmatpush1.bf16.msra.mxu0 0
    %8116 = vmatprep.subr.bf16.mxu0 0
    %8117 = vmatpush1.bf16.msra.mxu0 0
    %8118 = vmatprep.subr.bf16.mxu0 0
    %8119 = vmatpush1.bf16.msra.mxu0 0
    %8120 = vmatprep.subr.bf16.mxu0 0
    %8121 = vmatpush1.bf16.msra.mxu0 0
    %8122 = vmatprep.subr.bf16.mxu0 0
    %8123 = vmatpush1.bf16.msra.mxu0 0
    %8124 = vmatprep.subr.bf16.mxu0 0
    %8125 = vmatpush1.bf16.msra.mxu0 0
    %8126 = vmatprep.subr.bf16.mxu0 0
    %8127 = vmatpush1.bf16.msra.mxu0 0
    %8128 = vmatprep.subr.bf16.mxu0 0
    %8129 = vmatpush1.bf16.msra.mxu0 0
    %8130 = vmatprep.subr.bf16.mxu0 0
    %8131 = vmatpush1.bf16.msra.mxu0 0
    %8132 = vmatprep.mubr.bf16.mxu0 0
    %8133 = vmatmul.mubr.bf16.gmra.mrb[0].mxu0 %v8092
    %v8134 = vpop.f32.mrb[0].mxu0
    %v8135 = vadd.f32 0.0, %v8134
    %v8136 = vpop.f32.mrb[0].mxu0
    %v8137 = vpop.f32.mrb[0].mxu0
    %v8138 = vadd.f32 0.0, %v8137
    %v8139 = vpop.f32.mrb[0].mxu0
    %8140 = vmatprep.mubr.bf16.mxu0 0
    %8141 = vmatmul.mubr.bf16.gmra.mrb[0].mxu0 %v8095
    %v8142 = vpop.f32.mrb[0].mxu0
    %v8143 = vadd.f32 0.0, %v8142
    %v8144 = vpop.f32.mrb[0].mxu0
    %v8145 = vpop.f32.mrb[0].mxu0
    %v8146 = vpop.f32.mrb[0].mxu0
    %8147 = vdwg.mxu0
    %8148 = vrot.lane.b32.xlu0 %v5620, 80
    %v8149 = vpop.permute.xlu0 %8148
    %8150 = vrot.lane.b32.xlu0 %v5621, 80
    %v8151 = vpop.permute.xlu0 %8150
    %v8154 = vsel %vm947, %v8080, 0
    %v8157 = vsel %vm947, %v8081, 0
    %v8160 = vsel %vm1094, %v8151, 0
    %8162 = vmatprep.subr.bf16.mxu0 0
    %8163 = vmatpush1.bf16.msra.mxu0 %v8149
    %8164 = vmatprep.subr.bf16.mxu0 0
    %8165 = vmatpush1.bf16.msra.mxu0 %v8160
    %8166 = vmatprep.subr.bf16.mxu0 0
    %8167 = vmatpush1.bf16.msra.mxu0 0
    %8168 = vmatprep.subr.bf16.mxu0 0
    %8169 = vmatpush1.bf16.msra.mxu0 0
    %8170 = vmatprep.subr.bf16.mxu0 0
    %8171 = vmatpush1.bf16.msra.mxu0 0
    %8172 = vmatprep.subr.bf16.mxu0 0
    %8173 = vmatpush1.bf16.msra.mxu0 0
    %8174 = vmatprep.subr.bf16.mxu0 0
    %8175 = vmatpush1.bf16.msra.mxu0 0
    %8176 = vmatprep.subr.bf16.mxu0 0
    %8177 = vmatpush1.bf16.msra.mxu0 0
    %8178 = vmatprep.subr.bf16.mxu0 0
    %8179 = vmatpush1.bf16.msra.mxu0 0
    %8180 = vmatprep.subr.bf16.mxu0 0
    %8181 = vmatpush1.bf16.msra.mxu0 0
    %8182 = vmatprep.subr.bf16.mxu0 0
    %8183 = vmatpush1.bf16.msra.mxu0 0
    %8184 = vmatprep.subr.bf16.mxu0 0
    %8185 = vmatpush1.bf16.msra.mxu0 0
    %8186 = vmatprep.subr.bf16.mxu0 0
    %8187 = vmatpush1.bf16.msra.mxu0 0
    %8188 = vmatprep.subr.bf16.mxu0 0
    %8189 = vmatpush1.bf16.msra.mxu0 0
    %8190 = vmatprep.subr.bf16.mxu0 0
    %8191 = vmatpush1.bf16.msra.mxu0 0
    %8192 = vmatprep.subr.bf16.mxu0 0
    %8193 = vmatpush1.bf16.msra.mxu0 0
    %8194 = vmatprep.mubr.bf16.mxu0 0
    %8195 = vmatmul.mubr.bf16.gmra.mrb[0].mxu0 %v8154
    %v8196 = vpop.f32.mrb[0].mxu0
    %v8197 = vadd.f32 0.0, %v8196
    %v8198 = vpop.f32.mrb[0].mxu0
    %v8199 = vpop.f32.mrb[0].mxu0
    %v8200 = vadd.f32 0.0, %v8199
    %v8201 = vpop.f32.mrb[0].mxu0
    %8202 = vmatprep.mubr.bf16.mxu0 0
    %8203 = vmatmul.mubr.bf16.gmra.mrb[0].mxu0 %v8157
    %v8204 = vpop.f32.mrb[0].mxu0
    %v8205 = vadd.f32 0.0, %v8204
    %v8206 = vpop.f32.mrb[0].mxu0
    %v8207 = vpop.f32.mrb[0].mxu0
    %v8208 = vpop.f32.mrb[0].mxu0
    %8209 = vdwg.mxu0
    %8210 = vrot.lane.b32.xlu0 %v5622, 80
    %v8211 = vpop.permute.xlu0 %8210
    %8212 = vrot.lane.b32.xlu0 %v5623, 80
    %v8213 = vpop.permute.xlu0 %8212
    %v8216 = vsel %vm947, %v8082, 0
    %v8219 = vsel %vm947, %v8083, 0
    %v8222 = vsel %vm1094, %v8213, 0
    %8224 = vmatprep.subr.bf16.mxu0 0
    %8225 = vmatpush1.bf16.msra.mxu0 %v8211
    %8226 = vmatprep.subr.bf16.mxu0 0
    %8227 = vmatpush1.bf16.msra.mxu0 %v8222
    %8228 = vmatprep.subr.bf16.mxu0 0
    %8229 = vmatpush1.bf16.msra.mxu0 0
    %8230 = vmatprep.subr.bf16.mxu0 0
    %8231 = vmatpush1.bf16.msra.mxu0 0
    %8232 = vmatprep.subr.bf16.mxu0 0
    %8233 = vmatpush1.bf16.msra.mxu0 0
    %8234 = vmatprep.subr.bf16.mxu0 0
    %8235 = vmatpush1.bf16.msra.mxu0 0
    %8236 = vmatprep.subr.bf16.mxu0 0
    %8237 = vmatpush1.bf16.msra.mxu0 0
    %8238 = vmatprep.subr.bf16.mxu0 0
    %8239 = vmatpush1.bf16.msra.mxu0 0
    %8240 = vmatprep.subr.bf16.mxu0 0
    %8241 = vmatpush1.bf16.msra.mxu0 0
    %8242 = vmatprep.subr.bf16.mxu0 0
    %8243 = vmatpush1.bf16.msra.mxu0 0
    %8244 = vmatprep.subr.bf16.mxu0 0
    %8245 = vmatpush1.bf16.msra.mxu0 0
    %8246 = vmatprep.subr.bf16.mxu0 0
    %8247 = vmatpush1.bf16.msra.mxu0 0
    %8248 = vmatprep.subr.bf16.mxu0 0
    %8249 = vmatpush1.bf16.msra.mxu0 0
    %8250 = vmatprep.subr.bf16.mxu0 0
    %8251 = vmatpush1.bf16.msra.mxu0 0
    %8252 = vmatprep.subr.bf16.mxu0 0
    %8253 = vmatpush1.bf16.msra.mxu0 0
    %8254 = vmatprep.subr.bf16.mxu0 0
    %8255 = vmatpush1.bf16.msra.mxu0 0
    %8256 = vmatprep.mubr.bf16.mxu0 0
    %8257 = vmatmul.mubr.bf16.gmra.mrb[0].mxu0 %v8216
    %v8258 = vpop.f32.mrb[0].mxu0
    %v8259 = vadd.f32 0.0, %v8258
    %v8260 = vpop.f32.mrb[0].mxu0
    %v8261 = vpop.f32.mrb[0].mxu0
    %v8262 = vadd.f32 0.0, %v8261
    %v8263 = vpop.f32.mrb[0].mxu0
    %8264 = vmatprep.mubr.bf16.mxu0 0
    %8265 = vmatmul.mubr.bf16.gmra.mrb[0].mxu0 %v8219
    %v8266 = vpop.f32.mrb[0].mxu0
    %v8267 = vadd.f32 0.0, %v8266
    %v8268 = vpop.f32.mrb[0].mxu0
    %v8269 = vpop.f32.mrb[0].mxu0
    %v8270 = vpop.f32.mrb[0].mxu0
    %8271 = vdwg.mxu0
    %8272 = vrot.lane.b32.xlu0 %v5624, 80
    %v8273 = vpop.permute.xlu0 %8272
    %8274 = vrot.lane.b32.xlu0 %v5625, 80
    %v8275 = vpop.permute.xlu0 %8274
    %v8278 = vsel %vm947, %v8084, 0
    %v8281 = vsel %vm947, %v8085, 0
    %v8284 = vsel %vm1094, %v8275, 0
    %8286 = vmatprep.subr.bf16.mxu0 0
    %8287 = vmatpush1.bf16.msra.mxu0 %v8273
    %8288 = vmatprep.subr.bf16.mxu0 0
    %8289 = vmatpush1.bf16.msra.mxu0 %v8284
    %8290 = vmatprep.subr.bf16.mxu0 0
    %8291 = vmatpush1.bf16.msra.mxu0 0
    %8292 = vmatprep.subr.bf16.mxu0 0
    %8293 = vmatpush1.bf16.msra.mxu0 0
    %8294 = vmatprep.subr.bf16.mxu0 0
    %8295 = vmatpush1.bf16.msra.mxu0 0
    %8296 = vmatprep.subr.bf16.mxu0 0
    %8297 = vmatpush1.bf16.msra.mxu0 0
    %8298 = vmatprep.subr.bf16.mxu0 0
    %8299 = vmatpush1.bf16.msra.mxu0 0
    %8300 = vmatprep.subr.bf16.mxu0 0
    %8301 = vmatpush1.bf16.msra.mxu0 0
    %8302 = vmatprep.subr.bf16.mxu0 0
    %8303 = vmatpush1.bf16.msra.mxu0 0
    %8304 = vmatprep.subr.bf16.mxu0 0
    %8305 = vmatpush1.bf16.msra.mxu0 0
    %8306 = vmatprep.subr.bf16.mxu0 0
    %8307 = vmatpush1.bf16.msra.mxu0 0
    %8308 = vmatprep.subr.bf16.mxu0 0
    %8309 = vmatpush1.bf16.msra.mxu0 0
    %8310 = vmatprep.subr.bf16.mxu0 0
    %8311 = vmatpush1.bf16.msra.mxu0 0
    %8312 = vmatprep.subr.bf16.mxu0 0
    %8313 = vmatpush1.bf16.msra.mxu0 0
    %8314 = vmatprep.subr.bf16.mxu0 0
    %8315 = vmatpush1.bf16.msra.mxu0 0
    %8316 = vmatprep.subr.bf16.mxu0 0
    %8317 = vmatpush1.bf16.msra.mxu0 0
    %8318 = vmatprep.mubr.bf16.mxu0 0
    %8319 = vmatmul.mubr.bf16.gmra.mrb[0].mxu0 %v8278
    %v8320 = vpop.f32.mrb[0].mxu0
    %v8321 = vadd.f32 0.0, %v8320
    %v8322 = vpop.f32.mrb[0].mxu0
    %v8323 = vpop.f32.mrb[0].mxu0
    %v8324 = vadd.f32 0.0, %v8323
    %v8325 = vpop.f32.mrb[0].mxu0
    %8326 = vmatprep.mubr.bf16.mxu0 0
    %8327 = vmatmul.mubr.bf16.gmra.mrb[0].mxu0 %v8281
    %v8328 = vpop.f32.mrb[0].mxu0
    %v8329 = vadd.f32 0.0, %v8328
    %v8330 = vpop.f32.mrb[0].mxu0
    %v8331 = vpop.f32.mrb[0].mxu0
    %v8332 = vpop.f32.mrb[0].mxu0
    %8333 = vdwg.mxu0
    %8346 = vrot.lane.b32.xlu0 %v6761, 16
    %v8347 = vpop.permute.xlu0 %8346
    %8348 = vrot.lane.b32.xlu0 %v6764, 16
    %v8349 = vpop.permute.xlu0 %8348
    %8350 = vrot.lane.b32.xlu0 %v6769, 16
    %v8351 = vpop.permute.xlu0 %8350
    %8352 = vrot.lane.b32.xlu0 %v6825, 16
    %v8353 = vpop.permute.xlu0 %8352
    %8354 = vrot.lane.b32.xlu0 %v6828, 16
    %v8355 = vpop.permute.xlu0 %8354
    %8356 = vrot.lane.b32.xlu0 %v6833, 16
    %v8357 = vpop.permute.xlu0 %8356
    %8358 = vrot.lane.b32.xlu0 %v6889, 16
    %v8359 = vpop.permute.xlu0 %8358
    %8360 = vrot.lane.b32.xlu0 %v6892, 16
    %v8361 = vpop.permute.xlu0 %8360
    %8362 = vrot.lane.b32.xlu0 %v6897, 16
    %v8363 = vpop.permute.xlu0 %8362
    %8364 = vrot.lane.b32.xlu0 %v6953, 16
    %v8365 = vpop.permute.xlu0 %8364
    %8366 = vrot.lane.b32.xlu0 %v6956, 16
    %v8367 = vpop.permute.xlu0 %8366
    %8368 = vrot.lane.b32.xlu0 %v6961, 16
    %v8369 = vpop.permute.xlu0 %8368
    %8394 = vrot.lane.b32.xlu0 %v7451, 32
    %v8395 = vpop.permute.xlu0 %8394
    %8396 = vrot.lane.b32.xlu0 %v7454, 32
    %v8397 = vpop.permute.xlu0 %8396
    %8398 = vrot.lane.b32.xlu0 %v7459, 32
    %v8399 = vpop.permute.xlu0 %8398
    %8400 = vrot.lane.b32.xlu0 %v7513, 32
    %v8401 = vpop.permute.xlu0 %8400
    %8402 = vrot.lane.b32.xlu0 %v7516, 32
    %v8403 = vpop.permute.xlu0 %8402
    %8404 = vrot.lane.b32.xlu0 %v7521, 32
    %v8405 = vpop.permute.xlu0 %8404
    %8406 = vrot.lane.b32.xlu0 %v7575, 32
    %v8407 = vpop.permute.xlu0 %8406
    %8408 = vrot.lane.b32.xlu0 %v7578, 32
    %v8409 = vpop.permute.xlu0 %8408
    %8410 = vrot.lane.b32.xlu0 %v7583, 32
    %v8411 = vpop.permute.xlu0 %8410
    %8412 = vrot.lane.b32.xlu0 %v7637, 32
    %v8413 = vpop.permute.xlu0 %8412
    %8414 = vrot.lane.b32.xlu0 %v7640, 32
    %v8415 = vpop.permute.xlu0 %8414
    %8416 = vrot.lane.b32.xlu0 %v7645, 32
    %v8417 = vpop.permute.xlu0 %8416
    %8442 = vrot.lane.b32.xlu0 %v8135, 48
    %v8443 = vpop.permute.xlu0 %8442
    %8444 = vrot.lane.b32.xlu0 %v8138, 48
    %v8445 = vpop.permute.xlu0 %8444
    %8446 = vrot.lane.b32.xlu0 %v8143, 48
    %v8447 = vpop.permute.xlu0 %8446
    %8448 = vrot.lane.b32.xlu0 %v8197, 48
    %v8449 = vpop.permute.xlu0 %8448
    %8450 = vrot.lane.b32.xlu0 %v8200, 48
    %v8451 = vpop.permute.xlu0 %8450
    %8452 = vrot.lane.b32.xlu0 %v8205, 48
    %v8453 = vpop.permute.xlu0 %8452
    %8454 = vrot.lane.b32.xlu0 %v8259, 48
    %v8455 = vpop.permute.xlu0 %8454
    %8456 = vrot.lane.b32.xlu0 %v8262, 48
    %v8457 = vpop.permute.xlu0 %8456
    %8458 = vrot.lane.b32.xlu0 %v8267, 48
    %v8459 = vpop.permute.xlu0 %8458
    %8460 = vrot.lane.b32.xlu0 %v8321, 48
    %v8461 = vpop.permute.xlu0 %8460
    %8462 = vrot.lane.b32.xlu0 %v8324, 48
    %v8463 = vpop.permute.xlu0 %8462
    %8464 = vrot.lane.b32.xlu0 %v8329, 48
    %v8465 = vpop.permute.xlu0 %8464
    %v8478 = vsel %vm682, %v6074, %v8347
    %v8479 = vsel %vm682, %v6077, %v8349
    %v8480 = vsel %vm682, %v6082, %v8351
    %v8481 = vsel %vm682, %v6131, %v8353
    %v8482 = vsel %vm682, %v6134, %v8355
    %v8483 = vsel %vm682, %v6139, %v8357
    %v8484 = vsel %vm682, %v6188, %v8359
    %v8485 = vsel %vm682, %v6191, %v8361
    %v8486 = vsel %vm682, %v6196, %v8363
    %v8487 = vsel %vm682, %v6245, %v8365
    %v8488 = vsel %vm682, %v6248, %v8367
    %v8489 = vsel %vm682, %v6253, %v8369
    %v8490 = vsel %vm3549, %v8478, %v8395
    %v8491 = vsel %vm3549, %v8479, %v8397
    %v8492 = vsel %vm3549, %v8480, %v8399
    %v8493 = vsel %vm3549, %v8481, %v8401
    %v8494 = vsel %vm3549, %v8482, %v8403
    %v8495 = vsel %vm3549, %v8483, %v8405
    %v8496 = vsel %vm3549, %v8484, %v8407
    %v8497 = vsel %vm3549, %v8485, %v8409
    %v8498 = vsel %vm3549, %v8486, %v8411
    %v8499 = vsel %vm3549, %v8487, %v8413
    %v8500 = vsel %vm3549, %v8488, %v8415
    %v8501 = vsel %vm3549, %v8489, %v8417
    %v8502 = vsel %vm3562, %v8490, %v8443
    %v8503 = vsel %vm3562, %v8491, %v8445
    %v8504 = vsel %vm3562, %v8492, %v8447
    %v8505 = vsel %vm3562, %v8493, %v8449
    %v8506 = vsel %vm3562, %v8494, %v8451
    %v8507 = vsel %vm3562, %v8495, %v8453
    %v8508 = vsel %vm3562, %v8496, %v8455
    %v8509 = vsel %vm3562, %v8497, %v8457
    %v8510 = vsel %vm3562, %v8498, %v8459
    %v8511 = vsel %vm3562, %v8499, %v8461
    %v8512 = vsel %vm3562, %v8500, %v8463
    %v8513 = vsel %vm3562, %v8501, %v8465
    %v8514 = vpack.c.bf16 %v8503, %v8502
    %v8515 = vpack.c.bf16 %v8505, %v8504
    %v8516 = vpack.c.bf16 %v8507, %v8506
    %v8517 = vpack.c.bf16 %v8509, %v8508
    %v8518 = vpack.c.bf16 %v8511, %v8510
    %v8519 = vpack.c.bf16 %v8513, %v8512
    %s8520 = scalar_lea.vmem %s6, 32
    %v8521 = vld [vmem:[%s8520] sm:$0xf]
    %v8522 = vld [vmem:[%s8520 + $0x4] sm:$0xf]
    %v8523 = vld [vmem:[%s8520 + $0x8] sm:$0xf]
    %v8524 = vld [vmem:[%s8520 + $0xc] sm:$0xf]
    %v8525 = vld [vmem:[%s8520 + $0x10] sm:$0xf]
    %v8526 = vld [vmem:[%s8520 + $0x14] sm:$0xf]
    %v8527 = vld [vmem:[%s8520 + $0x18] sm:$0xf]
    %v8528 = vld [vmem:[%s8520 + $0x1c] sm:$0xf]
    %v8537 = vunpack.c.l.b16 %v8521
    %v8538 = vunpack.c.l.b16 %v8522
    %v8539 = vunpack.c.l.b16 %v8523
    %v8540 = vunpack.c.l.b16 %v8524
    %v8541 = vunpack.c.l.b16 %v8525
    %v8542 = vunpack.c.l.b16 %v8526
    %v8543 = vunpack.c.l.b16 %v8527
    %v8544 = vunpack.c.l.b16 %v8528
    %v8545 = vpack.c.b16 %v8538, %v8537
    %v8546 = vpack.c.b16 %v8540, %v8539
    %v8547 = vpack.c.b16 %v8542, %v8541
    %v8548 = vpack.c.b16 %v8544, %v8543
    %v8554 = vsel %vm76, %v8514, 0
    %v8557 = vsel %vm76, %v8515, 0
    %v8560 = vsel %vm76, %v8516, 0
    %v8563 = vsel %vm76, %v8517, 0
    %v8566 = vsel %vm76, %v8518, 0
    %v8569 = vsel %vm76, %v8519, 0
    %8571 = vmatprep.subr.bf16.mxu0 0
    %8572 = vmatpush1.bf16.msra.mxu0 %v8545
    %8573 = vmatprep.subr.bf16.mxu0 0
    %8574 = vmatpush1.bf16.msra.mxu0 %v8546
    %8575 = vmatprep.subr.bf16.mxu0 0
    %8576 = vmatpush1.bf16.msra.mxu0 %v8547
    %8577 = vmatprep.subr.bf16.mxu0 0
    %8578 = vmatpush1.bf16.msra.mxu0 %v8548
    %8579 = vmatprep.subr.bf16.mxu0 0
    %8580 = vmatpush1.bf16.msra.mxu0 0
    %8581 = vmatprep.subr.bf16.mxu0 0
    %8582 = vmatpush1.bf16.msra.mxu0 0
    %8583 = vmatprep.subr.bf16.mxu0 0
    %8584 = vmatpush1.bf16.msra.mxu0 0
    %8585 = vmatprep.subr.bf16.mxu0 0
    %8586 = vmatpush1.bf16.msra.mxu0 0
    %8587 = vmatprep.subr.bf16.mxu0 0
    %8588 = vmatpush1.bf16.msra.mxu0 0
    %8589 = vmatprep.subr.bf16.mxu0 0
    %8590 = vmatpush1.bf16.msra.mxu0 0
    %8591 = vmatprep.subr.bf16.mxu0 0
    %8592 = vmatpush1.bf16.msra.mxu0 0
    %8593 = vmatprep.subr.bf16.mxu0 0
    %8594 = vmatpush1.bf16.msra.mxu0 0
    %8595 = vmatprep.subr.bf16.mxu0 0
    %8596 = vmatpush1.bf16.msra.mxu0 0
    %8597 = vmatprep.subr.bf16.mxu0 0
    %8598 = vmatpush1.bf16.msra.mxu0 0
    %8599 = vmatprep.subr.bf16.mxu0 0
    %8600 = vmatpush1.bf16.msra.mxu0 0
    %8601 = vmatprep.subr.bf16.mxu0 0
    %8602 = vmatpush1.bf16.msra.mxu0 0
    %8603 = vmatprep.mubr.bf16.mxu0 0
    %8604 = vmatmul.mubr.bf16.gmra.mrb[0].mxu0 %v8554
    %v8605 = vpop.f32.mrb[0].mxu0
    %v8606 = vadd.f32 0.0, %v8605
    %v8607 = vpop.f32.mrb[0].mxu0
    %v8608 = vpop.f32.mrb[0].mxu0
    %v8609 = vadd.f32 0.0, %v8608
    %v8610 = vpop.f32.mrb[0].mxu0
    %8611 = vmatprep.mubr.bf16.mxu0 0
    %8612 = vmatmul.mubr.bf16.gmra.mrb[0].mxu0 %v8557
    %v8613 = vpop.f32.mrb[0].mxu0
    %v8614 = vadd.f32 0.0, %v8613
    %v8615 = vpop.f32.mrb[0].mxu0
    %v8616 = vpop.f32.mrb[0].mxu0
    %v8617 = vadd.f32 0.0, %v8616
    %v8618 = vpop.f32.mrb[0].mxu0
    %8619 = vmatprep.mubr.bf16.mxu0 0
    %8620 = vmatmul.mubr.bf16.gmra.mrb[0].mxu0 %v8560
    %v8621 = vpop.f32.mrb[0].mxu0
    %v8622 = vadd.f32 0.0, %v8621
    %v8623 = vpop.f32.mrb[0].mxu0
    %v8624 = vpop.f32.mrb[0].mxu0
    %v8625 = vadd.f32 0.0, %v8624
    %v8626 = vpop.f32.mrb[0].mxu0
    %8627 = vmatprep.mubr.bf16.mxu0 0
    %8628 = vmatmul.mubr.bf16.gmra.mrb[0].mxu0 %v8563
    %v8629 = vpop.f32.mrb[0].mxu0
    %v8630 = vadd.f32 0.0, %v8629
    %v8631 = vpop.f32.mrb[0].mxu0
    %v8632 = vpop.f32.mrb[0].mxu0
    %v8633 = vadd.f32 0.0, %v8632
    %v8634 = vpop.f32.mrb[0].mxu0
    %8635 = vmatprep.mubr.bf16.mxu0 0
    %8636 = vmatmul.mubr.bf16.gmra.mrb[0].mxu0 %v8566
    %v8637 = vpop.f32.mrb[0].mxu0
    %v8638 = vadd.f32 0.0, %v8637
    %v8639 = vpop.f32.mrb[0].mxu0
    %v8640 = vpop.f32.mrb[0].mxu0
    %v8641 = vadd.f32 0.0, %v8640
    %v8642 = vpop.f32.mrb[0].mxu0
    %8643 = vmatprep.mubr.bf16.mxu0 0
    %8644 = vmatmul.mubr.bf16.gmra.mrb[0].mxu0 %v8569
    %v8645 = vpop.f32.mrb[0].mxu0
    %v8646 = vadd.f32 0.0, %v8645
    %v8647 = vpop.f32.mrb[0].mxu0
    %v8648 = vpop.f32.mrb[0].mxu0
    %v8649 = vadd.f32 0.0, %v8648
    %v8650 = vpop.f32.mrb[0].mxu0
    %8651 = vdwg.mxu0
    %v8652 = vadd.f32 %v5004, %v8606
    %v8653 = vadd.f32 %v5005, %v8609
    %v8654 = vadd.f32 %v5006, %v8614
    %v8655 = vadd.f32 %v5007, %v8617
    %v8656 = vadd.f32 %v5008, %v8622
    %v8657 = vadd.f32 %v5009, %v8625
    %v8658 = vadd.f32 %v5010, %v8630
    %v8659 = vadd.f32 %v5011, %v8633
    %v8660 = vadd.f32 %v5012, %v8638
    %v8661 = vadd.f32 %v5013, %v8641
    %v8662 = vadd.f32 %v5014, %v8646
    %v8663 = vadd.f32 %v5015, %v8649
    %s8664 = scalar_lea.vmem %s7, 1
    %v8665 = vld [vmem:[%s8664] sm:$0x1]
    %v8667 = vlaneseq
    %v8668 = vshrl.u32 %v8667, 7
    %v8669 = vsub.s32 0, %v8668
    %v8670 = vrot.slane %v8665, %v8669
    %v8672 = vadd.f32 %v8652, %v8670
    %v8673 = vadd.f32 %v8653, %v8670
    %v8674 = vadd.f32 %v8654, %v8670
    %v8675 = vadd.f32 %v8655, %v8670
    %v8676 = vadd.f32 %v8656, %v8670
    %v8677 = vadd.f32 %v8657, %v8670
    %v8678 = vadd.f32 %v8658, %v8670
    %v8679 = vadd.f32 %v8659, %v8670
    %v8680 = vadd.f32 %v8660, %v8670
    %v8681 = vadd.f32 %v8661, %v8670
    %v8682 = vadd.f32 %v8662, %v8670
    %v8683 = vadd.f32 %v8663, %v8670
    %s8684 = scalar_lea.vmem %s2, 3
    %v8685 = vld [vmem:[%s8684] sm:$0x1]
    %s8686 = scalar_lea.vmem %s3, 3
    %v8687 = vld [vmem:[%s8686] sm:$0x1]
    %v8688 = vsel %vm76, %v8672, 0.0
    %8689 = vadd.xlane.f32.xlu0 %v8688
    %v8690 = vpop.xlane.xlu0 %8689
    %v8691 = vsel %vm76, %v8673, 0.0
    %8692 = vadd.xlane.f32.xlu0 %v8691
    %v8693 = vpop.xlane.xlu0 %8692
    %v8694 = vsel %vm76, %v8674, 0.0
    %8695 = vadd.xlane.f32.xlu0 %v8694
    %v8696 = vpop.xlane.xlu0 %8695
    %v8697 = vsel %vm76, %v8675, 0.0
    %8698 = vadd.xlane.f32.xlu0 %v8697
    %v8699 = vpop.xlane.xlu0 %8698
    %v8700 = vsel %vm76, %v8676, 0.0
    %8701 = vadd.xlane.f32.xlu0 %v8700
    %v8702 = vpop.xlane.xlu0 %8701
    %v8703 = vsel %vm76, %v8677, 0.0
    %8704 = vadd.xlane.f32.xlu0 %v8703
    %v8705 = vpop.xlane.xlu0 %8704
    %v8706 = vsel %vm76, %v8678, 0.0
    %8707 = vadd.xlane.f32.xlu0 %v8706
    %v8708 = vpop.xlane.xlu0 %8707
    %v8709 = vsel %vm76, %v8679, 0.0
    %8710 = vadd.xlane.f32.xlu0 %v8709
    %v8711 = vpop.xlane.xlu0 %8710
    %v8712 = vsel %vm76, %v8680, 0.0
    %8713 = vadd.xlane.f32.xlu0 %v8712
    %v8714 = vpop.xlane.xlu0 %8713
    %v8715 = vsel %vm76, %v8681, 0.0
    %8716 = vadd.xlane.f32.xlu0 %v8715
    %v8717 = vpop.xlane.xlu0 %8716
    %v8718 = vsel %vm76, %v8682, 0.0
    %8719 = vadd.xlane.f32.xlu0 %v8718
    %v8720 = vpop.xlane.xlu0 %8719
    %v8721 = vsel %vm76, %v8683, 0.0
    %8722 = vadd.xlane.f32.xlu0 %v8721
    %v8723 = vpop.xlane.xlu0 %8722
    %v8724 = vmul.f32 %v8690, %v113
    %v8725 = vmul.f32 %v8693, %v113
    %v8726 = vmul.f32 %v8696, %v113
    %v8727 = vmul.f32 %v8699, %v113
    %v8728 = vmul.f32 %v8702, %v113
    %v8729 = vmul.f32 %v8705, %v113
    %v8730 = vmul.f32 %v8708, %v113
    %v8731 = vmul.f32 %v8711, %v113
    %v8732 = vmul.f32 %v8714, %v113
    %v8733 = vmul.f32 %v8717, %v113
    %v8734 = vmul.f32 %v8720, %v113
    %v8735 = vmul.f32 %v8723, %v113
    %v8736 = vsub.f32 %v8672, %v8724
    %v8737 = vsub.f32 %v8673, %v8725
    %v8738 = vsub.f32 %v8674, %v8726
    %v8739 = vsub.f32 %v8675, %v8727
    %v8740 = vsub.f32 %v8676, %v8728
    %v8741 = vsub.f32 %v8677, %v8729
    %v8742 = vsub.f32 %v8678, %v8730
    %v8743 = vsub.f32 %v8679, %v8731
    %v8744 = vsub.f32 %v8680, %v8732
    %v8745 = vsub.f32 %v8681, %v8733
    %v8746 = vsub.f32 %v8682, %v8734
    %v8747 = vsub.f32 %v8683, %v8735
    %v8748 = vmul.f32 %v8736, %v8736
    %v8749 = vmul.f32 %v8737, %v8737
    %v8750 = vmul.f32 %v8738, %v8738
    %v8751 = vmul.f32 %v8739, %v8739
    %v8752 = vmul.f32 %v8740, %v8740
    %v8753 = vmul.f32 %v8741, %v8741
    %v8754 = vmul.f32 %v8742, %v8742
    %v8755 = vmul.f32 %v8743, %v8743
    %v8756 = vmul.f32 %v8744, %v8744
    %v8757 = vmul.f32 %v8745, %v8745
    %v8758 = vmul.f32 %v8746, %v8746
    %v8759 = vmul.f32 %v8747, %v8747
    %v8760 = vsel %vm76, %v8748, 0.0
    %8761 = vadd.xlane.f32.xlu0 %v8760
    %v8762 = vpop.xlane.xlu0 %8761
    %v8763 = vsel %vm76, %v8749, 0.0
    %8764 = vadd.xlane.f32.xlu0 %v8763
    %v8765 = vpop.xlane.xlu0 %8764
    %v8766 = vsel %vm76, %v8750, 0.0
    %8767 = vadd.xlane.f32.xlu0 %v8766
    %v8768 = vpop.xlane.xlu0 %8767
    %v8769 = vsel %vm76, %v8751, 0.0
    %8770 = vadd.xlane.f32.xlu0 %v8769
    %v8771 = vpop.xlane.xlu0 %8770
    %v8772 = vsel %vm76, %v8752, 0.0
    %8773 = vadd.xlane.f32.xlu0 %v8772
    %v8774 = vpop.xlane.xlu0 %8773
    %v8775 = vsel %vm76, %v8753, 0.0
    %8776 = vadd.xlane.f32.xlu0 %v8775
    %v8777 = vpop.xlane.xlu0 %8776
    %v8778 = vsel %vm76, %v8754, 0.0
    %8779 = vadd.xlane.f32.xlu0 %v8778
    %v8780 = vpop.xlane.xlu0 %8779
    %v8781 = vsel %vm76, %v8755, 0.0
    %8782 = vadd.xlane.f32.xlu0 %v8781
    %v8783 = vpop.xlane.xlu0 %8782
    %v8784 = vsel %vm76, %v8756, 0.0
    %8785 = vadd.xlane.f32.xlu0 %v8784
    %v8786 = vpop.xlane.xlu0 %8785
    %v8787 = vsel %vm76, %v8757, 0.0
    %8788 = vadd.xlane.f32.xlu0 %v8787
    %v8789 = vpop.xlane.xlu0 %8788
    %v8790 = vsel %vm76, %v8758, 0.0
    %8791 = vadd.xlane.f32.xlu0 %v8790
    %v8792 = vpop.xlane.xlu0 %8791
    %v8793 = vsel %vm76, %v8759, 0.0
    %8794 = vadd.xlane.f32.xlu0 %v8793
    %v8795 = vpop.xlane.xlu0 %8794
    %v8796 = vmul.f32 %v8762, %v113
    %v8797 = vmul.f32 %v8765, %v113
    %v8798 = vmul.f32 %v8768, %v113
    %v8799 = vmul.f32 %v8771, %v113
    %v8800 = vmul.f32 %v8774, %v113
    %v8801 = vmul.f32 %v8777, %v113
    %v8802 = vmul.f32 %v8780, %v113
    %v8803 = vmul.f32 %v8783, %v113
    %v8804 = vmul.f32 %v8786, %v113
    %v8805 = vmul.f32 %v8789, %v113
    %v8806 = vmul.f32 %v8792, %v113
    %v8807 = vmul.f32 %v8795, %v113
    %v8808 = vadd.f32 %v8796, 1e-06
    %v8809 = vadd.f32 %v8797, 1e-06
    %v8810 = vadd.f32 %v8798, 1e-06
    %v8811 = vadd.f32 %v8799, 1e-06
    %v8812 = vadd.f32 %v8800, 1e-06
    %v8813 = vadd.f32 %v8801, 1e-06
    %v8814 = vadd.f32 %v8802, 1e-06
    %v8815 = vadd.f32 %v8803, 1e-06
    %v8816 = vadd.f32 %v8804, 1e-06
    %v8817 = vadd.f32 %v8805, 1e-06
    %v8818 = vadd.f32 %v8806, 1e-06
    %v8819 = vadd.f32 %v8807, 1e-06
    %v8820 = vrsqrt.pop %v8808
    %v8821 = vrsqrt.pop %v8809
    %v8822 = vrsqrt.pop %v8810
    %v8823 = vrsqrt.pop %v8811
    %v8824 = vrsqrt.pop %v8812
    %v8825 = vrsqrt.pop %v8813
    %v8826 = vrsqrt.pop %v8814
    %v8827 = vrsqrt.pop %v8815
    %v8828 = vrsqrt.pop %v8816
    %v8829 = vrsqrt.pop %v8817
    %v8830 = vrsqrt.pop %v8818
    %v8831 = vrsqrt.pop %v8819
    %v8832 = vmul.f32 %v8736, %v8820
    %v8833 = vmul.f32 %v8737, %v8821
    %v8834 = vmul.f32 %v8738, %v8822
    %v8835 = vmul.f32 %v8739, %v8823
    %v8836 = vmul.f32 %v8740, %v8824
    %v8837 = vmul.f32 %v8741, %v8825
    %v8838 = vmul.f32 %v8742, %v8826
    %v8839 = vmul.f32 %v8743, %v8827
    %v8840 = vmul.f32 %v8744, %v8828
    %v8841 = vmul.f32 %v8745, %v8829
    %v8842 = vmul.f32 %v8746, %v8830
    %v8843 = vmul.f32 %v8747, %v8831
    %v8845 = vlaneseq
    %v8846 = vshrl.u32 %v8845, 7
    %v8847 = vsub.s32 0, %v8846
    %v8848 = vrot.slane %v8685, %v8847
    %v8850 = vmul.f32 %v8832, %v8848
    %v8851 = vmul.f32 %v8833, %v8848
    %v8852 = vmul.f32 %v8834, %v8848
    %v8853 = vmul.f32 %v8835, %v8848
    %v8854 = vmul.f32 %v8836, %v8848
    %v8855 = vmul.f32 %v8837, %v8848
    %v8856 = vmul.f32 %v8838, %v8848
    %v8857 = vmul.f32 %v8839, %v8848
    %v8858 = vmul.f32 %v8840, %v8848
    %v8859 = vmul.f32 %v8841, %v8848
    %v8860 = vmul.f32 %v8842, %v8848
    %v8861 = vmul.f32 %v8843, %v8848
    %v8863 = vlaneseq
    %v8864 = vshrl.u32 %v8863, 7
    %v8865 = vsub.s32 0, %v8864
    %v8866 = vrot.slane %v8687, %v8865
    %v8868 = vadd.f32 %v8850, %v8866
    %v8869 = vadd.f32 %v8851, %v8866
    %v8870 = vadd.f32 %v8852, %v8866
    %v8871 = vadd.f32 %v8853, %v8866
    %v8872 = vadd.f32 %v8854, %v8866
    %v8873 = vadd.f32 %v8855, %v8866
    %v8874 = vadd.f32 %v8856, %v8866
    %v8875 = vadd.f32 %v8857, %v8866
    %v8876 = vadd.f32 %v8858, %v8866
    %v8877 = vadd.f32 %v8859, %v8866
    %v8878 = vadd.f32 %v8860, %v8866
    %v8879 = vadd.f32 %v8861, %v8866
    %v8880 = vpack.c.bf16 %v8869, %v8868
    %v8881 = vpack.c.bf16 %v8871, %v8870
    %v8882 = vpack.c.bf16 %v8873, %v8872
    %v8883 = vpack.c.bf16 %v8875, %v8874
    %v8884 = vpack.c.bf16 %v8877, %v8876
    %v8885 = vpack.c.bf16 %v8879, %v8878
    %s8886 = scalar_lea.vmem %s8, 64
    %v8887 = vld [vmem:[%s8886] sm:$0xff]
    %v8888 = vld [vmem:[%s8886 + $0x8] sm:$0xff]
    %v8889 = vld [vmem:[%s8886 + $0x10] sm:$0xff]
    %v8890 = vld [vmem:[%s8886 + $0x18] sm:$0xff]
    %v8891 = vld [vmem:[%s8886 + $0x20] sm:$0xff]
    %v8892 = vld [vmem:[%s8886 + $0x28] sm:$0xff]
    %v8893 = vld [vmem:[%s8886 + $0x30] sm:$0xff]
    %v8894 = vld [vmem:[%s8886 + $0x38] sm:$0xff]
    %s8895 = scalar_lea.vmem %s9, 2
    %v8896 = vld [vmem:[%s8895] sm:$0x3]
    %v8898 = vlaneseq
    %v8899 = vshrl.u32 %v8898, 7
    %v8900 = vsub.s32 0, %v8899
    %v8901 = vrot.slane %v8896, %v8900
    %v8902 = vlaneseq
    %v8903 = vshrl.u32 %v8902, 7
    %v8904 = vsub.s32 1, %v8903
    %v8905 = vrot.slane %v8896, %v8904
    %v8916 = vunpack.c.l.b16 %v8887
    %v8917 = vunpack.c.h.b16 %v8887
    %v8918 = vunpack.c.l.b16 %v8888
    %v8919 = vunpack.c.h.b16 %v8888
    %v8920 = vunpack.c.l.b16 %v8889
    %v8921 = vunpack.c.h.b16 %v8889
    %v8922 = vunpack.c.l.b16 %v8890
    %v8923 = vunpack.c.h.b16 %v8890
    %v8924 = vunpack.c.l.b16 %v8891
    %v8925 = vunpack.c.h.b16 %v8891
    %v8926 = vunpack.c.l.b16 %v8892
    %v8927 = vunpack.c.h.b16 %v8892
    %v8928 = vunpack.c.l.b16 %v8893
    %v8929 = vunpack.c.h.b16 %v8893
    %v8930 = vunpack.c.l.b16 %v8894
    %v8931 = vunpack.c.h.b16 %v8894
    %v8932 = vpack.c.b16 %v8918, %v8916
    %v8933 = vpack.c.b16 %v8919, %v8917
    %v8934 = vpack.c.b16 %v8922, %v8920
    %v8935 = vpack.c.b16 %v8923, %v8921
    %v8936 = vpack.c.b16 %v8926, %v8924
    %v8937 = vpack.c.b16 %v8927, %v8925
    %v8938 = vpack.c.b16 %v8930, %v8928
    %v8939 = vpack.c.b16 %v8931, %v8929
    %v8949 = vsel %vm76, %v8880, 0
    %v8952 = vsel %vm76, %v8881, 0
    %v8955 = vsel %vm76, %v8882, 0
    %v8958 = vsel %vm76, %v8883, 0
    %v8961 = vsel %vm76, %v8884, 0
    %v8964 = vsel %vm76, %v8885, 0
    %8966 = vmatprep.subr.bf16.mxu0 %v8933
    %8967 = vmatpush1.bf16.msra.mxu0 %v8932
    %8968 = vmatprep.subr.bf16.mxu0 %v8935
    %8969 = vmatpush1.bf16.msra.mxu0 %v8934
    %8970 = vmatprep.subr.bf16.mxu0 %v8937
    %8971 = vmatpush1.bf16.msra.mxu0 %v8936
    %8972 = vmatprep.subr.bf16.mxu0 %v8939
    %8973 = vmatpush1.bf16.msra.mxu0 %v8938
    %8974 = vmatprep.subr.bf16.mxu0 0
    %8975 = vmatpush1.bf16.msra.mxu0 0
    %8976 = vmatprep.subr.bf16.mxu0 0
    %8977 = vmatpush1.bf16.msra.mxu0 0
    %8978 = vmatprep.subr.bf16.mxu0 0
    %8979 = vmatpush1.bf16.msra.mxu0 0
    %8980 = vmatprep.subr.bf16.mxu0 0
    %8981 = vmatpush1.bf16.msra.mxu0 0
    %8982 = vmatprep.subr.bf16.mxu0 0
    %8983 = vmatpush1.bf16.msra.mxu0 0
    %8984 = vmatprep.subr.bf16.mxu0 0
    %8985 = vmatpush1.bf16.msra.mxu0 0
    %8986 = vmatprep.subr.bf16.mxu0 0
    %8987 = vmatpush1.bf16.msra.mxu0 0
    %8988 = vmatprep.subr.bf16.mxu0 0
    %8989 = vmatpush1.bf16.msra.mxu0 0
    %8990 = vmatprep.subr.bf16.mxu0 0
    %8991 = vmatpush1.bf16.msra.mxu0 0
    %8992 = vmatprep.subr.bf16.mxu0 0
    %8993 = vmatpush1.bf16.msra.mxu0 0
    %8994 = vmatprep.subr.bf16.mxu0 0
    %8995 = vmatpush1.bf16.msra.mxu0 0
    %8996 = vmatprep.subr.bf16.mxu0 0
    %8997 = vmatpush1.bf16.msra.mxu0 0
    %8998 = vmatprep.mubr.bf16.mxu0 0
    %8999 = vmatmul.mubr.bf16.gmra.mrb[0].mxu0 %v8949
    %v9000 = vpop.f32.mrb[0].mxu0
    %v9001 = vadd.f32 %v8901, %v9000
    %v9002 = vpop.f32.mrb[0].mxu0
    %v9003 = vadd.f32 %v8905, %v9002
    %v9004 = vpop.f32.mrb[0].mxu0
    %v9005 = vadd.f32 %v8901, %v9004
    %v9006 = vpop.f32.mrb[0].mxu0
    %v9007 = vadd.f32 %v8905, %v9006
    %9008 = vmatprep.mubr.bf16.mxu0 0
    %9009 = vmatmul.mubr.bf16.gmra.mrb[0].mxu0 %v8952
    %v9010 = vpop.f32.mrb[0].mxu0
    %v9011 = vadd.f32 %v8901, %v9010
    %v9012 = vpop.f32.mrb[0].mxu0
    %v9013 = vadd.f32 %v8905, %v9012
    %v9014 = vpop.f32.mrb[0].mxu0
    %v9015 = vadd.f32 %v8901, %v9014
    %v9016 = vpop.f32.mrb[0].mxu0
    %v9017 = vadd.f32 %v8905, %v9016
    %9018 = vmatprep.mubr.bf16.mxu0 0
    %9019 = vmatmul.mubr.bf16.gmra.mrb[0].mxu0 %v8955
    %v9020 = vpop.f32.mrb[0].mxu0
    %v9021 = vadd.f32 %v8901, %v9020
    %v9022 = vpop.f32.mrb[0].mxu0
    %v9023 = vadd.f32 %v8905, %v9022
    %v9024 = vpop.f32.mrb[0].mxu0
    %v9025 = vadd.f32 %v8901, %v9024
    %v9026 = vpop.f32.mrb[0].mxu0
    %v9027 = vadd.f32 %v8905, %v9026
    %9028 = vmatprep.mubr.bf16.mxu0 0
    %9029 = vmatmul.mubr.bf16.gmra.mrb[0].mxu0 %v8958
    %v9030 = vpop.f32.mrb[0].mxu0
    %v9031 = vadd.f32 %v8901, %v9030
    %v9032 = vpop.f32.mrb[0].mxu0
    %v9033 = vadd.f32 %v8905, %v9032
    %v9034 = vpop.f32.mrb[0].mxu0
    %v9035 = vadd.f32 %v8901, %v9034
    %v9036 = vpop.f32.mrb[0].mxu0
    %v9037 = vadd.f32 %v8905, %v9036
    %9038 = vmatprep.mubr.bf16.mxu0 0
    %9039 = vmatmul.mubr.bf16.gmra.mrb[0].mxu0 %v8961
    %v9040 = vpop.f32.mrb[0].mxu0
    %v9041 = vadd.f32 %v8901, %v9040
    %v9042 = vpop.f32.mrb[0].mxu0
    %v9043 = vadd.f32 %v8905, %v9042
    %v9044 = vpop.f32.mrb[0].mxu0
    %v9045 = vadd.f32 %v8901, %v9044
    %v9046 = vpop.f32.mrb[0].mxu0
    %v9047 = vadd.f32 %v8905, %v9046
    %9048 = vmatprep.mubr.bf16.mxu0 0
    %9049 = vmatmul.mubr.bf16.gmra.mrb[0].mxu0 %v8964
    %v9050 = vpop.f32.mrb[0].mxu0
    %v9051 = vadd.f32 %v8901, %v9050
    %v9052 = vpop.f32.mrb[0].mxu0
    %v9053 = vadd.f32 %v8905, %v9052
    %v9054 = vpop.f32.mrb[0].mxu0
    %v9055 = vadd.f32 %v8901, %v9054
    %v9056 = vpop.f32.mrb[0].mxu0
    %v9057 = vadd.f32 %v8905, %v9056
    %9058 = vdwg.mxu0
    %v9059 = vmul.f32 %v9001, 0.5
    %v9060 = vmul.f32 %v9003, 0.5
    %v9061 = vmul.f32 %v9005, 0.5
    %v9062 = vmul.f32 %v9007, 0.5
    %v9063 = vmul.f32 %v9011, 0.5
    %v9064 = vmul.f32 %v9013, 0.5
    %v9065 = vmul.f32 %v9015, 0.5
    %v9066 = vmul.f32 %v9017, 0.5
    %v9067 = vmul.f32 %v9021, 0.5
    %v9068 = vmul.f32 %v9023, 0.5
    %v9069 = vmul.f32 %v9025, 0.5
    %v9070 = vmul.f32 %v9027, 0.5
    %v9071 = vmul.f32 %v9031, 0.5
    %v9072 = vmul.f32 %v9033, 0.5
    %v9073 = vmul.f32 %v9035, 0.5
    %v9074 = vmul.f32 %v9037, 0.5
    %v9075 = vmul.f32 %v9041, 0.5
    %v9076 = vmul.f32 %v9043, 0.5
    %v9077 = vmul.f32 %v9045, 0.5
    %v9078 = vmul.f32 %v9047, 0.5
    %v9079 = vmul.f32 %v9051, 0.5
    %v9080 = vmul.f32 %v9053, 0.5
    %v9081 = vmul.f32 %v9055, 0.5
    %v9082 = vmul.f32 %v9057, 0.5
    %v9083 = vmul.f32 %v9001, 0.70710677
    %v9084 = vmul.f32 %v9003, 0.70710677
    %v9085 = vmul.f32 %v9005, 0.70710677
    %v9086 = vmul.f32 %v9007, 0.70710677
    %v9087 = vmul.f32 %v9011, 0.70710677
    %v9088 = vmul.f32 %v9013, 0.70710677
    %v9089 = vmul.f32 %v9015, 0.70710677
    %v9090 = vmul.f32 %v9017, 0.70710677
    %v9091 = vmul.f32 %v9021, 0.70710677
    %v9092 = vmul.f32 %v9023, 0.70710677
    %v9093 = vmul.f32 %v9025, 0.70710677
    %v9094 = vmul.f32 %v9027, 0.70710677
    %v9095 = vmul.f32 %v9031, 0.70710677
    %v9096 = vmul.f32 %v9033, 0.70710677
    %v9097 = vmul.f32 %v9035, 0.70710677
    %v9098 = vmul.f32 %v9037, 0.70710677
    %v9099 = vmul.f32 %v9041, 0.70710677
    %v9100 = vmul.f32 %v9043, 0.70710677
    %v9101 = vmul.f32 %v9045, 0.70710677
    %v9102 = vmul.f32 %v9047, 0.70710677
    %v9103 = vmul.f32 %v9051, 0.70710677
    %v9104 = vmul.f32 %v9053, 0.70710677
    %v9105 = vmul.f32 %v9055, 0.70710677
    %v9106 = vmul.f32 %v9057, 0.70710677
    %vm9107 = vcmp.ge.f32.partialorder %v9083, 0.0
    %vm9108 = vcmp.ge.f32.partialorder %v9084, 0.0
    %vm9109 = vcmp.ge.f32.partialorder %v9085, 0.0
    %vm9110 = vcmp.ge.f32.partialorder %v9086, 0.0
    %vm9111 = vcmp.ge.f32.partialorder %v9087, 0.0
    %vm9112 = vcmp.ge.f32.partialorder %v9088, 0.0
    %vm9113 = vcmp.ge.f32.partialorder %v9089, 0.0
    %vm9114 = vcmp.ge.f32.partialorder %v9090, 0.0
    %vm9115 = vcmp.ge.f32.partialorder %v9091, 0.0
    %vm9116 = vcmp.ge.f32.partialorder %v9092, 0.0
    %vm9117 = vcmp.ge.f32.partialorder %v9093, 0.0
    %vm9118 = vcmp.ge.f32.partialorder %v9094, 0.0
    %vm9119 = vcmp.ge.f32.partialorder %v9095, 0.0
    %vm9120 = vcmp.ge.f32.partialorder %v9096, 0.0
    %vm9121 = vcmp.ge.f32.partialorder %v9097, 0.0
    %vm9122 = vcmp.ge.f32.partialorder %v9098, 0.0
    %vm9123 = vcmp.ge.f32.partialorder %v9099, 0.0
    %vm9124 = vcmp.ge.f32.partialorder %v9100, 0.0
    %vm9125 = vcmp.ge.f32.partialorder %v9101, 0.0
    %vm9126 = vcmp.ge.f32.partialorder %v9102, 0.0
    %vm9127 = vcmp.ge.f32.partialorder %v9103, 0.0
    %vm9128 = vcmp.ge.f32.partialorder %v9104, 0.0
    %vm9129 = vcmp.ge.f32.partialorder %v9105, 0.0
    %vm9130 = vcmp.ge.f32.partialorder %v9106, 0.0
    %v9131 = vsel %vm9107, 1.0, -1.0
    %v9132 = vsel %vm9108, 1.0, -1.0
    %v9133 = vsel %vm9109, 1.0, -1.0
    %v9134 = vsel %vm9110, 1.0, -1.0
    %v9135 = vsel %vm9111, 1.0, -1.0
    %v9136 = vsel %vm9112, 1.0, -1.0
    %v9137 = vsel %vm9113, 1.0, -1.0
    %v9138 = vsel %vm9114, 1.0, -1.0
    %v9139 = vsel %vm9115, 1.0, -1.0
    %v9140 = vsel %vm9116, 1.0, -1.0
    %v9141 = vsel %vm9117, 1.0, -1.0
    %v9142 = vsel %vm9118, 1.0, -1.0
    %v9143 = vsel %vm9119, 1.0, -1.0
    %v9144 = vsel %vm9120, 1.0, -1.0
    %v9145 = vsel %vm9121, 1.0, -1.0
    %v9146 = vsel %vm9122, 1.0, -1.0
    %v9147 = vsel %vm9123, 1.0, -1.0
    %v9148 = vsel %vm9124, 1.0, -1.0
    %v9149 = vsel %vm9125, 1.0, -1.0
    %v9150 = vsel %vm9126, 1.0, -1.0
    %v9151 = vsel %vm9127, 1.0, -1.0
    %v9152 = vsel %vm9128, 1.0, -1.0
    %v9153 = vsel %vm9129, 1.0, -1.0
    %v9154 = vsel %vm9130, 1.0, -1.0
    %v9155 = vand.u32 2147483647, %v9083
    %v9156 = vand.u32 2147483647, %v9084
    %v9157 = vand.u32 2147483647, %v9085
    %v9158 = vand.u32 2147483647, %v9086
    %v9159 = vand.u32 2147483647, %v9087
    %v9160 = vand.u32 2147483647, %v9088
    %v9161 = vand.u32 2147483647, %v9089
    %v9162 = vand.u32 2147483647, %v9090
    %v9163 = vand.u32 2147483647, %v9091
    %v9164 = vand.u32 2147483647, %v9092
    %v9165 = vand.u32 2147483647, %v9093
    %v9166 = vand.u32 2147483647, %v9094
    %v9167 = vand.u32 2147483647, %v9095
    %v9168 = vand.u32 2147483647, %v9096
    %v9169 = vand.u32 2147483647, %v9097
    %v9170 = vand.u32 2147483647, %v9098
    %v9171 = vand.u32 2147483647, %v9099
    %v9172 = vand.u32 2147483647, %v9100
    %v9173 = vand.u32 2147483647, %v9101
    %v9174 = vand.u32 2147483647, %v9102
    %v9175 = vand.u32 2147483647, %v9103
    %v9176 = vand.u32 2147483647, %v9104
    %v9177 = vand.u32 2147483647, %v9105
    %v9178 = vand.u32 2147483647, %v9106
    %v9179 = vmul.f32 %v9155, 0.3275911
    %v9180 = vmul.f32 %v9156, 0.3275911
    %v9181 = vmul.f32 %v9157, 0.3275911
    %v9182 = vmul.f32 %v9158, 0.3275911
    %v9183 = vmul.f32 %v9159, 0.3275911
    %v9184 = vmul.f32 %v9160, 0.3275911
    %v9185 = vmul.f32 %v9161, 0.3275911
    %v9186 = vmul.f32 %v9162, 0.3275911
    %v9187 = vmul.f32 %v9163, 0.3275911
    %v9188 = vmul.f32 %v9164, 0.3275911
    %v9189 = vmul.f32 %v9165, 0.3275911
    %v9190 = vmul.f32 %v9166, 0.3275911
    %v9191 = vmul.f32 %v9167, 0.3275911
    %v9192 = vmul.f32 %v9168, 0.3275911
    %v9193 = vmul.f32 %v9169, 0.3275911
    %v9194 = vmul.f32 %v9170, 0.3275911
    %v9195 = vmul.f32 %v9171, 0.3275911
    %v9196 = vmul.f32 %v9172, 0.3275911
    %v9197 = vmul.f32 %v9173, 0.3275911
    %v9198 = vmul.f32 %v9174, 0.3275911
    %v9199 = vmul.f32 %v9175, 0.3275911
    %v9200 = vmul.f32 %v9176, 0.3275911
    %v9201 = vmul.f32 %v9177, 0.3275911
    %v9202 = vmul.f32 %v9178, 0.3275911
    %v9203 = vadd.f32 %v9179, 1.0
    %v9204 = vadd.f32 %v9180, 1.0
    %v9205 = vadd.f32 %v9181, 1.0
    %v9206 = vadd.f32 %v9182, 1.0
    %v9207 = vadd.f32 %v9183, 1.0
    %v9208 = vadd.f32 %v9184, 1.0
    %v9209 = vadd.f32 %v9185, 1.0
    %v9210 = vadd.f32 %v9186, 1.0
    %v9211 = vadd.f32 %v9187, 1.0
    %v9212 = vadd.f32 %v9188, 1.0
    %v9213 = vadd.f32 %v9189, 1.0
    %v9214 = vadd.f32 %v9190, 1.0
    %v9215 = vadd.f32 %v9191, 1.0
    %v9216 = vadd.f32 %v9192, 1.0
    %v9217 = vadd.f32 %v9193, 1.0
    %v9218 = vadd.f32 %v9194, 1.0
    %v9219 = vadd.f32 %v9195, 1.0
    %v9220 = vadd.f32 %v9196, 1.0
    %v9221 = vadd.f32 %v9197, 1.0
    %v9222 = vadd.f32 %v9198, 1.0
    %v9223 = vadd.f32 %v9199, 1.0
    %v9224 = vadd.f32 %v9200, 1.0
    %v9225 = vadd.f32 %v9201, 1.0
    %v9226 = vadd.f32 %v9202, 1.0
    %v9227 = vrcp.pop %v9203
    %v9228 = vmul.f32 1.0, %v9227
    %v9229 = vrcp.pop %v9204
    %v9230 = vmul.f32 1.0, %v9229
    %v9231 = vrcp.pop %v9205
    %v9232 = vmul.f32 1.0, %v9231
    %v9233 = vrcp.pop %v9206
    %v9234 = vmul.f32 1.0, %v9233
    %v9235 = vrcp.pop %v9207
    %v9236 = vmul.f32 1.0, %v9235
    %v9237 = vrcp.pop %v9208
    %v9238 = vmul.f32 1.0, %v9237
    %v9239 = vrcp.pop %v9209
    %v9240 = vmul.f32 1.0, %v9239
    %v9241 = vrcp.pop %v9210
    %v9242 = vmul.f32 1.0, %v9241
    %v9243 = vrcp.pop %v9211
    %v9244 = vmul.f32 1.0, %v9243
    %v9245 = vrcp.pop %v9212
    %v9246 = vmul.f32 1.0, %v9245
    %v9247 = vrcp.pop %v9213
    %v9248 = vmul.f32 1.0, %v9247
    %v9249 = vrcp.pop %v9214
    %v9250 = vmul.f32 1.0, %v9249
    %v9251 = vrcp.pop %v9215
    %v9252 = vmul.f32 1.0, %v9251
    %v9253 = vrcp.pop %v9216
    %v9254 = vmul.f32 1.0, %v9253
    %v9255 = vrcp.pop %v9217
    %v9256 = vmul.f32 1.0, %v9255
    %v9257 = vrcp.pop %v9218
    %v9258 = vmul.f32 1.0, %v9257
    %v9259 = vrcp.pop %v9219
    %v9260 = vmul.f32 1.0, %v9259
    %v9261 = vrcp.pop %v9220
    %v9262 = vmul.f32 1.0, %v9261
    %v9263 = vrcp.pop %v9221
    %v9264 = vmul.f32 1.0, %v9263
    %v9265 = vrcp.pop %v9222
    %v9266 = vmul.f32 1.0, %v9265
    %v9267 = vrcp.pop %v9223
    %v9268 = vmul.f32 1.0, %v9267
    %v9269 = vrcp.pop %v9224
    %v9270 = vmul.f32 1.0, %v9269
    %v9271 = vrcp.pop %v9225
    %v9272 = vmul.f32 1.0, %v9271
    %v9273 = vrcp.pop %v9226
    %v9274 = vmul.f32 1.0, %v9273
    %v9275 = vmul.f32 %v9228, 1.0614054
    %v9276 = vmul.f32 %v9230, 1.0614054
    %v9277 = vmul.f32 %v9232, 1.0614054
    %v9278 = vmul.f32 %v9234, 1.0614054
    %v9279 = vmul.f32 %v9236, 1.0614054
    %v9280 = vmul.f32 %v9238, 1.0614054
    %v9281 = vmul.f32 %v9240, 1.0614054
    %v9282 = vmul.f32 %v9242, 1.0614054
    %v9283 = vmul.f32 %v9244, 1.0614054
    %v9284 = vmul.f32 %v9246, 1.0614054
    %v9285 = vmul.f32 %v9248, 1.0614054
    %v9286 = vmul.f32 %v9250, 1.0614054
    %v9287 = vmul.f32 %v9252, 1.0614054
    %v9288 = vmul.f32 %v9254, 1.0614054
    %v9289 = vmul.f32 %v9256, 1.0614054
    %v9290 = vmul.f32 %v9258, 1.0614054
    %v9291 = vmul.f32 %v9260, 1.0614054
    %v9292 = vmul.f32 %v9262, 1.0614054
    %v9293 = vmul.f32 %v9264, 1.0614054
    %v9294 = vmul.f32 %v9266, 1.0614054
    %v9295 = vmul.f32 %v9268, 1.0614054
    %v9296 = vmul.f32 %v9270, 1.0614054
    %v9297 = vmul.f32 %v9272, 1.0614054
    %v9298 = vmul.f32 %v9274, 1.0614054
    %v9299 = vadd.f32 %v9275, -1.4531521
    %v9300 = vadd.f32 %v9276, -1.4531521
    %v9301 = vadd.f32 %v9277, -1.4531521
    %v9302 = vadd.f32 %v9278, -1.4531521
    %v9303 = vadd.f32 %v9279, -1.4531521
    %v9304 = vadd.f32 %v9280, -1.4531521
    %v9305 = vadd.f32 %v9281, -1.4531521
    %v9306 = vadd.f32 %v9282, -1.4531521
    %v9307 = vadd.f32 %v9283, -1.4531521
    %v9308 = vadd.f32 %v9284, -1.4531521
    %v9309 = vadd.f32 %v9285, -1.4531521
    %v9310 = vadd.f32 %v9286, -1.4531521
    %v9311 = vadd.f32 %v9287, -1.4531521
    %v9312 = vadd.f32 %v9288, -1.4531521
    %v9313 = vadd.f32 %v9289, -1.4531521
    %v9314 = vadd.f32 %v9290, -1.4531521
    %v9315 = vadd.f32 %v9291, -1.4531521
    %v9316 = vadd.f32 %v9292, -1.4531521
    %v9317 = vadd.f32 %v9293, -1.4531521
    %v9318 = vadd.f32 %v9294, -1.4531521
    %v9319 = vadd.f32 %v9295, -1.4531521
    %v9320 = vadd.f32 %v9296, -1.4531521
    %v9321 = vadd.f32 %v9297, -1.4531521
    %v9322 = vadd.f32 %v9298, -1.4531521
    %v9323 = vmul.f32 %v9299, %v9228
    %v9324 = vmul.f32 %v9300, %v9230
    %v9325 = vmul.f32 %v9301, %v9232
    %v9326 = vmul.f32 %v9302, %v9234
    %v9327 = vmul.f32 %v9303, %v9236
    %v9328 = vmul.f32 %v9304, %v9238
    %v9329 = vmul.f32 %v9305, %v9240
    %v9330 = vmul.f32 %v9306, %v9242
    %v9331 = vmul.f32 %v9307, %v9244
    %v9332 = vmul.f32 %v9308, %v9246
    %v9333 = vmul.f32 %v9309, %v9248
    %v9334 = vmul.f32 %v9310, %v9250
    %v9335 = vmul.f32 %v9311, %v9252
    %v9336 = vmul.f32 %v9312, %v9254
    %v9337 = vmul.f32 %v9313, %v9256
    %v9338 = vmul.f32 %v9314, %v9258
    %v9339 = vmul.f32 %v9315, %v9260
    %v9340 = vmul.f32 %v9316, %v9262
    %v9341 = vmul.f32 %v9317, %v9264
    %v9342 = vmul.f32 %v9318, %v9266
    %v9343 = vmul.f32 %v9319, %v9268
    %v9344 = vmul.f32 %v9320, %v9270
    %v9345 = vmul.f32 %v9321, %v9272
    %v9346 = vmul.f32 %v9322, %v9274
    %v9347 = vadd.f32 %v9323, 1.4214138
    %v9348 = vadd.f32 %v9324, 1.4214138
    %v9349 = vadd.f32 %v9325, 1.4214138
    %v9350 = vadd.f32 %v9326, 1.4214138
    %v9351 = vadd.f32 %v9327, 1.4214138
    %v9352 = vadd.f32 %v9328, 1.4214138
    %v9353 = vadd.f32 %v9329, 1.4214138
    %v9354 = vadd.f32 %v9330, 1.4214138
    %v9355 = vadd.f32 %v9331, 1.4214138
    %v9356 = vadd.f32 %v9332, 1.4214138
    %v9357 = vadd.f32 %v9333, 1.4214138
    %v9358 = vadd.f32 %v9334, 1.4214138
    %v9359 = vadd.f32 %v9335, 1.4214138
    %v9360 = vadd.f32 %v9336, 1.4214138
    %v9361 = vadd.f32 %v9337, 1.4214138
    %v9362 = vadd.f32 %v9338, 1.4214138
    %v9363 = vadd.f32 %v9339, 1.4214138
    %v9364 = vadd.f32 %v9340, 1.4214138
    %v9365 = vadd.f32 %v9341, 1.4214138
    %v9366 = vadd.f32 %v9342, 1.4214138
    %v9367 = vadd.f32 %v9343, 1.4214138
    %v9368 = vadd.f32 %v9344, 1.4214138
    %v9369 = vadd.f32 %v9345, 1.4214138
    %v9370 = vadd.f32 %v9346, 1.4214138
    %v9371 = vmul.f32 %v9347, %v9228
    %v9372 = vmul.f32 %v9348, %v9230
    %v9373 = vmul.f32 %v9349, %v9232
    %v9374 = vmul.f32 %v9350, %v9234
    %v9375 = vmul.f32 %v9351, %v9236
    %v9376 = vmul.f32 %v9352, %v9238
    %v9377 = vmul.f32 %v9353, %v9240
    %v9378 = vmul.f32 %v9354, %v9242
    %v9379 = vmul.f32 %v9355, %v9244
    %v9380 = vmul.f32 %v9356, %v9246
    %v9381 = vmul.f32 %v9357, %v9248
    %v9382 = vmul.f32 %v9358, %v9250
    %v9383 = vmul.f32 %v9359, %v9252
    %v9384 = vmul.f32 %v9360, %v9254
    %v9385 = vmul.f32 %v9361, %v9256
    %v9386 = vmul.f32 %v9362, %v9258
    %v9387 = vmul.f32 %v9363, %v9260
    %v9388 = vmul.f32 %v9364, %v9262
    %v9389 = vmul.f32 %v9365, %v9264
    %v9390 = vmul.f32 %v9366, %v9266
    %v9391 = vmul.f32 %v9367, %v9268
    %v9392 = vmul.f32 %v9368, %v9270
    %v9393 = vmul.f32 %v9369, %v9272
    %v9394 = vmul.f32 %v9370, %v9274
    %v9395 = vadd.f32 %v9371, -0.28449672
    %v9396 = vadd.f32 %v9372, -0.28449672
    %v9397 = vadd.f32 %v9373, -0.28449672
    %v9398 = vadd.f32 %v9374, -0.28449672
    %v9399 = vadd.f32 %v9375, -0.28449672
    %v9400 = vadd.f32 %v9376, -0.28449672
    %v9401 = vadd.f32 %v9377, -0.28449672
    %v9402 = vadd.f32 %v9378, -0.28449672
    %v9403 = vadd.f32 %v9379, -0.28449672
    %v9404 = vadd.f32 %v9380, -0.28449672
    %v9405 = vadd.f32 %v9381, -0.28449672
    %v9406 = vadd.f32 %v9382, -0.28449672
    %v9407 = vadd.f32 %v9383, -0.28449672
    %v9408 = vadd.f32 %v9384, -0.28449672
    %v9409 = vadd.f32 %v9385, -0.28449672
    %v9410 = vadd.f32 %v9386, -0.28449672
    %v9411 = vadd.f32 %v9387, -0.28449672
    %v9412 = vadd.f32 %v9388, -0.28449672
    %v9413 = vadd.f32 %v9389, -0.28449672
    %v9414 = vadd.f32 %v9390, -0.28449672
    %v9415 = vadd.f32 %v9391, -0.28449672
    %v9416 = vadd.f32 %v9392, -0.28449672
    %v9417 = vadd.f32 %v9393, -0.28449672
    %v9418 = vadd.f32 %v9394, -0.28449672
    %v9419 = vmul.f32 %v9395, %v9228
    %v9420 = vmul.f32 %v9396, %v9230
    %v9421 = vmul.f32 %v9397, %v9232
    %v9422 = vmul.f32 %v9398, %v9234
    %v9423 = vmul.f32 %v9399, %v9236
    %v9424 = vmul.f32 %v9400, %v9238
    %v9425 = vmul.f32 %v9401, %v9240
    %v9426 = vmul.f32 %v9402, %v9242
    %v9427 = vmul.f32 %v9403, %v9244
    %v9428 = vmul.f32 %v9404, %v9246
    %v9429 = vmul.f32 %v9405, %v9248
    %v9430 = vmul.f32 %v9406, %v9250
    %v9431 = vmul.f32 %v9407, %v9252
    %v9432 = vmul.f32 %v9408, %v9254
    %v9433 = vmul.f32 %v9409, %v9256
    %v9434 = vmul.f32 %v9410, %v9258
    %v9435 = vmul.f32 %v9411, %v9260
    %v9436 = vmul.f32 %v9412, %v9262
    %v9437 = vmul.f32 %v9413, %v9264
    %v9438 = vmul.f32 %v9414, %v9266
    %v9439 = vmul.f32 %v9415, %v9268
    %v9440 = vmul.f32 %v9416, %v9270
    %v9441 = vmul.f32 %v9417, %v9272
    %v9442 = vmul.f32 %v9418, %v9274
    %v9443 = vadd.f32 %v9419, 0.2548296
    %v9444 = vadd.f32 %v9420, 0.2548296
    %v9445 = vadd.f32 %v9421, 0.2548296
    %v9446 = vadd.f32 %v9422, 0.2548296
    %v9447 = vadd.f32 %v9423, 0.2548296
    %v9448 = vadd.f32 %v9424, 0.2548296
    %v9449 = vadd.f32 %v9425, 0.2548296
    %v9450 = vadd.f32 %v9426, 0.2548296
    %v9451 = vadd.f32 %v9427, 0.2548296
    %v9452 = vadd.f32 %v9428, 0.2548296
    %v9453 = vadd.f32 %v9429, 0.2548296
    %v9454 = vadd.f32 %v9430, 0.2548296
    %v9455 = vadd.f32 %v9431, 0.2548296
    %v9456 = vadd.f32 %v9432, 0.2548296
    %v9457 = vadd.f32 %v9433, 0.2548296
    %v9458 = vadd.f32 %v9434, 0.2548296
    %v9459 = vadd.f32 %v9435, 0.2548296
    %v9460 = vadd.f32 %v9436, 0.2548296
    %v9461 = vadd.f32 %v9437, 0.2548296
    %v9462 = vadd.f32 %v9438, 0.2548296
    %v9463 = vadd.f32 %v9439, 0.2548296
    %v9464 = vadd.f32 %v9440, 0.2548296
    %v9465 = vadd.f32 %v9441, 0.2548296
    %v9466 = vadd.f32 %v9442, 0.2548296
    %v9467 = vmul.f32 %v9443, %v9228
    %v9468 = vmul.f32 %v9444, %v9230
    %v9469 = vmul.f32 %v9445, %v9232
    %v9470 = vmul.f32 %v9446, %v9234
    %v9471 = vmul.f32 %v9447, %v9236
    %v9472 = vmul.f32 %v9448, %v9238
    %v9473 = vmul.f32 %v9449, %v9240
    %v9474 = vmul.f32 %v9450, %v9242
    %v9475 = vmul.f32 %v9451, %v9244
    %v9476 = vmul.f32 %v9452, %v9246
    %v9477 = vmul.f32 %v9453, %v9248
    %v9478 = vmul.f32 %v9454, %v9250
    %v9479 = vmul.f32 %v9455, %v9252
    %v9480 = vmul.f32 %v9456, %v9254
    %v9481 = vmul.f32 %v9457, %v9256
    %v9482 = vmul.f32 %v9458, %v9258
    %v9483 = vmul.f32 %v9459, %v9260
    %v9484 = vmul.f32 %v9460, %v9262
    %v9485 = vmul.f32 %v9461, %v9264
    %v9486 = vmul.f32 %v9462, %v9266
    %v9487 = vmul.f32 %v9463, %v9268
    %v9488 = vmul.f32 %v9464, %v9270
    %v9489 = vmul.f32 %v9465, %v9272
    %v9490 = vmul.f32 %v9466, %v9274
    %v9491 = vsub.f32 0.0, %v9155
    %v9492 = vsub.f32 0.0, %v9156
    %v9493 = vsub.f32 0.0, %v9157
    %v9494 = vsub.f32 0.0, %v9158
    %v9495 = vsub.f32 0.0, %v9159
    %v9496 = vsub.f32 0.0, %v9160
    %v9497 = vsub.f32 0.0, %v9161
    %v9498 = vsub.f32 0.0, %v9162
    %v9499 = vsub.f32 0.0, %v9163
    %v9500 = vsub.f32 0.0, %v9164
    %v9501 = vsub.f32 0.0, %v9165
    %v9502 = vsub.f32 0.0, %v9166
    %v9503 = vsub.f32 0.0, %v9167
    %v9504 = vsub.f32 0.0, %v9168
    %v9505 = vsub.f32 0.0, %v9169
    %v9506 = vsub.f32 0.0, %v9170
    %v9507 = vsub.f32 0.0, %v9171
    %v9508 = vsub.f32 0.0, %v9172
    %v9509 = vsub.f32 0.0, %v9173
    %v9510 = vsub.f32 0.0, %v9174
    %v9511 = vsub.f32 0.0, %v9175
    %v9512 = vsub.f32 0.0, %v9176
    %v9513 = vsub.f32 0.0, %v9177
    %v9514 = vsub.f32 0.0, %v9178
    %v9515 = vmul.f32 %v9491, %v9155
    %v9516 = vmul.f32 %v9492, %v9156
    %v9517 = vmul.f32 %v9493, %v9157
    %v9518 = vmul.f32 %v9494, %v9158
    %v9519 = vmul.f32 %v9495, %v9159
    %v9520 = vmul.f32 %v9496, %v9160
    %v9521 = vmul.f32 %v9497, %v9161
    %v9522 = vmul.f32 %v9498, %v9162
    %v9523 = vmul.f32 %v9499, %v9163
    %v9524 = vmul.f32 %v9500, %v9164
    %v9525 = vmul.f32 %v9501, %v9165
    %v9526 = vmul.f32 %v9502, %v9166
    %v9527 = vmul.f32 %v9503, %v9167
    %v9528 = vmul.f32 %v9504, %v9168
    %v9529 = vmul.f32 %v9505, %v9169
    %v9530 = vmul.f32 %v9506, %v9170
    %v9531 = vmul.f32 %v9507, %v9171
    %v9532 = vmul.f32 %v9508, %v9172
    %v9533 = vmul.f32 %v9509, %v9173
    %v9534 = vmul.f32 %v9510, %v9174
    %v9535 = vmul.f32 %v9511, %v9175
    %v9536 = vmul.f32 %v9512, %v9176
    %v9537 = vmul.f32 %v9513, %v9177
    %v9538 = vmul.f32 %v9514, %v9178
    %v9539 = vmul.f32 %v9515, 1.442695
    %v9540 = vpow.pop %v9539
    %v9541 = vmul.f32 %v9516, 1.442695
    %v9542 = vpow.pop %v9541
    %v9543 = vmul.f32 %v9517, 1.442695
    %v9544 = vpow.pop %v9543
    %v9545 = vmul.f32 %v9518, 1.442695
    %v9546 = vpow.pop %v9545
    %v9547 = vmul.f32 %v9519, 1.442695
    %v9548 = vpow.pop %v9547
    %v9549 = vmul.f32 %v9520, 1.442695
    %v9550 = vpow.pop %v9549
    %v9551 = vmul.f32 %v9521, 1.442695
    %v9552 = vpow.pop %v9551
    %v9553 = vmul.f32 %v9522, 1.442695
    %v9554 = vpow.pop %v9553
    %v9555 = vmul.f32 %v9523, 1.442695
    %v9556 = vpow.pop %v9555
    %v9557 = vmul.f32 %v9524, 1.442695
    %v9558 = vpow.pop %v9557
    %v9559 = vmul.f32 %v9525, 1.442695
    %v9560 = vpow.pop %v9559
    %v9561 = vmul.f32 %v9526, 1.442695
    %v9562 = vpow.pop %v9561
    %v9563 = vmul.f32 %v9527, 1.442695
    %v9564 = vpow.pop %v9563
    %v9565 = vmul.f32 %v9528, 1.442695
    %v9566 = vpow.pop %v9565
    %v9567 = vmul.f32 %v9529, 1.442695
    %v9568 = vpow.pop %v9567
    %v9569 = vmul.f32 %v9530, 1.442695
    %v9570 = vpow.pop %v9569
    %v9571 = vmul.f32 %v9531, 1.442695
    %v9572 = vpow.pop %v9571
    %v9573 = vmul.f32 %v9532, 1.442695
    %v9574 = vpow.pop %v9573
    %v9575 = vmul.f32 %v9533, 1.442695
    %v9576 = vpow.pop %v9575
    %v9577 = vmul.f32 %v9534, 1.442695
    %v9578 = vpow.pop %v9577
    %v9579 = vmul.f32 %v9535, 1.442695
    %v9580 = vpow.pop %v9579
    %v9581 = vmul.f32 %v9536, 1.442695
    %v9582 = vpow.pop %v9581
    %v9583 = vmul.f32 %v9537, 1.442695
    %v9584 = vpow.pop %v9583
    %v9585 = vmul.f32 %v9538, 1.442695
    %v9586 = vpow.pop %v9585
    %v9587 = vmul.f32 %v9467, %v9540
    %v9588 = vmul.f32 %v9468, %v9542
    %v9589 = vmul.f32 %v9469, %v9544
    %v9590 = vmul.f32 %v9470, %v9546
    %v9591 = vmul.f32 %v9471, %v9548
    %v9592 = vmul.f32 %v9472, %v9550
    %v9593 = vmul.f32 %v9473, %v9552
    %v9594 = vmul.f32 %v9474, %v9554
    %v9595 = vmul.f32 %v9475, %v9556
    %v9596 = vmul.f32 %v9476, %v9558
    %v9597 = vmul.f32 %v9477, %v9560
    %v9598 = vmul.f32 %v9478, %v9562
    %v9599 = vmul.f32 %v9479, %v9564
    %v9600 = vmul.f32 %v9480, %v9566
    %v9601 = vmul.f32 %v9481, %v9568
    %v9602 = vmul.f32 %v9482, %v9570
    %v9603 = vmul.f32 %v9483, %v9572
    %v9604 = vmul.f32 %v9484, %v9574
    %v9605 = vmul.f32 %v9485, %v9576
    %v9606 = vmul.f32 %v9486, %v9578
    %v9607 = vmul.f32 %v9487, %v9580
    %v9608 = vmul.f32 %v9488, %v9582
    %v9609 = vmul.f32 %v9489, %v9584
    %v9610 = vmul.f32 %v9490, %v9586
    %v9611 = vsub.f32 1.0, %v9587
    %v9612 = vsub.f32 1.0, %v9588
    %v9613 = vsub.f32 1.0, %v9589
    %v9614 = vsub.f32 1.0, %v9590
    %v9615 = vsub.f32 1.0, %v9591
    %v9616 = vsub.f32 1.0, %v9592
    %v9617 = vsub.f32 1.0, %v9593
    %v9618 = vsub.f32 1.0, %v9594
    %v9619 = vsub.f32 1.0, %v9595
    %v9620 = vsub.f32 1.0, %v9596
    %v9621 = vsub.f32 1.0, %v9597
    %v9622 = vsub.f32 1.0, %v9598
    %v9623 = vsub.f32 1.0, %v9599
    %v9624 = vsub.f32 1.0, %v9600
    %v9625 = vsub.f32 1.0, %v9601
    %v9626 = vsub.f32 1.0, %v9602
    %v9627 = vsub.f32 1.0, %v9603
    %v9628 = vsub.f32 1.0, %v9604
    %v9629 = vsub.f32 1.0, %v9605
    %v9630 = vsub.f32 1.0, %v9606
    %v9631 = vsub.f32 1.0, %v9607
    %v9632 = vsub.f32 1.0, %v9608
    %v9633 = vsub.f32 1.0, %v9609
    %v9634 = vsub.f32 1.0, %v9610
    %v9635 = vmul.f32 %v9131, %v9611
    %v9636 = vmul.f32 %v9132, %v9612
    %v9637 = vmul.f32 %v9133, %v9613
    %v9638 = vmul.f32 %v9134, %v9614
    %v9639 = vmul.f32 %v9135, %v9615
    %v9640 = vmul.f32 %v9136, %v9616
    %v9641 = vmul.f32 %v9137, %v9617
    %v9642 = vmul.f32 %v9138, %v9618
    %v9643 = vmul.f32 %v9139, %v9619
    %v9644 = vmul.f32 %v9140, %v9620
    %v9645 = vmul.f32 %v9141, %v9621
    %v9646 = vmul.f32 %v9142, %v9622
    %v9647 = vmul.f32 %v9143, %v9623
    %v9648 = vmul.f32 %v9144, %v9624
    %v9649 = vmul.f32 %v9145, %v9625
    %v9650 = vmul.f32 %v9146, %v9626
    %v9651 = vmul.f32 %v9147, %v9627
    %v9652 = vmul.f32 %v9148, %v9628
    %v9653 = vmul.f32 %v9149, %v9629
    %v9654 = vmul.f32 %v9150, %v9630
    %v9655 = vmul.f32 %v9151, %v9631
    %v9656 = vmul.f32 %v9152, %v9632
    %v9657 = vmul.f32 %v9153, %v9633
    %v9658 = vmul.f32 %v9154, %v9634
    %v9659 = vadd.f32 %v9635, 1.0
    %v9660 = vadd.f32 %v9636, 1.0
    %v9661 = vadd.f32 %v9637, 1.0
    %v9662 = vadd.f32 %v9638, 1.0
    %v9663 = vadd.f32 %v9639, 1.0
    %v9664 = vadd.f32 %v9640, 1.0
    %v9665 = vadd.f32 %v9641, 1.0
    %v9666 = vadd.f32 %v9642, 1.0
    %v9667 = vadd.f32 %v9643, 1.0
    %v9668 = vadd.f32 %v9644, 1.0
    %v9669 = vadd.f32 %v9645, 1.0
    %v9670 = vadd.f32 %v9646, 1.0
    %v9671 = vadd.f32 %v9647, 1.0
    %v9672 = vadd.f32 %v9648, 1.0
    %v9673 = vadd.f32 %v9649, 1.0
    %v9674 = vadd.f32 %v9650, 1.0
    %v9675 = vadd.f32 %v9651, 1.0
    %v9676 = vadd.f32 %v9652, 1.0
    %v9677 = vadd.f32 %v9653, 1.0
    %v9678 = vadd.f32 %v9654, 1.0
    %v9679 = vadd.f32 %v9655, 1.0
    %v9680 = vadd.f32 %v9656, 1.0
    %v9681 = vadd.f32 %v9657, 1.0
    %v9682 = vadd.f32 %v9658, 1.0
    %v9683 = vmul.f32 %v9059, %v9659
    %v9684 = vmul.f32 %v9060, %v9660
    %v9685 = vmul.f32 %v9061, %v9661
    %v9686 = vmul.f32 %v9062, %v9662
    %v9687 = vmul.f32 %v9063, %v9663
    %v9688 = vmul.f32 %v9064, %v9664
    %v9689 = vmul.f32 %v9065, %v9665
    %v9690 = vmul.f32 %v9066, %v9666
    %v9691 = vmul.f32 %v9067, %v9667
    %v9692 = vmul.f32 %v9068, %v9668
    %v9693 = vmul.f32 %v9069, %v9669
    %v9694 = vmul.f32 %v9070, %v9670
    %v9695 = vmul.f32 %v9071, %v9671
    %v9696 = vmul.f32 %v9072, %v9672
    %v9697 = vmul.f32 %v9073, %v9673
    %v9698 = vmul.f32 %v9074, %v9674
    %v9699 = vmul.f32 %v9075, %v9675
    %v9700 = vmul.f32 %v9076, %v9676
    %v9701 = vmul.f32 %v9077, %v9677
    %v9702 = vmul.f32 %v9078, %v9678
    %v9703 = vmul.f32 %v9079, %v9679
    %v9704 = vmul.f32 %v9080, %v9680
    %v9705 = vmul.f32 %v9081, %v9681
    %v9706 = vmul.f32 %v9082, %v9682
    %v9707 = vpack.c.bf16 %v9685, %v9683
    %v9708 = vpack.c.bf16 %v9686, %v9684
    %v9709 = vpack.c.bf16 %v9689, %v9687
    %v9710 = vpack.c.bf16 %v9690, %v9688
    %v9711 = vpack.c.bf16 %v9693, %v9691
    %v9712 = vpack.c.bf16 %v9694, %v9692
    %v9713 = vpack.c.bf16 %v9697, %v9695
    %v9714 = vpack.c.bf16 %v9698, %v9696
    %v9715 = vpack.c.bf16 %v9701, %v9699
    %v9716 = vpack.c.bf16 %v9702, %v9700
    %v9717 = vpack.c.bf16 %v9705, %v9703
    %v9718 = vpack.c.bf16 %v9706, %v9704
    %s9719 = scalar_lea.vmem %s10, 128
    %v9720 = vld [vmem:[%s9719] sm:$0xf]
    %v9721 = vld [vmem:[%s9719 + $0x4] sm:$0xf]
    %v9722 = vld [vmem:[%s9719 + $0x8] sm:$0xf]
    %v9723 = vld [vmem:[%s9719 + $0xc] sm:$0xf]
    %v9724 = vld [vmem:[%s9719 + $0x10] sm:$0xf]
    %v9725 = vld [vmem:[%s9719 + $0x14] sm:$0xf]
    %v9726 = vld [vmem:[%s9719 + $0x18] sm:$0xf]
    %v9727 = vld [vmem:[%s9719 + $0x1c] sm:$0xf]
    %v9728 = vld [vmem:[%s9719 + $0x20] sm:$0xf]
    %v9729 = vld [vmem:[%s9719 + $0x24] sm:$0xf]
    %v9730 = vld [vmem:[%s9719 + $0x28] sm:$0xf]
    %v9731 = vld [vmem:[%s9719 + $0x2c] sm:$0xf]
    %v9732 = vld [vmem:[%s9719 + $0x30] sm:$0xf]
    %v9733 = vld [vmem:[%s9719 + $0x34] sm:$0xf]
    %v9734 = vld [vmem:[%s9719 + $0x38] sm:$0xf]
    %v9735 = vld [vmem:[%s9719 + $0x3c] sm:$0xf]
    %v9736 = vld [vmem:[%s9719 + $0x40] sm:$0xf]
    %v9737 = vld [vmem:[%s9719 + $0x44] sm:$0xf]
    %v9738 = vld [vmem:[%s9719 + $0x48] sm:$0xf]
    %v9739 = vld [vmem:[%s9719 + $0x4c] sm:$0xf]
    %v9740 = vld [vmem:[%s9719 + $0x50] sm:$0xf]
    %v9741 = vld [vmem:[%s9719 + $0x54] sm:$0xf]
    %v9742 = vld [vmem:[%s9719 + $0x58] sm:$0xf]
    %v9743 = vld [vmem:[%s9719 + $0x5c] sm:$0xf]
    %v9744 = vld [vmem:[%s9719 + $0x60] sm:$0xf]
    %v9745 = vld [vmem:[%s9719 + $0x64] sm:$0xf]
    %v9746 = vld [vmem:[%s9719 + $0x68] sm:$0xf]
    %v9747 = vld [vmem:[%s9719 + $0x6c] sm:$0xf]
    %v9748 = vld [vmem:[%s9719 + $0x70] sm:$0xf]
    %v9749 = vld [vmem:[%s9719 + $0x74] sm:$0xf]
    %v9750 = vld [vmem:[%s9719 + $0x78] sm:$0xf]
    %v9751 = vld [vmem:[%s9719 + $0x7c] sm:$0xf]
    %v9784 = vunpack.c.l.b16 %v9720
    %v9785 = vunpack.c.l.b16 %v9721
    %v9786 = vunpack.c.l.b16 %v9722
    %v9787 = vunpack.c.l.b16 %v9723
    %v9788 = vunpack.c.l.b16 %v9724
    %v9789 = vunpack.c.l.b16 %v9725
    %v9790 = vunpack.c.l.b16 %v9726
    %v9791 = vunpack.c.l.b16 %v9727
    %v9792 = vunpack.c.l.b16 %v9728
    %v9793 = vunpack.c.l.b16 %v9729
    %v9794 = vunpack.c.l.b16 %v9730
    %v9795 = vunpack.c.l.b16 %v9731
    %v9796 = vunpack.c.l.b16 %v9732
    %v9797 = vunpack.c.l.b16 %v9733
    %v9798 = vunpack.c.l.b16 %v9734
    %v9799 = vunpack.c.l.b16 %v9735
    %v9800 = vunpack.c.l.b16 %v9736
    %v9801 = vunpack.c.l.b16 %v9737
    %v9802 = vunpack.c.l.b16 %v9738
    %v9803 = vunpack.c.l.b16 %v9739
    %v9804 = vunpack.c.l.b16 %v9740
    %v9805 = vunpack.c.l.b16 %v9741
    %v9806 = vunpack.c.l.b16 %v9742
    %v9807 = vunpack.c.l.b16 %v9743
    %v9808 = vunpack.c.l.b16 %v9744
    %v9809 = vunpack.c.l.b16 %v9745
    %v9810 = vunpack.c.l.b16 %v9746
    %v9811 = vunpack.c.l.b16 %v9747
    %v9812 = vunpack.c.l.b16 %v9748
    %v9813 = vunpack.c.l.b16 %v9749
    %v9814 = vunpack.c.l.b16 %v9750
    %v9815 = vunpack.c.l.b16 %v9751
    %v9816 = vpack.c.b16 %v9785, %v9784
    %v9817 = vpack.c.b16 %v9787, %v9786
    %v9818 = vpack.c.b16 %v9789, %v9788
    %v9819 = vpack.c.b16 %v9791, %v9790
    %v9820 = vpack.c.b16 %v9793, %v9792
    %v9821 = vpack.c.b16 %v9795, %v9794
    %v9822 = vpack.c.b16 %v9797, %v9796
    %v9823 = vpack.c.b16 %v9799, %v9798
    %v9824 = vpack.c.b16 %v9801, %v9800
    %v9825 = vpack.c.b16 %v9803, %v9802
    %v9826 = vpack.c.b16 %v9805, %v9804
    %v9827 = vpack.c.b16 %v9807, %v9806
    %v9828 = vpack.c.b16 %v9809, %v9808
    %v9829 = vpack.c.b16 %v9811, %v9810
    %v9830 = vpack.c.b16 %v9813, %v9812
    %v9831 = vpack.c.b16 %v9815, %v9814
    %9848 = vmatprep.subr.bf16.mxu0 0
    %9849 = vmatpush1.bf16.msra.mxu0 %v9816
    %9850 = vmatprep.subr.bf16.mxu0 0
    %9851 = vmatpush1.bf16.msra.mxu0 %v9817
    %9852 = vmatprep.subr.bf16.mxu0 0
    %9853 = vmatpush1.bf16.msra.mxu0 %v9818
    %9854 = vmatprep.subr.bf16.mxu0 0
    %9855 = vmatpush1.bf16.msra.mxu0 %v9819
    %9856 = vmatprep.subr.bf16.mxu0 0
    %9857 = vmatpush1.bf16.msra.mxu0 %v9820
    %9858 = vmatprep.subr.bf16.mxu0 0
    %9859 = vmatpush1.bf16.msra.mxu0 %v9821
    %9860 = vmatprep.subr.bf16.mxu0 0
    %9861 = vmatpush1.bf16.msra.mxu0 %v9822
    %9862 = vmatprep.subr.bf16.mxu0 0
    %9863 = vmatpush1.bf16.msra.mxu0 %v9823
    %9864 = vmatprep.subr.bf16.mxu0 0
    %9865 = vmatpush1.bf16.msra.mxu0 %v9824
    %9866 = vmatprep.subr.bf16.mxu0 0
    %9867 = vmatpush1.bf16.msra.mxu0 %v9825
    %9868 = vmatprep.subr.bf16.mxu0 0
    %9869 = vmatpush1.bf16.msra.mxu0 %v9826
    %9870 = vmatprep.subr.bf16.mxu0 0
    %9871 = vmatpush1.bf16.msra.mxu0 %v9827
    %9872 = vmatprep.subr.bf16.mxu0 0
    %9873 = vmatpush1.bf16.msra.mxu0 %v9828
    %9874 = vmatprep.subr.bf16.mxu0 0
    %9875 = vmatpush1.bf16.msra.mxu0 %v9829
    %9876 = vmatprep.subr.bf16.mxu0 0
    %9877 = vmatpush1.bf16.msra.mxu0 %v9830
    %9878 = vmatprep.subr.bf16.mxu0 0
    %9879 = vmatpush1.bf16.msra.mxu0 %v9831
    %9880 = vmatprep.mubr.bf16.mxu0 %v9708
    %9881 = vmatmul.mubr.bf16.gmra.mrb[0].mxu0 %v9707
    %v9882 = vpop.f32.mrb[0].mxu0
    %v9883 = vadd.f32 0.0, %v9882
    %v9884 = vpop.f32.mrb[0].mxu0
    %v9885 = vpop.f32.mrb[0].mxu0
    %v9886 = vadd.f32 0.0, %v9885
    %v9887 = vpop.f32.mrb[0].mxu0
    %9888 = vmatprep.mubr.bf16.mxu0 %v9710
    %9889 = vmatmul.mubr.bf16.gmra.mrb[0].mxu0 %v9709
    %v9890 = vpop.f32.mrb[0].mxu0
    %v9891 = vpop.f32.mrb[0].mxu0
    %v9892 = vpop.f32.mrb[0].mxu0
    %v9893 = vadd.f32 0.0, %v9892
    %v9894 = vpop.f32.mrb[0].mxu0
    %9895 = vmatprep.mubr.bf16.mxu0 %v9712
    %9896 = vmatmul.mubr.bf16.gmra.mrb[0].mxu0 %v9711
    %v9897 = vpop.f32.mrb[0].mxu0
    %v9898 = vadd.f32 0.0, %v9897
    %v9899 = vpop.f32.mrb[0].mxu0
    %v9900 = vpop.f32.mrb[0].mxu0
    %v9901 = vpop.f32.mrb[0].mxu0
    %9902 = vmatprep.mubr.bf16.mxu0 %v9714
    %9903 = vmatmul.mubr.bf16.gmra.mrb[0].mxu0 %v9713
    %v9904 = vpop.f32.mrb[0].mxu0
    %v9905 = vadd.f32 0.0, %v9904
    %v9906 = vpop.f32.mrb[0].mxu0
    %v9907 = vpop.f32.mrb[0].mxu0
    %v9908 = vadd.f32 0.0, %v9907
    %v9909 = vpop.f32.mrb[0].mxu0
    %9910 = vmatprep.mubr.bf16.mxu0 %v9716
    %9911 = vmatmul.mubr.bf16.gmra.mrb[0].mxu0 %v9715
    %v9912 = vpop.f32.mrb[0].mxu0
    %v9913 = vpop.f32.mrb[0].mxu0
    %v9914 = vpop.f32.mrb[0].mxu0
    %v9915 = vadd.f32 0.0, %v9914
    %v9916 = vpop.f32.mrb[0].mxu0
    %9917 = vmatprep.mubr.bf16.mxu0 %v9718
    %9918 = vmatmul.mubr.bf16.gmra.mrb[0].mxu0 %v9717
    %v9919 = vpop.f32.mrb[0].mxu0
    %v9920 = vadd.f32 0.0, %v9919
    %v9921 = vpop.f32.mrb[0].mxu0
    %v9922 = vpop.f32.mrb[0].mxu0
    %v9923 = vpop.f32.mrb[0].mxu0
    %9924 = vdwg.mxu0
    %v9925 = vadd.f32 %v8672, %v9883
    %v9926 = vadd.f32 %v8673, %v9886
    %v9927 = vadd.f32 %v8675, %v9893
    %v9928 = vadd.f32 %v8676, %v9898
    %v9929 = vadd.f32 %v8678, %v9905
    %v9930 = vadd.f32 %v8679, %v9908
    %v9931 = vadd.f32 %v8681, %v9915
    %v9932 = vadd.f32 %v8682, %v9920
    %s9933 = scalar_lea.vmem %s11, 1
    %v9934 = vld [vmem:[%s9933] sm:$0x1]
    %v9936 = vlaneseq
    %v9937 = vshrl.u32 %v9936, 7
    %v9938 = vsub.s32 0, %v9937
    %v9939 = vrot.slane %v9934, %v9938
    %v9941 = vadd.f32 %v9925, %v9939
    %v9942 = vadd.f32 %v9926, %v9939
    %v9943 = vadd.f32 %v9927, %v9939
    %v9944 = vadd.f32 %v9928, %v9939
    %v9945 = vadd.f32 %v9929, %v9939
    %v9946 = vadd.f32 %v9930, %v9939
    %v9947 = vadd.f32 %v9931, %v9939
    %v9948 = vadd.f32 %v9932, %v9939
    %s9949 = scalar_lea.vmem %s2, 4
    %v9950 = vld [vmem:[%s9949] sm:$0x1]
    %s9951 = scalar_lea.vmem %s3, 4
    %v9952 = vld [vmem:[%s9951] sm:$0x1]
    %v9953 = vsel %vm76, %v9941, 0.0
    %9954 = vadd.xlane.f32.xlu0 %v9953
    %v9955 = vpop.xlane.xlu0 %9954
    %v9956 = vsel %vm76, %v9942, 0.0
    %9957 = vadd.xlane.f32.xlu0 %v9956
    %v9958 = vpop.xlane.xlu0 %9957
    %v9959 = vsel %vm76, %v9943, 0.0
    %9960 = vadd.xlane.f32.xlu0 %v9959
    %v9961 = vpop.xlane.xlu0 %9960
    %v9962 = vsel %vm76, %v9944, 0.0
    %9963 = vadd.xlane.f32.xlu0 %v9962
    %v9964 = vpop.xlane.xlu0 %9963
    %v9965 = vsel %vm76, %v9945, 0.0
    %9966 = vadd.xlane.f32.xlu0 %v9965
    %v9967 = vpop.xlane.xlu0 %9966
    %v9968 = vsel %vm76, %v9946, 0.0
    %9969 = vadd.xlane.f32.xlu0 %v9968
    %v9970 = vpop.xlane.xlu0 %9969
    %v9971 = vsel %vm76, %v9947, 0.0
    %9972 = vadd.xlane.f32.xlu0 %v9971
    %v9973 = vpop.xlane.xlu0 %9972
    %v9974 = vsel %vm76, %v9948, 0.0
    %9975 = vadd.xlane.f32.xlu0 %v9974
    %v9976 = vpop.xlane.xlu0 %9975
    %v9977 = vmul.f32 %v9955, %v113
    %v9978 = vmul.f32 %v9958, %v113
    %v9979 = vmul.f32 %v9961, %v113
    %v9980 = vmul.f32 %v9964, %v113
    %v9981 = vmul.f32 %v9967, %v113
    %v9982 = vmul.f32 %v9970, %v113
    %v9983 = vmul.f32 %v9973, %v113
    %v9984 = vmul.f32 %v9976, %v113
    %v9985 = vsub.f32 %v9941, %v9977
    %v9986 = vsub.f32 %v9942, %v9978
    %v9987 = vsub.f32 %v9943, %v9979
    %v9988 = vsub.f32 %v9944, %v9980
    %v9989 = vsub.f32 %v9945, %v9981
    %v9990 = vsub.f32 %v9946, %v9982
    %v9991 = vsub.f32 %v9947, %v9983
    %v9992 = vsub.f32 %v9948, %v9984
    %v9993 = vmul.f32 %v9985, %v9985
    %v9994 = vmul.f32 %v9986, %v9986
    %v9995 = vmul.f32 %v9987, %v9987
    %v9996 = vmul.f32 %v9988, %v9988
    %v9997 = vmul.f32 %v9989, %v9989
    %v9998 = vmul.f32 %v9990, %v9990
    %v9999 = vmul.f32 %v9991, %v9991
    %v10000 = vmul.f32 %v9992, %v9992
    %v10001 = vsel %vm76, %v9993, 0.0
    %10002 = vadd.xlane.f32.xlu0 %v10001
    %v10003 = vpop.xlane.xlu0 %10002
    %v10004 = vsel %vm76, %v9994, 0.0
    %10005 = vadd.xlane.f32.xlu0 %v10004
    %v10006 = vpop.xlane.xlu0 %10005
    %v10007 = vsel %vm76, %v9995, 0.0
    %10008 = vadd.xlane.f32.xlu0 %v10007
    %v10009 = vpop.xlane.xlu0 %10008
    %v10010 = vsel %vm76, %v9996, 0.0
    %10011 = vadd.xlane.f32.xlu0 %v10010
    %v10012 = vpop.xlane.xlu0 %10011
    %v10013 = vsel %vm76, %v9997, 0.0
    %10014 = vadd.xlane.f32.xlu0 %v10013
    %v10015 = vpop.xlane.xlu0 %10014
    %v10016 = vsel %vm76, %v9998, 0.0
    %10017 = vadd.xlane.f32.xlu0 %v10016
    %v10018 = vpop.xlane.xlu0 %10017
    %v10019 = vsel %vm76, %v9999, 0.0
    %10020 = vadd.xlane.f32.xlu0 %v10019
    %v10021 = vpop.xlane.xlu0 %10020
    %v10022 = vsel %vm76, %v10000, 0.0
    %10023 = vadd.xlane.f32.xlu0 %v10022
    %v10024 = vpop.xlane.xlu0 %10023
    %v10025 = vmul.f32 %v10003, %v113
    %v10026 = vmul.f32 %v10006, %v113
    %v10027 = vmul.f32 %v10009, %v113
    %v10028 = vmul.f32 %v10012, %v113
    %v10029 = vmul.f32 %v10015, %v113
    %v10030 = vmul.f32 %v10018, %v113
    %v10031 = vmul.f32 %v10021, %v113
    %v10032 = vmul.f32 %v10024, %v113
    %v10033 = vadd.f32 %v10025, 1e-06
    %v10034 = vadd.f32 %v10026, 1e-06
    %v10035 = vadd.f32 %v10027, 1e-06
    %v10036 = vadd.f32 %v10028, 1e-06
    %v10037 = vadd.f32 %v10029, 1e-06
    %v10038 = vadd.f32 %v10030, 1e-06
    %v10039 = vadd.f32 %v10031, 1e-06
    %v10040 = vadd.f32 %v10032, 1e-06
    %v10041 = vrsqrt.pop %v10033
    %v10042 = vrsqrt.pop %v10034
    %v10043 = vrsqrt.pop %v10035
    %v10044 = vrsqrt.pop %v10036
    %v10045 = vrsqrt.pop %v10037
    %v10046 = vrsqrt.pop %v10038
    %v10047 = vrsqrt.pop %v10039
    %v10048 = vrsqrt.pop %v10040
    %v10049 = vmul.f32 %v9985, %v10041
    %v10050 = vmul.f32 %v9986, %v10042
    %v10051 = vmul.f32 %v9987, %v10043
    %v10052 = vmul.f32 %v9988, %v10044
    %v10053 = vmul.f32 %v9989, %v10045
    %v10054 = vmul.f32 %v9990, %v10046
    %v10055 = vmul.f32 %v9991, %v10047
    %v10056 = vmul.f32 %v9992, %v10048
    %v10058 = vlaneseq
    %v10059 = vshrl.u32 %v10058, 7
    %v10060 = vsub.s32 0, %v10059
    %v10061 = vrot.slane %v9950, %v10060
    %v10063 = vmul.f32 %v10049, %v10061
    %v10064 = vmul.f32 %v10050, %v10061
    %v10065 = vmul.f32 %v10051, %v10061
    %v10066 = vmul.f32 %v10052, %v10061
    %v10067 = vmul.f32 %v10053, %v10061
    %v10068 = vmul.f32 %v10054, %v10061
    %v10069 = vmul.f32 %v10055, %v10061
    %v10070 = vmul.f32 %v10056, %v10061
    %v10072 = vlaneseq
    %v10073 = vshrl.u32 %v10072, 7
    %v10074 = vsub.s32 0, %v10073
    %v10075 = vrot.slane %v9952, %v10074
    %v10077 = vadd.f32 %v10063, %v10075
    %v10078 = vadd.f32 %v10064, %v10075
    %v10079 = vadd.f32 %v10065, %v10075
    %v10080 = vadd.f32 %v10066, %v10075
    %v10081 = vadd.f32 %v10067, %v10075
    %v10082 = vadd.f32 %v10068, %v10075
    %v10083 = vadd.f32 %v10069, %v10075
    %v10084 = vadd.f32 %v10070, %v10075
    %10085 = vst.msk [vmem:[#allocation2] sm:$0xff] %vm76, %v10077
    %10086 = vst.msk [vmem:[#allocation2 + $0x8] sm:$0xff] %vm76, %v10078
    %10087 = vst.msk [vmem:[#allocation2 + $0x10] sm:$0xff] %vm76, %v10079
    %10088 = vst.msk [vmem:[#allocation2 + $0x18] sm:$0xff] %vm76, %v10080
    %10089 = vst.msk [vmem:[#allocation2 + $0x20] sm:$0xff] %vm76, %v10081
    %10090 = vst.msk [vmem:[#allocation2 + $0x28] sm:$0xff] %vm76, %v10082
    %10091 = vst.msk [vmem:[#allocation2 + $0x30] sm:$0xff] %vm76, %v10083
    %10092 = vst.msk [vmem:[#allocation2 + $0x38] sm:$0xff] %vm76, %v10084
    // Predicated region
    $region50: #{radio_encoder_forward.1} parent=1 // pred_check
      _
    $region51: #{radio_encoder_forward.1} parent=1 // pred_check_branch
      %10094 = sbr.rel (0) target = $region53
    $region52: #{radio_encoder_forward.1} parent=1 // pred_region
      %s10096 = ssub.s32 1024, 1024
      %10097 = vsyncadd [#allocation3], %s10096
      %s10098 = sshll.u32 [#allocation2], 4
      %s10099 = int_to_ptr.vmem [resolvable:$true] %s10098
      %10104 = dma.vmem_to_hbm [thread:$0]  %s10099, 1024, %s12, [#allocation3], 128, 128, 8
    $region53: #{radio_encoder_forward.1} parent=1 // pred_fallthru
      _
    // Predicated region
    $region54: #{radio_encoder_forward.1} parent=1 // pred_check
      _
    $region55: #{radio_encoder_forward.1} parent=1 // pred_check_branch
      %10106 = sbr.rel (0) target = $region57
    $region56: #{radio_encoder_forward.1} parent=1 // pred_region
      %10107 = dma.done [#allocation3], 1024
    $region57: #{radio_encoder_forward.1} parent=1 // pred_fallthru
      _
    %10108 = vsyncpa [#allocation3], 1

</llo_original>
